<compile_context>
chip_gen: v5e
topology: v5e:2x2
jax: 0.10.0
libtpu: 0.0.40
codegen_flags: <defaults>
</compile_context>

<pallas_src>
import functools

import jax
import jax.numpy as jnp
from jax.experimental import pallas as pl
from jax.experimental.pallas import tpu as pltpu


def _round_up(x, m):
    return ((x + m - 1) // m) * m


def _choose_tm(M, max_tm=512, align=16):
    """Adaptive row tile: balance blocks so padding waste stays < align rows/block."""
    nb = (M + max_tm - 1) // max_tm            # number of row blocks
    return _round_up((M + nb - 1) // nb, align)


# ----------------------------- Pallas kernels ------------------------------ #
def _mm_bias_act_kernel(x_ref, w_ref, b_ref, o_ref, *, apply_relu):
    """Single-k-step GEMM: o = x @ w + b (optional ReLU).
    K fits in one block, so no accumulator scratch / init-finalize phases."""
    r = jnp.dot(x_ref[...], w_ref[...],
                preferred_element_type=jnp.float32) + b_ref[...]
    if apply_relu:
        r = jnp.maximum(r, 0.0)
    o_ref[...] = r.astype(o_ref.dtype)


def _fc_tail_kernel(x_ref, w1_ref, b1_ref, w2_ref, b2_ref, o_ref):
    """Fused Linear(17024,128) + ReLU + Linear(128,4): one launch; the (tm, 128)
    intermediate never touches HBM.  Whole K=17024 reduction in a single step."""
    h = jnp.dot(x_ref[...], w1_ref[...], preferred_element_type=jnp.float32)
    h = jnp.maximum(h + b1_ref[...], 0.0)
    y = jnp.dot(h.astype(w2_ref.dtype), w2_ref[...],
                preferred_element_type=jnp.float32) + b2_ref[...]
    o_ref[...] = y.astype(o_ref.dtype)


# ------------------------------ GEMM wrappers ------------------------------ #
def matmul_bias_act(x, w, b, *, relu, out_dtype, max_tm=512):
    """y = x @ w + b (optionally ReLU).  Full-K blocks (no K padding), adaptive tm,
    f32 bias/accumulation, bf16 (or f32) MXU operands."""
    M, K = x.shape
    Kw, N = w.shape
    assert K == Kw
    tm = _choose_tm(M, max_tm)
    Mp = _round_up(M, tm)
    xp = jnp.pad(x, ((0, Mp - M), (0, 0))) if Mp != M else x

    out = pl.pallas_call(
        functools.partial(_mm_bias_act_kernel, apply_relu=relu),
        out_shape=jax.ShapeDtypeStruct((Mp, N), out_dtype),
        grid_spec=pltpu.PrefetchScalarGridSpec(
            num_scalar_prefetch=0,
            grid=(Mp // tm,),
            in_specs=[
                pl.BlockSpec((tm, K), lambda i: (i, 0)),   # full-K block: no K pad copy
                pl.BlockSpec((K, N), lambda i: (0, 0)),    # weight resident across grid
                pl.BlockSpec((1, N), lambda i: (0, 0)),    # f32 bias
            ],
            out_specs=pl.BlockSpec((tm, N), lambda i: (i, 0)),
        ),
        compiler_params=pltpu.CompilerParams(
            dimension_semantics=("parallel",)),            # megacore-shard M blocks (v7x)
    )(xp, w, b.reshape(1, N))
    return out[:M]


def fc_tail(x, w1, b1, w2, b2):
    """Fused FC1(+ReLU)+FC2 in a single pallas_call."""
    M, K = x.shape
    N1 = w1.shape[1]
    N2 = w2.shape[1]
    tm = _choose_tm(M, max_tm=128)
    Mp = _round_up(M, tm)
    xp = jnp.pad(x, ((0, Mp - M), (0, 0))) if Mp != M else x

    out = pl.pallas_call(
        _fc_tail_kernel,
        out_shape=jax.ShapeDtypeStruct((Mp, N2), jnp.float32),
        grid_spec=pltpu.PrefetchScalarGridSpec(
            num_scalar_prefetch=0,
            grid=(Mp // tm,),
            in_specs=[
                pl.BlockSpec((tm, K), lambda i: (i, 0)),
                pl.BlockSpec((K, N1), lambda i: (0, 0)),   # whole 17024-deep reduction, 1 step
                pl.BlockSpec((1, N1), lambda i: (0, 0)),
                pl.BlockSpec((N1, N2), lambda i: (0, 0)),
                pl.BlockSpec((1, N2), lambda i: (0, 0)),
            ],
            out_specs=pl.BlockSpec((tm, N2), lambda i: (i, 0)),
        ),
        compiler_params=pltpu.CompilerParams(
            dimension_semantics=("parallel",),
            # bf16 w1 block (~4.4 MB) double-buffered + x/out/bias: ~9.5 MB total.
            # 32 MiB gives headroom over v5e's 16 MiB scoped default and is within
            # v7x's 64 MiB physical / 32 MiB scoped budget.
            vmem_limit_bytes=32 * 1024 * 1024),
    )(xp, w1, b1.reshape(1, N1), w2, b2.reshape(1, N2))
    return out[:M]


# ------------------------------ conv wrapper ------------------------------- #
def conv2d_s2_relu(x_nhwc, wmat, b, *, kh=3, kw=3, stride=2):
    """3x3, stride-2, VALID Conv2d + bias + ReLU == im2col (XLA glue) + Pallas GEMM."""
    # TODO(synk): fuse im2col into the GEMM kernel (tap-axis grid / in-kernel strided
    # reads) to avoid materializing `cols` in HBM (~1 MB per layer at B=2).
    B, H, W, Cin = x_nhwc.shape
    Cout = wmat.shape[1]
    Ho = (H - kh) // stride + 1
    Wo = (W - kw) // stride + 1

    patches = []
    for i in range(kh):
        for j in range(kw):
            patches.append(
                x_nhwc[:, i:i + stride * (Ho - 1) + 1:stride,
                       j:j + stride * (Wo - 1) + 1:stride, :])
    cols = jnp.concatenate(patches, axis=-1).reshape(B * Ho * Wo, kh * kw * Cin)

    y = matmul_bias_act(cols, wmat, b, relu=True, out_dtype=x_nhwc.dtype)
    return y.reshape(B, Ho, Wo, Cout)


# --------------------------- parameters / model ---------------------------- #
def init_params(key):
    """PyTorch-layout float32 parameters (Conv2d OIHW, Linear (out, in))."""
    def uinit(k, shape, fan_in):
        bound = 1.0 / jnp.sqrt(jnp.float32(fan_in))
        return jax.random.uniform(k, shape, jnp.float32, -bound, bound)

    ks = jax.random.split(key, 10)
    return {
        "w1": uinit(ks[0], (16, 3, 3, 3), 3 * 9),   "b1": uinit(ks[1], (16,), 3 * 9),
        "w2": uinit(ks[2], (32, 16, 3, 3), 16 * 9), "b2": uinit(ks[3], (32,), 16 * 9),
        "w3": uinit(ks[4], (64, 32, 3, 3), 32 * 9), "b3": uinit(ks[5], (64,), 32 * 9),
        "wf1": uinit(ks[6], (128, 17024), 17024),   "bf1": uinit(ks[7], (128,), 17024),
        "wf2": uinit(ks[8], (4, 128), 128),         "bf2": uinit(ks[9], (4,), 128),
    }


def pack_params(p, final_hwc=(14, 19, 64)):
    """One-time packing (outside the forward pass):
      * conv weights  -> (KH*KW*Cin, Cout) GEMM layout, bf16
      * FC weights    -> pre-transposed (in, out), bf16; FC1 columns permuted from
        PyTorch's NCHW-flatten order to our NHWC-flatten order so the forward needs
        no activation transpose and no per-call weight transpose.
      * biases stay float32 (kernels accumulate in f32)."""
    def conv_w(w_oihw):
        cout, cin, kh, kw = w_oihw.shape
        return (jnp.transpose(w_oihw, (2, 3, 1, 0))          # (kh, kw, cin, cout)
                .reshape(kh * kw * cin, cout).astype(jnp.bfloat16))

    Hf, Wf, Cf = final_hwc
    wf1 = jnp.transpose(p["wf1"].reshape(128, Cf, Hf, Wf),   # (out, c, h, w) = NCHW flatten
                        (0, 2, 3, 1))                        # (out, h, w, c) = NHWC flatten
    wf1 = wf1.reshape(128, Hf * Wf * Cf).T                   # (in, out): no runtime .T

    return {
        "w1": conv_w(p["w1"]), "b1": p["b1"],
        "w2": conv_w(p["w2"]), "b2": p["b2"],
        "w3": conv_w(p["w3"]), "b3": p["b3"],
        "wf1": wf1.astype(jnp.bfloat16), "bf1": p["bf1"],
        "wf2": p["wf2"].T.astype(jnp.bfloat16), "bf2": p["bf2"],
    }


def simple_cnn_forward(packed, x_nchw):
    # NCHW (PyTorch) -> NHWC bf16 for the conv GEMMs (f32 accumulation in-kernel).
    x = jnp.transpose(x_nchw, (0, 2, 3, 1)).astype(jnp.bfloat16)
    x = conv2d_s2_relu(x, packed["w1"], packed["b1"])     # (B, 59, 79, 16)
    x = conv2d_s2_relu(x, packed["w2"], packed["b2"])     # (B, 29, 39, 32)
    x = conv2d_s2_relu(x, packed["w3"], packed["b3"])     # (B, 14, 19, 64)
    B = x.shape[0]
    x = x.reshape(B, -1)          # NHWC flatten; wf1 columns pre-permuted to match
    # Fused Linear(17024,128)+ReLU+Linear(128,4): single pallas_call, f32 output.
    return fc_tail(x, packed["wf1"], packed["bf1"], packed["wf2"], packed["bf2"])


if __name__ == "__main__":
    key = jax.random.PRNGKey(0)
    kx, kp = jax.random.split(key)
    # Linear(17024, 128) implies 3x120x160 input (120,160 -> 59,79 -> 29,39 -> 14,19).
    x = jax.random.normal(kx, (2, 3, 120, 160), dtype=jnp.float32)
    packed = pack_params(init_params(kp))

    fwd = jax.jit(simple_cnn_forward)
    out = jax.block_until_ready(fwd(packed, x))
    assert out.shape == (2, 4) and out.dtype == jnp.float32
    print("KERNEL_OK")
</pallas_src>

<mosaic_0001>
module attributes {stable_mosaic.version = 11 : i64} {
  func.func @_mm_bias_act_kernel(%arg0: i32, %arg1: memref<496x27xbf16, #tpu.memory_space<vmem>>, %arg2: memref<27x16xbf16, #tpu.memory_space<vmem>>, %arg3: memref<1x16xf32, #tpu.memory_space<vmem>>, %arg4: memref<496x16xbf16, #tpu.memory_space<vmem>>) attributes {dimension_semantics = [#tpu.dimension_semantics<parallel>], iteration_bounds = array<i64: 19>, scalar_prefetch = 0 : i64, scratch_operands = 0 : i64, tpu.core_type = #tpu.core_type<tc>, window_params = [{transform_indices = @transform_0, window_bounds = array<i64: 496, 27>}, {pipeline_mode = #tpu.pipeline_mode<synchronous>, transform_indices = @transform_1, window_bounds = array<i64: 27, 16>}, {pipeline_mode = #tpu.pipeline_mode<synchronous>, transform_indices = @transform_2, window_bounds = array<i64: 1, 16>}, {transform_indices = @transform_3, window_bounds = array<i64: 496, 16>}]} {
    %c0 = arith.constant 0 : index
    %c0_0 = arith.constant 0 : index
    %0 = vector.load %arg1[%c0, %c0_0] : memref<496x27xbf16, #tpu.memory_space<vmem>>, vector<496x27xbf16>
    %c0_1 = arith.constant 0 : index
    %c0_2 = arith.constant 0 : index
    %1 = vector.load %arg2[%c0_1, %c0_2] : memref<27x16xbf16, #tpu.memory_space<vmem>>, vector<27x16xbf16>
    %cst = arith.constant dense<0.000000e+00> : vector<496x16xf32>
    %2 = tpu.matmul %0, %1, %cst {dimension_numbers = #tpu.dot_dimension_numbers<[1], [0], [0], [1], [0, 0, 1, 1], [], []>} : vector<496x27xbf16>, vector<27x16xbf16>, vector<496x16xf32> -> vector<496x16xf32>
    %c0_3 = arith.constant 0 : index
    %c0_4 = arith.constant 0 : index
    %3 = vector.load %arg3[%c0_3, %c0_4] : memref<1x16xf32, #tpu.memory_space<vmem>>, vector<1x16xf32>
    %4 = vector.broadcast %3 : vector<1x16xf32> to vector<496x16xf32>
    %5 = arith.addf %2, %4 : vector<496x16xf32>
    %cst_5 = arith.constant 0.000000e+00 : f32
    %6 = vector.broadcast %cst_5 : f32 to vector<496x16xf32>
    %7 = arith.maximumf %5, %6 : vector<496x16xf32>
    %8 = arith.truncf %7 : vector<496x16xf32> to vector<496x16xbf16>
    %c0_6 = arith.constant 0 : index
    %c0_7 = arith.constant 0 : index
    %9 = vector.load %arg4[%c0_6, %c0_7] : memref<496x16xbf16, #tpu.memory_space<vmem>>, vector<496x16xbf16>
    tpu.vector_store %arg4[%c0_6, %c0_7], %8 {strides = array<i32>} : memref<496x16xbf16, #tpu.memory_space<vmem>>, vector<496x16xbf16>,
    return
  }
  func.func @transform_0(%arg0: i32) -> (i32, i32) {
    %c0_i32 = arith.constant 0 : i32
    %c0_i32_0 = arith.constant 0 : i32
    return %arg0, %c0_i32 : i32, i32
  }
  func.func @transform_1(%arg0: i32) -> (i32, i32) {
    %c0_i32 = arith.constant 0 : i32
    %c0_i32_0 = arith.constant 0 : i32
    %c0_i32_1 = arith.constant 0 : i32
    return %c0_i32, %c0_i32_0 : i32, i32
  }
  func.func @transform_2(%arg0: i32) -> (i32, i32) {
    %c0_i32 = arith.constant 0 : i32
    %c0_i32_0 = arith.constant 0 : i32
    %c0_i32_1 = arith.constant 0 : i32
    return %c0_i32, %c0_i32_0 : i32, i32
  }
  func.func @transform_3(%arg0: i32) -> (i32, i32) {
    %c0_i32 = arith.constant 0 : i32
    %c0_i32_0 = arith.constant 0 : i32
    return %arg0, %c0_i32 : i32, i32
  }
}

module attributes {stable_mosaic.version = 11 : i64} {
  func.func @_mm_bias_act_kernel(%arg0: i32, %arg1: memref<464x144xbf16, #tpu.memory_space<vmem>>, %arg2: memref<144x32xbf16, #tpu.memory_space<vmem>>, %arg3: memref<1x32xf32, #tpu.memory_space<vmem>>, %arg4: memref<464x32xbf16, #tpu.memory_space<vmem>>) attributes {dimension_semantics = [#tpu.dimension_semantics<parallel>], iteration_bounds = array<i64: 5>, scalar_prefetch = 0 : i64, scratch_operands = 0 : i64, tpu.core_type = #tpu.core_type<tc>, window_params = [{transform_indices = @transform_0, window_bounds = array<i64: 464, 144>}, {pipeline_mode = #tpu.pipeline_mode<synchronous>, transform_indices = @transform_1, window_bounds = array<i64: 144, 32>}, {pipeline_mode = #tpu.pipeline_mode<synchronous>, transform_indices = @transform_2, window_bounds = array<i64: 1, 32>}, {transform_indices = @transform_3, window_bounds = array<i64: 464, 32>}]} {
    %c0 = arith.constant 0 : index
    %c0_0 = arith.constant 0 : index
    %0 = vector.load %arg1[%c0, %c0_0] : memref<464x144xbf16, #tpu.memory_space<vmem>>, vector<464x144xbf16>
    %c0_1 = arith.constant 0 : index
    %c0_2 = arith.constant 0 : index
    %1 = vector.load %arg2[%c0_1, %c0_2] : memref<144x32xbf16, #tpu.memory_space<vmem>>, vector<144x32xbf16>
    %cst = arith.constant dense<0.000000e+00> : vector<464x32xf32>
    %2 = tpu.matmul %0, %1, %cst {dimension_numbers = #tpu.dot_dimension_numbers<[1], [0], [0], [1], [0, 0, 1, 1], [], []>} : vector<464x144xbf16>, vector<144x32xbf16>, vector<464x32xf32> -> vector<464x32xf32>
    %c0_3 = arith.constant 0 : index
    %c0_4 = arith.constant 0 : index
    %3 = vector.load %arg3[%c0_3, %c0_4] : memref<1x32xf32, #tpu.memory_space<vmem>>, vector<1x32xf32>
    %4 = vector.broadcast %3 : vector<1x32xf32> to vector<464x32xf32>
    %5 = arith.addf %2, %4 : vector<464x32xf32>
    %cst_5 = arith.constant 0.000000e+00 : f32
    %6 = vector.broadcast %cst_5 : f32 to vector<464x32xf32>
    %7 = arith.maximumf %5, %6 : vector<464x32xf32>
    %8 = arith.truncf %7 : vector<464x32xf32> to vector<464x32xbf16>
    %c0_6 = arith.constant 0 : index
    %c0_7 = arith.constant 0 : index
    %9 = vector.load %arg4[%c0_6, %c0_7] : memref<464x32xbf16, #tpu.memory_space<vmem>>, vector<464x32xbf16>
    tpu.vector_store %arg4[%c0_6, %c0_7], %8 {strides = array<i32>} : memref<464x32xbf16, #tpu.memory_space<vmem>>, vector<464x32xbf16>,
    return
  }
  func.func @transform_0(%arg0: i32) -> (i32, i32) {
    %c0_i32 = arith.constant 0 : i32
    %c0_i32_0 = arith.constant 0 : i32
    return %arg0, %c0_i32 : i32, i32
  }
  func.func @transform_1(%arg0: i32) -> (i32, i32) {
    %c0_i32 = arith.constant 0 : i32
    %c0_i32_0 = arith.constant 0 : i32
    %c0_i32_1 = arith.constant 0 : i32
    return %c0_i32, %c0_i32_0 : i32, i32
  }
  func.func @transform_2(%arg0: i32) -> (i32, i32) {
    %c0_i32 = arith.constant 0 : i32
    %c0_i32_0 = arith.constant 0 : i32
    %c0_i32_1 = arith.constant 0 : i32
    return %c0_i32, %c0_i32_0 : i32, i32
  }
  func.func @transform_3(%arg0: i32) -> (i32, i32) {
    %c0_i32 = arith.constant 0 : i32
    %c0_i32_0 = arith.constant 0 : i32
    return %arg0, %c0_i32 : i32, i32
  }
}

module attributes {stable_mosaic.version = 11 : i64} {
  func.func @_mm_bias_act_kernel(%arg0: i32, %arg1: memref<272x288xbf16, #tpu.memory_space<vmem>>, %arg2: memref<288x64xbf16, #tpu.memory_space<vmem>>, %arg3: memref<1x64xf32, #tpu.memory_space<vmem>>, %arg4: memref<272x64xbf16, #tpu.memory_space<vmem>>) attributes {dimension_semantics = [#tpu.dimension_semantics<parallel>], iteration_bounds = array<i64: 2>, scalar_prefetch = 0 : i64, scratch_operands = 0 : i64, tpu.core_type = #tpu.core_type<tc>, window_params = [{transform_indices = @transform_0, window_bounds = array<i64: 272, 288>}, {pipeline_mode = #tpu.pipeline_mode<synchronous>, transform_indices = @transform_1, window_bounds = array<i64: 288, 64>}, {pipeline_mode = #tpu.pipeline_mode<synchronous>, transform_indices = @transform_2, window_bounds = array<i64: 1, 64>}, {transform_indices = @transform_3, window_bounds = array<i64: 272, 64>}]} {
    %c0 = arith.constant 0 : index
    %c0_0 = arith.constant 0 : index
    %0 = vector.load %arg1[%c0, %c0_0] : memref<272x288xbf16, #tpu.memory_space<vmem>>, vector<272x288xbf16>
    %c0_1 = arith.constant 0 : index
    %c0_2 = arith.constant 0 : index
    %1 = vector.load %arg2[%c0_1, %c0_2] : memref<288x64xbf16, #tpu.memory_space<vmem>>, vector<288x64xbf16>
    %cst = arith.constant dense<0.000000e+00> : vector<272x64xf32>
    %2 = tpu.matmul %0, %1, %cst {dimension_numbers = #tpu.dot_dimension_numbers<[1], [0], [0], [1], [0, 0, 1, 1], [], []>} : vector<272x288xbf16>, vector<288x64xbf16>, vector<272x64xf32> -> vector<272x64xf32>
    %c0_3 = arith.constant 0 : index
    %c0_4 = arith.constant 0 : index
    %3 = vector.load %arg3[%c0_3, %c0_4] : memref<1x64xf32, #tpu.memory_space<vmem>>, vector<1x64xf32>
    %4 = vector.broadcast %3 : vector<1x64xf32> to vector<272x64xf32>
    %5 = arith.addf %2, %4 : vector<272x64xf32>
    %cst_5 = arith.constant 0.000000e+00 : f32
    %6 = vector.broadcast %cst_5 : f32 to vector<272x64xf32>
    %7 = arith.maximumf %5, %6 : vector<272x64xf32>
    %8 = arith.truncf %7 : vector<272x64xf32> to vector<272x64xbf16>
    %c0_6 = arith.constant 0 : index
    %c0_7 = arith.constant 0 : index
    %9 = vector.load %arg4[%c0_6, %c0_7] : memref<272x64xbf16, #tpu.memory_space<vmem>>, vector<272x64xbf16>
    tpu.vector_store %arg4[%c0_6, %c0_7], %8 {strides = array<i32>} : memref<272x64xbf16, #tpu.memory_space<vmem>>, vector<272x64xbf16>,
    return
  }
  func.func @transform_0(%arg0: i32) -> (i32, i32) {
    %c0_i32 = arith.constant 0 : i32
    %c0_i32_0 = arith.constant 0 : i32
    return %arg0, %c0_i32 : i32, i32
  }
  func.func @transform_1(%arg0: i32) -> (i32, i32) {
    %c0_i32 = arith.constant 0 : i32
    %c0_i32_0 = arith.constant 0 : i32
    %c0_i32_1 = arith.constant 0 : i32
    return %c0_i32, %c0_i32_0 : i32, i32
  }
  func.func @transform_2(%arg0: i32) -> (i32, i32) {
    %c0_i32 = arith.constant 0 : i32
    %c0_i32_0 = arith.constant 0 : i32
    %c0_i32_1 = arith.constant 0 : i32
    return %c0_i32, %c0_i32_0 : i32, i32
  }
  func.func @transform_3(%arg0: i32) -> (i32, i32) {
    %c0_i32 = arith.constant 0 : i32
    %c0_i32_0 = arith.constant 0 : i32
    return %arg0, %c0_i32 : i32, i32
  }
}

module attributes {stable_mosaic.version = 11 : i64} {
  func.func @_fc_tail_kernel(%arg0: i32, %arg1: memref<16x17024xbf16, #tpu.memory_space<vmem>>, %arg2: memref<17024x128xbf16, #tpu.memory_space<vmem>>, %arg3: memref<1x128xf32, #tpu.memory_space<vmem>>, %arg4: memref<128x4xbf16, #tpu.memory_space<vmem>>, %arg5: memref<1x4xf32, #tpu.memory_space<vmem>>, %arg6: memref<16x4xf32, #tpu.memory_space<vmem>>) attributes {dimension_semantics = [#tpu.dimension_semantics<parallel>], iteration_bounds = array<i64: 1>, scalar_prefetch = 0 : i64, scratch_operands = 0 : i64, tpu.core_type = #tpu.core_type<tc>, window_params = [{transform_indices = @transform_0, window_bounds = array<i64: 16, 17024>}, {pipeline_mode = #tpu.pipeline_mode<synchronous>, transform_indices = @transform_1, window_bounds = array<i64: 17024, 128>}, {pipeline_mode = #tpu.pipeline_mode<synchronous>, transform_indices = @transform_2, window_bounds = array<i64: 1, 128>}, {pipeline_mode = #tpu.pipeline_mode<synchronous>, transform_indices = @transform_3, window_bounds = array<i64: 128, 4>}, {pipeline_mode = #tpu.pipeline_mode<synchronous>, transform_indices = @transform_4, window_bounds = array<i64: 1, 4>}, {transform_indices = @transform_5, window_bounds = array<i64: 16, 4>}]} {
    %c0 = arith.constant 0 : index
    %c0_0 = arith.constant 0 : index
    %0 = vector.load %arg1[%c0, %c0_0] : memref<16x17024xbf16, #tpu.memory_space<vmem>>, vector<16x17024xbf16>
    %c0_1 = arith.constant 0 : index
    %c0_2 = arith.constant 0 : index
    %1 = vector.load %arg2[%c0_1, %c0_2] : memref<17024x128xbf16, #tpu.memory_space<vmem>>, vector<17024x128xbf16>
    %cst = arith.constant dense<0.000000e+00> : vector<16x128xf32>
    %2 = tpu.matmul %0, %1, %cst {dimension_numbers = #tpu.dot_dimension_numbers<[1], [0], [0], [1], [0, 0, 1, 1], [], []>} : vector<16x17024xbf16>, vector<17024x128xbf16>, vector<16x128xf32> -> vector<16x128xf32>
    %c0_3 = arith.constant 0 : index
    %c0_4 = arith.constant 0 : index
    %3 = vector.load %arg3[%c0_3, %c0_4] : memref<1x128xf32, #tpu.memory_space<vmem>>, vector<1x128xf32>
    %4 = vector.broadcast %3 : vector<1x128xf32> to vector<16x128xf32>
    %5 = arith.addf %2, %4 : vector<16x128xf32>
    %cst_5 = arith.constant 0.000000e+00 : f32
    %6 = vector.broadcast %cst_5 : f32 to vector<16x128xf32>
    %7 = arith.maximumf %5, %6 : vector<16x128xf32>
    %8 = arith.truncf %7 : vector<16x128xf32> to vector<16x128xbf16>
    %c0_6 = arith.constant 0 : index
    %c0_7 = arith.constant 0 : index
    %9 = vector.load %arg4[%c0_6, %c0_7] : memref<128x4xbf16, #tpu.memory_space<vmem>>, vector<128x4xbf16>
    %cst_8 = arith.constant dense<0.000000e+00> : vector<16x4xf32>
    %10 = tpu.matmul %8, %9, %cst_8 {dimension_numbers = #tpu.dot_dimension_numbers<[1], [0], [0], [1], [0, 0, 1, 1], [], []>} : vector<16x128xbf16>, vector<128x4xbf16>, vector<16x4xf32> -> vector<16x4xf32>
    %c0_9 = arith.constant 0 : index
    %c0_10 = arith.constant 0 : index
    %11 = vector.load %arg5[%c0_9, %c0_10] : memref<1x4xf32, #tpu.memory_space<vmem>>, vector<1x4xf32>
    %12 = vector.broadcast %11 : vector<1x4xf32> to vector<16x4xf32>
    %13 = arith.addf %10, %12 : vector<16x4xf32>
    %c0_11 = arith.constant 0 : index
    %c0_12 = arith.constant 0 : index
    %14 = vector.load %arg6[%c0_11, %c0_12] : memref<16x4xf32, #tpu.memory_space<vmem>>, vector<16x4xf32>
    tpu.vector_store %arg6[%c0_11, %c0_12], %13 {strides = array<i32>} : memref<16x4xf32, #tpu.memory_space<vmem>>, vector<16x4xf32>,
    return
  }
  func.func @transform_0(%arg0: i32) -> (i32, i32) {
    %c0_i32 = arith.constant 0 : i32
    %c0_i32_0 = arith.constant 0 : i32
    return %arg0, %c0_i32 : i32, i32
  }
  func.func @transform_1(%arg0: i32) -> (i32, i32) {
    %c0_i32 = arith.constant 0 : i32
    %c0_i32_0 = arith.constant 0 : i32
    %c0_i32_1 = arith.constant 0 : i32
    return %c0_i32, %c0_i32_0 : i32, i32
  }
  func.func @transform_2(%arg0: i32) -> (i32, i32) {
    %c0_i32 = arith.constant 0 : i32
    %c0_i32_0 = arith.constant 0 : i32
    %c0_i32_1 = arith.constant 0 : i32
    return %c0_i32, %c0_i32_0 : i32, i32
  }
  func.func @transform_3(%arg0: i32) -> (i32, i32) {
    %c0_i32 = arith.constant 0 : i32
    %c0_i32_0 = arith.constant 0 : i32
    %c0_i32_1 = arith.constant 0 : i32
    return %c0_i32, %c0_i32_0 : i32, i32
  }
  func.func @transform_4(%arg0: i32) -> (i32, i32) {
    %c0_i32 = arith.constant 0 : i32
    %c0_i32_0 = arith.constant 0 : i32
    %c0_i32_1 = arith.constant 0 : i32
    return %c0_i32, %c0_i32_0 : i32, i32
  }
  func.func @transform_5(%arg0: i32) -> (i32, i32) {
    %c0_i32 = arith.constant 0 : i32
    %c0_i32_0 = arith.constant 0 : i32
    return %arg0, %c0_i32 : i32, i32
  }
}

</mosaic_0001>

<llo_original>
// kernel: simple_cnn_forward.4
$region0: #{simple_cnn_forward.4}
  #allocation0 [shape = 'u32[]', space=smem, size = 0x4, offset = 0x4, fixed_abs, tag = 'smem constant byte address 0x4 - core index']
  #allocation1 [shape = 'u32[72,128]{1,0:T(1,128)}', space=vmem, size = 0x9000, scoped, tag = 'internal scratch']
  %s0 = inlined_call_operand.vmem [shape: bf16[9424,27], index: 0, kind: input, shape index: {}]
  %s1 = inlined_call_operand.vmem [shape: bf16[27,16], index: 1, kind: input, shape index: {}]
  %s2 = inlined_call_operand.vmem [shape: f32[1,16], index: 2, kind: input, shape index: {}]
  %s3 = inlined_call_operand.vmem [shape: bf16[9424,16], index: 3, kind: output, shape index: {}]
  %s4 = sld [smem:[#allocation0]]
  $region45: #{simple_cnn_forward.4} parent=0
    _
  %s6 = ssub.s32 1, %s4
  %s7 = scalar_select 0, %s6, %s4
  loop: start=0, step=1, limit=21
  $region2: #{simple_cnn_forward.4} parent=0 // loop_pre_header
    _
  $region3: #{simple_cnn_forward.4} parent=0 // loop_header
    %s9 = sphi 0, %s13
    %p10 = scmp.ge.s32.totalorder %s9, 21
    %s19 = sphi 0, %s21
    %s22 = sphi 0, %s19
    %s23 = sphi 0, %s22
    %s39 = sphi 0, %s23
    %s43 = sphi 0, %s43
    %s45 = sphi 0, %s43
    %s46 = sphi 0, %s45
    %s60 = sphi 0, %s46
    %s64 = sphi 0, %s64
    %s66 = sphi 0, %s64
    %s67 = sphi 0, %s66
    %s81 = sphi 0, %s67
    %s87 = sphi 0, %s89
    %s90 = sphi 0, %s87
    %s91 = sphi 0, %s90
    %s107 = sphi 0, %s91
  $region4: #{simple_cnn_forward.4} parent=0 // loop_header_branch
    %12 = sbr.rel (%p10) target = $region8
  $region5: #{simple_cnn_forward.4} parent=0 // loop_body
    %s14 = ssub.s32 %s9, 1
    %s15 = ssub.s32 %s9, 2
    %s16 = sadd.s32 %s9, 1
    %s17 = ssub.s32 %s9, %s16
    %p18 = scmp.eq.s32.totalorder %s17, 0
    %s20 = sadd.s32 %s19, 1
    %s21 = scalar_select %p18, %s19, %s20
    %p24 = pneg %p18
    %p25 = scmp.eq.s32.totalorder %s9, 18
    %p26 = por %p24, %p25
    %p27 = scmp.ne.s32.totalorder %s19, %s22
    %p28 = scmp.eq.s32.totalorder %s9, 0
    %p29 = por %p27, %p28
    %p30 = scmp.ne.s32.totalorder %s19, %s22
    %p31 = scmp.eq.s32.totalorder %s14, 18
    %p32 = por %p30, %p31
    %p33 = scmp.ne.s32.totalorder %s22, %s23
    %p34 = scmp.eq.s32.totalorder %s14, 0
    %p35 = por %p33, %p34
    %p36 = scmp.ne.s32.totalorder %s22, %s23
    %p37 = scmp.eq.s32.totalorder %s15, 18
    %p38 = por %p36, %p37
    %p40 = scmp.ne.s32.totalorder %s23, %s39
    %p41 = scmp.eq.s32.totalorder %s15, 0
    %p42 = por %p40, %p41
    %s44 = sadd.s32 %s43, 1
    %p47 = scmp.eq.s32.totalorder %s9, 18
    %p48 = scmp.ne.s32.totalorder %s43, %s45
    %p49 = scmp.eq.s32.totalorder %s9, 0
    %p50 = por %p48, %p49
    %p51 = scmp.ne.s32.totalorder %s43, %s45
    %p52 = scmp.eq.s32.totalorder %s14, 18
    %p53 = por %p51, %p52
    %p54 = scmp.ne.s32.totalorder %s45, %s46
    %p55 = scmp.eq.s32.totalorder %s14, 0
    %p56 = por %p54, %p55
    %p57 = scmp.ne.s32.totalorder %s45, %s46
    %p58 = scmp.eq.s32.totalorder %s15, 18
    %p59 = por %p57, %p58
    %p61 = scmp.ne.s32.totalorder %s46, %s60
    %p62 = scmp.eq.s32.totalorder %s15, 0
    %p63 = por %p61, %p62
    %s65 = sadd.s32 %s64, 1
    %p68 = scmp.eq.s32.totalorder %s9, 18
    %p69 = scmp.ne.s32.totalorder %s64, %s66
    %p70 = scmp.eq.s32.totalorder %s9, 0
    %p71 = por %p69, %p70
    %p72 = scmp.ne.s32.totalorder %s64, %s66
    %p73 = scmp.eq.s32.totalorder %s14, 18
    %p74 = por %p72, %p73
    %p75 = scmp.ne.s32.totalorder %s66, %s67
    %p76 = scmp.eq.s32.totalorder %s14, 0
    %p77 = por %p75, %p76
    %p78 = scmp.ne.s32.totalorder %s66, %s67
    %p79 = scmp.eq.s32.totalorder %s15, 18
    %p80 = por %p78, %p79
    %p82 = scmp.ne.s32.totalorder %s67, %s81
    %p83 = scmp.eq.s32.totalorder %s15, 0
    %p84 = por %p82, %p83
    %s85 = ssub.s32 %s9, %s16
    %p86 = scmp.eq.s32.totalorder %s85, 0
    %s88 = sadd.s32 %s87, 1
    %s89 = scalar_select %p86, %s87, %s88
    %p92 = pneg %p86
    %p93 = scmp.eq.s32.totalorder %s9, 18
    %p94 = por %p92, %p93
    %p95 = scmp.ne.s32.totalorder %s87, %s90
    %p96 = scmp.eq.s32.totalorder %s9, 0
    %p97 = por %p95, %p96
    %p98 = scmp.ne.s32.totalorder %s87, %s90
    %p99 = scmp.eq.s32.totalorder %s14, 18
    %p100 = por %p98, %p99
    %p101 = scmp.ne.s32.totalorder %s90, %s91
    %p102 = scmp.eq.s32.totalorder %s14, 0
    %p103 = por %p101, %p102
    %p104 = scmp.ne.s32.totalorder %s90, %s91
    %p105 = scmp.eq.s32.totalorder %s15, 18
    %p106 = por %p104, %p105
    %p108 = scmp.ne.s32.totalorder %s91, %s107
    %p109 = scmp.eq.s32.totalorder %s15, 0
    %p110 = por %p108, %p109
    %p111 = scmp.le.s32.totalorder 1, %s9
    %p112 = scmp.lt.s32.totalorder %s9, 20
    %p113 = pnand %p111, %p112
    %p114 = pneg %p113
    // Predicated region
    $region9: #{simple_cnn_forward.4} parent=5 // pred_check
      _
    $region10: #{simple_cnn_forward.4} parent=5 // pred_check_branch
      %116 = sbr.rel (%p113) target = $region12
    $region11: #{simple_cnn_forward.4} parent=5 // pred_region
      %s117 = ssub.s32 %s9, 1
      // Predicated region
      $region13: #{simple_cnn_forward.4} parent=11 // pred_check
        %p118 = pneg %p56
      $region14: #{simple_cnn_forward.4} parent=11 // pred_check_branch
        %120 = sbr.rel (%p118) target = $region16
      $region15: #{simple_cnn_forward.4} parent=11 // pred_region
        _
      $region16: #{simple_cnn_forward.4} parent=11 // pred_fallthru
        _
      // Predicated region
      $region17: #{simple_cnn_forward.4} parent=11 // pred_check
        %p121 = pneg %p77
      $region18: #{simple_cnn_forward.4} parent=11 // pred_check_branch
        %123 = sbr.rel (%p121) target = $region20
      $region19: #{simple_cnn_forward.4} parent=11 // pred_region
        _
      $region20: #{simple_cnn_forward.4} parent=11 // pred_fallthru
        _
    $region12: #{simple_cnn_forward.4} parent=5 // pred_fallthru
      _
    %p124 = scmp.lt.s32.totalorder %s9, 19
    // Predicated region
    $region21: #{simple_cnn_forward.4} parent=5 // pred_check
      %p125 = pneg %p124
    $region22: #{simple_cnn_forward.4} parent=5 // pred_check_branch
      %127 = sbr.rel (%p125) target = $region24
    $region23: #{simple_cnn_forward.4} parent=5 // pred_region
      // Predicated region
      $region25: #{simple_cnn_forward.4} parent=23 // pred_check
        %p128 = pneg %p29
      $region26: #{simple_cnn_forward.4} parent=23 // pred_check_branch
        %130 = sbr.rel (%p128) target = $region28
      $region27: #{simple_cnn_forward.4} parent=23 // pred_region
        %s131 = smul.u32 62, %s9
        %p132 = scmp.lt.s32.totalorder %s131, 1177
        %s133 = scalar_select %p132, %s131, 1177
        %s134 = smul.addr %s133, 4
        %s135 = scalar_lea.vmem %s0, %s134
        %s136 = smul.u32 62, %s9
      $region28: #{simple_cnn_forward.4} parent=23 // pred_fallthru
        _
    $region24: #{simple_cnn_forward.4} parent=5 // pred_fallthru
      _
    %p137 = scmp.le.s32.totalorder 1, %s9
    %p138 = scmp.lt.s32.totalorder %s9, 20
    %p139 = pnand %p137, %p138
    %p140 = pneg %p139
    // Predicated region
    $region29: #{simple_cnn_forward.4} parent=5 // pred_check
      _
    $region30: #{simple_cnn_forward.4} parent=5 // pred_check_branch
      %142 = sbr.rel (%p139) target = $region32
    $region31: #{simple_cnn_forward.4} parent=5 // pred_region
      %s143 = ssub.s32 %s9, 1
      %s144 = smul.u32 62, %s14
      %p145 = scmp.lt.s32.totalorder %s144, 1177
      %s146 = scalar_select %p145, %s144, 1177
      %s147 = smul.addr %s146, 4
      %s148 = scalar_lea.vmem %s0, %s147
      %p149 = pneg %p35
      %p150 = pneg %p32
      %p151 = pneg %p56
      %p152 = pneg %p53
      %p153 = pneg %p77
      %p154 = pneg %p74
      %p155 = pneg %p103
      %p156 = pneg %p100
      %s157 = smul.u32 62, %s14
      %p158 = scmp.lt.s32.totalorder %s157, 1177
      %s159 = scalar_select %p158, %s157, 1177
      %s160 = smul.addr %s159, 4
      %s161 = scalar_lea.vmem %s3, %s160
      %s162 = smul.u32 62, %s14
      %p163 = scmp.lt.s32.totalorder %s162, 1177
      %s164 = scalar_select %p163, %s162, 1177
      %s165 = smul.addr %s164, 4
      %s166 = scalar_lea.vmem %s0, %s165
      %s167 = smul.u32 62, %s14
      %s168 = smul.u32 62, %s14
      %p169 = scmp.lt.s32.totalorder %s168, 1177
      %s170 = scalar_select %p169, %s168, 1177
      %s171 = smul.addr %s170, 4
      %s172 = scalar_lea.vmem %s3, %s171
      %s173 = smul.u32 62, %s14
      %v175 = vld [vmem:[%s166] sm:$0xf]
      %v176 = vld [vmem:[%s166 + $0x4] sm:$0xf]
      %v177 = vld [vmem:[%s166 + $0x8] sm:$0xf]
      %v178 = vld [vmem:[%s166 + $0xc] sm:$0xf]
      %v179 = vld [vmem:[%s166 + $0x10] sm:$0xf]
      %v180 = vld [vmem:[%s166 + $0x14] sm:$0xf]
      %v181 = vld [vmem:[%s166 + $0x18] sm:$0xf]
      %v182 = vld [vmem:[%s166 + $0x1c] sm:$0xf]
      %v183 = vld [vmem:[%s166 + $0x20] sm:$0xf]
      %v184 = vld [vmem:[%s166 + $0x24] sm:$0xf]
      %v185 = vld [vmem:[%s166 + $0x28] sm:$0xf]
      %v186 = vld [vmem:[%s166 + $0x2c] sm:$0xf]
      %v187 = vld [vmem:[%s166 + $0x30] sm:$0xf]
      %v188 = vld [vmem:[%s166 + $0x34] sm:$0xf]
      %v189 = vld [vmem:[%s166 + $0x38] sm:$0xf]
      %v190 = vld [vmem:[%s166 + $0x3c] sm:$0xf]
      %v191 = vld [vmem:[%s166 + $0x40] sm:$0xf]
      %v192 = vld [vmem:[%s166 + $0x44] sm:$0xf]
      %v193 = vld [vmem:[%s166 + $0x48] sm:$0xf]
      %v194 = vld [vmem:[%s166 + $0x4c] sm:$0xf]
      %v195 = vld [vmem:[%s166 + $0x50] sm:$0xf]
      %v196 = vld [vmem:[%s166 + $0x54] sm:$0xf]
      %v197 = vld [vmem:[%s166 + $0x58] sm:$0xf]
      %v198 = vld [vmem:[%s166 + $0x5c] sm:$0xf]
      %v199 = vld [vmem:[%s166 + $0x60] sm:$0xf]
      %v200 = vld [vmem:[%s166 + $0x64] sm:$0xf]
      %v201 = vld [vmem:[%s166 + $0x68] sm:$0xf]
      %v202 = vld [vmem:[%s166 + $0x6c] sm:$0xf]
      %v203 = vld [vmem:[%s166 + $0x70] sm:$0xf]
      %v204 = vld [vmem:[%s166 + $0x74] sm:$0xf]
      %v205 = vld [vmem:[%s166 + $0x78] sm:$0xf]
      %v206 = vld [vmem:[%s166 + $0x7c] sm:$0xf]
      %v207 = vld [vmem:[%s166 + $0x80] sm:$0xf]
      %v208 = vld [vmem:[%s166 + $0x84] sm:$0xf]
      %v209 = vld [vmem:[%s166 + $0x88] sm:$0xf]
      %v210 = vld [vmem:[%s166 + $0x8c] sm:$0xf]
      %v211 = vld [vmem:[%s166 + $0x90] sm:$0xf]
      %v212 = vld [vmem:[%s166 + $0x94] sm:$0xf]
      %v213 = vld [vmem:[%s166 + $0x98] sm:$0xf]
      %v214 = vld [vmem:[%s166 + $0x9c] sm:$0xf]
      %v215 = vld [vmem:[%s166 + $0xa0] sm:$0xf]
      %v216 = vld [vmem:[%s166 + $0xa4] sm:$0xf]
      %v217 = vld [vmem:[%s166 + $0xa8] sm:$0xf]
      %v218 = vld [vmem:[%s166 + $0xac] sm:$0xf]
      %v219 = vld [vmem:[%s166 + $0xb0] sm:$0xf]
      %v220 = vld [vmem:[%s166 + $0xb4] sm:$0xf]
      %v221 = vld [vmem:[%s166 + $0xb8] sm:$0xf]
      %v222 = vld [vmem:[%s166 + $0xbc] sm:$0xf]
      %v223 = vld [vmem:[%s166 + $0xc0] sm:$0xf]
      %v224 = vld [vmem:[%s166 + $0xc4] sm:$0xf]
      %v225 = vld [vmem:[%s166 + $0xc8] sm:$0xf]
      %v226 = vld [vmem:[%s166 + $0xcc] sm:$0xf]
      %v227 = vld [vmem:[%s166 + $0xd0] sm:$0xf]
      %v228 = vld [vmem:[%s166 + $0xd4] sm:$0xf]
      %v229 = vld [vmem:[%s166 + $0xd8] sm:$0xf]
      %v230 = vld [vmem:[%s166 + $0xdc] sm:$0xf]
      %v231 = vld [vmem:[%s166 + $0xe0] sm:$0xf]
      %v232 = vld [vmem:[%s166 + $0xe4] sm:$0xf]
      %v233 = vld [vmem:[%s166 + $0xe8] sm:$0xf]
      %v234 = vld [vmem:[%s166 + $0xec] sm:$0xf]
      %v235 = vld [vmem:[%s166 + $0xf0] sm:$0xf]
      %v236 = vld [vmem:[%s166 + $0xf4] sm:$0xf]
      %v237 = vld [vmem:[%s1] sm:$0xf]
      %v238 = vld [vmem:[%s1 + $0x4] sm:$0xf]
      %v239 = vld [vmem:[%s1 + $0x8] sm:$0xf]
      %v240 = vld [vmem:[%s1 + $0xc] sm:$0x3]
      %v241 = vld [vmem:[%s2] sm:$0x1]
      %v243 = vperm.slane %v241, 0
      %v307 = vunpack.c.l.b16 %v175
      %v308 = vunpack.c.l.b16 %v176
      %v309 = vunpack.c.l.b16 %v177
      %v310 = vunpack.c.l.b16 %v178
      %v311 = vunpack.c.l.b16 %v179
      %v312 = vunpack.c.l.b16 %v180
      %v313 = vunpack.c.l.b16 %v181
      %v314 = vunpack.c.l.b16 %v182
      %v315 = vunpack.c.l.b16 %v183
      %v316 = vunpack.c.l.b16 %v184
      %v317 = vunpack.c.l.b16 %v185
      %v318 = vunpack.c.l.b16 %v186
      %v319 = vunpack.c.l.b16 %v187
      %v320 = vunpack.c.l.b16 %v188
      %v321 = vunpack.c.l.b16 %v189
      %v322 = vunpack.c.l.b16 %v190
      %v323 = vunpack.c.l.b16 %v191
      %v324 = vunpack.c.l.b16 %v192
      %v325 = vunpack.c.l.b16 %v193
      %v326 = vunpack.c.l.b16 %v194
      %v327 = vunpack.c.l.b16 %v195
      %v328 = vunpack.c.l.b16 %v196
      %v329 = vunpack.c.l.b16 %v197
      %v330 = vunpack.c.l.b16 %v198
      %v331 = vunpack.c.l.b16 %v199
      %v332 = vunpack.c.l.b16 %v200
      %v333 = vunpack.c.l.b16 %v201
      %v334 = vunpack.c.l.b16 %v202
      %v335 = vunpack.c.l.b16 %v203
      %v336 = vunpack.c.l.b16 %v204
      %v337 = vunpack.c.l.b16 %v205
      %v338 = vunpack.c.l.b16 %v206
      %v339 = vunpack.c.l.b16 %v207
      %v340 = vunpack.c.l.b16 %v208
      %v341 = vunpack.c.l.b16 %v209
      %v342 = vunpack.c.l.b16 %v210
      %v343 = vunpack.c.l.b16 %v211
      %v344 = vunpack.c.l.b16 %v212
      %v345 = vunpack.c.l.b16 %v213
      %v346 = vunpack.c.l.b16 %v214
      %v347 = vunpack.c.l.b16 %v215
      %v348 = vunpack.c.l.b16 %v216
      %v349 = vunpack.c.l.b16 %v217
      %v350 = vunpack.c.l.b16 %v218
      %v351 = vunpack.c.l.b16 %v219
      %v352 = vunpack.c.l.b16 %v220
      %v353 = vunpack.c.l.b16 %v221
      %v354 = vunpack.c.l.b16 %v222
      %v355 = vunpack.c.l.b16 %v223
      %v356 = vunpack.c.l.b16 %v224
      %v357 = vunpack.c.l.b16 %v225
      %v358 = vunpack.c.l.b16 %v226
      %v359 = vunpack.c.l.b16 %v227
      %v360 = vunpack.c.l.b16 %v228
      %v361 = vunpack.c.l.b16 %v229
      %v362 = vunpack.c.l.b16 %v230
      %v363 = vunpack.c.l.b16 %v231
      %v364 = vunpack.c.l.b16 %v232
      %v365 = vunpack.c.l.b16 %v233
      %v366 = vunpack.c.l.b16 %v234
      %v367 = vunpack.c.l.b16 %v235
      %v368 = vunpack.c.l.b16 %v236
      %v369 = vpack.c.b16 %v308, %v307
      %v370 = vpack.c.b16 %v310, %v309
      %v371 = vpack.c.b16 %v312, %v311
      %v372 = vpack.c.b16 %v314, %v313
      %v373 = vpack.c.b16 %v316, %v315
      %v374 = vpack.c.b16 %v318, %v317
      %v375 = vpack.c.b16 %v320, %v319
      %v376 = vpack.c.b16 %v322, %v321
      %v377 = vpack.c.b16 %v324, %v323
      %v378 = vpack.c.b16 %v326, %v325
      %v379 = vpack.c.b16 %v328, %v327
      %v380 = vpack.c.b16 %v330, %v329
      %v381 = vpack.c.b16 %v332, %v331
      %v382 = vpack.c.b16 %v334, %v333
      %v383 = vpack.c.b16 %v336, %v335
      %v384 = vpack.c.b16 %v338, %v337
      %v385 = vpack.c.b16 %v340, %v339
      %v386 = vpack.c.b16 %v342, %v341
      %v387 = vpack.c.b16 %v344, %v343
      %v388 = vpack.c.b16 %v346, %v345
      %v389 = vpack.c.b16 %v348, %v347
      %v390 = vpack.c.b16 %v350, %v349
      %v391 = vpack.c.b16 %v352, %v351
      %v392 = vpack.c.b16 %v354, %v353
      %v393 = vpack.c.b16 %v356, %v355
      %v394 = vpack.c.b16 %v358, %v357
      %v395 = vpack.c.b16 %v360, %v359
      %v396 = vpack.c.b16 %v362, %v361
      %v397 = vpack.c.b16 %v364, %v363
      %v398 = vpack.c.b16 %v366, %v365
      %v399 = vpack.c.b16 %v368, %v367
      %v404 = vunpack.c.l.b16 %v237
      %v405 = vunpack.c.l.b16 %v238
      %v406 = vunpack.c.l.b16 %v239
      %v407 = vunpack.c.l.b16 %v240
      %v408 = vpack.c.b16 %v405, %v404
      %v409 = vpack.c.b16 %v407, %v406
      %vm411 = vcmask 220160
      %v413 = vsel %vm411, %v369, 0
      %v416 = vsel %vm411, %v370, 0
      %v419 = vsel %vm411, %v371, 0
      %v422 = vsel %vm411, %v372, 0
      %v425 = vsel %vm411, %v373, 0
      %v428 = vsel %vm411, %v374, 0
      %v431 = vsel %vm411, %v375, 0
      %v434 = vsel %vm411, %v376, 0
      %v437 = vsel %vm411, %v377, 0
      %v440 = vsel %vm411, %v378, 0
      %v443 = vsel %vm411, %v379, 0
      %v446 = vsel %vm411, %v380, 0
      %v449 = vsel %vm411, %v381, 0
      %v452 = vsel %vm411, %v382, 0
      %v455 = vsel %vm411, %v383, 0
      %v458 = vsel %vm411, %v384, 0
      %v461 = vsel %vm411, %v385, 0
      %v464 = vsel %vm411, %v386, 0
      %v467 = vsel %vm411, %v387, 0
      %v470 = vsel %vm411, %v388, 0
      %v473 = vsel %vm411, %v389, 0
      %v476 = vsel %vm411, %v390, 0
      %v479 = vsel %vm411, %v391, 0
      %v482 = vsel %vm411, %v392, 0
      %v485 = vsel %vm411, %v393, 0
      %v488 = vsel %vm411, %v394, 0
      %v491 = vsel %vm411, %v395, 0
      %v494 = vsel %vm411, %v396, 0
      %v497 = vsel %vm411, %v397, 0
      %v500 = vsel %vm411, %v398, 0
      %v503 = vsel %vm411, %v399, 0
      %vm505 = vcmask 1044480
      %vm506 = vcmask 1045504
      %v507 = vsel %vm505, 4294967295, 65535
      %v508 = vsel %vm506, %v507, 0
      %v510 = vand.u32 %v409, %v508
      %512 = vmatpush.bf16.msra.mxu0 0
      %513 = vmatpush.bf16.msra.mxu0 0
      %514 = vmatpush.bf16.msra.mxu0 0
      %515 = vmatpush.bf16.msra.mxu0 0
      %516 = vmatpush.bf16.msra.mxu0 0
      %517 = vmatpush.bf16.msra.mxu0 0
      %518 = vmatpush.bf16.msra.mxu0 %v510
      %519 = vmatpush.bf16.msra.mxu0 %v408
      %520 = vmatmul.bf16.gmra.mxu0 %v413
      %v521 = vpop.f32.mrf.mxu0
      %v522 = vadd.f32 %v243, %v521
      %v523 = vpop.f32.mrf.mxu0
      %v524 = vadd.f32 %v243, %v523
      %525 = vmatmul.bf16.gmra.mxu0 %v416
      %v526 = vpop.f32.mrf.mxu0
      %v527 = vadd.f32 %v243, %v526
      %v528 = vpop.f32.mrf.mxu0
      %v529 = vadd.f32 %v243, %v528
      %530 = vmatmul.bf16.gmra.mxu0 %v419
      %v531 = vpop.f32.mrf.mxu0
      %v532 = vadd.f32 %v243, %v531
      %v533 = vpop.f32.mrf.mxu0
      %v534 = vadd.f32 %v243, %v533
      %535 = vmatmul.bf16.gmra.mxu0 %v422
      %v536 = vpop.f32.mrf.mxu0
      %v537 = vadd.f32 %v243, %v536
      %v538 = vpop.f32.mrf.mxu0
      %v539 = vadd.f32 %v243, %v538
      %540 = vmatmul.bf16.gmra.mxu0 %v425
      %v541 = vpop.f32.mrf.mxu0
      %v542 = vadd.f32 %v243, %v541
      %v543 = vpop.f32.mrf.mxu0
      %v544 = vadd.f32 %v243, %v543
      %545 = vmatmul.bf16.gmra.mxu0 %v428
      %v546 = vpop.f32.mrf.mxu0
      %v547 = vadd.f32 %v243, %v546
      %v548 = vpop.f32.mrf.mxu0
      %v549 = vadd.f32 %v243, %v548
      %550 = vmatmul.bf16.gmra.mxu0 %v431
      %v551 = vpop.f32.mrf.mxu0
      %v552 = vadd.f32 %v243, %v551
      %v553 = vpop.f32.mrf.mxu0
      %v554 = vadd.f32 %v243, %v553
      %555 = vmatmul.bf16.gmra.mxu0 %v434
      %v556 = vpop.f32.mrf.mxu0
      %v557 = vadd.f32 %v243, %v556
      %v558 = vpop.f32.mrf.mxu0
      %v559 = vadd.f32 %v243, %v558
      %560 = vmatmul.bf16.gmra.mxu0 %v437
      %v561 = vpop.f32.mrf.mxu0
      %v562 = vadd.f32 %v243, %v561
      %v563 = vpop.f32.mrf.mxu0
      %v564 = vadd.f32 %v243, %v563
      %565 = vmatmul.bf16.gmra.mxu0 %v440
      %v566 = vpop.f32.mrf.mxu0
      %v567 = vadd.f32 %v243, %v566
      %v568 = vpop.f32.mrf.mxu0
      %v569 = vadd.f32 %v243, %v568
      %570 = vmatmul.bf16.gmra.mxu0 %v443
      %v571 = vpop.f32.mrf.mxu0
      %v572 = vadd.f32 %v243, %v571
      %v573 = vpop.f32.mrf.mxu0
      %v574 = vadd.f32 %v243, %v573
      %575 = vmatmul.bf16.gmra.mxu0 %v446
      %v576 = vpop.f32.mrf.mxu0
      %v577 = vadd.f32 %v243, %v576
      %v578 = vpop.f32.mrf.mxu0
      %v579 = vadd.f32 %v243, %v578
      %580 = vmatmul.bf16.gmra.mxu0 %v449
      %v581 = vpop.f32.mrf.mxu0
      %v582 = vadd.f32 %v243, %v581
      %v583 = vpop.f32.mrf.mxu0
      %v584 = vadd.f32 %v243, %v583
      %585 = vmatmul.bf16.gmra.mxu0 %v452
      %v586 = vpop.f32.mrf.mxu0
      %v587 = vadd.f32 %v243, %v586
      %v588 = vpop.f32.mrf.mxu0
      %v589 = vadd.f32 %v243, %v588
      %590 = vmatmul.bf16.gmra.mxu0 %v455
      %v591 = vpop.f32.mrf.mxu0
      %v592 = vadd.f32 %v243, %v591
      %v593 = vpop.f32.mrf.mxu0
      %v594 = vadd.f32 %v243, %v593
      %595 = vmatmul.bf16.gmra.mxu0 %v458
      %v596 = vpop.f32.mrf.mxu0
      %v597 = vadd.f32 %v243, %v596
      %v598 = vpop.f32.mrf.mxu0
      %v599 = vadd.f32 %v243, %v598
      %600 = vmatmul.bf16.gmra.mxu0 %v461
      %v601 = vpop.f32.mrf.mxu0
      %v602 = vadd.f32 %v243, %v601
      %v603 = vpop.f32.mrf.mxu0
      %v604 = vadd.f32 %v243, %v603
      %605 = vmatmul.bf16.gmra.mxu0 %v464
      %v606 = vpop.f32.mrf.mxu0
      %v607 = vadd.f32 %v243, %v606
      %v608 = vpop.f32.mrf.mxu0
      %v609 = vadd.f32 %v243, %v608
      %610 = vmatmul.bf16.gmra.mxu0 %v467
      %v611 = vpop.f32.mrf.mxu0
      %v612 = vadd.f32 %v243, %v611
      %v613 = vpop.f32.mrf.mxu0
      %v614 = vadd.f32 %v243, %v613
      %615 = vmatmul.bf16.gmra.mxu0 %v470
      %v616 = vpop.f32.mrf.mxu0
      %v617 = vadd.f32 %v243, %v616
      %v618 = vpop.f32.mrf.mxu0
      %v619 = vadd.f32 %v243, %v618
      %620 = vmatmul.bf16.gmra.mxu0 %v473
      %v621 = vpop.f32.mrf.mxu0
      %v622 = vadd.f32 %v243, %v621
      %v623 = vpop.f32.mrf.mxu0
      %v624 = vadd.f32 %v243, %v623
      %625 = vmatmul.bf16.gmra.mxu0 %v476
      %v626 = vpop.f32.mrf.mxu0
      %v627 = vadd.f32 %v243, %v626
      %v628 = vpop.f32.mrf.mxu0
      %v629 = vadd.f32 %v243, %v628
      %630 = vmatmul.bf16.gmra.mxu0 %v479
      %v631 = vpop.f32.mrf.mxu0
      %v632 = vadd.f32 %v243, %v631
      %v633 = vpop.f32.mrf.mxu0
      %v634 = vadd.f32 %v243, %v633
      %635 = vmatmul.bf16.gmra.mxu0 %v482
      %v636 = vpop.f32.mrf.mxu0
      %v637 = vadd.f32 %v243, %v636
      %v638 = vpop.f32.mrf.mxu0
      %v639 = vadd.f32 %v243, %v638
      %640 = vmatmul.bf16.gmra.mxu0 %v485
      %v641 = vpop.f32.mrf.mxu0
      %v642 = vadd.f32 %v243, %v641
      %v643 = vpop.f32.mrf.mxu0
      %v644 = vadd.f32 %v243, %v643
      %645 = vmatmul.bf16.gmra.mxu0 %v488
      %v646 = vpop.f32.mrf.mxu0
      %v647 = vadd.f32 %v243, %v646
      %v648 = vpop.f32.mrf.mxu0
      %v649 = vadd.f32 %v243, %v648
      %650 = vmatmul.bf16.gmra.mxu0 %v491
      %v651 = vpop.f32.mrf.mxu0
      %v652 = vadd.f32 %v243, %v651
      %v653 = vpop.f32.mrf.mxu0
      %v654 = vadd.f32 %v243, %v653
      %655 = vmatmul.bf16.gmra.mxu0 %v494
      %v656 = vpop.f32.mrf.mxu0
      %v657 = vadd.f32 %v243, %v656
      %v658 = vpop.f32.mrf.mxu0
      %v659 = vadd.f32 %v243, %v658
      %660 = vmatmul.bf16.gmra.mxu0 %v497
      %v661 = vpop.f32.mrf.mxu0
      %v662 = vadd.f32 %v243, %v661
      %v663 = vpop.f32.mrf.mxu0
      %v664 = vadd.f32 %v243, %v663
      %665 = vmatmul.bf16.gmra.mxu0 %v500
      %v666 = vpop.f32.mrf.mxu0
      %v667 = vadd.f32 %v243, %v666
      %v668 = vpop.f32.mrf.mxu0
      %v669 = vadd.f32 %v243, %v668
      %670 = vmatmul.bf16.gmra.mxu0 %v503
      %v671 = vpop.f32.mrf.mxu0
      %v672 = vadd.f32 %v243, %v671
      %v673 = vpop.f32.mrf.mxu0
      %v674 = vadd.f32 %v243, %v673
      %675 = vdwg.mxu0
      %v676 = vmax.f32 %v522, 0.0
      %v677 = vmax.f32 %v524, 0.0
      %v678 = vmax.f32 %v527, 0.0
      %v679 = vmax.f32 %v529, 0.0
      %v680 = vmax.f32 %v532, 0.0
      %v681 = vmax.f32 %v534, 0.0
      %v682 = vmax.f32 %v537, 0.0
      %v683 = vmax.f32 %v539, 0.0
      %v684 = vmax.f32 %v542, 0.0
      %v685 = vmax.f32 %v544, 0.0
      %v686 = vmax.f32 %v547, 0.0
      %v687 = vmax.f32 %v549, 0.0
      %v688 = vmax.f32 %v552, 0.0
      %v689 = vmax.f32 %v554, 0.0
      %v690 = vmax.f32 %v557, 0.0
      %v691 = vmax.f32 %v559, 0.0
      %v692 = vmax.f32 %v562, 0.0
      %v693 = vmax.f32 %v564, 0.0
      %v694 = vmax.f32 %v567, 0.0
      %v695 = vmax.f32 %v569, 0.0
      %v696 = vmax.f32 %v572, 0.0
      %v697 = vmax.f32 %v574, 0.0
      %v698 = vmax.f32 %v577, 0.0
      %v699 = vmax.f32 %v579, 0.0
      %v700 = vmax.f32 %v582, 0.0
      %v701 = vmax.f32 %v584, 0.0
      %v702 = vmax.f32 %v587, 0.0
      %v703 = vmax.f32 %v589, 0.0
      %v704 = vmax.f32 %v592, 0.0
      %v705 = vmax.f32 %v594, 0.0
      %v706 = vmax.f32 %v597, 0.0
      %v707 = vmax.f32 %v599, 0.0
      %v708 = vmax.f32 %v602, 0.0
      %v709 = vmax.f32 %v604, 0.0
      %v710 = vmax.f32 %v607, 0.0
      %v711 = vmax.f32 %v609, 0.0
      %v712 = vmax.f32 %v612, 0.0
      %v713 = vmax.f32 %v614, 0.0
      %v714 = vmax.f32 %v617, 0.0
      %v715 = vmax.f32 %v619, 0.0
      %v716 = vmax.f32 %v622, 0.0
      %v717 = vmax.f32 %v624, 0.0
      %v718 = vmax.f32 %v627, 0.0
      %v719 = vmax.f32 %v629, 0.0
      %v720 = vmax.f32 %v632, 0.0
      %v721 = vmax.f32 %v634, 0.0
      %v722 = vmax.f32 %v637, 0.0
      %v723 = vmax.f32 %v639, 0.0
      %v724 = vmax.f32 %v642, 0.0
      %v725 = vmax.f32 %v644, 0.0
      %v726 = vmax.f32 %v647, 0.0
      %v727 = vmax.f32 %v649, 0.0
      %v728 = vmax.f32 %v652, 0.0
      %v729 = vmax.f32 %v654, 0.0
      %v730 = vmax.f32 %v657, 0.0
      %v731 = vmax.f32 %v659, 0.0
      %v732 = vmax.f32 %v662, 0.0
      %v733 = vmax.f32 %v664, 0.0
      %v734 = vmax.f32 %v667, 0.0
      %v735 = vmax.f32 %v669, 0.0
      %v736 = vmax.f32 %v672, 0.0
      %v737 = vmax.f32 %v674, 0.0
      %v738 = vpack.c.bf16 %v676, %v676
      %v739 = vpack.c.bf16 %v677, %v677
      %v740 = vpack.c.bf16 %v678, %v678
      %v741 = vpack.c.bf16 %v679, %v679
      %v742 = vpack.c.bf16 %v680, %v680
      %v743 = vpack.c.bf16 %v681, %v681
      %v744 = vpack.c.bf16 %v682, %v682
      %v745 = vpack.c.bf16 %v683, %v683
      %v746 = vpack.c.bf16 %v684, %v684
      %v747 = vpack.c.bf16 %v685, %v685
      %v748 = vpack.c.bf16 %v686, %v686
      %v749 = vpack.c.bf16 %v687, %v687
      %v750 = vpack.c.bf16 %v688, %v688
      %v751 = vpack.c.bf16 %v689, %v689
      %v752 = vpack.c.bf16 %v690, %v690
      %v753 = vpack.c.bf16 %v691, %v691
      %v754 = vpack.c.bf16 %v692, %v692
      %v755 = vpack.c.bf16 %v693, %v693
      %v756 = vpack.c.bf16 %v694, %v694
      %v757 = vpack.c.bf16 %v695, %v695
      %v758 = vpack.c.bf16 %v696, %v696
      %v759 = vpack.c.bf16 %v697, %v697
      %v760 = vpack.c.bf16 %v698, %v698
      %v761 = vpack.c.bf16 %v699, %v699
      %v762 = vpack.c.bf16 %v700, %v700
      %v763 = vpack.c.bf16 %v701, %v701
      %v764 = vpack.c.bf16 %v702, %v702
      %v765 = vpack.c.bf16 %v703, %v703
      %v766 = vpack.c.bf16 %v704, %v704
      %v767 = vpack.c.bf16 %v705, %v705
      %v768 = vpack.c.bf16 %v706, %v706
      %v769 = vpack.c.bf16 %v707, %v707
      %v770 = vpack.c.bf16 %v708, %v708
      %v771 = vpack.c.bf16 %v709, %v709
      %v772 = vpack.c.bf16 %v710, %v710
      %v773 = vpack.c.bf16 %v711, %v711
      %v774 = vpack.c.bf16 %v712, %v712
      %v775 = vpack.c.bf16 %v713, %v713
      %v776 = vpack.c.bf16 %v714, %v714
      %v777 = vpack.c.bf16 %v715, %v715
      %v778 = vpack.c.bf16 %v716, %v716
      %v779 = vpack.c.bf16 %v717, %v717
      %v780 = vpack.c.bf16 %v718, %v718
      %v781 = vpack.c.bf16 %v719, %v719
      %v782 = vpack.c.bf16 %v720, %v720
      %v783 = vpack.c.bf16 %v721, %v721
      %v784 = vpack.c.bf16 %v722, %v722
      %v785 = vpack.c.bf16 %v723, %v723
      %v786 = vpack.c.bf16 %v724, %v724
      %v787 = vpack.c.bf16 %v725, %v725
      %v788 = vpack.c.bf16 %v726, %v726
      %v789 = vpack.c.bf16 %v727, %v727
      %v790 = vpack.c.bf16 %v728, %v728
      %v791 = vpack.c.bf16 %v729, %v729
      %v792 = vpack.c.bf16 %v730, %v730
      %v793 = vpack.c.bf16 %v731, %v731
      %v794 = vpack.c.bf16 %v732, %v732
      %v795 = vpack.c.bf16 %v733, %v733
      %v796 = vpack.c.bf16 %v734, %v734
      %v797 = vpack.c.bf16 %v735, %v735
      %v798 = vpack.c.bf16 %v736, %v736
      %v799 = vpack.c.bf16 %v737, %v737
      %vm800 = vcmask 125952
      %801 = vst.msk [vmem:[%s172] sm:$0xf] %vm800, %v738
      %802 = vst.msk [vmem:[%s172 + $0x4] sm:$0xf] %vm800, %v739
      %803 = vst.msk [vmem:[%s172 + $0x8] sm:$0xf] %vm800, %v740
      %804 = vst.msk [vmem:[%s172 + $0xc] sm:$0xf] %vm800, %v741
      %805 = vst.msk [vmem:[%s172 + $0x10] sm:$0xf] %vm800, %v742
      %806 = vst.msk [vmem:[%s172 + $0x14] sm:$0xf] %vm800, %v743
      %807 = vst.msk [vmem:[%s172 + $0x18] sm:$0xf] %vm800, %v744
      %808 = vst.msk [vmem:[%s172 + $0x1c] sm:$0xf] %vm800, %v745
      %809 = vst.msk [vmem:[%s172 + $0x20] sm:$0xf] %vm800, %v746
      %810 = vst.msk [vmem:[%s172 + $0x24] sm:$0xf] %vm800, %v747
      %811 = vst.msk [vmem:[%s172 + $0x28] sm:$0xf] %vm800, %v748
      %812 = vst.msk [vmem:[%s172 + $0x2c] sm:$0xf] %vm800, %v749
      %813 = vst.msk [vmem:[%s172 + $0x30] sm:$0xf] %vm800, %v750
      %814 = vst.msk [vmem:[%s172 + $0x34] sm:$0xf] %vm800, %v751
      %815 = vst.msk [vmem:[%s172 + $0x38] sm:$0xf] %vm800, %v752
      %816 = vst.msk [vmem:[%s172 + $0x3c] sm:$0xf] %vm800, %v753
      %817 = vst.msk [vmem:[%s172 + $0x40] sm:$0xf] %vm800, %v754
      %818 = vst.msk [vmem:[%s172 + $0x44] sm:$0xf] %vm800, %v755
      %819 = vst.msk [vmem:[%s172 + $0x48] sm:$0xf] %vm800, %v756
      %820 = vst.msk [vmem:[%s172 + $0x4c] sm:$0xf] %vm800, %v757
      %821 = vst.msk [vmem:[%s172 + $0x50] sm:$0xf] %vm800, %v758
      %822 = vst.msk [vmem:[%s172 + $0x54] sm:$0xf] %vm800, %v759
      %823 = vst.msk [vmem:[%s172 + $0x58] sm:$0xf] %vm800, %v760
      %824 = vst.msk [vmem:[%s172 + $0x5c] sm:$0xf] %vm800, %v761
      %825 = vst.msk [vmem:[%s172 + $0x60] sm:$0xf] %vm800, %v762
      %826 = vst.msk [vmem:[%s172 + $0x64] sm:$0xf] %vm800, %v763
      %827 = vst.msk [vmem:[%s172 + $0x68] sm:$0xf] %vm800, %v764
      %828 = vst.msk [vmem:[%s172 + $0x6c] sm:$0xf] %vm800, %v765
      %829 = vst.msk [vmem:[%s172 + $0x70] sm:$0xf] %vm800, %v766
      %830 = vst.msk [vmem:[%s172 + $0x74] sm:$0xf] %vm800, %v767
      %831 = vst.msk [vmem:[%s172 + $0x78] sm:$0xf] %vm800, %v768
      %832 = vst.msk [vmem:[%s172 + $0x7c] sm:$0xf] %vm800, %v769
      %833 = vst.msk [vmem:[%s172 + $0x80] sm:$0xf] %vm800, %v770
      %834 = vst.msk [vmem:[%s172 + $0x84] sm:$0xf] %vm800, %v771
      %835 = vst.msk [vmem:[%s172 + $0x88] sm:$0xf] %vm800, %v772
      %836 = vst.msk [vmem:[%s172 + $0x8c] sm:$0xf] %vm800, %v773
      %837 = vst.msk [vmem:[%s172 + $0x90] sm:$0xf] %vm800, %v774
      %838 = vst.msk [vmem:[%s172 + $0x94] sm:$0xf] %vm800, %v775
      %839 = vst.msk [vmem:[%s172 + $0x98] sm:$0xf] %vm800, %v776
      %840 = vst.msk [vmem:[%s172 + $0x9c] sm:$0xf] %vm800, %v777
      %841 = vst.msk [vmem:[%s172 + $0xa0] sm:$0xf] %vm800, %v778
      %842 = vst.msk [vmem:[%s172 + $0xa4] sm:$0xf] %vm800, %v779
      %843 = vst.msk [vmem:[%s172 + $0xa8] sm:$0xf] %vm800, %v780
      %844 = vst.msk [vmem:[%s172 + $0xac] sm:$0xf] %vm800, %v781
      %845 = vst.msk [vmem:[%s172 + $0xb0] sm:$0xf] %vm800, %v782
      %846 = vst.msk [vmem:[%s172 + $0xb4] sm:$0xf] %vm800, %v783
      %847 = vst.msk [vmem:[%s172 + $0xb8] sm:$0xf] %vm800, %v784
      %848 = vst.msk [vmem:[%s172 + $0xbc] sm:$0xf] %vm800, %v785
      %849 = vst.msk [vmem:[%s172 + $0xc0] sm:$0xf] %vm800, %v786
      %850 = vst.msk [vmem:[%s172 + $0xc4] sm:$0xf] %vm800, %v787
      %851 = vst.msk [vmem:[%s172 + $0xc8] sm:$0xf] %vm800, %v788
      %852 = vst.msk [vmem:[%s172 + $0xcc] sm:$0xf] %vm800, %v789
      %853 = vst.msk [vmem:[%s172 + $0xd0] sm:$0xf] %vm800, %v790
      %854 = vst.msk [vmem:[%s172 + $0xd4] sm:$0xf] %vm800, %v791
      %855 = vst.msk [vmem:[%s172 + $0xd8] sm:$0xf] %vm800, %v792
      %856 = vst.msk [vmem:[%s172 + $0xdc] sm:$0xf] %vm800, %v793
      %857 = vst.msk [vmem:[%s172 + $0xe0] sm:$0xf] %vm800, %v794
      %858 = vst.msk [vmem:[%s172 + $0xe4] sm:$0xf] %vm800, %v795
      %859 = vst.msk [vmem:[%s172 + $0xe8] sm:$0xf] %vm800, %v796
      %860 = vst.msk [vmem:[%s172 + $0xec] sm:$0xf] %vm800, %v797
      %861 = vst.msk [vmem:[%s172 + $0xf0] sm:$0xf] %vm800, %v798
      %862 = vst.msk [vmem:[%s172 + $0xf4] sm:$0xf] %vm800, %v799
      %s863 = smul.u32 62, %s14
      %p864 = scmp.lt.s32.totalorder %s863, 1177
      %s865 = scalar_select %p864, %s863, 1177
      %s866 = smul.addr %s865, 4
      %s867 = scalar_lea.vmem %s3, %s866
      // Predicated region
      $region33: #{simple_cnn_forward.4} parent=31 // pred_check
        %p868 = pneg %p100
      $region34: #{simple_cnn_forward.4} parent=31 // pred_check_branch
        %870 = sbr.rel (%p868) target = $region36
      $region35: #{simple_cnn_forward.4} parent=31 // pred_region
        %s871 = smul.u32 62, %s14
      $region36: #{simple_cnn_forward.4} parent=31 // pred_fallthru
        _
    $region32: #{simple_cnn_forward.4} parent=5 // pred_fallthru
      _
    %p872 = scmp.le.s32.totalorder 2, %s9
    // Predicated region
    $region37: #{simple_cnn_forward.4} parent=5 // pred_check
      %p873 = pneg %p872
    $region38: #{simple_cnn_forward.4} parent=5 // pred_check_branch
      %875 = sbr.rel (%p873) target = $region40
    $region39: #{simple_cnn_forward.4} parent=5 // pred_region
      %s876 = ssub.s32 %s9, 2
      // Predicated region
      $region41: #{simple_cnn_forward.4} parent=39 // pred_check
        %p877 = pneg %p106
      $region42: #{simple_cnn_forward.4} parent=39 // pred_check_branch
        %879 = sbr.rel (%p877) target = $region44
      $region43: #{simple_cnn_forward.4} parent=39 // pred_region
        %s880 = smul.u32 62, %s15
        %p881 = scmp.lt.s32.totalorder %s880, 1177
        %s882 = scalar_select %p881, %s880, 1177
        %s883 = smul.addr %s882, 4
        %s884 = scalar_lea.vmem %s3, %s883
      $region44: #{simple_cnn_forward.4} parent=39 // pred_fallthru
        _
    $region40: #{simple_cnn_forward.4} parent=5 // pred_fallthru
      _
  $region6: #{simple_cnn_forward.4} parent=0 // loop_footer
    %s13 = sadd.s32 1, %s9
  $region7: #{simple_cnn_forward.4} parent=0 // loop_footer_branch
    %8 = sbr.rel target = $region3
  $region8: #{simple_cnn_forward.4} parent=0 // loop_exit
    _

// kernel: simple_cnn_forward.5
$region0: #{simple_cnn_forward.5}
  #allocation0 [shape = 'u32[]', space=smem, size = 0x4, offset = 0x4, fixed_abs, tag = 'smem constant byte address 0x4 - core index']
  #allocation1 [shape = 'u32[72,128]{1,0:T(1,128)}', space=vmem, size = 0x9000, scoped, tag = 'internal scratch']
  %s0 = inlined_call_operand.vmem [shape: bf16[2320,144], index: 0, kind: input, shape index: {}]
  %s1 = inlined_call_operand.vmem [shape: bf16[144,32], index: 1, kind: input, shape index: {}]
  %s2 = inlined_call_operand.vmem [shape: f32[1,32], index: 2, kind: input, shape index: {}]
  %s3 = inlined_call_operand.vmem [shape: bf16[2320,32], index: 3, kind: output, shape index: {}]
  %s4 = sld [smem:[#allocation0]]
  $region45: #{simple_cnn_forward.5} parent=0
    _
  %s6 = ssub.s32 1, %s4
  %s7 = scalar_select 0, %s6, %s4
  loop: start=0, step=1, limit=7
  $region2: #{simple_cnn_forward.5} parent=0 // loop_pre_header
    _
  $region3: #{simple_cnn_forward.5} parent=0 // loop_header
    %s9 = sphi 0, %s13
    %p10 = scmp.ge.s32.totalorder %s9, 7
    %s19 = sphi 0, %s21
    %s22 = sphi 0, %s19
    %s23 = sphi 0, %s22
    %s39 = sphi 0, %s23
    %s43 = sphi 0, %s43
    %s45 = sphi 0, %s43
    %s46 = sphi 0, %s45
    %s60 = sphi 0, %s46
    %s64 = sphi 0, %s64
    %s66 = sphi 0, %s64
    %s67 = sphi 0, %s66
    %s81 = sphi 0, %s67
    %s87 = sphi 0, %s89
    %s90 = sphi 0, %s87
    %s91 = sphi 0, %s90
    %s107 = sphi 0, %s91
  $region4: #{simple_cnn_forward.5} parent=0 // loop_header_branch
    %12 = sbr.rel (%p10) target = $region8
  $region5: #{simple_cnn_forward.5} parent=0 // loop_body
    %s14 = ssub.s32 %s9, 1
    %s15 = ssub.s32 %s9, 2
    %s16 = sadd.s32 %s9, 1
    %s17 = ssub.s32 %s9, %s16
    %p18 = scmp.eq.s32.totalorder %s17, 0
    %s20 = sadd.s32 %s19, 1
    %s21 = scalar_select %p18, %s19, %s20
    %p24 = pneg %p18
    %p25 = scmp.eq.s32.totalorder %s9, 4
    %p26 = por %p24, %p25
    %p27 = scmp.ne.s32.totalorder %s19, %s22
    %p28 = scmp.eq.s32.totalorder %s9, 0
    %p29 = por %p27, %p28
    %p30 = scmp.ne.s32.totalorder %s19, %s22
    %p31 = scmp.eq.s32.totalorder %s14, 4
    %p32 = por %p30, %p31
    %p33 = scmp.ne.s32.totalorder %s22, %s23
    %p34 = scmp.eq.s32.totalorder %s14, 0
    %p35 = por %p33, %p34
    %p36 = scmp.ne.s32.totalorder %s22, %s23
    %p37 = scmp.eq.s32.totalorder %s15, 4
    %p38 = por %p36, %p37
    %p40 = scmp.ne.s32.totalorder %s23, %s39
    %p41 = scmp.eq.s32.totalorder %s15, 0
    %p42 = por %p40, %p41
    %s44 = sadd.s32 %s43, 1
    %p47 = scmp.eq.s32.totalorder %s9, 4
    %p48 = scmp.ne.s32.totalorder %s43, %s45
    %p49 = scmp.eq.s32.totalorder %s9, 0
    %p50 = por %p48, %p49
    %p51 = scmp.ne.s32.totalorder %s43, %s45
    %p52 = scmp.eq.s32.totalorder %s14, 4
    %p53 = por %p51, %p52
    %p54 = scmp.ne.s32.totalorder %s45, %s46
    %p55 = scmp.eq.s32.totalorder %s14, 0
    %p56 = por %p54, %p55
    %p57 = scmp.ne.s32.totalorder %s45, %s46
    %p58 = scmp.eq.s32.totalorder %s15, 4
    %p59 = por %p57, %p58
    %p61 = scmp.ne.s32.totalorder %s46, %s60
    %p62 = scmp.eq.s32.totalorder %s15, 0
    %p63 = por %p61, %p62
    %s65 = sadd.s32 %s64, 1
    %p68 = scmp.eq.s32.totalorder %s9, 4
    %p69 = scmp.ne.s32.totalorder %s64, %s66
    %p70 = scmp.eq.s32.totalorder %s9, 0
    %p71 = por %p69, %p70
    %p72 = scmp.ne.s32.totalorder %s64, %s66
    %p73 = scmp.eq.s32.totalorder %s14, 4
    %p74 = por %p72, %p73
    %p75 = scmp.ne.s32.totalorder %s66, %s67
    %p76 = scmp.eq.s32.totalorder %s14, 0
    %p77 = por %p75, %p76
    %p78 = scmp.ne.s32.totalorder %s66, %s67
    %p79 = scmp.eq.s32.totalorder %s15, 4
    %p80 = por %p78, %p79
    %p82 = scmp.ne.s32.totalorder %s67, %s81
    %p83 = scmp.eq.s32.totalorder %s15, 0
    %p84 = por %p82, %p83
    %s85 = ssub.s32 %s9, %s16
    %p86 = scmp.eq.s32.totalorder %s85, 0
    %s88 = sadd.s32 %s87, 1
    %s89 = scalar_select %p86, %s87, %s88
    %p92 = pneg %p86
    %p93 = scmp.eq.s32.totalorder %s9, 4
    %p94 = por %p92, %p93
    %p95 = scmp.ne.s32.totalorder %s87, %s90
    %p96 = scmp.eq.s32.totalorder %s9, 0
    %p97 = por %p95, %p96
    %p98 = scmp.ne.s32.totalorder %s87, %s90
    %p99 = scmp.eq.s32.totalorder %s14, 4
    %p100 = por %p98, %p99
    %p101 = scmp.ne.s32.totalorder %s90, %s91
    %p102 = scmp.eq.s32.totalorder %s14, 0
    %p103 = por %p101, %p102
    %p104 = scmp.ne.s32.totalorder %s90, %s91
    %p105 = scmp.eq.s32.totalorder %s15, 4
    %p106 = por %p104, %p105
    %p108 = scmp.ne.s32.totalorder %s91, %s107
    %p109 = scmp.eq.s32.totalorder %s15, 0
    %p110 = por %p108, %p109
    %p111 = scmp.le.s32.totalorder 1, %s9
    %p112 = scmp.lt.s32.totalorder %s9, 6
    %p113 = pnand %p111, %p112
    %p114 = pneg %p113
    // Predicated region
    $region9: #{simple_cnn_forward.5} parent=5 // pred_check
      _
    $region10: #{simple_cnn_forward.5} parent=5 // pred_check_branch
      %116 = sbr.rel (%p113) target = $region12
    $region11: #{simple_cnn_forward.5} parent=5 // pred_region
      %s117 = ssub.s32 %s9, 1
      // Predicated region
      $region13: #{simple_cnn_forward.5} parent=11 // pred_check
        %p118 = pneg %p56
      $region14: #{simple_cnn_forward.5} parent=11 // pred_check_branch
        %120 = sbr.rel (%p118) target = $region16
      $region15: #{simple_cnn_forward.5} parent=11 // pred_region
        _
      $region16: #{simple_cnn_forward.5} parent=11 // pred_fallthru
        _
      // Predicated region
      $region17: #{simple_cnn_forward.5} parent=11 // pred_check
        %p121 = pneg %p77
      $region18: #{simple_cnn_forward.5} parent=11 // pred_check_branch
        %123 = sbr.rel (%p121) target = $region20
      $region19: #{simple_cnn_forward.5} parent=11 // pred_region
        _
      $region20: #{simple_cnn_forward.5} parent=11 // pred_fallthru
        _
    $region12: #{simple_cnn_forward.5} parent=5 // pred_fallthru
      _
    %p124 = scmp.lt.s32.totalorder %s9, 5
    // Predicated region
    $region21: #{simple_cnn_forward.5} parent=5 // pred_check
      %p125 = pneg %p124
    $region22: #{simple_cnn_forward.5} parent=5 // pred_check_branch
      %127 = sbr.rel (%p125) target = $region24
    $region23: #{simple_cnn_forward.5} parent=5 // pred_region
      // Predicated region
      $region25: #{simple_cnn_forward.5} parent=23 // pred_check
        %p128 = pneg %p29
      $region26: #{simple_cnn_forward.5} parent=23 // pred_check_branch
        %130 = sbr.rel (%p128) target = $region28
      $region27: #{simple_cnn_forward.5} parent=23 // pred_region
        %s131 = smul.u32 58, %s9
        %p132 = scmp.lt.s32.totalorder %s131, 289
        %s133 = scalar_select %p132, %s131, 289
        %s134 = smul.addr %s133, 2
        %s135 = smul.addr %s134, 4
        %s136 = scalar_lea.vmem %s0, %s135
        %s137 = smul.u32 58, %s9
      $region28: #{simple_cnn_forward.5} parent=23 // pred_fallthru
        _
    $region24: #{simple_cnn_forward.5} parent=5 // pred_fallthru
      _
    %p138 = scmp.le.s32.totalorder 1, %s9
    %p139 = scmp.lt.s32.totalorder %s9, 6
    %p140 = pnand %p138, %p139
    %p141 = pneg %p140
    // Predicated region
    $region29: #{simple_cnn_forward.5} parent=5 // pred_check
      _
    $region30: #{simple_cnn_forward.5} parent=5 // pred_check_branch
      %143 = sbr.rel (%p140) target = $region32
    $region31: #{simple_cnn_forward.5} parent=5 // pred_region
      %s144 = ssub.s32 %s9, 1
      %s145 = smul.u32 58, %s14
      %p146 = scmp.lt.s32.totalorder %s145, 289
      %s147 = scalar_select %p146, %s145, 289
      %s148 = smul.addr %s147, 2
      %s149 = smul.addr %s148, 4
      %s150 = scalar_lea.vmem %s0, %s149
      %p151 = pneg %p35
      %p152 = pneg %p32
      %p153 = pneg %p56
      %p154 = pneg %p53
      %p155 = pneg %p77
      %p156 = pneg %p74
      %p157 = pneg %p103
      %p158 = pneg %p100
      %s159 = smul.u32 58, %s14
      %p160 = scmp.lt.s32.totalorder %s159, 289
      %s161 = scalar_select %p160, %s159, 289
      %s162 = smul.addr %s161, 4
      %s163 = scalar_lea.vmem %s3, %s162
      %s164 = smul.u32 58, %s14
      %p165 = scmp.lt.s32.totalorder %s164, 289
      %s166 = scalar_select %p165, %s164, 289
      %s167 = smul.addr %s166, 2
      %s168 = smul.addr %s167, 4
      %s169 = scalar_lea.vmem %s0, %s168
      %s170 = smul.u32 58, %s14
      %s171 = smul.u32 58, %s14
      %p172 = scmp.lt.s32.totalorder %s171, 289
      %s173 = scalar_select %p172, %s171, 289
      %s174 = smul.addr %s173, 4
      %s175 = scalar_lea.vmem %s3, %s174
      %s176 = smul.u32 58, %s14
      %v178 = vld [vmem:[%s169] sm:$0xff]
      %v179 = vld [vmem:[%s169 + $0x8] sm:$0xff]
      %v180 = vld [vmem:[%s169 + $0x10] sm:$0xff]
      %v181 = vld [vmem:[%s169 + $0x18] sm:$0xff]
      %v182 = vld [vmem:[%s169 + $0x20] sm:$0xff]
      %v183 = vld [vmem:[%s169 + $0x28] sm:$0xff]
      %v184 = vld [vmem:[%s169 + $0x30] sm:$0xff]
      %v185 = vld [vmem:[%s169 + $0x38] sm:$0xff]
      %v186 = vld [vmem:[%s169 + $0x40] sm:$0xff]
      %v187 = vld [vmem:[%s169 + $0x48] sm:$0xff]
      %v188 = vld [vmem:[%s169 + $0x50] sm:$0xff]
      %v189 = vld [vmem:[%s169 + $0x58] sm:$0xff]
      %v190 = vld [vmem:[%s169 + $0x60] sm:$0xff]
      %v191 = vld [vmem:[%s169 + $0x68] sm:$0xff]
      %v192 = vld [vmem:[%s169 + $0x70] sm:$0xff]
      %v193 = vld [vmem:[%s169 + $0x78] sm:$0xff]
      %v194 = vld [vmem:[%s169 + $0x80] sm:$0xff]
      %v195 = vld [vmem:[%s169 + $0x88] sm:$0xff]
      %v196 = vld [vmem:[%s169 + $0x90] sm:$0xff]
      %v197 = vld [vmem:[%s169 + $0x98] sm:$0xff]
      %v198 = vld [vmem:[%s169 + $0xa0] sm:$0xff]
      %v199 = vld [vmem:[%s169 + $0xa8] sm:$0xff]
      %v200 = vld [vmem:[%s169 + $0xb0] sm:$0xff]
      %v201 = vld [vmem:[%s169 + $0xb8] sm:$0xff]
      %v202 = vld [vmem:[%s169 + $0xc0] sm:$0xff]
      %v203 = vld [vmem:[%s169 + $0xc8] sm:$0xff]
      %v204 = vld [vmem:[%s169 + $0xd0] sm:$0xff]
      %v205 = vld [vmem:[%s169 + $0xd8] sm:$0xff]
      %v206 = vld [vmem:[%s169 + $0xe0] sm:$0xff]
      %v207 = vld [vmem:[%s169 + $0xe8] sm:$0xff]
      %v208 = vld [vmem:[%s169 + $0xf0] sm:$0xff]
      %v209 = vld [vmem:[%s169 + $0xf8] sm:$0xff]
      %v210 = vld [vmem:[%s169 + $0x100] sm:$0xff]
      %v211 = vld [vmem:[%s169 + $0x108] sm:$0xff]
      %v212 = vld [vmem:[%s169 + $0x110] sm:$0xff]
      %v213 = vld [vmem:[%s169 + $0x118] sm:$0xff]
      %v214 = vld [vmem:[%s169 + $0x120] sm:$0xff]
      %v215 = vld [vmem:[%s169 + $0x128] sm:$0xff]
      %v216 = vld [vmem:[%s169 + $0x130] sm:$0xff]
      %v217 = vld [vmem:[%s169 + $0x138] sm:$0xff]
      %v218 = vld [vmem:[%s169 + $0x140] sm:$0xff]
      %v219 = vld [vmem:[%s169 + $0x148] sm:$0xff]
      %v220 = vld [vmem:[%s169 + $0x150] sm:$0xff]
      %v221 = vld [vmem:[%s169 + $0x158] sm:$0xff]
      %v222 = vld [vmem:[%s169 + $0x160] sm:$0xff]
      %v223 = vld [vmem:[%s169 + $0x168] sm:$0xff]
      %v224 = vld [vmem:[%s169 + $0x170] sm:$0xff]
      %v225 = vld [vmem:[%s169 + $0x178] sm:$0xff]
      %v226 = vld [vmem:[%s169 + $0x180] sm:$0xff]
      %v227 = vld [vmem:[%s169 + $0x188] sm:$0xff]
      %v228 = vld [vmem:[%s169 + $0x190] sm:$0xff]
      %v229 = vld [vmem:[%s169 + $0x198] sm:$0xff]
      %v230 = vld [vmem:[%s169 + $0x1a0] sm:$0xff]
      %v231 = vld [vmem:[%s169 + $0x1a8] sm:$0xff]
      %v232 = vld [vmem:[%s169 + $0x1b0] sm:$0xff]
      %v233 = vld [vmem:[%s169 + $0x1b8] sm:$0xff]
      %v234 = vld [vmem:[%s169 + $0x1c0] sm:$0xff]
      %v235 = vld [vmem:[%s169 + $0x1c8] sm:$0xff]
      %v236 = vld [vmem:[%s1] sm:$0xf]
      %v237 = vld [vmem:[%s1 + $0x4] sm:$0xf]
      %v238 = vld [vmem:[%s1 + $0x8] sm:$0xf]
      %v239 = vld [vmem:[%s1 + $0xc] sm:$0xf]
      %v240 = vld [vmem:[%s1 + $0x10] sm:$0xf]
      %v241 = vld [vmem:[%s1 + $0x14] sm:$0xf]
      %v242 = vld [vmem:[%s1 + $0x18] sm:$0xf]
      %v243 = vld [vmem:[%s1 + $0x1c] sm:$0xf]
      %v244 = vld [vmem:[%s1 + $0x20] sm:$0xf]
      %v245 = vld [vmem:[%s1 + $0x24] sm:$0xf]
      %v246 = vld [vmem:[%s1 + $0x28] sm:$0xf]
      %v247 = vld [vmem:[%s1 + $0x2c] sm:$0xf]
      %v248 = vld [vmem:[%s1 + $0x30] sm:$0xf]
      %v249 = vld [vmem:[%s1 + $0x34] sm:$0xf]
      %v250 = vld [vmem:[%s1 + $0x38] sm:$0xf]
      %v251 = vld [vmem:[%s1 + $0x3c] sm:$0xf]
      %v252 = vld [vmem:[%s1 + $0x40] sm:$0xf]
      %v253 = vld [vmem:[%s1 + $0x44] sm:$0xf]
      %v254 = vld [vmem:[%s2] sm:$0x1]
      %v256 = vperm.slane %v254, 0
      %v316 = vunpack.c.l.b16 %v178
      %v317 = vunpack.c.h.b16 %v178
      %v318 = vunpack.c.l.b16 %v179
      %v319 = vunpack.c.h.b16 %v179
      %v320 = vunpack.c.l.b16 %v180
      %v321 = vunpack.c.h.b16 %v180
      %v322 = vunpack.c.l.b16 %v181
      %v323 = vunpack.c.h.b16 %v181
      %v324 = vunpack.c.l.b16 %v182
      %v325 = vunpack.c.h.b16 %v182
      %v326 = vunpack.c.l.b16 %v183
      %v327 = vunpack.c.h.b16 %v183
      %v328 = vunpack.c.l.b16 %v184
      %v329 = vunpack.c.h.b16 %v184
      %v330 = vunpack.c.l.b16 %v185
      %v331 = vunpack.c.h.b16 %v185
      %v332 = vunpack.c.l.b16 %v186
      %v333 = vunpack.c.h.b16 %v186
      %v334 = vunpack.c.l.b16 %v187
      %v335 = vunpack.c.h.b16 %v187
      %v336 = vunpack.c.l.b16 %v188
      %v337 = vunpack.c.h.b16 %v188
      %v338 = vunpack.c.l.b16 %v189
      %v339 = vunpack.c.h.b16 %v189
      %v340 = vunpack.c.l.b16 %v190
      %v341 = vunpack.c.h.b16 %v190
      %v342 = vunpack.c.l.b16 %v191
      %v343 = vunpack.c.h.b16 %v191
      %v344 = vunpack.c.l.b16 %v192
      %v345 = vunpack.c.h.b16 %v192
      %v346 = vunpack.c.l.b16 %v193
      %v347 = vunpack.c.h.b16 %v193
      %v348 = vunpack.c.l.b16 %v194
      %v349 = vunpack.c.h.b16 %v194
      %v350 = vunpack.c.l.b16 %v195
      %v351 = vunpack.c.h.b16 %v195
      %v352 = vunpack.c.l.b16 %v196
      %v353 = vunpack.c.h.b16 %v196
      %v354 = vunpack.c.l.b16 %v197
      %v355 = vunpack.c.h.b16 %v197
      %v356 = vunpack.c.l.b16 %v198
      %v357 = vunpack.c.h.b16 %v198
      %v358 = vunpack.c.l.b16 %v199
      %v359 = vunpack.c.h.b16 %v199
      %v360 = vunpack.c.l.b16 %v200
      %v361 = vunpack.c.h.b16 %v200
      %v362 = vunpack.c.l.b16 %v201
      %v363 = vunpack.c.h.b16 %v201
      %v364 = vunpack.c.l.b16 %v202
      %v365 = vunpack.c.h.b16 %v202
      %v366 = vunpack.c.l.b16 %v203
      %v367 = vunpack.c.h.b16 %v203
      %v368 = vunpack.c.l.b16 %v204
      %v369 = vunpack.c.h.b16 %v204
      %v370 = vunpack.c.l.b16 %v205
      %v371 = vunpack.c.h.b16 %v205
      %v372 = vunpack.c.l.b16 %v206
      %v373 = vunpack.c.h.b16 %v206
      %v374 = vunpack.c.l.b16 %v207
      %v375 = vunpack.c.h.b16 %v207
      %v376 = vunpack.c.l.b16 %v208
      %v377 = vunpack.c.h.b16 %v208
      %v378 = vunpack.c.l.b16 %v209
      %v379 = vunpack.c.h.b16 %v209
      %v380 = vunpack.c.l.b16 %v210
      %v381 = vunpack.c.h.b16 %v210
      %v382 = vunpack.c.l.b16 %v211
      %v383 = vunpack.c.h.b16 %v211
      %v384 = vunpack.c.l.b16 %v212
      %v385 = vunpack.c.h.b16 %v212
      %v386 = vunpack.c.l.b16 %v213
      %v387 = vunpack.c.h.b16 %v213
      %v388 = vunpack.c.l.b16 %v214
      %v389 = vunpack.c.h.b16 %v214
      %v390 = vunpack.c.l.b16 %v215
      %v391 = vunpack.c.h.b16 %v215
      %v392 = vunpack.c.l.b16 %v216
      %v393 = vunpack.c.h.b16 %v216
      %v394 = vunpack.c.l.b16 %v217
      %v395 = vunpack.c.h.b16 %v217
      %v396 = vunpack.c.l.b16 %v218
      %v397 = vunpack.c.h.b16 %v218
      %v398 = vunpack.c.l.b16 %v219
      %v399 = vunpack.c.h.b16 %v219
      %v400 = vunpack.c.l.b16 %v220
      %v401 = vunpack.c.h.b16 %v220
      %v402 = vunpack.c.l.b16 %v221
      %v403 = vunpack.c.h.b16 %v221
      %v404 = vunpack.c.l.b16 %v222
      %v405 = vunpack.c.h.b16 %v222
      %v406 = vunpack.c.l.b16 %v223
      %v407 = vunpack.c.h.b16 %v223
      %v408 = vunpack.c.l.b16 %v224
      %v409 = vunpack.c.h.b16 %v224
      %v410 = vunpack.c.l.b16 %v225
      %v411 = vunpack.c.h.b16 %v225
      %v412 = vunpack.c.l.b16 %v226
      %v413 = vunpack.c.h.b16 %v226
      %v414 = vunpack.c.l.b16 %v227
      %v415 = vunpack.c.h.b16 %v227
      %v416 = vunpack.c.l.b16 %v228
      %v417 = vunpack.c.h.b16 %v228
      %v418 = vunpack.c.l.b16 %v229
      %v419 = vunpack.c.h.b16 %v229
      %v420 = vunpack.c.l.b16 %v230
      %v421 = vunpack.c.h.b16 %v230
      %v422 = vunpack.c.l.b16 %v231
      %v423 = vunpack.c.h.b16 %v231
      %v424 = vunpack.c.l.b16 %v232
      %v425 = vunpack.c.h.b16 %v232
      %v426 = vunpack.c.l.b16 %v233
      %v427 = vunpack.c.h.b16 %v233
      %v428 = vunpack.c.l.b16 %v234
      %v429 = vunpack.c.h.b16 %v234
      %v430 = vunpack.c.l.b16 %v235
      %v431 = vunpack.c.h.b16 %v235
      %v432 = vpack.c.b16 %v318, %v316
      %v433 = vpack.c.b16 %v319, %v317
      %v434 = vpack.c.b16 %v322, %v320
      %v435 = vpack.c.b16 %v323, %v321
      %v436 = vpack.c.b16 %v326, %v324
      %v437 = vpack.c.b16 %v327, %v325
      %v438 = vpack.c.b16 %v330, %v328
      %v439 = vpack.c.b16 %v331, %v329
      %v440 = vpack.c.b16 %v334, %v332
      %v441 = vpack.c.b16 %v335, %v333
      %v442 = vpack.c.b16 %v338, %v336
      %v443 = vpack.c.b16 %v339, %v337
      %v444 = vpack.c.b16 %v342, %v340
      %v445 = vpack.c.b16 %v343, %v341
      %v446 = vpack.c.b16 %v346, %v344
      %v447 = vpack.c.b16 %v347, %v345
      %v448 = vpack.c.b16 %v350, %v348
      %v449 = vpack.c.b16 %v351, %v349
      %v450 = vpack.c.b16 %v354, %v352
      %v451 = vpack.c.b16 %v355, %v353
      %v452 = vpack.c.b16 %v358, %v356
      %v453 = vpack.c.b16 %v359, %v357
      %v454 = vpack.c.b16 %v362, %v360
      %v455 = vpack.c.b16 %v363, %v361
      %v456 = vpack.c.b16 %v366, %v364
      %v457 = vpack.c.b16 %v367, %v365
      %v458 = vpack.c.b16 %v370, %v368
      %v459 = vpack.c.b16 %v371, %v369
      %v460 = vpack.c.b16 %v374, %v372
      %v461 = vpack.c.b16 %v375, %v373
      %v462 = vpack.c.b16 %v378, %v376
      %v463 = vpack.c.b16 %v379, %v377
      %v464 = vpack.c.b16 %v382, %v380
      %v465 = vpack.c.b16 %v383, %v381
      %v466 = vpack.c.b16 %v386, %v384
      %v467 = vpack.c.b16 %v387, %v385
      %v468 = vpack.c.b16 %v390, %v388
      %v469 = vpack.c.b16 %v391, %v389
      %v470 = vpack.c.b16 %v394, %v392
      %v471 = vpack.c.b16 %v395, %v393
      %v472 = vpack.c.b16 %v398, %v396
      %v473 = vpack.c.b16 %v399, %v397
      %v474 = vpack.c.b16 %v402, %v400
      %v475 = vpack.c.b16 %v403, %v401
      %v476 = vpack.c.b16 %v406, %v404
      %v477 = vpack.c.b16 %v407, %v405
      %v478 = vpack.c.b16 %v410, %v408
      %v479 = vpack.c.b16 %v411, %v409
      %v480 = vpack.c.b16 %v414, %v412
      %v481 = vpack.c.b16 %v415, %v413
      %v482 = vpack.c.b16 %v418, %v416
      %v483 = vpack.c.b16 %v419, %v417
      %v484 = vpack.c.b16 %v422, %v420
      %v485 = vpack.c.b16 %v423, %v421
      %v486 = vpack.c.b16 %v426, %v424
      %v487 = vpack.c.b16 %v427, %v425
      %v488 = vpack.c.b16 %v430, %v428
      %v489 = vpack.c.b16 %v431, %v429
      %v537 = vunpack.c.l.b16 %v236
      %v538 = vunpack.c.l.b16 %v237
      %v539 = vunpack.c.l.b16 %v238
      %v540 = vunpack.c.l.b16 %v239
      %v541 = vunpack.c.l.b16 %v240
      %v542 = vunpack.c.l.b16 %v241
      %v543 = vunpack.c.l.b16 %v242
      %v544 = vunpack.c.l.b16 %v243
      %v545 = vunpack.c.l.b16 %v244
      %v546 = vunpack.c.l.b16 %v245
      %v547 = vunpack.c.l.b16 %v246
      %v548 = vunpack.c.l.b16 %v247
      %v549 = vunpack.c.l.b16 %v248
      %v550 = vunpack.c.l.b16 %v249
      %v551 = vunpack.c.l.b16 %v250
      %v552 = vunpack.c.l.b16 %v251
      %v553 = vunpack.c.l.b16 %v252
      %v554 = vunpack.c.l.b16 %v253
      %v555 = vpack.c.b16 %v538, %v537
      %v556 = vpack.c.b16 %v540, %v539
      %v557 = vpack.c.b16 %v542, %v541
      %v558 = vpack.c.b16 %v544, %v543
      %v559 = vpack.c.b16 %v546, %v545
      %v560 = vpack.c.b16 %v548, %v547
      %v561 = vpack.c.b16 %v550, %v549
      %v562 = vpack.c.b16 %v552, %v551
      %v563 = vpack.c.b16 %v554, %v553
      %vm573 = vcmask 130048
      %v575 = vsel %vm573, %v433, 0
      %v578 = vsel %vm573, %v435, 0
      %v581 = vsel %vm573, %v437, 0
      %v584 = vsel %vm573, %v439, 0
      %v587 = vsel %vm573, %v441, 0
      %v590 = vsel %vm573, %v443, 0
      %v593 = vsel %vm573, %v445, 0
      %v596 = vsel %vm573, %v447, 0
      %v599 = vsel %vm573, %v449, 0
      %v602 = vsel %vm573, %v451, 0
      %v605 = vsel %vm573, %v453, 0
      %v608 = vsel %vm573, %v455, 0
      %v611 = vsel %vm573, %v457, 0
      %v614 = vsel %vm573, %v459, 0
      %v617 = vsel %vm573, %v461, 0
      %v620 = vsel %vm573, %v463, 0
      %v623 = vsel %vm573, %v465, 0
      %v626 = vsel %vm573, %v467, 0
      %v629 = vsel %vm573, %v469, 0
      %v632 = vsel %vm573, %v471, 0
      %v635 = vsel %vm573, %v473, 0
      %v638 = vsel %vm573, %v475, 0
      %v641 = vsel %vm573, %v477, 0
      %v644 = vsel %vm573, %v479, 0
      %v647 = vsel %vm573, %v481, 0
      %v650 = vsel %vm573, %v483, 0
      %v653 = vsel %vm573, %v485, 0
      %v656 = vsel %vm573, %v487, 0
      %v659 = vsel %vm573, %v489, 0
      %661 = vmatpush.bf16.msra.mxu0 %v562
      %662 = vmatpush.bf16.msra.mxu0 %v561
      %663 = vmatpush.bf16.msra.mxu0 %v560
      %664 = vmatpush.bf16.msra.mxu0 %v559
      %665 = vmatpush.bf16.msra.mxu0 %v558
      %666 = vmatpush.bf16.msra.mxu0 %v557
      %667 = vmatpush.bf16.msra.mxu0 %v556
      %668 = vmatpush.bf16.msra.mxu0 %v555
      %669 = vmatmul.bf16.gmra.mxu0 %v432
      %v670 = vpop.f32.mrf.mxu0
      %v671 = vadd.f32 %v256, %v670
      %v672 = vpop.f32.mrf.mxu0
      %v673 = vadd.f32 %v256, %v672
      %674 = vmatmul.bf16.gmra.mxu0 %v434
      %v675 = vpop.f32.mrf.mxu0
      %v676 = vadd.f32 %v256, %v675
      %v677 = vpop.f32.mrf.mxu0
      %v678 = vadd.f32 %v256, %v677
      %679 = vmatmul.bf16.gmra.mxu0 %v436
      %v680 = vpop.f32.mrf.mxu0
      %v681 = vadd.f32 %v256, %v680
      %v682 = vpop.f32.mrf.mxu0
      %v683 = vadd.f32 %v256, %v682
      %684 = vmatmul.bf16.gmra.mxu0 %v438
      %v685 = vpop.f32.mrf.mxu0
      %v686 = vadd.f32 %v256, %v685
      %v687 = vpop.f32.mrf.mxu0
      %v688 = vadd.f32 %v256, %v687
      %689 = vmatmul.bf16.gmra.mxu0 %v440
      %v690 = vpop.f32.mrf.mxu0
      %v691 = vadd.f32 %v256, %v690
      %v692 = vpop.f32.mrf.mxu0
      %v693 = vadd.f32 %v256, %v692
      %694 = vmatmul.bf16.gmra.mxu0 %v442
      %v695 = vpop.f32.mrf.mxu0
      %v696 = vadd.f32 %v256, %v695
      %v697 = vpop.f32.mrf.mxu0
      %v698 = vadd.f32 %v256, %v697
      %699 = vmatmul.bf16.gmra.mxu0 %v444
      %v700 = vpop.f32.mrf.mxu0
      %v701 = vadd.f32 %v256, %v700
      %v702 = vpop.f32.mrf.mxu0
      %v703 = vadd.f32 %v256, %v702
      %704 = vmatmul.bf16.gmra.mxu0 %v446
      %v705 = vpop.f32.mrf.mxu0
      %v706 = vadd.f32 %v256, %v705
      %v707 = vpop.f32.mrf.mxu0
      %v708 = vadd.f32 %v256, %v707
      %709 = vmatmul.bf16.gmra.mxu0 %v448
      %v710 = vpop.f32.mrf.mxu0
      %v711 = vadd.f32 %v256, %v710
      %v712 = vpop.f32.mrf.mxu0
      %v713 = vadd.f32 %v256, %v712
      %714 = vmatmul.bf16.gmra.mxu0 %v450
      %v715 = vpop.f32.mrf.mxu0
      %v716 = vadd.f32 %v256, %v715
      %v717 = vpop.f32.mrf.mxu0
      %v718 = vadd.f32 %v256, %v717
      %719 = vmatmul.bf16.gmra.mxu0 %v452
      %v720 = vpop.f32.mrf.mxu0
      %v721 = vadd.f32 %v256, %v720
      %v722 = vpop.f32.mrf.mxu0
      %v723 = vadd.f32 %v256, %v722
      %724 = vmatmul.bf16.gmra.mxu0 %v454
      %v725 = vpop.f32.mrf.mxu0
      %v726 = vadd.f32 %v256, %v725
      %v727 = vpop.f32.mrf.mxu0
      %v728 = vadd.f32 %v256, %v727
      %729 = vmatmul.bf16.gmra.mxu0 %v456
      %v730 = vpop.f32.mrf.mxu0
      %v731 = vadd.f32 %v256, %v730
      %v732 = vpop.f32.mrf.mxu0
      %v733 = vadd.f32 %v256, %v732
      %734 = vmatmul.bf16.gmra.mxu0 %v458
      %v735 = vpop.f32.mrf.mxu0
      %v736 = vadd.f32 %v256, %v735
      %v737 = vpop.f32.mrf.mxu0
      %v738 = vadd.f32 %v256, %v737
      %739 = vmatmul.bf16.gmra.mxu0 %v460
      %v740 = vpop.f32.mrf.mxu0
      %v741 = vadd.f32 %v256, %v740
      %v742 = vpop.f32.mrf.mxu0
      %v743 = vadd.f32 %v256, %v742
      %744 = vmatmul.bf16.gmra.mxu0 %v462
      %v745 = vpop.f32.mrf.mxu0
      %v746 = vadd.f32 %v256, %v745
      %v747 = vpop.f32.mrf.mxu0
      %v748 = vadd.f32 %v256, %v747
      %749 = vmatmul.bf16.gmra.mxu0 %v464
      %v750 = vpop.f32.mrf.mxu0
      %v751 = vadd.f32 %v256, %v750
      %v752 = vpop.f32.mrf.mxu0
      %v753 = vadd.f32 %v256, %v752
      %754 = vmatmul.bf16.gmra.mxu0 %v466
      %v755 = vpop.f32.mrf.mxu0
      %v756 = vadd.f32 %v256, %v755
      %v757 = vpop.f32.mrf.mxu0
      %v758 = vadd.f32 %v256, %v757
      %759 = vmatmul.bf16.gmra.mxu0 %v468
      %v760 = vpop.f32.mrf.mxu0
      %v761 = vadd.f32 %v256, %v760
      %v762 = vpop.f32.mrf.mxu0
      %v763 = vadd.f32 %v256, %v762
      %764 = vmatmul.bf16.gmra.mxu0 %v470
      %v765 = vpop.f32.mrf.mxu0
      %v766 = vadd.f32 %v256, %v765
      %v767 = vpop.f32.mrf.mxu0
      %v768 = vadd.f32 %v256, %v767
      %769 = vmatmul.bf16.gmra.mxu0 %v472
      %v770 = vpop.f32.mrf.mxu0
      %v771 = vadd.f32 %v256, %v770
      %v772 = vpop.f32.mrf.mxu0
      %v773 = vadd.f32 %v256, %v772
      %774 = vmatmul.bf16.gmra.mxu0 %v474
      %v775 = vpop.f32.mrf.mxu0
      %v776 = vadd.f32 %v256, %v775
      %v777 = vpop.f32.mrf.mxu0
      %v778 = vadd.f32 %v256, %v777
      %779 = vmatmul.bf16.gmra.mxu0 %v476
      %v780 = vpop.f32.mrf.mxu0
      %v781 = vadd.f32 %v256, %v780
      %v782 = vpop.f32.mrf.mxu0
      %v783 = vadd.f32 %v256, %v782
      %784 = vmatmul.bf16.gmra.mxu0 %v478
      %v785 = vpop.f32.mrf.mxu0
      %v786 = vadd.f32 %v256, %v785
      %v787 = vpop.f32.mrf.mxu0
      %v788 = vadd.f32 %v256, %v787
      %789 = vmatmul.bf16.gmra.mxu0 %v480
      %v790 = vpop.f32.mrf.mxu0
      %v791 = vadd.f32 %v256, %v790
      %v792 = vpop.f32.mrf.mxu0
      %v793 = vadd.f32 %v256, %v792
      %794 = vmatmul.bf16.gmra.mxu0 %v482
      %v795 = vpop.f32.mrf.mxu0
      %v796 = vadd.f32 %v256, %v795
      %v797 = vpop.f32.mrf.mxu0
      %v798 = vadd.f32 %v256, %v797
      %799 = vmatmul.bf16.gmra.mxu0 %v484
      %v800 = vpop.f32.mrf.mxu0
      %v801 = vadd.f32 %v256, %v800
      %v802 = vpop.f32.mrf.mxu0
      %v803 = vadd.f32 %v256, %v802
      %804 = vmatmul.bf16.gmra.mxu0 %v486
      %v805 = vpop.f32.mrf.mxu0
      %v806 = vadd.f32 %v256, %v805
      %v807 = vpop.f32.mrf.mxu0
      %v808 = vadd.f32 %v256, %v807
      %809 = vmatmul.bf16.gmra.mxu0 %v488
      %v810 = vpop.f32.mrf.mxu0
      %v811 = vadd.f32 %v256, %v810
      %v812 = vpop.f32.mrf.mxu0
      %v813 = vadd.f32 %v256, %v812
      %814 = vdwg.mxu0
      %815 = vmatpush.bf16.msra.mxu0 0
      %816 = vmatpush.bf16.msra.mxu0 0
      %817 = vmatpush.bf16.msra.mxu0 0
      %818 = vmatpush.bf16.msra.mxu0 0
      %819 = vmatpush.bf16.msra.mxu0 0
      %820 = vmatpush.bf16.msra.mxu0 0
      %821 = vmatpush.bf16.msra.mxu0 0
      %822 = vmatpush.bf16.msra.mxu0 %v563
      %823 = vmatmul.bf16.gmra.mxu0 %v575
      %v824 = vpop.f32.mrf.mxu0
      %v825 = vadd.f32 %v671, %v824
      %v826 = vpop.f32.mrf.mxu0
      %v827 = vadd.f32 %v673, %v826
      %828 = vmatmul.bf16.gmra.mxu0 %v578
      %v829 = vpop.f32.mrf.mxu0
      %v830 = vadd.f32 %v676, %v829
      %v831 = vpop.f32.mrf.mxu0
      %v832 = vadd.f32 %v678, %v831
      %833 = vmatmul.bf16.gmra.mxu0 %v581
      %v834 = vpop.f32.mrf.mxu0
      %v835 = vadd.f32 %v681, %v834
      %v836 = vpop.f32.mrf.mxu0
      %v837 = vadd.f32 %v683, %v836
      %838 = vmatmul.bf16.gmra.mxu0 %v584
      %v839 = vpop.f32.mrf.mxu0
      %v840 = vadd.f32 %v686, %v839
      %v841 = vpop.f32.mrf.mxu0
      %v842 = vadd.f32 %v688, %v841
      %843 = vmatmul.bf16.gmra.mxu0 %v587
      %v844 = vpop.f32.mrf.mxu0
      %v845 = vadd.f32 %v691, %v844
      %v846 = vpop.f32.mrf.mxu0
      %v847 = vadd.f32 %v693, %v846
      %848 = vmatmul.bf16.gmra.mxu0 %v590
      %v849 = vpop.f32.mrf.mxu0
      %v850 = vadd.f32 %v696, %v849
      %v851 = vpop.f32.mrf.mxu0
      %v852 = vadd.f32 %v698, %v851
      %853 = vmatmul.bf16.gmra.mxu0 %v593
      %v854 = vpop.f32.mrf.mxu0
      %v855 = vadd.f32 %v701, %v854
      %v856 = vpop.f32.mrf.mxu0
      %v857 = vadd.f32 %v703, %v856
      %858 = vmatmul.bf16.gmra.mxu0 %v596
      %v859 = vpop.f32.mrf.mxu0
      %v860 = vadd.f32 %v706, %v859
      %v861 = vpop.f32.mrf.mxu0
      %v862 = vadd.f32 %v708, %v861
      %863 = vmatmul.bf16.gmra.mxu0 %v599
      %v864 = vpop.f32.mrf.mxu0
      %v865 = vadd.f32 %v711, %v864
      %v866 = vpop.f32.mrf.mxu0
      %v867 = vadd.f32 %v713, %v866
      %868 = vmatmul.bf16.gmra.mxu0 %v602
      %v869 = vpop.f32.mrf.mxu0
      %v870 = vadd.f32 %v716, %v869
      %v871 = vpop.f32.mrf.mxu0
      %v872 = vadd.f32 %v718, %v871
      %873 = vmatmul.bf16.gmra.mxu0 %v605
      %v874 = vpop.f32.mrf.mxu0
      %v875 = vadd.f32 %v721, %v874
      %v876 = vpop.f32.mrf.mxu0
      %v877 = vadd.f32 %v723, %v876
      %878 = vmatmul.bf16.gmra.mxu0 %v608
      %v879 = vpop.f32.mrf.mxu0
      %v880 = vadd.f32 %v726, %v879
      %v881 = vpop.f32.mrf.mxu0
      %v882 = vadd.f32 %v728, %v881
      %883 = vmatmul.bf16.gmra.mxu0 %v611
      %v884 = vpop.f32.mrf.mxu0
      %v885 = vadd.f32 %v731, %v884
      %v886 = vpop.f32.mrf.mxu0
      %v887 = vadd.f32 %v733, %v886
      %888 = vmatmul.bf16.gmra.mxu0 %v614
      %v889 = vpop.f32.mrf.mxu0
      %v890 = vadd.f32 %v736, %v889
      %v891 = vpop.f32.mrf.mxu0
      %v892 = vadd.f32 %v738, %v891
      %893 = vmatmul.bf16.gmra.mxu0 %v617
      %v894 = vpop.f32.mrf.mxu0
      %v895 = vadd.f32 %v741, %v894
      %v896 = vpop.f32.mrf.mxu0
      %v897 = vadd.f32 %v743, %v896
      %898 = vmatmul.bf16.gmra.mxu0 %v620
      %v899 = vpop.f32.mrf.mxu0
      %v900 = vadd.f32 %v746, %v899
      %v901 = vpop.f32.mrf.mxu0
      %v902 = vadd.f32 %v748, %v901
      %903 = vmatmul.bf16.gmra.mxu0 %v623
      %v904 = vpop.f32.mrf.mxu0
      %v905 = vadd.f32 %v751, %v904
      %v906 = vpop.f32.mrf.mxu0
      %v907 = vadd.f32 %v753, %v906
      %908 = vmatmul.bf16.gmra.mxu0 %v626
      %v909 = vpop.f32.mrf.mxu0
      %v910 = vadd.f32 %v756, %v909
      %v911 = vpop.f32.mrf.mxu0
      %v912 = vadd.f32 %v758, %v911
      %913 = vmatmul.bf16.gmra.mxu0 %v629
      %v914 = vpop.f32.mrf.mxu0
      %v915 = vadd.f32 %v761, %v914
      %v916 = vpop.f32.mrf.mxu0
      %v917 = vadd.f32 %v763, %v916
      %918 = vmatmul.bf16.gmra.mxu0 %v632
      %v919 = vpop.f32.mrf.mxu0
      %v920 = vadd.f32 %v766, %v919
      %v921 = vpop.f32.mrf.mxu0
      %v922 = vadd.f32 %v768, %v921
      %923 = vmatmul.bf16.gmra.mxu0 %v635
      %v924 = vpop.f32.mrf.mxu0
      %v925 = vadd.f32 %v771, %v924
      %v926 = vpop.f32.mrf.mxu0
      %v927 = vadd.f32 %v773, %v926
      %928 = vmatmul.bf16.gmra.mxu0 %v638
      %v929 = vpop.f32.mrf.mxu0
      %v930 = vadd.f32 %v776, %v929
      %v931 = vpop.f32.mrf.mxu0
      %v932 = vadd.f32 %v778, %v931
      %933 = vmatmul.bf16.gmra.mxu0 %v641
      %v934 = vpop.f32.mrf.mxu0
      %v935 = vadd.f32 %v781, %v934
      %v936 = vpop.f32.mrf.mxu0
      %v937 = vadd.f32 %v783, %v936
      %938 = vmatmul.bf16.gmra.mxu0 %v644
      %v939 = vpop.f32.mrf.mxu0
      %v940 = vadd.f32 %v786, %v939
      %v941 = vpop.f32.mrf.mxu0
      %v942 = vadd.f32 %v788, %v941
      %943 = vmatmul.bf16.gmra.mxu0 %v647
      %v944 = vpop.f32.mrf.mxu0
      %v945 = vadd.f32 %v791, %v944
      %v946 = vpop.f32.mrf.mxu0
      %v947 = vadd.f32 %v793, %v946
      %948 = vmatmul.bf16.gmra.mxu0 %v650
      %v949 = vpop.f32.mrf.mxu0
      %v950 = vadd.f32 %v796, %v949
      %v951 = vpop.f32.mrf.mxu0
      %v952 = vadd.f32 %v798, %v951
      %953 = vmatmul.bf16.gmra.mxu0 %v653
      %v954 = vpop.f32.mrf.mxu0
      %v955 = vadd.f32 %v801, %v954
      %v956 = vpop.f32.mrf.mxu0
      %v957 = vadd.f32 %v803, %v956
      %958 = vmatmul.bf16.gmra.mxu0 %v656
      %v959 = vpop.f32.mrf.mxu0
      %v960 = vadd.f32 %v806, %v959
      %v961 = vpop.f32.mrf.mxu0
      %v962 = vadd.f32 %v808, %v961
      %963 = vmatmul.bf16.gmra.mxu0 %v659
      %v964 = vpop.f32.mrf.mxu0
      %v965 = vadd.f32 %v811, %v964
      %v966 = vpop.f32.mrf.mxu0
      %v967 = vadd.f32 %v813, %v966
      %968 = vdwg.mxu0
      %v969 = vmax.f32 %v825, 0.0
      %v970 = vmax.f32 %v827, 0.0
      %v971 = vmax.f32 %v830, 0.0
      %v972 = vmax.f32 %v832, 0.0
      %v973 = vmax.f32 %v835, 0.0
      %v974 = vmax.f32 %v837, 0.0
      %v975 = vmax.f32 %v840, 0.0
      %v976 = vmax.f32 %v842, 0.0
      %v977 = vmax.f32 %v845, 0.0
      %v978 = vmax.f32 %v847, 0.0
      %v979 = vmax.f32 %v850, 0.0
      %v980 = vmax.f32 %v852, 0.0
      %v981 = vmax.f32 %v855, 0.0
      %v982 = vmax.f32 %v857, 0.0
      %v983 = vmax.f32 %v860, 0.0
      %v984 = vmax.f32 %v862, 0.0
      %v985 = vmax.f32 %v865, 0.0
      %v986 = vmax.f32 %v867, 0.0
      %v987 = vmax.f32 %v870, 0.0
      %v988 = vmax.f32 %v872, 0.0
      %v989 = vmax.f32 %v875, 0.0
      %v990 = vmax.f32 %v877, 0.0
      %v991 = vmax.f32 %v880, 0.0
      %v992 = vmax.f32 %v882, 0.0
      %v993 = vmax.f32 %v885, 0.0
      %v994 = vmax.f32 %v887, 0.0
      %v995 = vmax.f32 %v890, 0.0
      %v996 = vmax.f32 %v892, 0.0
      %v997 = vmax.f32 %v895, 0.0
      %v998 = vmax.f32 %v897, 0.0
      %v999 = vmax.f32 %v900, 0.0
      %v1000 = vmax.f32 %v902, 0.0
      %v1001 = vmax.f32 %v905, 0.0
      %v1002 = vmax.f32 %v907, 0.0
      %v1003 = vmax.f32 %v910, 0.0
      %v1004 = vmax.f32 %v912, 0.0
      %v1005 = vmax.f32 %v915, 0.0
      %v1006 = vmax.f32 %v917, 0.0
      %v1007 = vmax.f32 %v920, 0.0
      %v1008 = vmax.f32 %v922, 0.0
      %v1009 = vmax.f32 %v925, 0.0
      %v1010 = vmax.f32 %v927, 0.0
      %v1011 = vmax.f32 %v930, 0.0
      %v1012 = vmax.f32 %v932, 0.0
      %v1013 = vmax.f32 %v935, 0.0
      %v1014 = vmax.f32 %v937, 0.0
      %v1015 = vmax.f32 %v940, 0.0
      %v1016 = vmax.f32 %v942, 0.0
      %v1017 = vmax.f32 %v945, 0.0
      %v1018 = vmax.f32 %v947, 0.0
      %v1019 = vmax.f32 %v950, 0.0
      %v1020 = vmax.f32 %v952, 0.0
      %v1021 = vmax.f32 %v955, 0.0
      %v1022 = vmax.f32 %v957, 0.0
      %v1023 = vmax.f32 %v960, 0.0
      %v1024 = vmax.f32 %v962, 0.0
      %v1025 = vmax.f32 %v965, 0.0
      %v1026 = vmax.f32 %v967, 0.0
      %v1027 = vpack.c.bf16 %v969, %v969
      %v1028 = vpack.c.bf16 %v970, %v970
      %v1029 = vpack.c.bf16 %v971, %v971
      %v1030 = vpack.c.bf16 %v972, %v972
      %v1031 = vpack.c.bf16 %v973, %v973
      %v1032 = vpack.c.bf16 %v974, %v974
      %v1033 = vpack.c.bf16 %v975, %v975
      %v1034 = vpack.c.bf16 %v976, %v976
      %v1035 = vpack.c.bf16 %v977, %v977
      %v1036 = vpack.c.bf16 %v978, %v978
      %v1037 = vpack.c.bf16 %v979, %v979
      %v1038 = vpack.c.bf16 %v980, %v980
      %v1039 = vpack.c.bf16 %v981, %v981
      %v1040 = vpack.c.bf16 %v982, %v982
      %v1041 = vpack.c.bf16 %v983, %v983
      %v1042 = vpack.c.bf16 %v984, %v984
      %v1043 = vpack.c.bf16 %v985, %v985
      %v1044 = vpack.c.bf16 %v986, %v986
      %v1045 = vpack.c.bf16 %v987, %v987
      %v1046 = vpack.c.bf16 %v988, %v988
      %v1047 = vpack.c.bf16 %v989, %v989
      %v1048 = vpack.c.bf16 %v990, %v990
      %v1049 = vpack.c.bf16 %v991, %v991
      %v1050 = vpack.c.bf16 %v992, %v992
      %v1051 = vpack.c.bf16 %v993, %v993
      %v1052 = vpack.c.bf16 %v994, %v994
      %v1053 = vpack.c.bf16 %v995, %v995
      %v1054 = vpack.c.bf16 %v996, %v996
      %v1055 = vpack.c.bf16 %v997, %v997
      %v1056 = vpack.c.bf16 %v998, %v998
      %v1057 = vpack.c.bf16 %v999, %v999
      %v1058 = vpack.c.bf16 %v1000, %v1000
      %v1059 = vpack.c.bf16 %v1001, %v1001
      %v1060 = vpack.c.bf16 %v1002, %v1002
      %v1061 = vpack.c.bf16 %v1003, %v1003
      %v1062 = vpack.c.bf16 %v1004, %v1004
      %v1063 = vpack.c.bf16 %v1005, %v1005
      %v1064 = vpack.c.bf16 %v1006, %v1006
      %v1065 = vpack.c.bf16 %v1007, %v1007
      %v1066 = vpack.c.bf16 %v1008, %v1008
      %v1067 = vpack.c.bf16 %v1009, %v1009
      %v1068 = vpack.c.bf16 %v1010, %v1010
      %v1069 = vpack.c.bf16 %v1011, %v1011
      %v1070 = vpack.c.bf16 %v1012, %v1012
      %v1071 = vpack.c.bf16 %v1013, %v1013
      %v1072 = vpack.c.bf16 %v1014, %v1014
      %v1073 = vpack.c.bf16 %v1015, %v1015
      %v1074 = vpack.c.bf16 %v1016, %v1016
      %v1075 = vpack.c.bf16 %v1017, %v1017
      %v1076 = vpack.c.bf16 %v1018, %v1018
      %v1077 = vpack.c.bf16 %v1019, %v1019
      %v1078 = vpack.c.bf16 %v1020, %v1020
      %v1079 = vpack.c.bf16 %v1021, %v1021
      %v1080 = vpack.c.bf16 %v1022, %v1022
      %v1081 = vpack.c.bf16 %v1023, %v1023
      %v1082 = vpack.c.bf16 %v1024, %v1024
      %v1083 = vpack.c.bf16 %v1025, %v1025
      %v1084 = vpack.c.bf16 %v1026, %v1026
      %vm1085 = vcmask 257024
      %1086 = vst.msk [vmem:[%s175] sm:$0xf] %vm1085, %v1027
      %1087 = vst.msk [vmem:[%s175 + $0x4] sm:$0xf] %vm1085, %v1028
      %1088 = vst.msk [vmem:[%s175 + $0x8] sm:$0xf] %vm1085, %v1029
      %1089 = vst.msk [vmem:[%s175 + $0xc] sm:$0xf] %vm1085, %v1030
      %1090 = vst.msk [vmem:[%s175 + $0x10] sm:$0xf] %vm1085, %v1031
      %1091 = vst.msk [vmem:[%s175 + $0x14] sm:$0xf] %vm1085, %v1032
      %1092 = vst.msk [vmem:[%s175 + $0x18] sm:$0xf] %vm1085, %v1033
      %1093 = vst.msk [vmem:[%s175 + $0x1c] sm:$0xf] %vm1085, %v1034
      %1094 = vst.msk [vmem:[%s175 + $0x20] sm:$0xf] %vm1085, %v1035
      %1095 = vst.msk [vmem:[%s175 + $0x24] sm:$0xf] %vm1085, %v1036
      %1096 = vst.msk [vmem:[%s175 + $0x28] sm:$0xf] %vm1085, %v1037
      %1097 = vst.msk [vmem:[%s175 + $0x2c] sm:$0xf] %vm1085, %v1038
      %1098 = vst.msk [vmem:[%s175 + $0x30] sm:$0xf] %vm1085, %v1039
      %1099 = vst.msk [vmem:[%s175 + $0x34] sm:$0xf] %vm1085, %v1040
      %1100 = vst.msk [vmem:[%s175 + $0x38] sm:$0xf] %vm1085, %v1041
      %1101 = vst.msk [vmem:[%s175 + $0x3c] sm:$0xf] %vm1085, %v1042
      %1102 = vst.msk [vmem:[%s175 + $0x40] sm:$0xf] %vm1085, %v1043
      %1103 = vst.msk [vmem:[%s175 + $0x44] sm:$0xf] %vm1085, %v1044
      %1104 = vst.msk [vmem:[%s175 + $0x48] sm:$0xf] %vm1085, %v1045
      %1105 = vst.msk [vmem:[%s175 + $0x4c] sm:$0xf] %vm1085, %v1046
      %1106 = vst.msk [vmem:[%s175 + $0x50] sm:$0xf] %vm1085, %v1047
      %1107 = vst.msk [vmem:[%s175 + $0x54] sm:$0xf] %vm1085, %v1048
      %1108 = vst.msk [vmem:[%s175 + $0x58] sm:$0xf] %vm1085, %v1049
      %1109 = vst.msk [vmem:[%s175 + $0x5c] sm:$0xf] %vm1085, %v1050
      %1110 = vst.msk [vmem:[%s175 + $0x60] sm:$0xf] %vm1085, %v1051
      %1111 = vst.msk [vmem:[%s175 + $0x64] sm:$0xf] %vm1085, %v1052
      %1112 = vst.msk [vmem:[%s175 + $0x68] sm:$0xf] %vm1085, %v1053
      %1113 = vst.msk [vmem:[%s175 + $0x6c] sm:$0xf] %vm1085, %v1054
      %1114 = vst.msk [vmem:[%s175 + $0x70] sm:$0xf] %vm1085, %v1055
      %1115 = vst.msk [vmem:[%s175 + $0x74] sm:$0xf] %vm1085, %v1056
      %1116 = vst.msk [vmem:[%s175 + $0x78] sm:$0xf] %vm1085, %v1057
      %1117 = vst.msk [vmem:[%s175 + $0x7c] sm:$0xf] %vm1085, %v1058
      %1118 = vst.msk [vmem:[%s175 + $0x80] sm:$0xf] %vm1085, %v1059
      %1119 = vst.msk [vmem:[%s175 + $0x84] sm:$0xf] %vm1085, %v1060
      %1120 = vst.msk [vmem:[%s175 + $0x88] sm:$0xf] %vm1085, %v1061
      %1121 = vst.msk [vmem:[%s175 + $0x8c] sm:$0xf] %vm1085, %v1062
      %1122 = vst.msk [vmem:[%s175 + $0x90] sm:$0xf] %vm1085, %v1063
      %1123 = vst.msk [vmem:[%s175 + $0x94] sm:$0xf] %vm1085, %v1064
      %1124 = vst.msk [vmem:[%s175 + $0x98] sm:$0xf] %vm1085, %v1065
      %1125 = vst.msk [vmem:[%s175 + $0x9c] sm:$0xf] %vm1085, %v1066
      %1126 = vst.msk [vmem:[%s175 + $0xa0] sm:$0xf] %vm1085, %v1067
      %1127 = vst.msk [vmem:[%s175 + $0xa4] sm:$0xf] %vm1085, %v1068
      %1128 = vst.msk [vmem:[%s175 + $0xa8] sm:$0xf] %vm1085, %v1069
      %1129 = vst.msk [vmem:[%s175 + $0xac] sm:$0xf] %vm1085, %v1070
      %1130 = vst.msk [vmem:[%s175 + $0xb0] sm:$0xf] %vm1085, %v1071
      %1131 = vst.msk [vmem:[%s175 + $0xb4] sm:$0xf] %vm1085, %v1072
      %1132 = vst.msk [vmem:[%s175 + $0xb8] sm:$0xf] %vm1085, %v1073
      %1133 = vst.msk [vmem:[%s175 + $0xbc] sm:$0xf] %vm1085, %v1074
      %1134 = vst.msk [vmem:[%s175 + $0xc0] sm:$0xf] %vm1085, %v1075
      %1135 = vst.msk [vmem:[%s175 + $0xc4] sm:$0xf] %vm1085, %v1076
      %1136 = vst.msk [vmem:[%s175 + $0xc8] sm:$0xf] %vm1085, %v1077
      %1137 = vst.msk [vmem:[%s175 + $0xcc] sm:$0xf] %vm1085, %v1078
      %1138 = vst.msk [vmem:[%s175 + $0xd0] sm:$0xf] %vm1085, %v1079
      %1139 = vst.msk [vmem:[%s175 + $0xd4] sm:$0xf] %vm1085, %v1080
      %1140 = vst.msk [vmem:[%s175 + $0xd8] sm:$0xf] %vm1085, %v1081
      %1141 = vst.msk [vmem:[%s175 + $0xdc] sm:$0xf] %vm1085, %v1082
      %1142 = vst.msk [vmem:[%s175 + $0xe0] sm:$0xf] %vm1085, %v1083
      %1143 = vst.msk [vmem:[%s175 + $0xe4] sm:$0xf] %vm1085, %v1084
      %s1144 = smul.u32 58, %s14
      %p1145 = scmp.lt.s32.totalorder %s1144, 289
      %s1146 = scalar_select %p1145, %s1144, 289
      %s1147 = smul.addr %s1146, 4
      %s1148 = scalar_lea.vmem %s3, %s1147
      // Predicated region
      $region33: #{simple_cnn_forward.5} parent=31 // pred_check
        %p1149 = pneg %p100
      $region34: #{simple_cnn_forward.5} parent=31 // pred_check_branch
        %1151 = sbr.rel (%p1149) target = $region36
      $region35: #{simple_cnn_forward.5} parent=31 // pred_region
        %s1152 = smul.u32 58, %s14
      $region36: #{simple_cnn_forward.5} parent=31 // pred_fallthru
        _
    $region32: #{simple_cnn_forward.5} parent=5 // pred_fallthru
      _
    %p1153 = scmp.le.s32.totalorder 2, %s9
    // Predicated region
    $region37: #{simple_cnn_forward.5} parent=5 // pred_check
      %p1154 = pneg %p1153
    $region38: #{simple_cnn_forward.5} parent=5 // pred_check_branch
      %1156 = sbr.rel (%p1154) target = $region40
    $region39: #{simple_cnn_forward.5} parent=5 // pred_region
      %s1157 = ssub.s32 %s9, 2
      // Predicated region
      $region41: #{simple_cnn_forward.5} parent=39 // pred_check
        %p1158 = pneg %p106
      $region42: #{simple_cnn_forward.5} parent=39 // pred_check_branch
        %1160 = sbr.rel (%p1158) target = $region44
      $region43: #{simple_cnn_forward.5} parent=39 // pred_region
        %s1161 = smul.u32 58, %s15
        %p1162 = scmp.lt.s32.totalorder %s1161, 289
        %s1163 = scalar_select %p1162, %s1161, 289
        %s1164 = smul.addr %s1163, 4
        %s1165 = scalar_lea.vmem %s3, %s1164
      $region44: #{simple_cnn_forward.5} parent=39 // pred_fallthru
        _
    $region40: #{simple_cnn_forward.5} parent=5 // pred_fallthru
      _
  $region6: #{simple_cnn_forward.5} parent=0 // loop_footer
    %s13 = sadd.s32 1, %s9
  $region7: #{simple_cnn_forward.5} parent=0 // loop_footer_branch
    %8 = sbr.rel target = $region3
  $region8: #{simple_cnn_forward.5} parent=0 // loop_exit
    _

// kernel: simple_cnn_forward.6
$region0: #{simple_cnn_forward.6}
  #allocation0 [shape = 'u32[]', space=smem, size = 0x4, offset = 0x4, fixed_abs, tag = 'smem constant byte address 0x4 - core index']
  #allocation1 [shape = 'u32[72,128]{1,0:T(1,128)}', space=vmem, size = 0x9000, scoped, tag = 'internal scratch']
  %s0 = inlined_call_operand.vmem [shape: bf16[544,288], index: 0, kind: input, shape index: {}]
  %s1 = inlined_call_operand.vmem [shape: bf16[288,64], index: 1, kind: input, shape index: {}]
  %s2 = inlined_call_operand.vmem [shape: f32[1,64], index: 2, kind: input, shape index: {}]
  %s3 = inlined_call_operand.vmem [shape: bf16[544,64], index: 3, kind: output, shape index: {}]
  %s4 = sld [smem:[#allocation0]]
  $region45: #{simple_cnn_forward.6} parent=0
    _
  %s6 = ssub.s32 1, %s4
  %s7 = scalar_select 0, %s6, %s4
  loop: start=0, step=1, limit=4
  $region2: #{simple_cnn_forward.6} parent=0 // loop_pre_header
    _
  $region3: #{simple_cnn_forward.6} parent=0 // loop_header
    %s9 = sphi 0, %s13
    %p10 = scmp.ge.s32.totalorder %s9, 4
    %s19 = sphi 0, %s21
    %s22 = sphi 0, %s19
    %s23 = sphi 0, %s22
    %s39 = sphi 0, %s23
    %s43 = sphi 0, %s43
    %s45 = sphi 0, %s43
    %s46 = sphi 0, %s45
    %s60 = sphi 0, %s46
    %s64 = sphi 0, %s64
    %s66 = sphi 0, %s64
    %s67 = sphi 0, %s66
    %s81 = sphi 0, %s67
    %s87 = sphi 0, %s89
    %s90 = sphi 0, %s87
    %s91 = sphi 0, %s90
    %s107 = sphi 0, %s91
  $region4: #{simple_cnn_forward.6} parent=0 // loop_header_branch
    %12 = sbr.rel (%p10) target = $region8
  $region5: #{simple_cnn_forward.6} parent=0 // loop_body
    %s14 = ssub.s32 %s9, 1
    %s15 = ssub.s32 %s9, 2
    %s16 = sadd.s32 %s9, 1
    %s17 = ssub.s32 %s9, %s16
    %p18 = scmp.eq.s32.totalorder %s17, 0
    %s20 = sadd.s32 %s19, 1
    %s21 = scalar_select %p18, %s19, %s20
    %p24 = pneg %p18
    %p25 = scmp.eq.s32.totalorder %s9, 1
    %p26 = por %p24, %p25
    %p27 = scmp.ne.s32.totalorder %s19, %s22
    %p28 = scmp.eq.s32.totalorder %s9, 0
    %p29 = por %p27, %p28
    %p30 = scmp.ne.s32.totalorder %s19, %s22
    %p31 = scmp.eq.s32.totalorder %s14, 1
    %p32 = por %p30, %p31
    %p33 = scmp.ne.s32.totalorder %s22, %s23
    %p34 = scmp.eq.s32.totalorder %s14, 0
    %p35 = por %p33, %p34
    %p36 = scmp.ne.s32.totalorder %s22, %s23
    %p37 = scmp.eq.s32.totalorder %s15, 1
    %p38 = por %p36, %p37
    %p40 = scmp.ne.s32.totalorder %s23, %s39
    %p41 = scmp.eq.s32.totalorder %s15, 0
    %p42 = por %p40, %p41
    %s44 = sadd.s32 %s43, 1
    %p47 = scmp.eq.s32.totalorder %s9, 1
    %p48 = scmp.ne.s32.totalorder %s43, %s45
    %p49 = scmp.eq.s32.totalorder %s9, 0
    %p50 = por %p48, %p49
    %p51 = scmp.ne.s32.totalorder %s43, %s45
    %p52 = scmp.eq.s32.totalorder %s14, 1
    %p53 = por %p51, %p52
    %p54 = scmp.ne.s32.totalorder %s45, %s46
    %p55 = scmp.eq.s32.totalorder %s14, 0
    %p56 = por %p54, %p55
    %p57 = scmp.ne.s32.totalorder %s45, %s46
    %p58 = scmp.eq.s32.totalorder %s15, 1
    %p59 = por %p57, %p58
    %p61 = scmp.ne.s32.totalorder %s46, %s60
    %p62 = scmp.eq.s32.totalorder %s15, 0
    %p63 = por %p61, %p62
    %s65 = sadd.s32 %s64, 1
    %p68 = scmp.eq.s32.totalorder %s9, 1
    %p69 = scmp.ne.s32.totalorder %s64, %s66
    %p70 = scmp.eq.s32.totalorder %s9, 0
    %p71 = por %p69, %p70
    %p72 = scmp.ne.s32.totalorder %s64, %s66
    %p73 = scmp.eq.s32.totalorder %s14, 1
    %p74 = por %p72, %p73
    %p75 = scmp.ne.s32.totalorder %s66, %s67
    %p76 = scmp.eq.s32.totalorder %s14, 0
    %p77 = por %p75, %p76
    %p78 = scmp.ne.s32.totalorder %s66, %s67
    %p79 = scmp.eq.s32.totalorder %s15, 1
    %p80 = por %p78, %p79
    %p82 = scmp.ne.s32.totalorder %s67, %s81
    %p83 = scmp.eq.s32.totalorder %s15, 0
    %p84 = por %p82, %p83
    %s85 = ssub.s32 %s9, %s16
    %p86 = scmp.eq.s32.totalorder %s85, 0
    %s88 = sadd.s32 %s87, 1
    %s89 = scalar_select %p86, %s87, %s88
    %p92 = pneg %p86
    %p93 = scmp.eq.s32.totalorder %s9, 1
    %p94 = por %p92, %p93
    %p95 = scmp.ne.s32.totalorder %s87, %s90
    %p96 = scmp.eq.s32.totalorder %s9, 0
    %p97 = por %p95, %p96
    %p98 = scmp.ne.s32.totalorder %s87, %s90
    %p99 = scmp.eq.s32.totalorder %s14, 1
    %p100 = por %p98, %p99
    %p101 = scmp.ne.s32.totalorder %s90, %s91
    %p102 = scmp.eq.s32.totalorder %s14, 0
    %p103 = por %p101, %p102
    %p104 = scmp.ne.s32.totalorder %s90, %s91
    %p105 = scmp.eq.s32.totalorder %s15, 1
    %p106 = por %p104, %p105
    %p108 = scmp.ne.s32.totalorder %s91, %s107
    %p109 = scmp.eq.s32.totalorder %s15, 0
    %p110 = por %p108, %p109
    %p111 = scmp.le.s32.totalorder 1, %s9
    %p112 = scmp.lt.s32.totalorder %s9, 3
    %p113 = pnand %p111, %p112
    %p114 = pneg %p113
    // Predicated region
    $region9: #{simple_cnn_forward.6} parent=5 // pred_check
      _
    $region10: #{simple_cnn_forward.6} parent=5 // pred_check_branch
      %116 = sbr.rel (%p113) target = $region12
    $region11: #{simple_cnn_forward.6} parent=5 // pred_region
      %s117 = ssub.s32 %s9, 1
      // Predicated region
      $region13: #{simple_cnn_forward.6} parent=11 // pred_check
        %p118 = pneg %p56
      $region14: #{simple_cnn_forward.6} parent=11 // pred_check_branch
        %120 = sbr.rel (%p118) target = $region16
      $region15: #{simple_cnn_forward.6} parent=11 // pred_region
        _
      $region16: #{simple_cnn_forward.6} parent=11 // pred_fallthru
        _
      // Predicated region
      $region17: #{simple_cnn_forward.6} parent=11 // pred_check
        %p121 = pneg %p77
      $region18: #{simple_cnn_forward.6} parent=11 // pred_check_branch
        %123 = sbr.rel (%p121) target = $region20
      $region19: #{simple_cnn_forward.6} parent=11 // pred_region
        _
      $region20: #{simple_cnn_forward.6} parent=11 // pred_fallthru
        _
    $region12: #{simple_cnn_forward.6} parent=5 // pred_fallthru
      _
    %p124 = scmp.lt.s32.totalorder %s9, 2
    // Predicated region
    $region21: #{simple_cnn_forward.6} parent=5 // pred_check
      %p125 = pneg %p124
    $region22: #{simple_cnn_forward.6} parent=5 // pred_check_branch
      %127 = sbr.rel (%p125) target = $region24
    $region23: #{simple_cnn_forward.6} parent=5 // pred_region
      // Predicated region
      $region25: #{simple_cnn_forward.6} parent=23 // pred_check
        %p128 = pneg %p29
      $region26: #{simple_cnn_forward.6} parent=23 // pred_check_branch
        %130 = sbr.rel (%p128) target = $region28
      $region27: #{simple_cnn_forward.6} parent=23 // pred_region
        %s131 = smul.u32 34, %s9
        %p132 = scmp.lt.s32.totalorder %s131, 67
        %s133 = scalar_select %p132, %s131, 67
        %s134 = smul.addr %s133, 3
        %s135 = smul.addr %s134, 4
        %s136 = scalar_lea.vmem %s0, %s135
        %s137 = smul.u32 34, %s9
      $region28: #{simple_cnn_forward.6} parent=23 // pred_fallthru
        _
    $region24: #{simple_cnn_forward.6} parent=5 // pred_fallthru
      _
    %p138 = scmp.le.s32.totalorder 1, %s9
    %p139 = scmp.lt.s32.totalorder %s9, 3
    %p140 = pnand %p138, %p139
    %p141 = pneg %p140
    // Predicated region
    $region29: #{simple_cnn_forward.6} parent=5 // pred_check
      _
    $region30: #{simple_cnn_forward.6} parent=5 // pred_check_branch
      %143 = sbr.rel (%p140) target = $region32
    $region31: #{simple_cnn_forward.6} parent=5 // pred_region
      %s144 = ssub.s32 %s9, 1
      %s145 = smul.u32 34, %s14
      %p146 = scmp.lt.s32.totalorder %s145, 67
      %s147 = scalar_select %p146, %s145, 67
      %s148 = smul.addr %s147, 3
      %s149 = smul.addr %s148, 4
      %s150 = scalar_lea.vmem %s0, %s149
      %p151 = pneg %p35
      %p152 = pneg %p32
      %p153 = pneg %p56
      %p154 = pneg %p53
      %p155 = pneg %p77
      %p156 = pneg %p74
      %p157 = pneg %p103
      %p158 = pneg %p100
      %s159 = smul.u32 34, %s14
      %p160 = scmp.lt.s32.totalorder %s159, 67
      %s161 = scalar_select %p160, %s159, 67
      %s162 = smul.addr %s161, 4
      %s163 = scalar_lea.vmem %s3, %s162
      %s164 = smul.u32 34, %s14
      %p165 = scmp.lt.s32.totalorder %s164, 67
      %s166 = scalar_select %p165, %s164, 67
      %s167 = smul.addr %s166, 3
      %s168 = smul.addr %s167, 4
      %s169 = scalar_lea.vmem %s0, %s168
      %s170 = smul.u32 34, %s14
      %s171 = smul.u32 34, %s14
      %p172 = scmp.lt.s32.totalorder %s171, 67
      %s173 = scalar_select %p172, %s171, 67
      %s174 = smul.addr %s173, 4
      %s175 = scalar_lea.vmem %s3, %s174
      %s176 = smul.u32 34, %s14
      %v178 = vld [vmem:[%s169] sm:$0xff]
      %v179 = vld [vmem:[%s169 + $0x8] sm:$0xf]
      %v180 = vld [vmem:[%s169 + $0xc] sm:$0xff]
      %v181 = vld [vmem:[%s169 + $0x14] sm:$0xf]
      %v182 = vld [vmem:[%s169 + $0x18] sm:$0xff]
      %v183 = vld [vmem:[%s169 + $0x20] sm:$0xf]
      %v184 = vld [vmem:[%s169 + $0x24] sm:$0xff]
      %v185 = vld [vmem:[%s169 + $0x2c] sm:$0xf]
      %v186 = vld [vmem:[%s169 + $0x30] sm:$0xff]
      %v187 = vld [vmem:[%s169 + $0x38] sm:$0xf]
      %v188 = vld [vmem:[%s169 + $0x3c] sm:$0xff]
      %v189 = vld [vmem:[%s169 + $0x44] sm:$0xf]
      %v190 = vld [vmem:[%s169 + $0x48] sm:$0xff]
      %v191 = vld [vmem:[%s169 + $0x50] sm:$0xf]
      %v192 = vld [vmem:[%s169 + $0x54] sm:$0xff]
      %v193 = vld [vmem:[%s169 + $0x5c] sm:$0xf]
      %v194 = vld [vmem:[%s169 + $0x60] sm:$0xff]
      %v195 = vld [vmem:[%s169 + $0x68] sm:$0xf]
      %v196 = vld [vmem:[%s169 + $0x6c] sm:$0xff]
      %v197 = vld [vmem:[%s169 + $0x74] sm:$0xf]
      %v198 = vld [vmem:[%s169 + $0x78] sm:$0xff]
      %v199 = vld [vmem:[%s169 + $0x80] sm:$0xf]
      %v200 = vld [vmem:[%s169 + $0x84] sm:$0xff]
      %v201 = vld [vmem:[%s169 + $0x8c] sm:$0xf]
      %v202 = vld [vmem:[%s169 + $0x90] sm:$0xff]
      %v203 = vld [vmem:[%s169 + $0x98] sm:$0xf]
      %v204 = vld [vmem:[%s169 + $0x9c] sm:$0xff]
      %v205 = vld [vmem:[%s169 + $0xa4] sm:$0xf]
      %v206 = vld [vmem:[%s169 + $0xa8] sm:$0xff]
      %v207 = vld [vmem:[%s169 + $0xb0] sm:$0xf]
      %v208 = vld [vmem:[%s169 + $0xb4] sm:$0xff]
      %v209 = vld [vmem:[%s169 + $0xbc] sm:$0xf]
      %v210 = vld [vmem:[%s169 + $0xc0] sm:$0xff]
      %v211 = vld [vmem:[%s169 + $0xc8] sm:$0xf]
      %v212 = vld [vmem:[%s169 + $0xcc] sm:$0xff]
      %v213 = vld [vmem:[%s169 + $0xd4] sm:$0xf]
      %v214 = vld [vmem:[%s169 + $0xd8] sm:$0xff]
      %v215 = vld [vmem:[%s169 + $0xe0] sm:$0xf]
      %v216 = vld [vmem:[%s169 + $0xe4] sm:$0xff]
      %v217 = vld [vmem:[%s169 + $0xec] sm:$0xf]
      %v218 = vld [vmem:[%s169 + $0xf0] sm:$0xff]
      %v219 = vld [vmem:[%s169 + $0xf8] sm:$0xf]
      %v220 = vld [vmem:[%s169 + $0xfc] sm:$0xff]
      %v221 = vld [vmem:[%s169 + $0x104] sm:$0xf]
      %v222 = vld [vmem:[%s169 + $0x108] sm:$0xff]
      %v223 = vld [vmem:[%s169 + $0x110] sm:$0xf]
      %v224 = vld [vmem:[%s169 + $0x114] sm:$0xff]
      %v225 = vld [vmem:[%s169 + $0x11c] sm:$0xf]
      %v226 = vld [vmem:[%s169 + $0x120] sm:$0xff]
      %v227 = vld [vmem:[%s169 + $0x128] sm:$0xf]
      %v228 = vld [vmem:[%s169 + $0x12c] sm:$0xff]
      %v229 = vld [vmem:[%s169 + $0x134] sm:$0xf]
      %v230 = vld [vmem:[%s169 + $0x138] sm:$0xff]
      %v231 = vld [vmem:[%s169 + $0x140] sm:$0xf]
      %v232 = vld [vmem:[%s169 + $0x144] sm:$0xff]
      %v233 = vld [vmem:[%s169 + $0x14c] sm:$0xf]
      %v234 = vld [vmem:[%s169 + $0x150] sm:$0xff]
      %v235 = vld [vmem:[%s169 + $0x158] sm:$0xf]
      %v236 = vld [vmem:[%s169 + $0x15c] sm:$0xff]
      %v237 = vld [vmem:[%s169 + $0x164] sm:$0xf]
      %v238 = vld [vmem:[%s169 + $0x168] sm:$0xff]
      %v239 = vld [vmem:[%s169 + $0x170] sm:$0xf]
      %v240 = vld [vmem:[%s169 + $0x174] sm:$0xff]
      %v241 = vld [vmem:[%s169 + $0x17c] sm:$0xf]
      %v242 = vld [vmem:[%s169 + $0x180] sm:$0xff]
      %v243 = vld [vmem:[%s169 + $0x188] sm:$0xf]
      %v244 = vld [vmem:[%s169 + $0x18c] sm:$0xff]
      %v245 = vld [vmem:[%s169 + $0x194] sm:$0xf]
      %v246 = vld [vmem:[%s1] sm:$0xf]
      %v247 = vld [vmem:[%s1 + $0x4] sm:$0xf]
      %v248 = vld [vmem:[%s1 + $0x8] sm:$0xf]
      %v249 = vld [vmem:[%s1 + $0xc] sm:$0xf]
      %v250 = vld [vmem:[%s1 + $0x10] sm:$0xf]
      %v251 = vld [vmem:[%s1 + $0x14] sm:$0xf]
      %v252 = vld [vmem:[%s1 + $0x18] sm:$0xf]
      %v253 = vld [vmem:[%s1 + $0x1c] sm:$0xf]
      %v254 = vld [vmem:[%s1 + $0x20] sm:$0xf]
      %v255 = vld [vmem:[%s1 + $0x24] sm:$0xf]
      %v256 = vld [vmem:[%s1 + $0x28] sm:$0xf]
      %v257 = vld [vmem:[%s1 + $0x2c] sm:$0xf]
      %v258 = vld [vmem:[%s1 + $0x30] sm:$0xf]
      %v259 = vld [vmem:[%s1 + $0x34] sm:$0xf]
      %v260 = vld [vmem:[%s1 + $0x38] sm:$0xf]
      %v261 = vld [vmem:[%s1 + $0x3c] sm:$0xf]
      %v262 = vld [vmem:[%s1 + $0x40] sm:$0xf]
      %v263 = vld [vmem:[%s1 + $0x44] sm:$0xf]
      %v264 = vld [vmem:[%s1 + $0x48] sm:$0xf]
      %v265 = vld [vmem:[%s1 + $0x4c] sm:$0xf]
      %v266 = vld [vmem:[%s1 + $0x50] sm:$0xf]
      %v267 = vld [vmem:[%s1 + $0x54] sm:$0xf]
      %v268 = vld [vmem:[%s1 + $0x58] sm:$0xf]
      %v269 = vld [vmem:[%s1 + $0x5c] sm:$0xf]
      %v270 = vld [vmem:[%s1 + $0x60] sm:$0xf]
      %v271 = vld [vmem:[%s1 + $0x64] sm:$0xf]
      %v272 = vld [vmem:[%s1 + $0x68] sm:$0xf]
      %v273 = vld [vmem:[%s1 + $0x6c] sm:$0xf]
      %v274 = vld [vmem:[%s1 + $0x70] sm:$0xf]
      %v275 = vld [vmem:[%s1 + $0x74] sm:$0xf]
      %v276 = vld [vmem:[%s1 + $0x78] sm:$0xf]
      %v277 = vld [vmem:[%s1 + $0x7c] sm:$0xf]
      %v278 = vld [vmem:[%s1 + $0x80] sm:$0xf]
      %v279 = vld [vmem:[%s1 + $0x84] sm:$0xf]
      %v280 = vld [vmem:[%s1 + $0x88] sm:$0xf]
      %v281 = vld [vmem:[%s1 + $0x8c] sm:$0xf]
      %v282 = vld [vmem:[%s2] sm:$0x1]
      %v284 = vperm.slane %v282, 0
      %v354 = vunpack.c.l.b16 %v178
      %v355 = vunpack.c.h.b16 %v178
      %v356 = vunpack.c.l.b16 %v179
      %v357 = vunpack.c.l.b16 %v180
      %v358 = vunpack.c.h.b16 %v180
      %v359 = vunpack.c.l.b16 %v181
      %v360 = vunpack.c.l.b16 %v182
      %v361 = vunpack.c.h.b16 %v182
      %v362 = vunpack.c.l.b16 %v183
      %v363 = vunpack.c.l.b16 %v184
      %v364 = vunpack.c.h.b16 %v184
      %v365 = vunpack.c.l.b16 %v185
      %v366 = vunpack.c.l.b16 %v186
      %v367 = vunpack.c.h.b16 %v186
      %v368 = vunpack.c.l.b16 %v187
      %v369 = vunpack.c.l.b16 %v188
      %v370 = vunpack.c.h.b16 %v188
      %v371 = vunpack.c.l.b16 %v189
      %v372 = vunpack.c.l.b16 %v190
      %v373 = vunpack.c.h.b16 %v190
      %v374 = vunpack.c.l.b16 %v191
      %v375 = vunpack.c.l.b16 %v192
      %v376 = vunpack.c.h.b16 %v192
      %v377 = vunpack.c.l.b16 %v193
      %v378 = vunpack.c.l.b16 %v194
      %v379 = vunpack.c.h.b16 %v194
      %v380 = vunpack.c.l.b16 %v195
      %v381 = vunpack.c.l.b16 %v196
      %v382 = vunpack.c.h.b16 %v196
      %v383 = vunpack.c.l.b16 %v197
      %v384 = vunpack.c.l.b16 %v198
      %v385 = vunpack.c.h.b16 %v198
      %v386 = vunpack.c.l.b16 %v199
      %v387 = vunpack.c.l.b16 %v200
      %v388 = vunpack.c.h.b16 %v200
      %v389 = vunpack.c.l.b16 %v201
      %v390 = vunpack.c.l.b16 %v202
      %v391 = vunpack.c.h.b16 %v202
      %v392 = vunpack.c.l.b16 %v203
      %v393 = vunpack.c.l.b16 %v204
      %v394 = vunpack.c.h.b16 %v204
      %v395 = vunpack.c.l.b16 %v205
      %v396 = vunpack.c.l.b16 %v206
      %v397 = vunpack.c.h.b16 %v206
      %v398 = vunpack.c.l.b16 %v207
      %v399 = vunpack.c.l.b16 %v208
      %v400 = vunpack.c.h.b16 %v208
      %v401 = vunpack.c.l.b16 %v209
      %v402 = vunpack.c.l.b16 %v210
      %v403 = vunpack.c.h.b16 %v210
      %v404 = vunpack.c.l.b16 %v211
      %v405 = vunpack.c.l.b16 %v212
      %v406 = vunpack.c.h.b16 %v212
      %v407 = vunpack.c.l.b16 %v213
      %v408 = vunpack.c.l.b16 %v214
      %v409 = vunpack.c.h.b16 %v214
      %v410 = vunpack.c.l.b16 %v215
      %v411 = vunpack.c.l.b16 %v216
      %v412 = vunpack.c.h.b16 %v216
      %v413 = vunpack.c.l.b16 %v217
      %v414 = vunpack.c.l.b16 %v218
      %v415 = vunpack.c.h.b16 %v218
      %v416 = vunpack.c.l.b16 %v219
      %v417 = vunpack.c.l.b16 %v220
      %v418 = vunpack.c.h.b16 %v220
      %v419 = vunpack.c.l.b16 %v221
      %v420 = vunpack.c.l.b16 %v222
      %v421 = vunpack.c.h.b16 %v222
      %v422 = vunpack.c.l.b16 %v223
      %v423 = vunpack.c.l.b16 %v224
      %v424 = vunpack.c.h.b16 %v224
      %v425 = vunpack.c.l.b16 %v225
      %v426 = vunpack.c.l.b16 %v226
      %v427 = vunpack.c.h.b16 %v226
      %v428 = vunpack.c.l.b16 %v227
      %v429 = vunpack.c.l.b16 %v228
      %v430 = vunpack.c.h.b16 %v228
      %v431 = vunpack.c.l.b16 %v229
      %v432 = vunpack.c.l.b16 %v230
      %v433 = vunpack.c.h.b16 %v230
      %v434 = vunpack.c.l.b16 %v231
      %v435 = vunpack.c.l.b16 %v232
      %v436 = vunpack.c.h.b16 %v232
      %v437 = vunpack.c.l.b16 %v233
      %v438 = vunpack.c.l.b16 %v234
      %v439 = vunpack.c.h.b16 %v234
      %v440 = vunpack.c.l.b16 %v235
      %v441 = vunpack.c.l.b16 %v236
      %v442 = vunpack.c.h.b16 %v236
      %v443 = vunpack.c.l.b16 %v237
      %v444 = vunpack.c.l.b16 %v238
      %v445 = vunpack.c.h.b16 %v238
      %v446 = vunpack.c.l.b16 %v239
      %v447 = vunpack.c.l.b16 %v240
      %v448 = vunpack.c.h.b16 %v240
      %v449 = vunpack.c.l.b16 %v241
      %v450 = vunpack.c.l.b16 %v242
      %v451 = vunpack.c.h.b16 %v242
      %v452 = vunpack.c.l.b16 %v243
      %v453 = vunpack.c.l.b16 %v244
      %v454 = vunpack.c.h.b16 %v244
      %v455 = vunpack.c.l.b16 %v245
      %v456 = vpack.c.b16 %v357, %v354
      %v457 = vpack.c.b16 %v358, %v355
      %v458 = vpack.c.b16 %v359, %v356
      %v459 = vpack.c.b16 %v363, %v360
      %v460 = vpack.c.b16 %v364, %v361
      %v461 = vpack.c.b16 %v365, %v362
      %v462 = vpack.c.b16 %v369, %v366
      %v463 = vpack.c.b16 %v370, %v367
      %v464 = vpack.c.b16 %v371, %v368
      %v465 = vpack.c.b16 %v375, %v372
      %v466 = vpack.c.b16 %v376, %v373
      %v467 = vpack.c.b16 %v377, %v374
      %v468 = vpack.c.b16 %v381, %v378
      %v469 = vpack.c.b16 %v382, %v379
      %v470 = vpack.c.b16 %v383, %v380
      %v471 = vpack.c.b16 %v387, %v384
      %v472 = vpack.c.b16 %v388, %v385
      %v473 = vpack.c.b16 %v389, %v386
      %v474 = vpack.c.b16 %v393, %v390
      %v475 = vpack.c.b16 %v394, %v391
      %v476 = vpack.c.b16 %v395, %v392
      %v477 = vpack.c.b16 %v399, %v396
      %v478 = vpack.c.b16 %v400, %v397
      %v479 = vpack.c.b16 %v401, %v398
      %v480 = vpack.c.b16 %v405, %v402
      %v481 = vpack.c.b16 %v406, %v403
      %v482 = vpack.c.b16 %v407, %v404
      %v483 = vpack.c.b16 %v411, %v408
      %v484 = vpack.c.b16 %v412, %v409
      %v485 = vpack.c.b16 %v413, %v410
      %v486 = vpack.c.b16 %v417, %v414
      %v487 = vpack.c.b16 %v418, %v415
      %v488 = vpack.c.b16 %v419, %v416
      %v489 = vpack.c.b16 %v423, %v420
      %v490 = vpack.c.b16 %v424, %v421
      %v491 = vpack.c.b16 %v425, %v422
      %v492 = vpack.c.b16 %v429, %v426
      %v493 = vpack.c.b16 %v430, %v427
      %v494 = vpack.c.b16 %v431, %v428
      %v495 = vpack.c.b16 %v435, %v432
      %v496 = vpack.c.b16 %v436, %v433
      %v497 = vpack.c.b16 %v437, %v434
      %v498 = vpack.c.b16 %v441, %v438
      %v499 = vpack.c.b16 %v442, %v439
      %v500 = vpack.c.b16 %v443, %v440
      %v501 = vpack.c.b16 %v447, %v444
      %v502 = vpack.c.b16 %v448, %v445
      %v503 = vpack.c.b16 %v449, %v446
      %v504 = vpack.c.b16 %v453, %v450
      %v505 = vpack.c.b16 %v454, %v451
      %v506 = vpack.c.b16 %v455, %v452
      %v577 = vunpack.c.l.b16 %v246
      %v578 = vunpack.c.l.b16 %v247
      %v579 = vunpack.c.l.b16 %v248
      %v580 = vunpack.c.l.b16 %v249
      %v581 = vunpack.c.l.b16 %v250
      %v582 = vunpack.c.l.b16 %v251
      %v583 = vunpack.c.l.b16 %v252
      %v584 = vunpack.c.l.b16 %v253
      %v585 = vunpack.c.l.b16 %v254
      %v586 = vunpack.c.l.b16 %v255
      %v587 = vunpack.c.l.b16 %v256
      %v588 = vunpack.c.l.b16 %v257
      %v589 = vunpack.c.l.b16 %v258
      %v590 = vunpack.c.l.b16 %v259
      %v591 = vunpack.c.l.b16 %v260
      %v592 = vunpack.c.l.b16 %v261
      %v593 = vunpack.c.l.b16 %v262
      %v594 = vunpack.c.l.b16 %v263
      %v595 = vunpack.c.l.b16 %v264
      %v596 = vunpack.c.l.b16 %v265
      %v597 = vunpack.c.l.b16 %v266
      %v598 = vunpack.c.l.b16 %v267
      %v599 = vunpack.c.l.b16 %v268
      %v600 = vunpack.c.l.b16 %v269
      %v601 = vunpack.c.l.b16 %v270
      %v602 = vunpack.c.l.b16 %v271
      %v603 = vunpack.c.l.b16 %v272
      %v604 = vunpack.c.l.b16 %v273
      %v605 = vunpack.c.l.b16 %v274
      %v606 = vunpack.c.l.b16 %v275
      %v607 = vunpack.c.l.b16 %v276
      %v608 = vunpack.c.l.b16 %v277
      %v609 = vunpack.c.l.b16 %v278
      %v610 = vunpack.c.l.b16 %v279
      %v611 = vunpack.c.l.b16 %v280
      %v612 = vunpack.c.l.b16 %v281
      %v613 = vpack.c.b16 %v578, %v577
      %v614 = vpack.c.b16 %v580, %v579
      %v615 = vpack.c.b16 %v582, %v581
      %v616 = vpack.c.b16 %v584, %v583
      %v617 = vpack.c.b16 %v586, %v585
      %v618 = vpack.c.b16 %v588, %v587
      %v619 = vpack.c.b16 %v590, %v589
      %v620 = vpack.c.b16 %v592, %v591
      %v621 = vpack.c.b16 %v594, %v593
      %v622 = vpack.c.b16 %v596, %v595
      %v623 = vpack.c.b16 %v598, %v597
      %v624 = vpack.c.b16 %v600, %v599
      %v625 = vpack.c.b16 %v602, %v601
      %v626 = vpack.c.b16 %v604, %v603
      %v627 = vpack.c.b16 %v606, %v605
      %v628 = vpack.c.b16 %v608, %v607
      %v629 = vpack.c.b16 %v610, %v609
      %v630 = vpack.c.b16 %v612, %v611
      %vm649 = vcmask 261120
      %v651 = vsel %vm649, %v458, 0
      %v654 = vsel %vm649, %v461, 0
      %v657 = vsel %vm649, %v464, 0
      %v660 = vsel %vm649, %v467, 0
      %v663 = vsel %vm649, %v470, 0
      %v666 = vsel %vm649, %v473, 0
      %v669 = vsel %vm649, %v476, 0
      %v672 = vsel %vm649, %v479, 0
      %v675 = vsel %vm649, %v482, 0
      %v678 = vsel %vm649, %v485, 0
      %v681 = vsel %vm649, %v488, 0
      %v684 = vsel %vm649, %v491, 0
      %v687 = vsel %vm649, %v494, 0
      %v690 = vsel %vm649, %v497, 0
      %v693 = vsel %vm649, %v500, 0
      %v696 = vsel %vm649, %v503, 0
      %v699 = vsel %vm649, %v506, 0
      %701 = vmatpush.bf16.msra.mxu0 %v620
      %702 = vmatpush.bf16.msra.mxu0 %v619
      %703 = vmatpush.bf16.msra.mxu0 %v618
      %704 = vmatpush.bf16.msra.mxu0 %v617
      %705 = vmatpush.bf16.msra.mxu0 %v616
      %706 = vmatpush.bf16.msra.mxu0 %v615
      %707 = vmatpush.bf16.msra.mxu0 %v614
      %708 = vmatpush.bf16.msra.mxu0 %v613
      %709 = vmatmul.bf16.gmra.mxu0 %v456
      %v710 = vpop.f32.mrf.mxu0
      %v711 = vadd.f32 %v284, %v710
      %v712 = vpop.f32.mrf.mxu0
      %v713 = vadd.f32 %v284, %v712
      %714 = vmatmul.bf16.gmra.mxu0 %v459
      %v715 = vpop.f32.mrf.mxu0
      %v716 = vadd.f32 %v284, %v715
      %v717 = vpop.f32.mrf.mxu0
      %v718 = vadd.f32 %v284, %v717
      %719 = vmatmul.bf16.gmra.mxu0 %v462
      %v720 = vpop.f32.mrf.mxu0
      %v721 = vadd.f32 %v284, %v720
      %v722 = vpop.f32.mrf.mxu0
      %v723 = vadd.f32 %v284, %v722
      %724 = vmatmul.bf16.gmra.mxu0 %v465
      %v725 = vpop.f32.mrf.mxu0
      %v726 = vadd.f32 %v284, %v725
      %v727 = vpop.f32.mrf.mxu0
      %v728 = vadd.f32 %v284, %v727
      %729 = vmatmul.bf16.gmra.mxu0 %v468
      %v730 = vpop.f32.mrf.mxu0
      %v731 = vadd.f32 %v284, %v730
      %v732 = vpop.f32.mrf.mxu0
      %v733 = vadd.f32 %v284, %v732
      %734 = vmatmul.bf16.gmra.mxu0 %v471
      %v735 = vpop.f32.mrf.mxu0
      %v736 = vadd.f32 %v284, %v735
      %v737 = vpop.f32.mrf.mxu0
      %v738 = vadd.f32 %v284, %v737
      %739 = vmatmul.bf16.gmra.mxu0 %v474
      %v740 = vpop.f32.mrf.mxu0
      %v741 = vadd.f32 %v284, %v740
      %v742 = vpop.f32.mrf.mxu0
      %v743 = vadd.f32 %v284, %v742
      %744 = vmatmul.bf16.gmra.mxu0 %v477
      %v745 = vpop.f32.mrf.mxu0
      %v746 = vadd.f32 %v284, %v745
      %v747 = vpop.f32.mrf.mxu0
      %v748 = vadd.f32 %v284, %v747
      %749 = vmatmul.bf16.gmra.mxu0 %v480
      %v750 = vpop.f32.mrf.mxu0
      %v751 = vadd.f32 %v284, %v750
      %v752 = vpop.f32.mrf.mxu0
      %v753 = vadd.f32 %v284, %v752
      %754 = vmatmul.bf16.gmra.mxu0 %v483
      %v755 = vpop.f32.mrf.mxu0
      %v756 = vadd.f32 %v284, %v755
      %v757 = vpop.f32.mrf.mxu0
      %v758 = vadd.f32 %v284, %v757
      %759 = vmatmul.bf16.gmra.mxu0 %v486
      %v760 = vpop.f32.mrf.mxu0
      %v761 = vadd.f32 %v284, %v760
      %v762 = vpop.f32.mrf.mxu0
      %v763 = vadd.f32 %v284, %v762
      %764 = vmatmul.bf16.gmra.mxu0 %v489
      %v765 = vpop.f32.mrf.mxu0
      %v766 = vadd.f32 %v284, %v765
      %v767 = vpop.f32.mrf.mxu0
      %v768 = vadd.f32 %v284, %v767
      %769 = vmatmul.bf16.gmra.mxu0 %v492
      %v770 = vpop.f32.mrf.mxu0
      %v771 = vadd.f32 %v284, %v770
      %v772 = vpop.f32.mrf.mxu0
      %v773 = vadd.f32 %v284, %v772
      %774 = vmatmul.bf16.gmra.mxu0 %v495
      %v775 = vpop.f32.mrf.mxu0
      %v776 = vadd.f32 %v284, %v775
      %v777 = vpop.f32.mrf.mxu0
      %v778 = vadd.f32 %v284, %v777
      %779 = vmatmul.bf16.gmra.mxu0 %v498
      %v780 = vpop.f32.mrf.mxu0
      %v781 = vadd.f32 %v284, %v780
      %v782 = vpop.f32.mrf.mxu0
      %v783 = vadd.f32 %v284, %v782
      %784 = vmatmul.bf16.gmra.mxu0 %v501
      %v785 = vpop.f32.mrf.mxu0
      %v786 = vadd.f32 %v284, %v785
      %v787 = vpop.f32.mrf.mxu0
      %v788 = vadd.f32 %v284, %v787
      %789 = vmatmul.bf16.gmra.mxu0 %v504
      %v790 = vpop.f32.mrf.mxu0
      %v791 = vadd.f32 %v284, %v790
      %v792 = vpop.f32.mrf.mxu0
      %v793 = vadd.f32 %v284, %v792
      %794 = vdwg.mxu0
      %795 = vmatpush.bf16.msra.mxu0 %v628
      %796 = vmatpush.bf16.msra.mxu0 %v627
      %797 = vmatpush.bf16.msra.mxu0 %v626
      %798 = vmatpush.bf16.msra.mxu0 %v625
      %799 = vmatpush.bf16.msra.mxu0 %v624
      %800 = vmatpush.bf16.msra.mxu0 %v623
      %801 = vmatpush.bf16.msra.mxu0 %v622
      %802 = vmatpush.bf16.msra.mxu0 %v621
      %803 = vmatmul.bf16.gmra.mxu0 %v457
      %v804 = vpop.f32.mrf.mxu0
      %v805 = vadd.f32 %v711, %v804
      %v806 = vpop.f32.mrf.mxu0
      %v807 = vadd.f32 %v713, %v806
      %808 = vmatmul.bf16.gmra.mxu0 %v460
      %v809 = vpop.f32.mrf.mxu0
      %v810 = vadd.f32 %v716, %v809
      %v811 = vpop.f32.mrf.mxu0
      %v812 = vadd.f32 %v718, %v811
      %813 = vmatmul.bf16.gmra.mxu0 %v463
      %v814 = vpop.f32.mrf.mxu0
      %v815 = vadd.f32 %v721, %v814
      %v816 = vpop.f32.mrf.mxu0
      %v817 = vadd.f32 %v723, %v816
      %818 = vmatmul.bf16.gmra.mxu0 %v466
      %v819 = vpop.f32.mrf.mxu0
      %v820 = vadd.f32 %v726, %v819
      %v821 = vpop.f32.mrf.mxu0
      %v822 = vadd.f32 %v728, %v821
      %823 = vmatmul.bf16.gmra.mxu0 %v469
      %v824 = vpop.f32.mrf.mxu0
      %v825 = vadd.f32 %v731, %v824
      %v826 = vpop.f32.mrf.mxu0
      %v827 = vadd.f32 %v733, %v826
      %828 = vmatmul.bf16.gmra.mxu0 %v472
      %v829 = vpop.f32.mrf.mxu0
      %v830 = vadd.f32 %v736, %v829
      %v831 = vpop.f32.mrf.mxu0
      %v832 = vadd.f32 %v738, %v831
      %833 = vmatmul.bf16.gmra.mxu0 %v475
      %v834 = vpop.f32.mrf.mxu0
      %v835 = vadd.f32 %v741, %v834
      %v836 = vpop.f32.mrf.mxu0
      %v837 = vadd.f32 %v743, %v836
      %838 = vmatmul.bf16.gmra.mxu0 %v478
      %v839 = vpop.f32.mrf.mxu0
      %v840 = vadd.f32 %v746, %v839
      %v841 = vpop.f32.mrf.mxu0
      %v842 = vadd.f32 %v748, %v841
      %843 = vmatmul.bf16.gmra.mxu0 %v481
      %v844 = vpop.f32.mrf.mxu0
      %v845 = vadd.f32 %v751, %v844
      %v846 = vpop.f32.mrf.mxu0
      %v847 = vadd.f32 %v753, %v846
      %848 = vmatmul.bf16.gmra.mxu0 %v484
      %v849 = vpop.f32.mrf.mxu0
      %v850 = vadd.f32 %v756, %v849
      %v851 = vpop.f32.mrf.mxu0
      %v852 = vadd.f32 %v758, %v851
      %853 = vmatmul.bf16.gmra.mxu0 %v487
      %v854 = vpop.f32.mrf.mxu0
      %v855 = vadd.f32 %v761, %v854
      %v856 = vpop.f32.mrf.mxu0
      %v857 = vadd.f32 %v763, %v856
      %858 = vmatmul.bf16.gmra.mxu0 %v490
      %v859 = vpop.f32.mrf.mxu0
      %v860 = vadd.f32 %v766, %v859
      %v861 = vpop.f32.mrf.mxu0
      %v862 = vadd.f32 %v768, %v861
      %863 = vmatmul.bf16.gmra.mxu0 %v493
      %v864 = vpop.f32.mrf.mxu0
      %v865 = vadd.f32 %v771, %v864
      %v866 = vpop.f32.mrf.mxu0
      %v867 = vadd.f32 %v773, %v866
      %868 = vmatmul.bf16.gmra.mxu0 %v496
      %v869 = vpop.f32.mrf.mxu0
      %v870 = vadd.f32 %v776, %v869
      %v871 = vpop.f32.mrf.mxu0
      %v872 = vadd.f32 %v778, %v871
      %873 = vmatmul.bf16.gmra.mxu0 %v499
      %v874 = vpop.f32.mrf.mxu0
      %v875 = vadd.f32 %v781, %v874
      %v876 = vpop.f32.mrf.mxu0
      %v877 = vadd.f32 %v783, %v876
      %878 = vmatmul.bf16.gmra.mxu0 %v502
      %v879 = vpop.f32.mrf.mxu0
      %v880 = vadd.f32 %v786, %v879
      %v881 = vpop.f32.mrf.mxu0
      %v882 = vadd.f32 %v788, %v881
      %883 = vmatmul.bf16.gmra.mxu0 %v505
      %v884 = vpop.f32.mrf.mxu0
      %v885 = vadd.f32 %v791, %v884
      %v886 = vpop.f32.mrf.mxu0
      %v887 = vadd.f32 %v793, %v886
      %888 = vdwg.mxu0
      %889 = vmatpush.bf16.msra.mxu0 0
      %890 = vmatpush.bf16.msra.mxu0 0
      %891 = vmatpush.bf16.msra.mxu0 0
      %892 = vmatpush.bf16.msra.mxu0 0
      %893 = vmatpush.bf16.msra.mxu0 0
      %894 = vmatpush.bf16.msra.mxu0 0
      %895 = vmatpush.bf16.msra.mxu0 %v630
      %896 = vmatpush.bf16.msra.mxu0 %v629
      %897 = vmatmul.bf16.gmra.mxu0 %v651
      %v898 = vpop.f32.mrf.mxu0
      %v899 = vadd.f32 %v805, %v898
      %v900 = vpop.f32.mrf.mxu0
      %v901 = vadd.f32 %v807, %v900
      %902 = vmatmul.bf16.gmra.mxu0 %v654
      %v903 = vpop.f32.mrf.mxu0
      %v904 = vadd.f32 %v810, %v903
      %v905 = vpop.f32.mrf.mxu0
      %v906 = vadd.f32 %v812, %v905
      %907 = vmatmul.bf16.gmra.mxu0 %v657
      %v908 = vpop.f32.mrf.mxu0
      %v909 = vadd.f32 %v815, %v908
      %v910 = vpop.f32.mrf.mxu0
      %v911 = vadd.f32 %v817, %v910
      %912 = vmatmul.bf16.gmra.mxu0 %v660
      %v913 = vpop.f32.mrf.mxu0
      %v914 = vadd.f32 %v820, %v913
      %v915 = vpop.f32.mrf.mxu0
      %v916 = vadd.f32 %v822, %v915
      %917 = vmatmul.bf16.gmra.mxu0 %v663
      %v918 = vpop.f32.mrf.mxu0
      %v919 = vadd.f32 %v825, %v918
      %v920 = vpop.f32.mrf.mxu0
      %v921 = vadd.f32 %v827, %v920
      %922 = vmatmul.bf16.gmra.mxu0 %v666
      %v923 = vpop.f32.mrf.mxu0
      %v924 = vadd.f32 %v830, %v923
      %v925 = vpop.f32.mrf.mxu0
      %v926 = vadd.f32 %v832, %v925
      %927 = vmatmul.bf16.gmra.mxu0 %v669
      %v928 = vpop.f32.mrf.mxu0
      %v929 = vadd.f32 %v835, %v928
      %v930 = vpop.f32.mrf.mxu0
      %v931 = vadd.f32 %v837, %v930
      %932 = vmatmul.bf16.gmra.mxu0 %v672
      %v933 = vpop.f32.mrf.mxu0
      %v934 = vadd.f32 %v840, %v933
      %v935 = vpop.f32.mrf.mxu0
      %v936 = vadd.f32 %v842, %v935
      %937 = vmatmul.bf16.gmra.mxu0 %v675
      %v938 = vpop.f32.mrf.mxu0
      %v939 = vadd.f32 %v845, %v938
      %v940 = vpop.f32.mrf.mxu0
      %v941 = vadd.f32 %v847, %v940
      %942 = vmatmul.bf16.gmra.mxu0 %v678
      %v943 = vpop.f32.mrf.mxu0
      %v944 = vadd.f32 %v850, %v943
      %v945 = vpop.f32.mrf.mxu0
      %v946 = vadd.f32 %v852, %v945
      %947 = vmatmul.bf16.gmra.mxu0 %v681
      %v948 = vpop.f32.mrf.mxu0
      %v949 = vadd.f32 %v855, %v948
      %v950 = vpop.f32.mrf.mxu0
      %v951 = vadd.f32 %v857, %v950
      %952 = vmatmul.bf16.gmra.mxu0 %v684
      %v953 = vpop.f32.mrf.mxu0
      %v954 = vadd.f32 %v860, %v953
      %v955 = vpop.f32.mrf.mxu0
      %v956 = vadd.f32 %v862, %v955
      %957 = vmatmul.bf16.gmra.mxu0 %v687
      %v958 = vpop.f32.mrf.mxu0
      %v959 = vadd.f32 %v865, %v958
      %v960 = vpop.f32.mrf.mxu0
      %v961 = vadd.f32 %v867, %v960
      %962 = vmatmul.bf16.gmra.mxu0 %v690
      %v963 = vpop.f32.mrf.mxu0
      %v964 = vadd.f32 %v870, %v963
      %v965 = vpop.f32.mrf.mxu0
      %v966 = vadd.f32 %v872, %v965
      %967 = vmatmul.bf16.gmra.mxu0 %v693
      %v968 = vpop.f32.mrf.mxu0
      %v969 = vadd.f32 %v875, %v968
      %v970 = vpop.f32.mrf.mxu0
      %v971 = vadd.f32 %v877, %v970
      %972 = vmatmul.bf16.gmra.mxu0 %v696
      %v973 = vpop.f32.mrf.mxu0
      %v974 = vadd.f32 %v880, %v973
      %v975 = vpop.f32.mrf.mxu0
      %v976 = vadd.f32 %v882, %v975
      %977 = vmatmul.bf16.gmra.mxu0 %v699
      %v978 = vpop.f32.mrf.mxu0
      %v979 = vadd.f32 %v885, %v978
      %v980 = vpop.f32.mrf.mxu0
      %v981 = vadd.f32 %v887, %v980
      %982 = vdwg.mxu0
      %v983 = vmax.f32 %v899, 0.0
      %v984 = vmax.f32 %v901, 0.0
      %v985 = vmax.f32 %v904, 0.0
      %v986 = vmax.f32 %v906, 0.0
      %v987 = vmax.f32 %v909, 0.0
      %v988 = vmax.f32 %v911, 0.0
      %v989 = vmax.f32 %v914, 0.0
      %v990 = vmax.f32 %v916, 0.0
      %v991 = vmax.f32 %v919, 0.0
      %v992 = vmax.f32 %v921, 0.0
      %v993 = vmax.f32 %v924, 0.0
      %v994 = vmax.f32 %v926, 0.0
      %v995 = vmax.f32 %v929, 0.0
      %v996 = vmax.f32 %v931, 0.0
      %v997 = vmax.f32 %v934, 0.0
      %v998 = vmax.f32 %v936, 0.0
      %v999 = vmax.f32 %v939, 0.0
      %v1000 = vmax.f32 %v941, 0.0
      %v1001 = vmax.f32 %v944, 0.0
      %v1002 = vmax.f32 %v946, 0.0
      %v1003 = vmax.f32 %v949, 0.0
      %v1004 = vmax.f32 %v951, 0.0
      %v1005 = vmax.f32 %v954, 0.0
      %v1006 = vmax.f32 %v956, 0.0
      %v1007 = vmax.f32 %v959, 0.0
      %v1008 = vmax.f32 %v961, 0.0
      %v1009 = vmax.f32 %v964, 0.0
      %v1010 = vmax.f32 %v966, 0.0
      %v1011 = vmax.f32 %v969, 0.0
      %v1012 = vmax.f32 %v971, 0.0
      %v1013 = vmax.f32 %v974, 0.0
      %v1014 = vmax.f32 %v976, 0.0
      %v1015 = vmax.f32 %v979, 0.0
      %v1016 = vmax.f32 %v981, 0.0
      %v1017 = vpack.c.bf16 %v983, %v983
      %v1018 = vpack.c.bf16 %v984, %v984
      %v1019 = vpack.c.bf16 %v985, %v985
      %v1020 = vpack.c.bf16 %v986, %v986
      %v1021 = vpack.c.bf16 %v987, %v987
      %v1022 = vpack.c.bf16 %v988, %v988
      %v1023 = vpack.c.bf16 %v989, %v989
      %v1024 = vpack.c.bf16 %v990, %v990
      %v1025 = vpack.c.bf16 %v991, %v991
      %v1026 = vpack.c.bf16 %v992, %v992
      %v1027 = vpack.c.bf16 %v993, %v993
      %v1028 = vpack.c.bf16 %v994, %v994
      %v1029 = vpack.c.bf16 %v995, %v995
      %v1030 = vpack.c.bf16 %v996, %v996
      %v1031 = vpack.c.bf16 %v997, %v997
      %v1032 = vpack.c.bf16 %v998, %v998
      %v1033 = vpack.c.bf16 %v999, %v999
      %v1034 = vpack.c.bf16 %v1000, %v1000
      %v1035 = vpack.c.bf16 %v1001, %v1001
      %v1036 = vpack.c.bf16 %v1002, %v1002
      %v1037 = vpack.c.bf16 %v1003, %v1003
      %v1038 = vpack.c.bf16 %v1004, %v1004
      %v1039 = vpack.c.bf16 %v1005, %v1005
      %v1040 = vpack.c.bf16 %v1006, %v1006
      %v1041 = vpack.c.bf16 %v1007, %v1007
      %v1042 = vpack.c.bf16 %v1008, %v1008
      %v1043 = vpack.c.bf16 %v1009, %v1009
      %v1044 = vpack.c.bf16 %v1010, %v1010
      %v1045 = vpack.c.bf16 %v1011, %v1011
      %v1046 = vpack.c.bf16 %v1012, %v1012
      %v1047 = vpack.c.bf16 %v1013, %v1013
      %v1048 = vpack.c.bf16 %v1014, %v1014
      %v1049 = vpack.c.bf16 %v1015, %v1015
      %v1050 = vpack.c.bf16 %v1016, %v1016
      %vm1051 = vcmask 519168
      %1052 = vst.msk [vmem:[%s175] sm:$0xf] %vm1051, %v1017
      %1053 = vst.msk [vmem:[%s175 + $0x4] sm:$0xf] %vm1051, %v1018
      %1054 = vst.msk [vmem:[%s175 + $0x8] sm:$0xf] %vm1051, %v1019
      %1055 = vst.msk [vmem:[%s175 + $0xc] sm:$0xf] %vm1051, %v1020
      %1056 = vst.msk [vmem:[%s175 + $0x10] sm:$0xf] %vm1051, %v1021
      %1057 = vst.msk [vmem:[%s175 + $0x14] sm:$0xf] %vm1051, %v1022
      %1058 = vst.msk [vmem:[%s175 + $0x18] sm:$0xf] %vm1051, %v1023
      %1059 = vst.msk [vmem:[%s175 + $0x1c] sm:$0xf] %vm1051, %v1024
      %1060 = vst.msk [vmem:[%s175 + $0x20] sm:$0xf] %vm1051, %v1025
      %1061 = vst.msk [vmem:[%s175 + $0x24] sm:$0xf] %vm1051, %v1026
      %1062 = vst.msk [vmem:[%s175 + $0x28] sm:$0xf] %vm1051, %v1027
      %1063 = vst.msk [vmem:[%s175 + $0x2c] sm:$0xf] %vm1051, %v1028
      %1064 = vst.msk [vmem:[%s175 + $0x30] sm:$0xf] %vm1051, %v1029
      %1065 = vst.msk [vmem:[%s175 + $0x34] sm:$0xf] %vm1051, %v1030
      %1066 = vst.msk [vmem:[%s175 + $0x38] sm:$0xf] %vm1051, %v1031
      %1067 = vst.msk [vmem:[%s175 + $0x3c] sm:$0xf] %vm1051, %v1032
      %1068 = vst.msk [vmem:[%s175 + $0x40] sm:$0xf] %vm1051, %v1033
      %1069 = vst.msk [vmem:[%s175 + $0x44] sm:$0xf] %vm1051, %v1034
      %1070 = vst.msk [vmem:[%s175 + $0x48] sm:$0xf] %vm1051, %v1035
      %1071 = vst.msk [vmem:[%s175 + $0x4c] sm:$0xf] %vm1051, %v1036
      %1072 = vst.msk [vmem:[%s175 + $0x50] sm:$0xf] %vm1051, %v1037
      %1073 = vst.msk [vmem:[%s175 + $0x54] sm:$0xf] %vm1051, %v1038
      %1074 = vst.msk [vmem:[%s175 + $0x58] sm:$0xf] %vm1051, %v1039
      %1075 = vst.msk [vmem:[%s175 + $0x5c] sm:$0xf] %vm1051, %v1040
      %1076 = vst.msk [vmem:[%s175 + $0x60] sm:$0xf] %vm1051, %v1041
      %1077 = vst.msk [vmem:[%s175 + $0x64] sm:$0xf] %vm1051, %v1042
      %1078 = vst.msk [vmem:[%s175 + $0x68] sm:$0xf] %vm1051, %v1043
      %1079 = vst.msk [vmem:[%s175 + $0x6c] sm:$0xf] %vm1051, %v1044
      %1080 = vst.msk [vmem:[%s175 + $0x70] sm:$0xf] %vm1051, %v1045
      %1081 = vst.msk [vmem:[%s175 + $0x74] sm:$0xf] %vm1051, %v1046
      %1082 = vst.msk [vmem:[%s175 + $0x78] sm:$0xf] %vm1051, %v1047
      %1083 = vst.msk [vmem:[%s175 + $0x7c] sm:$0xf] %vm1051, %v1048
      %1084 = vst.msk [vmem:[%s175 + $0x80] sm:$0xf] %vm1051, %v1049
      %1085 = vst.msk [vmem:[%s175 + $0x84] sm:$0xf] %vm1051, %v1050
      %s1086 = smul.u32 34, %s14
      %p1087 = scmp.lt.s32.totalorder %s1086, 67
      %s1088 = scalar_select %p1087, %s1086, 67
      %s1089 = smul.addr %s1088, 4
      %s1090 = scalar_lea.vmem %s3, %s1089
      // Predicated region
      $region33: #{simple_cnn_forward.6} parent=31 // pred_check
        %p1091 = pneg %p100
      $region34: #{simple_cnn_forward.6} parent=31 // pred_check_branch
        %1093 = sbr.rel (%p1091) target = $region36
      $region35: #{simple_cnn_forward.6} parent=31 // pred_region
        %s1094 = smul.u32 34, %s14
      $region36: #{simple_cnn_forward.6} parent=31 // pred_fallthru
        _
    $region32: #{simple_cnn_forward.6} parent=5 // pred_fallthru
      _
    %p1095 = scmp.le.s32.totalorder 2, %s9
    // Predicated region
    $region37: #{simple_cnn_forward.6} parent=5 // pred_check
      %p1096 = pneg %p1095
    $region38: #{simple_cnn_forward.6} parent=5 // pred_check_branch
      %1098 = sbr.rel (%p1096) target = $region40
    $region39: #{simple_cnn_forward.6} parent=5 // pred_region
      %s1099 = ssub.s32 %s9, 2
      // Predicated region
      $region41: #{simple_cnn_forward.6} parent=39 // pred_check
        %p1100 = pneg %p106
      $region42: #{simple_cnn_forward.6} parent=39 // pred_check_branch
        %1102 = sbr.rel (%p1100) target = $region44
      $region43: #{simple_cnn_forward.6} parent=39 // pred_region
        %s1103 = smul.u32 34, %s15
        %p1104 = scmp.lt.s32.totalorder %s1103, 67
        %s1105 = scalar_select %p1104, %s1103, 67
        %s1106 = smul.addr %s1105, 4
        %s1107 = scalar_lea.vmem %s3, %s1106
      $region44: #{simple_cnn_forward.6} parent=39 // pred_fallthru
        _
    $region40: #{simple_cnn_forward.6} parent=5 // pred_fallthru
      _
  $region6: #{simple_cnn_forward.6} parent=0 // loop_footer
    %s13 = sadd.s32 1, %s9
  $region7: #{simple_cnn_forward.6} parent=0 // loop_footer_branch
    %8 = sbr.rel target = $region3
  $region8: #{simple_cnn_forward.6} parent=0 // loop_exit
    _

// kernel: simple_cnn_forward.7
$region0: #{simple_cnn_forward.7}
  #allocation0 [shape = 'u32[]', space=smem, size = 0x4, offset = 0x4, fixed_abs, tag = 'smem constant byte address 0x4 - core index']
  #allocation1 [shape = 'u32[72,128]{1,0:T(1,128)}', space=vmem, size = 0x9000, scoped, tag = 'internal scratch']
  %s0 = inlined_call_operand.vmem [shape: bf16[16,17024], index: 0, kind: input, shape index: {}]
  %s1 = inlined_call_operand.vmem [shape: bf16[17024,128], index: 1, kind: input, shape index: {}]
  %s2 = inlined_call_operand.vmem [shape: f32[1,128], index: 2, kind: input, shape index: {}]
  %s3 = inlined_call_operand.vmem [shape: bf16[128,4], index: 3, kind: input, shape index: {}]
  %s4 = inlined_call_operand.vmem [shape: f32[1,4], index: 4, kind: input, shape index: {}]
  %s5 = inlined_call_operand.vmem [shape: f32[16,4], index: 5, kind: output, shape index: {}]
  %s6 = sld [smem:[#allocation0]]
  $region30: #{simple_cnn_forward.7} parent=0
    _
  %s8 = ssub.s32 1, %s6
  %s9 = scalar_select 0, %s8, %s6
  // Predicated region
  $region2: #{simple_cnn_forward.7} parent=0 // pred_check
    _
  $region3: #{simple_cnn_forward.7} parent=0 // pred_check_branch
    %11 = sbr.rel (0) target = $region5
  $region4: #{simple_cnn_forward.7} parent=0 // pred_region
    _
  $region5: #{simple_cnn_forward.7} parent=0 // pred_fallthru
    _
  // Predicated region
  $region6: #{simple_cnn_forward.7} parent=0 // pred_check
    _
  $region7: #{simple_cnn_forward.7} parent=0 // pred_check_branch
    %13 = sbr.rel (0) target = $region9
  $region8: #{simple_cnn_forward.7} parent=0 // pred_region
    _
  $region9: #{simple_cnn_forward.7} parent=0 // pred_fallthru
    _
  // Predicated region
  $region10: #{simple_cnn_forward.7} parent=0 // pred_check
    _
  $region11: #{simple_cnn_forward.7} parent=0 // pred_check_branch
    %15 = sbr.rel (0) target = $region13
  $region12: #{simple_cnn_forward.7} parent=0 // pred_region
    _
  $region13: #{simple_cnn_forward.7} parent=0 // pred_fallthru
    _
  // Predicated region
  $region14: #{simple_cnn_forward.7} parent=0 // pred_check
    _
  $region15: #{simple_cnn_forward.7} parent=0 // pred_check_branch
    %17 = sbr.rel (0) target = $region17
  $region16: #{simple_cnn_forward.7} parent=0 // pred_region
    _
  $region17: #{simple_cnn_forward.7} parent=0 // pred_fallthru
    _
  // Predicated region
  $region18: #{simple_cnn_forward.7} parent=0 // pred_check
    _
  $region19: #{simple_cnn_forward.7} parent=0 // pred_check_branch
    %19 = sbr.rel (0) target = $region21
  $region20: #{simple_cnn_forward.7} parent=0 // pred_region
    _
  $region21: #{simple_cnn_forward.7} parent=0 // pred_fallthru
    _
  %v20 = vld [vmem:[%s0] sm:$0xff]
  %v21 = vld [vmem:[%s0 + $0x8] sm:$0xff]
  %v22 = vld [vmem:[%s0 + $0x10] sm:$0xff]
  %v23 = vld [vmem:[%s0 + $0x18] sm:$0xff]
  %v24 = vld [vmem:[%s0 + $0x20] sm:$0xff]
  %v25 = vld [vmem:[%s0 + $0x28] sm:$0xff]
  %v26 = vld [vmem:[%s0 + $0x30] sm:$0xff]
  %v27 = vld [vmem:[%s0 + $0x38] sm:$0xff]
  %v28 = vld [vmem:[%s0 + $0x40] sm:$0xff]
  %v29 = vld [vmem:[%s0 + $0x48] sm:$0xff]
  %v30 = vld [vmem:[%s0 + $0x50] sm:$0xff]
  %v31 = vld [vmem:[%s0 + $0x58] sm:$0xff]
  %v32 = vld [vmem:[%s0 + $0x60] sm:$0xff]
  %v33 = vld [vmem:[%s0 + $0x68] sm:$0xff]
  %v34 = vld [vmem:[%s0 + $0x70] sm:$0xff]
  %v35 = vld [vmem:[%s0 + $0x78] sm:$0xff]
  %v36 = vld [vmem:[%s0 + $0x80] sm:$0xff]
  %v37 = vld [vmem:[%s0 + $0x88] sm:$0xff]
  %v38 = vld [vmem:[%s0 + $0x90] sm:$0xff]
  %v39 = vld [vmem:[%s0 + $0x98] sm:$0xff]
  %v40 = vld [vmem:[%s0 + $0xa0] sm:$0xff]
  %v41 = vld [vmem:[%s0 + $0xa8] sm:$0xff]
  %v42 = vld [vmem:[%s0 + $0xb0] sm:$0xff]
  %v43 = vld [vmem:[%s0 + $0xb8] sm:$0xff]
  %v44 = vld [vmem:[%s0 + $0xc0] sm:$0xff]
  %v45 = vld [vmem:[%s0 + $0xc8] sm:$0xff]
  %v46 = vld [vmem:[%s0 + $0xd0] sm:$0xff]
  %v47 = vld [vmem:[%s0 + $0xd8] sm:$0xff]
  %v48 = vld [vmem:[%s0 + $0xe0] sm:$0xff]
  %v49 = vld [vmem:[%s0 + $0xe8] sm:$0xff]
  %v50 = vld [vmem:[%s0 + $0xf0] sm:$0xff]
  %v51 = vld [vmem:[%s0 + $0xf8] sm:$0xff]
  %v52 = vld [vmem:[%s0 + $0x100] sm:$0xff]
  %v53 = vld [vmem:[%s0 + $0x108] sm:$0xff]
  %v54 = vld [vmem:[%s0 + $0x110] sm:$0xff]
  %v55 = vld [vmem:[%s0 + $0x118] sm:$0xff]
  %v56 = vld [vmem:[%s0 + $0x120] sm:$0xff]
  %v57 = vld [vmem:[%s0 + $0x128] sm:$0xff]
  %v58 = vld [vmem:[%s0 + $0x130] sm:$0xff]
  %v59 = vld [vmem:[%s0 + $0x138] sm:$0xff]
  %v60 = vld [vmem:[%s0 + $0x140] sm:$0xff]
  %v61 = vld [vmem:[%s0 + $0x148] sm:$0xff]
  %v62 = vld [vmem:[%s0 + $0x150] sm:$0xff]
  %v63 = vld [vmem:[%s0 + $0x158] sm:$0xff]
  %v64 = vld [vmem:[%s0 + $0x160] sm:$0xff]
  %v65 = vld [vmem:[%s0 + $0x168] sm:$0xff]
  %v66 = vld [vmem:[%s0 + $0x170] sm:$0xff]
  %v67 = vld [vmem:[%s0 + $0x178] sm:$0xff]
  %v68 = vld [vmem:[%s0 + $0x180] sm:$0xff]
  %v69 = vld [vmem:[%s0 + $0x188] sm:$0xff]
  %v70 = vld [vmem:[%s0 + $0x190] sm:$0xff]
  %v71 = vld [vmem:[%s0 + $0x198] sm:$0xff]
  %v72 = vld [vmem:[%s0 + $0x1a0] sm:$0xff]
  %v73 = vld [vmem:[%s0 + $0x1a8] sm:$0xff]
  %v74 = vld [vmem:[%s0 + $0x1b0] sm:$0xff]
  %v75 = vld [vmem:[%s0 + $0x1b8] sm:$0xff]
  %v76 = vld [vmem:[%s0 + $0x1c0] sm:$0xff]
  %v77 = vld [vmem:[%s0 + $0x1c8] sm:$0xff]
  %v78 = vld [vmem:[%s0 + $0x1d0] sm:$0xff]
  %v79 = vld [vmem:[%s0 + $0x1d8] sm:$0xff]
  %v80 = vld [vmem:[%s0 + $0x1e0] sm:$0xff]
  %v81 = vld [vmem:[%s0 + $0x1e8] sm:$0xff]
  %v82 = vld [vmem:[%s0 + $0x1f0] sm:$0xff]
  %v83 = vld [vmem:[%s0 + $0x1f8] sm:$0xff]
  %v84 = vld [vmem:[%s0 + $0x200] sm:$0xff]
  %v85 = vld [vmem:[%s0 + $0x208] sm:$0xff]
  %v86 = vld [vmem:[%s0 + $0x210] sm:$0xf]
  %v87 = vld [vmem:[%s0 + $0x214] sm:$0xff]
  %v88 = vld [vmem:[%s0 + $0x21c] sm:$0xff]
  %v89 = vld [vmem:[%s0 + $0x224] sm:$0xff]
  %v90 = vld [vmem:[%s0 + $0x22c] sm:$0xff]
  %v91 = vld [vmem:[%s0 + $0x234] sm:$0xff]
  %v92 = vld [vmem:[%s0 + $0x23c] sm:$0xff]
  %v93 = vld [vmem:[%s0 + $0x244] sm:$0xff]
  %v94 = vld [vmem:[%s0 + $0x24c] sm:$0xff]
  %v95 = vld [vmem:[%s0 + $0x254] sm:$0xff]
  %v96 = vld [vmem:[%s0 + $0x25c] sm:$0xff]
  %v97 = vld [vmem:[%s0 + $0x264] sm:$0xff]
  %v98 = vld [vmem:[%s0 + $0x26c] sm:$0xff]
  %v99 = vld [vmem:[%s0 + $0x274] sm:$0xff]
  %v100 = vld [vmem:[%s0 + $0x27c] sm:$0xff]
  %v101 = vld [vmem:[%s0 + $0x284] sm:$0xff]
  %v102 = vld [vmem:[%s0 + $0x28c] sm:$0xff]
  %v103 = vld [vmem:[%s0 + $0x294] sm:$0xff]
  %v104 = vld [vmem:[%s0 + $0x29c] sm:$0xff]
  %v105 = vld [vmem:[%s0 + $0x2a4] sm:$0xff]
  %v106 = vld [vmem:[%s0 + $0x2ac] sm:$0xff]
  %v107 = vld [vmem:[%s0 + $0x2b4] sm:$0xff]
  %v108 = vld [vmem:[%s0 + $0x2bc] sm:$0xff]
  %v109 = vld [vmem:[%s0 + $0x2c4] sm:$0xff]
  %v110 = vld [vmem:[%s0 + $0x2cc] sm:$0xff]
  %v111 = vld [vmem:[%s0 + $0x2d4] sm:$0xff]
  %v112 = vld [vmem:[%s0 + $0x2dc] sm:$0xff]
  %v113 = vld [vmem:[%s0 + $0x2e4] sm:$0xff]
  %v114 = vld [vmem:[%s0 + $0x2ec] sm:$0xff]
  %v115 = vld [vmem:[%s0 + $0x2f4] sm:$0xff]
  %v116 = vld [vmem:[%s0 + $0x2fc] sm:$0xff]
  %v117 = vld [vmem:[%s0 + $0x304] sm:$0xff]
  %v118 = vld [vmem:[%s0 + $0x30c] sm:$0xff]
  %v119 = vld [vmem:[%s0 + $0x314] sm:$0xff]
  %v120 = vld [vmem:[%s0 + $0x31c] sm:$0xff]
  %v121 = vld [vmem:[%s0 + $0x324] sm:$0xff]
  %v122 = vld [vmem:[%s0 + $0x32c] sm:$0xff]
  %v123 = vld [vmem:[%s0 + $0x334] sm:$0xff]
  %v124 = vld [vmem:[%s0 + $0x33c] sm:$0xff]
  %v125 = vld [vmem:[%s0 + $0x344] sm:$0xff]
  %v126 = vld [vmem:[%s0 + $0x34c] sm:$0xff]
  %v127 = vld [vmem:[%s0 + $0x354] sm:$0xff]
  %v128 = vld [vmem:[%s0 + $0x35c] sm:$0xff]
  %v129 = vld [vmem:[%s0 + $0x364] sm:$0xff]
  %v130 = vld [vmem:[%s0 + $0x36c] sm:$0xff]
  %v131 = vld [vmem:[%s0 + $0x374] sm:$0xff]
  %v132 = vld [vmem:[%s0 + $0x37c] sm:$0xff]
  %v133 = vld [vmem:[%s0 + $0x384] sm:$0xff]
  %v134 = vld [vmem:[%s0 + $0x38c] sm:$0xff]
  %v135 = vld [vmem:[%s0 + $0x394] sm:$0xff]
  %v136 = vld [vmem:[%s0 + $0x39c] sm:$0xff]
  %v137 = vld [vmem:[%s0 + $0x3a4] sm:$0xff]
  %v138 = vld [vmem:[%s0 + $0x3ac] sm:$0xff]
  %v139 = vld [vmem:[%s0 + $0x3b4] sm:$0xff]
  %v140 = vld [vmem:[%s0 + $0x3bc] sm:$0xff]
  %v141 = vld [vmem:[%s0 + $0x3c4] sm:$0xff]
  %v142 = vld [vmem:[%s0 + $0x3cc] sm:$0xff]
  %v143 = vld [vmem:[%s0 + $0x3d4] sm:$0xff]
  %v144 = vld [vmem:[%s0 + $0x3dc] sm:$0xff]
  %v145 = vld [vmem:[%s0 + $0x3e4] sm:$0xff]
  %v146 = vld [vmem:[%s0 + $0x3ec] sm:$0xff]
  %v147 = vld [vmem:[%s0 + $0x3f4] sm:$0xff]
  %v148 = vld [vmem:[%s0 + $0x3fc] sm:$0xff]
  %v149 = vld [vmem:[%s0 + $0x404] sm:$0xff]
  %v150 = vld [vmem:[%s0 + $0x40c] sm:$0xff]
  %v151 = vld [vmem:[%s0 + $0x414] sm:$0xff]
  %v152 = vld [vmem:[%s0 + $0x41c] sm:$0xff]
  %v153 = vld [vmem:[%s0 + $0x424] sm:$0xf]
  %v154 = vld [vmem:[%s1] sm:$0xf]
  %v155 = vld [vmem:[%s1 + $0x4] sm:$0xf]
  %v156 = vld [vmem:[%s1 + $0x8] sm:$0xf]
  %v157 = vld [vmem:[%s1 + $0xc] sm:$0xf]
  %v158 = vld [vmem:[%s1 + $0x10] sm:$0xf]
  %v159 = vld [vmem:[%s1 + $0x14] sm:$0xf]
  %v160 = vld [vmem:[%s1 + $0x18] sm:$0xf]
  %v161 = vld [vmem:[%s1 + $0x1c] sm:$0xf]
  %v162 = vld [vmem:[%s1 + $0x20] sm:$0xf]
  %v163 = vld [vmem:[%s1 + $0x24] sm:$0xf]
  %v164 = vld [vmem:[%s1 + $0x28] sm:$0xf]
  %v165 = vld [vmem:[%s1 + $0x2c] sm:$0xf]
  %v166 = vld [vmem:[%s1 + $0x30] sm:$0xf]
  %v167 = vld [vmem:[%s1 + $0x34] sm:$0xf]
  %v168 = vld [vmem:[%s1 + $0x38] sm:$0xf]
  %v169 = vld [vmem:[%s1 + $0x3c] sm:$0xf]
  %v170 = vld [vmem:[%s1 + $0x40] sm:$0xf]
  %v171 = vld [vmem:[%s1 + $0x44] sm:$0xf]
  %v172 = vld [vmem:[%s1 + $0x48] sm:$0xf]
  %v173 = vld [vmem:[%s1 + $0x4c] sm:$0xf]
  %v174 = vld [vmem:[%s1 + $0x50] sm:$0xf]
  %v175 = vld [vmem:[%s1 + $0x54] sm:$0xf]
  %v176 = vld [vmem:[%s1 + $0x58] sm:$0xf]
  %v177 = vld [vmem:[%s1 + $0x5c] sm:$0xf]
  %v178 = vld [vmem:[%s1 + $0x60] sm:$0xf]
  %v179 = vld [vmem:[%s1 + $0x64] sm:$0xf]
  %v180 = vld [vmem:[%s1 + $0x68] sm:$0xf]
  %v181 = vld [vmem:[%s1 + $0x6c] sm:$0xf]
  %v182 = vld [vmem:[%s1 + $0x70] sm:$0xf]
  %v183 = vld [vmem:[%s1 + $0x74] sm:$0xf]
  %v184 = vld [vmem:[%s1 + $0x78] sm:$0xf]
  %v185 = vld [vmem:[%s1 + $0x7c] sm:$0xf]
  %v186 = vld [vmem:[%s1 + $0x80] sm:$0xf]
  %v187 = vld [vmem:[%s1 + $0x84] sm:$0xf]
  %v188 = vld [vmem:[%s1 + $0x88] sm:$0xf]
  %v189 = vld [vmem:[%s1 + $0x8c] sm:$0xf]
  %v190 = vld [vmem:[%s1 + $0x90] sm:$0xf]
  %v191 = vld [vmem:[%s1 + $0x94] sm:$0xf]
  %v192 = vld [vmem:[%s1 + $0x98] sm:$0xf]
  %v193 = vld [vmem:[%s1 + $0x9c] sm:$0xf]
  %v194 = vld [vmem:[%s1 + $0xa0] sm:$0xf]
  %v195 = vld [vmem:[%s1 + $0xa4] sm:$0xf]
  %v196 = vld [vmem:[%s1 + $0xa8] sm:$0xf]
  %v197 = vld [vmem:[%s1 + $0xac] sm:$0xf]
  %v198 = vld [vmem:[%s1 + $0xb0] sm:$0xf]
  %v199 = vld [vmem:[%s1 + $0xb4] sm:$0xf]
  %v200 = vld [vmem:[%s1 + $0xb8] sm:$0xf]
  %v201 = vld [vmem:[%s1 + $0xbc] sm:$0xf]
  %v202 = vld [vmem:[%s1 + $0xc0] sm:$0xf]
  %v203 = vld [vmem:[%s1 + $0xc4] sm:$0xf]
  %v204 = vld [vmem:[%s1 + $0xc8] sm:$0xf]
  %v205 = vld [vmem:[%s1 + $0xcc] sm:$0xf]
  %v206 = vld [vmem:[%s1 + $0xd0] sm:$0xf]
  %v207 = vld [vmem:[%s1 + $0xd4] sm:$0xf]
  %v208 = vld [vmem:[%s1 + $0xd8] sm:$0xf]
  %v209 = vld [vmem:[%s1 + $0xdc] sm:$0xf]
  %v210 = vld [vmem:[%s1 + $0xe0] sm:$0xf]
  %v211 = vld [vmem:[%s1 + $0xe4] sm:$0xf]
  %v212 = vld [vmem:[%s1 + $0xe8] sm:$0xf]
  %v213 = vld [vmem:[%s1 + $0xec] sm:$0xf]
  %v214 = vld [vmem:[%s1 + $0xf0] sm:$0xf]
  %v215 = vld [vmem:[%s1 + $0xf4] sm:$0xf]
  %v216 = vld [vmem:[%s1 + $0xf8] sm:$0xf]
  %v217 = vld [vmem:[%s1 + $0xfc] sm:$0xf]
  %v218 = vld [vmem:[%s1 + $0x100] sm:$0xf]
  %v219 = vld [vmem:[%s1 + $0x104] sm:$0xf]
  %v220 = vld [vmem:[%s1 + $0x108] sm:$0xf]
  %v221 = vld [vmem:[%s1 + $0x10c] sm:$0xf]
  %v222 = vld [vmem:[%s1 + $0x110] sm:$0xf]
  %v223 = vld [vmem:[%s1 + $0x114] sm:$0xf]
  %v224 = vld [vmem:[%s1 + $0x118] sm:$0xf]
  %v225 = vld [vmem:[%s1 + $0x11c] sm:$0xf]
  %v226 = vld [vmem:[%s1 + $0x120] sm:$0xf]
  %v227 = vld [vmem:[%s1 + $0x124] sm:$0xf]
  %v228 = vld [vmem:[%s1 + $0x128] sm:$0xf]
  %v229 = vld [vmem:[%s1 + $0x12c] sm:$0xf]
  %v230 = vld [vmem:[%s1 + $0x130] sm:$0xf]
  %v231 = vld [vmem:[%s1 + $0x134] sm:$0xf]
  %v232 = vld [vmem:[%s1 + $0x138] sm:$0xf]
  %v233 = vld [vmem:[%s1 + $0x13c] sm:$0xf]
  %v234 = vld [vmem:[%s1 + $0x140] sm:$0xf]
  %v235 = vld [vmem:[%s1 + $0x144] sm:$0xf]
  %v236 = vld [vmem:[%s1 + $0x148] sm:$0xf]
  %v237 = vld [vmem:[%s1 + $0x14c] sm:$0xf]
  %v238 = vld [vmem:[%s1 + $0x150] sm:$0xf]
  %v239 = vld [vmem:[%s1 + $0x154] sm:$0xf]
  %v240 = vld [vmem:[%s1 + $0x158] sm:$0xf]
  %v241 = vld [vmem:[%s1 + $0x15c] sm:$0xf]
  %v242 = vld [vmem:[%s1 + $0x160] sm:$0xf]
  %v243 = vld [vmem:[%s1 + $0x164] sm:$0xf]
  %v244 = vld [vmem:[%s1 + $0x168] sm:$0xf]
  %v245 = vld [vmem:[%s1 + $0x16c] sm:$0xf]
  %v246 = vld [vmem:[%s1 + $0x170] sm:$0xf]
  %v247 = vld [vmem:[%s1 + $0x174] sm:$0xf]
  %v248 = vld [vmem:[%s1 + $0x178] sm:$0xf]
  %v249 = vld [vmem:[%s1 + $0x17c] sm:$0xf]
  %v250 = vld [vmem:[%s1 + $0x180] sm:$0xf]
  %v251 = vld [vmem:[%s1 + $0x184] sm:$0xf]
  %v252 = vld [vmem:[%s1 + $0x188] sm:$0xf]
  %v253 = vld [vmem:[%s1 + $0x18c] sm:$0xf]
  %v254 = vld [vmem:[%s1 + $0x190] sm:$0xf]
  %v255 = vld [vmem:[%s1 + $0x194] sm:$0xf]
  %v256 = vld [vmem:[%s1 + $0x198] sm:$0xf]
  %v257 = vld [vmem:[%s1 + $0x19c] sm:$0xf]
  %v258 = vld [vmem:[%s1 + $0x1a0] sm:$0xf]
  %v259 = vld [vmem:[%s1 + $0x1a4] sm:$0xf]
  %v260 = vld [vmem:[%s1 + $0x1a8] sm:$0xf]
  %v261 = vld [vmem:[%s1 + $0x1ac] sm:$0xf]
  %v262 = vld [vmem:[%s1 + $0x1b0] sm:$0xf]
  %v263 = vld [vmem:[%s1 + $0x1b4] sm:$0xf]
  %v264 = vld [vmem:[%s1 + $0x1b8] sm:$0xf]
  %v265 = vld [vmem:[%s1 + $0x1bc] sm:$0xf]
  %v266 = vld [vmem:[%s1 + $0x1c0] sm:$0xf]
  %v267 = vld [vmem:[%s1 + $0x1c4] sm:$0xf]
  %v268 = vld [vmem:[%s1 + $0x1c8] sm:$0xf]
  %v269 = vld [vmem:[%s1 + $0x1cc] sm:$0xf]
  %v270 = vld [vmem:[%s1 + $0x1d0] sm:$0xf]
  %v271 = vld [vmem:[%s1 + $0x1d4] sm:$0xf]
  %v272 = vld [vmem:[%s1 + $0x1d8] sm:$0xf]
  %v273 = vld [vmem:[%s1 + $0x1dc] sm:$0xf]
  %v274 = vld [vmem:[%s1 + $0x1e0] sm:$0xf]
  %v275 = vld [vmem:[%s1 + $0x1e4] sm:$0xf]
  %v276 = vld [vmem:[%s1 + $0x1e8] sm:$0xf]
  %v277 = vld [vmem:[%s1 + $0x1ec] sm:$0xf]
  %v278 = vld [vmem:[%s1 + $0x1f0] sm:$0xf]
  %v279 = vld [vmem:[%s1 + $0x1f4] sm:$0xf]
  %v280 = vld [vmem:[%s1 + $0x1f8] sm:$0xf]
  %v281 = vld [vmem:[%s1 + $0x1fc] sm:$0xf]
  %v282 = vld [vmem:[%s1 + $0x200] sm:$0xf]
  %v283 = vld [vmem:[%s1 + $0x204] sm:$0xf]
  %v284 = vld [vmem:[%s1 + $0x208] sm:$0xf]
  %v285 = vld [vmem:[%s1 + $0x20c] sm:$0xf]
  %v286 = vld [vmem:[%s1 + $0x210] sm:$0xf]
  %v287 = vld [vmem:[%s1 + $0x214] sm:$0xf]
  %v288 = vld [vmem:[%s1 + $0x218] sm:$0xf]
  %v289 = vld [vmem:[%s1 + $0x21c] sm:$0xf]
  %v290 = vld [vmem:[%s1 + $0x220] sm:$0xf]
  %v291 = vld [vmem:[%s1 + $0x224] sm:$0xf]
  %v292 = vld [vmem:[%s1 + $0x228] sm:$0xf]
  %v293 = vld [vmem:[%s1 + $0x22c] sm:$0xf]
  %v294 = vld [vmem:[%s1 + $0x230] sm:$0xf]
  %v295 = vld [vmem:[%s1 + $0x234] sm:$0xf]
  %v296 = vld [vmem:[%s1 + $0x238] sm:$0xf]
  %v297 = vld [vmem:[%s1 + $0x23c] sm:$0xf]
  %v298 = vld [vmem:[%s1 + $0x240] sm:$0xf]
  %v299 = vld [vmem:[%s1 + $0x244] sm:$0xf]
  %v300 = vld [vmem:[%s1 + $0x248] sm:$0xf]
  %v301 = vld [vmem:[%s1 + $0x24c] sm:$0xf]
  %v302 = vld [vmem:[%s1 + $0x250] sm:$0xf]
  %v303 = vld [vmem:[%s1 + $0x254] sm:$0xf]
  %v304 = vld [vmem:[%s1 + $0x258] sm:$0xf]
  %v305 = vld [vmem:[%s1 + $0x25c] sm:$0xf]
  %v306 = vld [vmem:[%s1 + $0x260] sm:$0xf]
  %v307 = vld [vmem:[%s1 + $0x264] sm:$0xf]
  %v308 = vld [vmem:[%s1 + $0x268] sm:$0xf]
  %v309 = vld [vmem:[%s1 + $0x26c] sm:$0xf]
  %v310 = vld [vmem:[%s1 + $0x270] sm:$0xf]
  %v311 = vld [vmem:[%s1 + $0x274] sm:$0xf]
  %v312 = vld [vmem:[%s1 + $0x278] sm:$0xf]
  %v313 = vld [vmem:[%s1 + $0x27c] sm:$0xf]
  %v314 = vld [vmem:[%s1 + $0x280] sm:$0xf]
  %v315 = vld [vmem:[%s1 + $0x284] sm:$0xf]
  %v316 = vld [vmem:[%s1 + $0x288] sm:$0xf]
  %v317 = vld [vmem:[%s1 + $0x28c] sm:$0xf]
  %v318 = vld [vmem:[%s1 + $0x290] sm:$0xf]
  %v319 = vld [vmem:[%s1 + $0x294] sm:$0xf]
  %v320 = vld [vmem:[%s1 + $0x298] sm:$0xf]
  %v321 = vld [vmem:[%s1 + $0x29c] sm:$0xf]
  %v322 = vld [vmem:[%s1 + $0x2a0] sm:$0xf]
  %v323 = vld [vmem:[%s1 + $0x2a4] sm:$0xf]
  %v324 = vld [vmem:[%s1 + $0x2a8] sm:$0xf]
  %v325 = vld [vmem:[%s1 + $0x2ac] sm:$0xf]
  %v326 = vld [vmem:[%s1 + $0x2b0] sm:$0xf]
  %v327 = vld [vmem:[%s1 + $0x2b4] sm:$0xf]
  %v328 = vld [vmem:[%s1 + $0x2b8] sm:$0xf]
  %v329 = vld [vmem:[%s1 + $0x2bc] sm:$0xf]
  %v330 = vld [vmem:[%s1 + $0x2c0] sm:$0xf]
  %v331 = vld [vmem:[%s1 + $0x2c4] sm:$0xf]
  %v332 = vld [vmem:[%s1 + $0x2c8] sm:$0xf]
  %v333 = vld [vmem:[%s1 + $0x2cc] sm:$0xf]
  %v334 = vld [vmem:[%s1 + $0x2d0] sm:$0xf]
  %v335 = vld [vmem:[%s1 + $0x2d4] sm:$0xf]
  %v336 = vld [vmem:[%s1 + $0x2d8] sm:$0xf]
  %v337 = vld [vmem:[%s1 + $0x2dc] sm:$0xf]
  %v338 = vld [vmem:[%s1 + $0x2e0] sm:$0xf]
  %v339 = vld [vmem:[%s1 + $0x2e4] sm:$0xf]
  %v340 = vld [vmem:[%s1 + $0x2e8] sm:$0xf]
  %v341 = vld [vmem:[%s1 + $0x2ec] sm:$0xf]
  %v342 = vld [vmem:[%s1 + $0x2f0] sm:$0xf]
  %v343 = vld [vmem:[%s1 + $0x2f4] sm:$0xf]
  %v344 = vld [vmem:[%s1 + $0x2f8] sm:$0xf]
  %v345 = vld [vmem:[%s1 + $0x2fc] sm:$0xf]
  %v346 = vld [vmem:[%s1 + $0x300] sm:$0xf]
  %v347 = vld [vmem:[%s1 + $0x304] sm:$0xf]
  %v348 = vld [vmem:[%s1 + $0x308] sm:$0xf]
  %v349 = vld [vmem:[%s1 + $0x30c] sm:$0xf]
  %v350 = vld [vmem:[%s1 + $0x310] sm:$0xf]
  %v351 = vld [vmem:[%s1 + $0x314] sm:$0xf]
  %v352 = vld [vmem:[%s1 + $0x318] sm:$0xf]
  %v353 = vld [vmem:[%s1 + $0x31c] sm:$0xf]
  %v354 = vld [vmem:[%s1 + $0x320] sm:$0xf]
  %v355 = vld [vmem:[%s1 + $0x324] sm:$0xf]
  %v356 = vld [vmem:[%s1 + $0x328] sm:$0xf]
  %v357 = vld [vmem:[%s1 + $0x32c] sm:$0xf]
  %v358 = vld [vmem:[%s1 + $0x330] sm:$0xf]
  %v359 = vld [vmem:[%s1 + $0x334] sm:$0xf]
  %v360 = vld [vmem:[%s1 + $0x338] sm:$0xf]
  %v361 = vld [vmem:[%s1 + $0x33c] sm:$0xf]
  %v362 = vld [vmem:[%s1 + $0x340] sm:$0xf]
  %v363 = vld [vmem:[%s1 + $0x344] sm:$0xf]
  %v364 = vld [vmem:[%s1 + $0x348] sm:$0xf]
  %v365 = vld [vmem:[%s1 + $0x34c] sm:$0xf]
  %v366 = vld [vmem:[%s1 + $0x350] sm:$0xf]
  %v367 = vld [vmem:[%s1 + $0x354] sm:$0xf]
  %v368 = vld [vmem:[%s1 + $0x358] sm:$0xf]
  %v369 = vld [vmem:[%s1 + $0x35c] sm:$0xf]
  %v370 = vld [vmem:[%s1 + $0x360] sm:$0xf]
  %v371 = vld [vmem:[%s1 + $0x364] sm:$0xf]
  %v372 = vld [vmem:[%s1 + $0x368] sm:$0xf]
  %v373 = vld [vmem:[%s1 + $0x36c] sm:$0xf]
  %v374 = vld [vmem:[%s1 + $0x370] sm:$0xf]
  %v375 = vld [vmem:[%s1 + $0x374] sm:$0xf]
  %v376 = vld [vmem:[%s1 + $0x378] sm:$0xf]
  %v377 = vld [vmem:[%s1 + $0x37c] sm:$0xf]
  %v378 = vld [vmem:[%s1 + $0x380] sm:$0xf]
  %v379 = vld [vmem:[%s1 + $0x384] sm:$0xf]
  %v380 = vld [vmem:[%s1 + $0x388] sm:$0xf]
  %v381 = vld [vmem:[%s1 + $0x38c] sm:$0xf]
  %v382 = vld [vmem:[%s1 + $0x390] sm:$0xf]
  %v383 = vld [vmem:[%s1 + $0x394] sm:$0xf]
  %v384 = vld [vmem:[%s1 + $0x398] sm:$0xf]
  %v385 = vld [vmem:[%s1 + $0x39c] sm:$0xf]
  %v386 = vld [vmem:[%s1 + $0x3a0] sm:$0xf]
  %v387 = vld [vmem:[%s1 + $0x3a4] sm:$0xf]
  %v388 = vld [vmem:[%s1 + $0x3a8] sm:$0xf]
  %v389 = vld [vmem:[%s1 + $0x3ac] sm:$0xf]
  %v390 = vld [vmem:[%s1 + $0x3b0] sm:$0xf]
  %v391 = vld [vmem:[%s1 + $0x3b4] sm:$0xf]
  %v392 = vld [vmem:[%s1 + $0x3b8] sm:$0xf]
  %v393 = vld [vmem:[%s1 + $0x3bc] sm:$0xf]
  %v394 = vld [vmem:[%s1 + $0x3c0] sm:$0xf]
  %v395 = vld [vmem:[%s1 + $0x3c4] sm:$0xf]
  %v396 = vld [vmem:[%s1 + $0x3c8] sm:$0xf]
  %v397 = vld [vmem:[%s1 + $0x3cc] sm:$0xf]
  %v398 = vld [vmem:[%s1 + $0x3d0] sm:$0xf]
  %v399 = vld [vmem:[%s1 + $0x3d4] sm:$0xf]
  %v400 = vld [vmem:[%s1 + $0x3d8] sm:$0xf]
  %v401 = vld [vmem:[%s1 + $0x3dc] sm:$0xf]
  %v402 = vld [vmem:[%s1 + $0x3e0] sm:$0xf]
  %v403 = vld [vmem:[%s1 + $0x3e4] sm:$0xf]
  %v404 = vld [vmem:[%s1 + $0x3e8] sm:$0xf]
  %v405 = vld [vmem:[%s1 + $0x3ec] sm:$0xf]
  %v406 = vld [vmem:[%s1 + $0x3f0] sm:$0xf]
  %v407 = vld [vmem:[%s1 + $0x3f4] sm:$0xf]
  %v408 = vld [vmem:[%s1 + $0x3f8] sm:$0xf]
  %v409 = vld [vmem:[%s1 + $0x3fc] sm:$0xf]
  %v410 = vld [vmem:[%s1 + $0x400] sm:$0xf]
  %v411 = vld [vmem:[%s1 + $0x404] sm:$0xf]
  %v412 = vld [vmem:[%s1 + $0x408] sm:$0xf]
  %v413 = vld [vmem:[%s1 + $0x40c] sm:$0xf]
  %v414 = vld [vmem:[%s1 + $0x410] sm:$0xf]
  %v415 = vld [vmem:[%s1 + $0x414] sm:$0xf]
  %v416 = vld [vmem:[%s1 + $0x418] sm:$0xf]
  %v417 = vld [vmem:[%s1 + $0x41c] sm:$0xf]
  %v418 = vld [vmem:[%s1 + $0x420] sm:$0xf]
  %v419 = vld [vmem:[%s1 + $0x424] sm:$0xf]
  %v420 = vld [vmem:[%s1 + $0x428] sm:$0xf]
  %v421 = vld [vmem:[%s1 + $0x42c] sm:$0xf]
  %v422 = vld [vmem:[%s1 + $0x430] sm:$0xf]
  %v423 = vld [vmem:[%s1 + $0x434] sm:$0xf]
  %v424 = vld [vmem:[%s1 + $0x438] sm:$0xf]
  %v425 = vld [vmem:[%s1 + $0x43c] sm:$0xf]
  %v426 = vld [vmem:[%s1 + $0x440] sm:$0xf]
  %v427 = vld [vmem:[%s1 + $0x444] sm:$0xf]
  %v428 = vld [vmem:[%s1 + $0x448] sm:$0xf]
  %v429 = vld [vmem:[%s1 + $0x44c] sm:$0xf]
  %v430 = vld [vmem:[%s1 + $0x450] sm:$0xf]
  %v431 = vld [vmem:[%s1 + $0x454] sm:$0xf]
  %v432 = vld [vmem:[%s1 + $0x458] sm:$0xf]
  %v433 = vld [vmem:[%s1 + $0x45c] sm:$0xf]
  %v434 = vld [vmem:[%s1 + $0x460] sm:$0xf]
  %v435 = vld [vmem:[%s1 + $0x464] sm:$0xf]
  %v436 = vld [vmem:[%s1 + $0x468] sm:$0xf]
  %v437 = vld [vmem:[%s1 + $0x46c] sm:$0xf]
  %v438 = vld [vmem:[%s1 + $0x470] sm:$0xf]
  %v439 = vld [vmem:[%s1 + $0x474] sm:$0xf]
  %v440 = vld [vmem:[%s1 + $0x478] sm:$0xf]
  %v441 = vld [vmem:[%s1 + $0x47c] sm:$0xf]
  %v442 = vld [vmem:[%s1 + $0x480] sm:$0xf]
  %v443 = vld [vmem:[%s1 + $0x484] sm:$0xf]
  %v444 = vld [vmem:[%s1 + $0x488] sm:$0xf]
  %v445 = vld [vmem:[%s1 + $0x48c] sm:$0xf]
  %v446 = vld [vmem:[%s1 + $0x490] sm:$0xf]
  %v447 = vld [vmem:[%s1 + $0x494] sm:$0xf]
  %v448 = vld [vmem:[%s1 + $0x498] sm:$0xf]
  %v449 = vld [vmem:[%s1 + $0x49c] sm:$0xf]
  %v450 = vld [vmem:[%s1 + $0x4a0] sm:$0xf]
  %v451 = vld [vmem:[%s1 + $0x4a4] sm:$0xf]
  %v452 = vld [vmem:[%s1 + $0x4a8] sm:$0xf]
  %v453 = vld [vmem:[%s1 + $0x4ac] sm:$0xf]
  %v454 = vld [vmem:[%s1 + $0x4b0] sm:$0xf]
  %v455 = vld [vmem:[%s1 + $0x4b4] sm:$0xf]
  %v456 = vld [vmem:[%s1 + $0x4b8] sm:$0xf]
  %v457 = vld [vmem:[%s1 + $0x4bc] sm:$0xf]
  %v458 = vld [vmem:[%s1 + $0x4c0] sm:$0xf]
  %v459 = vld [vmem:[%s1 + $0x4c4] sm:$0xf]
  %v460 = vld [vmem:[%s1 + $0x4c8] sm:$0xf]
  %v461 = vld [vmem:[%s1 + $0x4cc] sm:$0xf]
  %v462 = vld [vmem:[%s1 + $0x4d0] sm:$0xf]
  %v463 = vld [vmem:[%s1 + $0x4d4] sm:$0xf]
  %v464 = vld [vmem:[%s1 + $0x4d8] sm:$0xf]
  %v465 = vld [vmem:[%s1 + $0x4dc] sm:$0xf]
  %v466 = vld [vmem:[%s1 + $0x4e0] sm:$0xf]
  %v467 = vld [vmem:[%s1 + $0x4e4] sm:$0xf]
  %v468 = vld [vmem:[%s1 + $0x4e8] sm:$0xf]
  %v469 = vld [vmem:[%s1 + $0x4ec] sm:$0xf]
  %v470 = vld [vmem:[%s1 + $0x4f0] sm:$0xf]
  %v471 = vld [vmem:[%s1 + $0x4f4] sm:$0xf]
  %v472 = vld [vmem:[%s1 + $0x4f8] sm:$0xf]
  %v473 = vld [vmem:[%s1 + $0x4fc] sm:$0xf]
  %v474 = vld [vmem:[%s1 + $0x500] sm:$0xf]
  %v475 = vld [vmem:[%s1 + $0x504] sm:$0xf]
  %v476 = vld [vmem:[%s1 + $0x508] sm:$0xf]
  %v477 = vld [vmem:[%s1 + $0x50c] sm:$0xf]
  %v478 = vld [vmem:[%s1 + $0x510] sm:$0xf]
  %v479 = vld [vmem:[%s1 + $0x514] sm:$0xf]
  %v480 = vld [vmem:[%s1 + $0x518] sm:$0xf]
  %v481 = vld [vmem:[%s1 + $0x51c] sm:$0xf]
  %v482 = vld [vmem:[%s1 + $0x520] sm:$0xf]
  %v483 = vld [vmem:[%s1 + $0x524] sm:$0xf]
  %v484 = vld [vmem:[%s1 + $0x528] sm:$0xf]
  %v485 = vld [vmem:[%s1 + $0x52c] sm:$0xf]
  %v486 = vld [vmem:[%s1 + $0x530] sm:$0xf]
  %v487 = vld [vmem:[%s1 + $0x534] sm:$0xf]
  %v488 = vld [vmem:[%s1 + $0x538] sm:$0xf]
  %v489 = vld [vmem:[%s1 + $0x53c] sm:$0xf]
  %v490 = vld [vmem:[%s1 + $0x540] sm:$0xf]
  %v491 = vld [vmem:[%s1 + $0x544] sm:$0xf]
  %v492 = vld [vmem:[%s1 + $0x548] sm:$0xf]
  %v493 = vld [vmem:[%s1 + $0x54c] sm:$0xf]
  %v494 = vld [vmem:[%s1 + $0x550] sm:$0xf]
  %v495 = vld [vmem:[%s1 + $0x554] sm:$0xf]
  %v496 = vld [vmem:[%s1 + $0x558] sm:$0xf]
  %v497 = vld [vmem:[%s1 + $0x55c] sm:$0xf]
  %v498 = vld [vmem:[%s1 + $0x560] sm:$0xf]
  %v499 = vld [vmem:[%s1 + $0x564] sm:$0xf]
  %v500 = vld [vmem:[%s1 + $0x568] sm:$0xf]
  %v501 = vld [vmem:[%s1 + $0x56c] sm:$0xf]
  %v502 = vld [vmem:[%s1 + $0x570] sm:$0xf]
  %v503 = vld [vmem:[%s1 + $0x574] sm:$0xf]
  %v504 = vld [vmem:[%s1 + $0x578] sm:$0xf]
  %v505 = vld [vmem:[%s1 + $0x57c] sm:$0xf]
  %v506 = vld [vmem:[%s1 + $0x580] sm:$0xf]
  %v507 = vld [vmem:[%s1 + $0x584] sm:$0xf]
  %v508 = vld [vmem:[%s1 + $0x588] sm:$0xf]
  %v509 = vld [vmem:[%s1 + $0x58c] sm:$0xf]
  %v510 = vld [vmem:[%s1 + $0x590] sm:$0xf]
  %v511 = vld [vmem:[%s1 + $0x594] sm:$0xf]
  %v512 = vld [vmem:[%s1 + $0x598] sm:$0xf]
  %v513 = vld [vmem:[%s1 + $0x59c] sm:$0xf]
  %v514 = vld [vmem:[%s1 + $0x5a0] sm:$0xf]
  %v515 = vld [vmem:[%s1 + $0x5a4] sm:$0xf]
  %v516 = vld [vmem:[%s1 + $0x5a8] sm:$0xf]
  %v517 = vld [vmem:[%s1 + $0x5ac] sm:$0xf]
  %v518 = vld [vmem:[%s1 + $0x5b0] sm:$0xf]
  %v519 = vld [vmem:[%s1 + $0x5b4] sm:$0xf]
  %v520 = vld [vmem:[%s1 + $0x5b8] sm:$0xf]
  %v521 = vld [vmem:[%s1 + $0x5bc] sm:$0xf]
  %v522 = vld [vmem:[%s1 + $0x5c0] sm:$0xf]
  %v523 = vld [vmem:[%s1 + $0x5c4] sm:$0xf]
  %v524 = vld [vmem:[%s1 + $0x5c8] sm:$0xf]
  %v525 = vld [vmem:[%s1 + $0x5cc] sm:$0xf]
  %v526 = vld [vmem:[%s1 + $0x5d0] sm:$0xf]
  %v527 = vld [vmem:[%s1 + $0x5d4] sm:$0xf]
  %v528 = vld [vmem:[%s1 + $0x5d8] sm:$0xf]
  %v529 = vld [vmem:[%s1 + $0x5dc] sm:$0xf]
  %v530 = vld [vmem:[%s1 + $0x5e0] sm:$0xf]
  %v531 = vld [vmem:[%s1 + $0x5e4] sm:$0xf]
  %v532 = vld [vmem:[%s1 + $0x5e8] sm:$0xf]
  %v533 = vld [vmem:[%s1 + $0x5ec] sm:$0xf]
  %v534 = vld [vmem:[%s1 + $0x5f0] sm:$0xf]
  %v535 = vld [vmem:[%s1 + $0x5f4] sm:$0xf]
  %v536 = vld [vmem:[%s1 + $0x5f8] sm:$0xf]
  %v537 = vld [vmem:[%s1 + $0x5fc] sm:$0xf]
  %v538 = vld [vmem:[%s1 + $0x600] sm:$0xf]
  %v539 = vld [vmem:[%s1 + $0x604] sm:$0xf]
  %v540 = vld [vmem:[%s1 + $0x608] sm:$0xf]
  %v541 = vld [vmem:[%s1 + $0x60c] sm:$0xf]
  %v542 = vld [vmem:[%s1 + $0x610] sm:$0xf]
  %v543 = vld [vmem:[%s1 + $0x614] sm:$0xf]
  %v544 = vld [vmem:[%s1 + $0x618] sm:$0xf]
  %v545 = vld [vmem:[%s1 + $0x61c] sm:$0xf]
  %v546 = vld [vmem:[%s1 + $0x620] sm:$0xf]
  %v547 = vld [vmem:[%s1 + $0x624] sm:$0xf]
  %v548 = vld [vmem:[%s1 + $0x628] sm:$0xf]
  %v549 = vld [vmem:[%s1 + $0x62c] sm:$0xf]
  %v550 = vld [vmem:[%s1 + $0x630] sm:$0xf]
  %v551 = vld [vmem:[%s1 + $0x634] sm:$0xf]
  %v552 = vld [vmem:[%s1 + $0x638] sm:$0xf]
  %v553 = vld [vmem:[%s1 + $0x63c] sm:$0xf]
  %v554 = vld [vmem:[%s1 + $0x640] sm:$0xf]
  %v555 = vld [vmem:[%s1 + $0x644] sm:$0xf]
  %v556 = vld [vmem:[%s1 + $0x648] sm:$0xf]
  %v557 = vld [vmem:[%s1 + $0x64c] sm:$0xf]
  %v558 = vld [vmem:[%s1 + $0x650] sm:$0xf]
  %v559 = vld [vmem:[%s1 + $0x654] sm:$0xf]
  %v560 = vld [vmem:[%s1 + $0x658] sm:$0xf]
  %v561 = vld [vmem:[%s1 + $0x65c] sm:$0xf]
  %v562 = vld [vmem:[%s1 + $0x660] sm:$0xf]
  %v563 = vld [vmem:[%s1 + $0x664] sm:$0xf]
  %v564 = vld [vmem:[%s1 + $0x668] sm:$0xf]
  %v565 = vld [vmem:[%s1 + $0x66c] sm:$0xf]
  %v566 = vld [vmem:[%s1 + $0x670] sm:$0xf]
  %v567 = vld [vmem:[%s1 + $0x674] sm:$0xf]
  %v568 = vld [vmem:[%s1 + $0x678] sm:$0xf]
  %v569 = vld [vmem:[%s1 + $0x67c] sm:$0xf]
  %v570 = vld [vmem:[%s1 + $0x680] sm:$0xf]
  %v571 = vld [vmem:[%s1 + $0x684] sm:$0xf]
  %v572 = vld [vmem:[%s1 + $0x688] sm:$0xf]
  %v573 = vld [vmem:[%s1 + $0x68c] sm:$0xf]
  %v574 = vld [vmem:[%s1 + $0x690] sm:$0xf]
  %v575 = vld [vmem:[%s1 + $0x694] sm:$0xf]
  %v576 = vld [vmem:[%s1 + $0x698] sm:$0xf]
  %v577 = vld [vmem:[%s1 + $0x69c] sm:$0xf]
  %v578 = vld [vmem:[%s1 + $0x6a0] sm:$0xf]
  %v579 = vld [vmem:[%s1 + $0x6a4] sm:$0xf]
  %v580 = vld [vmem:[%s1 + $0x6a8] sm:$0xf]
  %v581 = vld [vmem:[%s1 + $0x6ac] sm:$0xf]
  %v582 = vld [vmem:[%s1 + $0x6b0] sm:$0xf]
  %v583 = vld [vmem:[%s1 + $0x6b4] sm:$0xf]
  %v584 = vld [vmem:[%s1 + $0x6b8] sm:$0xf]
  %v585 = vld [vmem:[%s1 + $0x6bc] sm:$0xf]
  %v586 = vld [vmem:[%s1 + $0x6c0] sm:$0xf]
  %v587 = vld [vmem:[%s1 + $0x6c4] sm:$0xf]
  %v588 = vld [vmem:[%s1 + $0x6c8] sm:$0xf]
  %v589 = vld [vmem:[%s1 + $0x6cc] sm:$0xf]
  %v590 = vld [vmem:[%s1 + $0x6d0] sm:$0xf]
  %v591 = vld [vmem:[%s1 + $0x6d4] sm:$0xf]
  %v592 = vld [vmem:[%s1 + $0x6d8] sm:$0xf]
  %v593 = vld [vmem:[%s1 + $0x6dc] sm:$0xf]
  %v594 = vld [vmem:[%s1 + $0x6e0] sm:$0xf]
  %v595 = vld [vmem:[%s1 + $0x6e4] sm:$0xf]
  %v596 = vld [vmem:[%s1 + $0x6e8] sm:$0xf]
  %v597 = vld [vmem:[%s1 + $0x6ec] sm:$0xf]
  %v598 = vld [vmem:[%s1 + $0x6f0] sm:$0xf]
  %v599 = vld [vmem:[%s1 + $0x6f4] sm:$0xf]
  %v600 = vld [vmem:[%s1 + $0x6f8] sm:$0xf]
  %v601 = vld [vmem:[%s1 + $0x6fc] sm:$0xf]
  %v602 = vld [vmem:[%s1 + $0x700] sm:$0xf]
  %v603 = vld [vmem:[%s1 + $0x704] sm:$0xf]
  %v604 = vld [vmem:[%s1 + $0x708] sm:$0xf]
  %v605 = vld [vmem:[%s1 + $0x70c] sm:$0xf]
  %v606 = vld [vmem:[%s1 + $0x710] sm:$0xf]
  %v607 = vld [vmem:[%s1 + $0x714] sm:$0xf]
  %v608 = vld [vmem:[%s1 + $0x718] sm:$0xf]
  %v609 = vld [vmem:[%s1 + $0x71c] sm:$0xf]
  %v610 = vld [vmem:[%s1 + $0x720] sm:$0xf]
  %v611 = vld [vmem:[%s1 + $0x724] sm:$0xf]
  %v612 = vld [vmem:[%s1 + $0x728] sm:$0xf]
  %v613 = vld [vmem:[%s1 + $0x72c] sm:$0xf]
  %v614 = vld [vmem:[%s1 + $0x730] sm:$0xf]
  %v615 = vld [vmem:[%s1 + $0x734] sm:$0xf]
  %v616 = vld [vmem:[%s1 + $0x738] sm:$0xf]
  %v617 = vld [vmem:[%s1 + $0x73c] sm:$0xf]
  %v618 = vld [vmem:[%s1 + $0x740] sm:$0xf]
  %v619 = vld [vmem:[%s1 + $0x744] sm:$0xf]
  %v620 = vld [vmem:[%s1 + $0x748] sm:$0xf]
  %v621 = vld [vmem:[%s1 + $0x74c] sm:$0xf]
  %v622 = vld [vmem:[%s1 + $0x750] sm:$0xf]
  %v623 = vld [vmem:[%s1 + $0x754] sm:$0xf]
  %v624 = vld [vmem:[%s1 + $0x758] sm:$0xf]
  %v625 = vld [vmem:[%s1 + $0x75c] sm:$0xf]
  %v626 = vld [vmem:[%s1 + $0x760] sm:$0xf]
  %v627 = vld [vmem:[%s1 + $0x764] sm:$0xf]
  %v628 = vld [vmem:[%s1 + $0x768] sm:$0xf]
  %v629 = vld [vmem:[%s1 + $0x76c] sm:$0xf]
  %v630 = vld [vmem:[%s1 + $0x770] sm:$0xf]
  %v631 = vld [vmem:[%s1 + $0x774] sm:$0xf]
  %v632 = vld [vmem:[%s1 + $0x778] sm:$0xf]
  %v633 = vld [vmem:[%s1 + $0x77c] sm:$0xf]
  %v634 = vld [vmem:[%s1 + $0x780] sm:$0xf]
  %v635 = vld [vmem:[%s1 + $0x784] sm:$0xf]
  %v636 = vld [vmem:[%s1 + $0x788] sm:$0xf]
  %v637 = vld [vmem:[%s1 + $0x78c] sm:$0xf]
  %v638 = vld [vmem:[%s1 + $0x790] sm:$0xf]
  %v639 = vld [vmem:[%s1 + $0x794] sm:$0xf]
  %v640 = vld [vmem:[%s1 + $0x798] sm:$0xf]
  %v641 = vld [vmem:[%s1 + $0x79c] sm:$0xf]
  %v642 = vld [vmem:[%s1 + $0x7a0] sm:$0xf]
  %v643 = vld [vmem:[%s1 + $0x7a4] sm:$0xf]
  %v644 = vld [vmem:[%s1 + $0x7a8] sm:$0xf]
  %v645 = vld [vmem:[%s1 + $0x7ac] sm:$0xf]
  %v646 = vld [vmem:[%s1 + $0x7b0] sm:$0xf]
  %v647 = vld [vmem:[%s1 + $0x7b4] sm:$0xf]
  %v648 = vld [vmem:[%s1 + $0x7b8] sm:$0xf]
  %v649 = vld [vmem:[%s1 + $0x7bc] sm:$0xf]
  %v650 = vld [vmem:[%s1 + $0x7c0] sm:$0xf]
  %v651 = vld [vmem:[%s1 + $0x7c4] sm:$0xf]
  %v652 = vld [vmem:[%s1 + $0x7c8] sm:$0xf]
  %v653 = vld [vmem:[%s1 + $0x7cc] sm:$0xf]
  %v654 = vld [vmem:[%s1 + $0x7d0] sm:$0xf]
  %v655 = vld [vmem:[%s1 + $0x7d4] sm:$0xf]
  %v656 = vld [vmem:[%s1 + $0x7d8] sm:$0xf]
  %v657 = vld [vmem:[%s1 + $0x7dc] sm:$0xf]
  %v658 = vld [vmem:[%s1 + $0x7e0] sm:$0xf]
  %v659 = vld [vmem:[%s1 + $0x7e4] sm:$0xf]
  %v660 = vld [vmem:[%s1 + $0x7e8] sm:$0xf]
  %v661 = vld [vmem:[%s1 + $0x7ec] sm:$0xf]
  %v662 = vld [vmem:[%s1 + $0x7f0] sm:$0xf]
  %v663 = vld [vmem:[%s1 + $0x7f4] sm:$0xf]
  %v664 = vld [vmem:[%s1 + $0x7f8] sm:$0xf]
  %v665 = vld [vmem:[%s1 + $0x7fc] sm:$0xf]
  %v666 = vld [vmem:[%s1 + $0x800] sm:$0xf]
  %v667 = vld [vmem:[%s1 + $0x804] sm:$0xf]
  %v668 = vld [vmem:[%s1 + $0x808] sm:$0xf]
  %v669 = vld [vmem:[%s1 + $0x80c] sm:$0xf]
  %v670 = vld [vmem:[%s1 + $0x810] sm:$0xf]
  %v671 = vld [vmem:[%s1 + $0x814] sm:$0xf]
  %v672 = vld [vmem:[%s1 + $0x818] sm:$0xf]
  %v673 = vld [vmem:[%s1 + $0x81c] sm:$0xf]
  %v674 = vld [vmem:[%s1 + $0x820] sm:$0xf]
  %v675 = vld [vmem:[%s1 + $0x824] sm:$0xf]
  %v676 = vld [vmem:[%s1 + $0x828] sm:$0xf]
  %v677 = vld [vmem:[%s1 + $0x82c] sm:$0xf]
  %v678 = vld [vmem:[%s1 + $0x830] sm:$0xf]
  %v679 = vld [vmem:[%s1 + $0x834] sm:$0xf]
  %v680 = vld [vmem:[%s1 + $0x838] sm:$0xf]
  %v681 = vld [vmem:[%s1 + $0x83c] sm:$0xf]
  %v682 = vld [vmem:[%s1 + $0x840] sm:$0xf]
  %v683 = vld [vmem:[%s1 + $0x844] sm:$0xf]
  %v684 = vld [vmem:[%s1 + $0x848] sm:$0xf]
  %v685 = vld [vmem:[%s1 + $0x84c] sm:$0xf]
  %v686 = vld [vmem:[%s1 + $0x850] sm:$0xf]
  %v687 = vld [vmem:[%s1 + $0x854] sm:$0xf]
  %v688 = vld [vmem:[%s1 + $0x858] sm:$0xf]
  %v689 = vld [vmem:[%s1 + $0x85c] sm:$0xf]
  %v690 = vld [vmem:[%s1 + $0x860] sm:$0xf]
  %v691 = vld [vmem:[%s1 + $0x864] sm:$0xf]
  %v692 = vld [vmem:[%s1 + $0x868] sm:$0xf]
  %v693 = vld [vmem:[%s1 + $0x86c] sm:$0xf]
  %v694 = vld [vmem:[%s1 + $0x870] sm:$0xf]
  %v695 = vld [vmem:[%s1 + $0x874] sm:$0xf]
  %v696 = vld [vmem:[%s1 + $0x878] sm:$0xf]
  %v697 = vld [vmem:[%s1 + $0x87c] sm:$0xf]
  %v698 = vld [vmem:[%s1 + $0x880] sm:$0xf]
  %v699 = vld [vmem:[%s1 + $0x884] sm:$0xf]
  %v700 = vld [vmem:[%s1 + $0x888] sm:$0xf]
  %v701 = vld [vmem:[%s1 + $0x88c] sm:$0xf]
  %v702 = vld [vmem:[%s1 + $0x890] sm:$0xf]
  %v703 = vld [vmem:[%s1 + $0x894] sm:$0xf]
  %v704 = vld [vmem:[%s1 + $0x898] sm:$0xf]
  %v705 = vld [vmem:[%s1 + $0x89c] sm:$0xf]
  %v706 = vld [vmem:[%s1 + $0x8a0] sm:$0xf]
  %v707 = vld [vmem:[%s1 + $0x8a4] sm:$0xf]
  %v708 = vld [vmem:[%s1 + $0x8a8] sm:$0xf]
  %v709 = vld [vmem:[%s1 + $0x8ac] sm:$0xf]
  %v710 = vld [vmem:[%s1 + $0x8b0] sm:$0xf]
  %v711 = vld [vmem:[%s1 + $0x8b4] sm:$0xf]
  %v712 = vld [vmem:[%s1 + $0x8b8] sm:$0xf]
  %v713 = vld [vmem:[%s1 + $0x8bc] sm:$0xf]
  %v714 = vld [vmem:[%s1 + $0x8c0] sm:$0xf]
  %v715 = vld [vmem:[%s1 + $0x8c4] sm:$0xf]
  %v716 = vld [vmem:[%s1 + $0x8c8] sm:$0xf]
  %v717 = vld [vmem:[%s1 + $0x8cc] sm:$0xf]
  %v718 = vld [vmem:[%s1 + $0x8d0] sm:$0xf]
  %v719 = vld [vmem:[%s1 + $0x8d4] sm:$0xf]
  %v720 = vld [vmem:[%s1 + $0x8d8] sm:$0xf]
  %v721 = vld [vmem:[%s1 + $0x8dc] sm:$0xf]
  %v722 = vld [vmem:[%s1 + $0x8e0] sm:$0xf]
  %v723 = vld [vmem:[%s1 + $0x8e4] sm:$0xf]
  %v724 = vld [vmem:[%s1 + $0x8e8] sm:$0xf]
  %v725 = vld [vmem:[%s1 + $0x8ec] sm:$0xf]
  %v726 = vld [vmem:[%s1 + $0x8f0] sm:$0xf]
  %v727 = vld [vmem:[%s1 + $0x8f4] sm:$0xf]
  %v728 = vld [vmem:[%s1 + $0x8f8] sm:$0xf]
  %v729 = vld [vmem:[%s1 + $0x8fc] sm:$0xf]
  %v730 = vld [vmem:[%s1 + $0x900] sm:$0xf]
  %v731 = vld [vmem:[%s1 + $0x904] sm:$0xf]
  %v732 = vld [vmem:[%s1 + $0x908] sm:$0xf]
  %v733 = vld [vmem:[%s1 + $0x90c] sm:$0xf]
  %v734 = vld [vmem:[%s1 + $0x910] sm:$0xf]
  %v735 = vld [vmem:[%s1 + $0x914] sm:$0xf]
  %v736 = vld [vmem:[%s1 + $0x918] sm:$0xf]
  %v737 = vld [vmem:[%s1 + $0x91c] sm:$0xf]
  %v738 = vld [vmem:[%s1 + $0x920] sm:$0xf]
  %v739 = vld [vmem:[%s1 + $0x924] sm:$0xf]
  %v740 = vld [vmem:[%s1 + $0x928] sm:$0xf]
  %v741 = vld [vmem:[%s1 + $0x92c] sm:$0xf]
  %v742 = vld [vmem:[%s1 + $0x930] sm:$0xf]
  %v743 = vld [vmem:[%s1 + $0x934] sm:$0xf]
  %v744 = vld [vmem:[%s1 + $0x938] sm:$0xf]
  %v745 = vld [vmem:[%s1 + $0x93c] sm:$0xf]
  %v746 = vld [vmem:[%s1 + $0x940] sm:$0xf]
  %v747 = vld [vmem:[%s1 + $0x944] sm:$0xf]
  %v748 = vld [vmem:[%s1 + $0x948] sm:$0xf]
  %v749 = vld [vmem:[%s1 + $0x94c] sm:$0xf]
  %v750 = vld [vmem:[%s1 + $0x950] sm:$0xf]
  %v751 = vld [vmem:[%s1 + $0x954] sm:$0xf]
  %v752 = vld [vmem:[%s1 + $0x958] sm:$0xf]
  %v753 = vld [vmem:[%s1 + $0x95c] sm:$0xf]
  %v754 = vld [vmem:[%s1 + $0x960] sm:$0xf]
  %v755 = vld [vmem:[%s1 + $0x964] sm:$0xf]
  %v756 = vld [vmem:[%s1 + $0x968] sm:$0xf]
  %v757 = vld [vmem:[%s1 + $0x96c] sm:$0xf]
  %v758 = vld [vmem:[%s1 + $0x970] sm:$0xf]
  %v759 = vld [vmem:[%s1 + $0x974] sm:$0xf]
  %v760 = vld [vmem:[%s1 + $0x978] sm:$0xf]
  %v761 = vld [vmem:[%s1 + $0x97c] sm:$0xf]
  %v762 = vld [vmem:[%s1 + $0x980] sm:$0xf]
  %v763 = vld [vmem:[%s1 + $0x984] sm:$0xf]
  %v764 = vld [vmem:[%s1 + $0x988] sm:$0xf]
  %v765 = vld [vmem:[%s1 + $0x98c] sm:$0xf]
  %v766 = vld [vmem:[%s1 + $0x990] sm:$0xf]
  %v767 = vld [vmem:[%s1 + $0x994] sm:$0xf]
  %v768 = vld [vmem:[%s1 + $0x998] sm:$0xf]
  %v769 = vld [vmem:[%s1 + $0x99c] sm:$0xf]
  %v770 = vld [vmem:[%s1 + $0x9a0] sm:$0xf]
  %v771 = vld [vmem:[%s1 + $0x9a4] sm:$0xf]
  %v772 = vld [vmem:[%s1 + $0x9a8] sm:$0xf]
  %v773 = vld [vmem:[%s1 + $0x9ac] sm:$0xf]
  %v774 = vld [vmem:[%s1 + $0x9b0] sm:$0xf]
  %v775 = vld [vmem:[%s1 + $0x9b4] sm:$0xf]
  %v776 = vld [vmem:[%s1 + $0x9b8] sm:$0xf]
  %v777 = vld [vmem:[%s1 + $0x9bc] sm:$0xf]
  %v778 = vld [vmem:[%s1 + $0x9c0] sm:$0xf]
  %v779 = vld [vmem:[%s1 + $0x9c4] sm:$0xf]
  %v780 = vld [vmem:[%s1 + $0x9c8] sm:$0xf]
  %v781 = vld [vmem:[%s1 + $0x9cc] sm:$0xf]
  %v782 = vld [vmem:[%s1 + $0x9d0] sm:$0xf]
  %v783 = vld [vmem:[%s1 + $0x9d4] sm:$0xf]
  %v784 = vld [vmem:[%s1 + $0x9d8] sm:$0xf]
  %v785 = vld [vmem:[%s1 + $0x9dc] sm:$0xf]
  %v786 = vld [vmem:[%s1 + $0x9e0] sm:$0xf]
  %v787 = vld [vmem:[%s1 + $0x9e4] sm:$0xf]
  %v788 = vld [vmem:[%s1 + $0x9e8] sm:$0xf]
  %v789 = vld [vmem:[%s1 + $0x9ec] sm:$0xf]
  %v790 = vld [vmem:[%s1 + $0x9f0] sm:$0xf]
  %v791 = vld [vmem:[%s1 + $0x9f4] sm:$0xf]
  %v792 = vld [vmem:[%s1 + $0x9f8] sm:$0xf]
  %v793 = vld [vmem:[%s1 + $0x9fc] sm:$0xf]
  %v794 = vld [vmem:[%s1 + $0xa00] sm:$0xf]
  %v795 = vld [vmem:[%s1 + $0xa04] sm:$0xf]
  %v796 = vld [vmem:[%s1 + $0xa08] sm:$0xf]
  %v797 = vld [vmem:[%s1 + $0xa0c] sm:$0xf]
  %v798 = vld [vmem:[%s1 + $0xa10] sm:$0xf]
  %v799 = vld [vmem:[%s1 + $0xa14] sm:$0xf]
  %v800 = vld [vmem:[%s1 + $0xa18] sm:$0xf]
  %v801 = vld [vmem:[%s1 + $0xa1c] sm:$0xf]
  %v802 = vld [vmem:[%s1 + $0xa20] sm:$0xf]
  %v803 = vld [vmem:[%s1 + $0xa24] sm:$0xf]
  %v804 = vld [vmem:[%s1 + $0xa28] sm:$0xf]
  %v805 = vld [vmem:[%s1 + $0xa2c] sm:$0xf]
  %v806 = vld [vmem:[%s1 + $0xa30] sm:$0xf]
  %v807 = vld [vmem:[%s1 + $0xa34] sm:$0xf]
  %v808 = vld [vmem:[%s1 + $0xa38] sm:$0xf]
  %v809 = vld [vmem:[%s1 + $0xa3c] sm:$0xf]
  %v810 = vld [vmem:[%s1 + $0xa40] sm:$0xf]
  %v811 = vld [vmem:[%s1 + $0xa44] sm:$0xf]
  %v812 = vld [vmem:[%s1 + $0xa48] sm:$0xf]
  %v813 = vld [vmem:[%s1 + $0xa4c] sm:$0xf]
  %v814 = vld [vmem:[%s1 + $0xa50] sm:$0xf]
  %v815 = vld [vmem:[%s1 + $0xa54] sm:$0xf]
  %v816 = vld [vmem:[%s1 + $0xa58] sm:$0xf]
  %v817 = vld [vmem:[%s1 + $0xa5c] sm:$0xf]
  %v818 = vld [vmem:[%s1 + $0xa60] sm:$0xf]
  %v819 = vld [vmem:[%s1 + $0xa64] sm:$0xf]
  %v820 = vld [vmem:[%s1 + $0xa68] sm:$0xf]
  %v821 = vld [vmem:[%s1 + $0xa6c] sm:$0xf]
  %v822 = vld [vmem:[%s1 + $0xa70] sm:$0xf]
  %v823 = vld [vmem:[%s1 + $0xa74] sm:$0xf]
  %v824 = vld [vmem:[%s1 + $0xa78] sm:$0xf]
  %v825 = vld [vmem:[%s1 + $0xa7c] sm:$0xf]
  %v826 = vld [vmem:[%s1 + $0xa80] sm:$0xf]
  %v827 = vld [vmem:[%s1 + $0xa84] sm:$0xf]
  %v828 = vld [vmem:[%s1 + $0xa88] sm:$0xf]
  %v829 = vld [vmem:[%s1 + $0xa8c] sm:$0xf]
  %v830 = vld [vmem:[%s1 + $0xa90] sm:$0xf]
  %v831 = vld [vmem:[%s1 + $0xa94] sm:$0xf]
  %v832 = vld [vmem:[%s1 + $0xa98] sm:$0xf]
  %v833 = vld [vmem:[%s1 + $0xa9c] sm:$0xf]
  %v834 = vld [vmem:[%s1 + $0xaa0] sm:$0xf]
  %v835 = vld [vmem:[%s1 + $0xaa4] sm:$0xf]
  %v836 = vld [vmem:[%s1 + $0xaa8] sm:$0xf]
  %v837 = vld [vmem:[%s1 + $0xaac] sm:$0xf]
  %v838 = vld [vmem:[%s1 + $0xab0] sm:$0xf]
  %v839 = vld [vmem:[%s1 + $0xab4] sm:$0xf]
  %v840 = vld [vmem:[%s1 + $0xab8] sm:$0xf]
  %v841 = vld [vmem:[%s1 + $0xabc] sm:$0xf]
  %v842 = vld [vmem:[%s1 + $0xac0] sm:$0xf]
  %v843 = vld [vmem:[%s1 + $0xac4] sm:$0xf]
  %v844 = vld [vmem:[%s1 + $0xac8] sm:$0xf]
  %v845 = vld [vmem:[%s1 + $0xacc] sm:$0xf]
  %v846 = vld [vmem:[%s1 + $0xad0] sm:$0xf]
  %v847 = vld [vmem:[%s1 + $0xad4] sm:$0xf]
  %v848 = vld [vmem:[%s1 + $0xad8] sm:$0xf]
  %v849 = vld [vmem:[%s1 + $0xadc] sm:$0xf]
  %v850 = vld [vmem:[%s1 + $0xae0] sm:$0xf]
  %v851 = vld [vmem:[%s1 + $0xae4] sm:$0xf]
  %v852 = vld [vmem:[%s1 + $0xae8] sm:$0xf]
  %v853 = vld [vmem:[%s1 + $0xaec] sm:$0xf]
  %v854 = vld [vmem:[%s1 + $0xaf0] sm:$0xf]
  %v855 = vld [vmem:[%s1 + $0xaf4] sm:$0xf]
  %v856 = vld [vmem:[%s1 + $0xaf8] sm:$0xf]
  %v857 = vld [vmem:[%s1 + $0xafc] sm:$0xf]
  %v858 = vld [vmem:[%s1 + $0xb00] sm:$0xf]
  %v859 = vld [vmem:[%s1 + $0xb04] sm:$0xf]
  %v860 = vld [vmem:[%s1 + $0xb08] sm:$0xf]
  %v861 = vld [vmem:[%s1 + $0xb0c] sm:$0xf]
  %v862 = vld [vmem:[%s1 + $0xb10] sm:$0xf]
  %v863 = vld [vmem:[%s1 + $0xb14] sm:$0xf]
  %v864 = vld [vmem:[%s1 + $0xb18] sm:$0xf]
  %v865 = vld [vmem:[%s1 + $0xb1c] sm:$0xf]
  %v866 = vld [vmem:[%s1 + $0xb20] sm:$0xf]
  %v867 = vld [vmem:[%s1 + $0xb24] sm:$0xf]
  %v868 = vld [vmem:[%s1 + $0xb28] sm:$0xf]
  %v869 = vld [vmem:[%s1 + $0xb2c] sm:$0xf]
  %v870 = vld [vmem:[%s1 + $0xb30] sm:$0xf]
  %v871 = vld [vmem:[%s1 + $0xb34] sm:$0xf]
  %v872 = vld [vmem:[%s1 + $0xb38] sm:$0xf]
  %v873 = vld [vmem:[%s1 + $0xb3c] sm:$0xf]
  %v874 = vld [vmem:[%s1 + $0xb40] sm:$0xf]
  %v875 = vld [vmem:[%s1 + $0xb44] sm:$0xf]
  %v876 = vld [vmem:[%s1 + $0xb48] sm:$0xf]
  %v877 = vld [vmem:[%s1 + $0xb4c] sm:$0xf]
  %v878 = vld [vmem:[%s1 + $0xb50] sm:$0xf]
  %v879 = vld [vmem:[%s1 + $0xb54] sm:$0xf]
  %v880 = vld [vmem:[%s1 + $0xb58] sm:$0xf]
  %v881 = vld [vmem:[%s1 + $0xb5c] sm:$0xf]
  %v882 = vld [vmem:[%s1 + $0xb60] sm:$0xf]
  %v883 = vld [vmem:[%s1 + $0xb64] sm:$0xf]
  %v884 = vld [vmem:[%s1 + $0xb68] sm:$0xf]
  %v885 = vld [vmem:[%s1 + $0xb6c] sm:$0xf]
  %v886 = vld [vmem:[%s1 + $0xb70] sm:$0xf]
  %v887 = vld [vmem:[%s1 + $0xb74] sm:$0xf]
  %v888 = vld [vmem:[%s1 + $0xb78] sm:$0xf]
  %v889 = vld [vmem:[%s1 + $0xb7c] sm:$0xf]
  %v890 = vld [vmem:[%s1 + $0xb80] sm:$0xf]
  %v891 = vld [vmem:[%s1 + $0xb84] sm:$0xf]
  %v892 = vld [vmem:[%s1 + $0xb88] sm:$0xf]
  %v893 = vld [vmem:[%s1 + $0xb8c] sm:$0xf]
  %v894 = vld [vmem:[%s1 + $0xb90] sm:$0xf]
  %v895 = vld [vmem:[%s1 + $0xb94] sm:$0xf]
  %v896 = vld [vmem:[%s1 + $0xb98] sm:$0xf]
  %v897 = vld [vmem:[%s1 + $0xb9c] sm:$0xf]
  %v898 = vld [vmem:[%s1 + $0xba0] sm:$0xf]
  %v899 = vld [vmem:[%s1 + $0xba4] sm:$0xf]
  %v900 = vld [vmem:[%s1 + $0xba8] sm:$0xf]
  %v901 = vld [vmem:[%s1 + $0xbac] sm:$0xf]
  %v902 = vld [vmem:[%s1 + $0xbb0] sm:$0xf]
  %v903 = vld [vmem:[%s1 + $0xbb4] sm:$0xf]
  %v904 = vld [vmem:[%s1 + $0xbb8] sm:$0xf]
  %v905 = vld [vmem:[%s1 + $0xbbc] sm:$0xf]
  %v906 = vld [vmem:[%s1 + $0xbc0] sm:$0xf]
  %v907 = vld [vmem:[%s1 + $0xbc4] sm:$0xf]
  %v908 = vld [vmem:[%s1 + $0xbc8] sm:$0xf]
  %v909 = vld [vmem:[%s1 + $0xbcc] sm:$0xf]
  %v910 = vld [vmem:[%s1 + $0xbd0] sm:$0xf]
  %v911 = vld [vmem:[%s1 + $0xbd4] sm:$0xf]
  %v912 = vld [vmem:[%s1 + $0xbd8] sm:$0xf]
  %v913 = vld [vmem:[%s1 + $0xbdc] sm:$0xf]
  %v914 = vld [vmem:[%s1 + $0xbe0] sm:$0xf]
  %v915 = vld [vmem:[%s1 + $0xbe4] sm:$0xf]
  %v916 = vld [vmem:[%s1 + $0xbe8] sm:$0xf]
  %v917 = vld [vmem:[%s1 + $0xbec] sm:$0xf]
  %v918 = vld [vmem:[%s1 + $0xbf0] sm:$0xf]
  %v919 = vld [vmem:[%s1 + $0xbf4] sm:$0xf]
  %v920 = vld [vmem:[%s1 + $0xbf8] sm:$0xf]
  %v921 = vld [vmem:[%s1 + $0xbfc] sm:$0xf]
  %v922 = vld [vmem:[%s1 + $0xc00] sm:$0xf]
  %v923 = vld [vmem:[%s1 + $0xc04] sm:$0xf]
  %v924 = vld [vmem:[%s1 + $0xc08] sm:$0xf]
  %v925 = vld [vmem:[%s1 + $0xc0c] sm:$0xf]
  %v926 = vld [vmem:[%s1 + $0xc10] sm:$0xf]
  %v927 = vld [vmem:[%s1 + $0xc14] sm:$0xf]
  %v928 = vld [vmem:[%s1 + $0xc18] sm:$0xf]
  %v929 = vld [vmem:[%s1 + $0xc1c] sm:$0xf]
  %v930 = vld [vmem:[%s1 + $0xc20] sm:$0xf]
  %v931 = vld [vmem:[%s1 + $0xc24] sm:$0xf]
  %v932 = vld [vmem:[%s1 + $0xc28] sm:$0xf]
  %v933 = vld [vmem:[%s1 + $0xc2c] sm:$0xf]
  %v934 = vld [vmem:[%s1 + $0xc30] sm:$0xf]
  %v935 = vld [vmem:[%s1 + $0xc34] sm:$0xf]
  %v936 = vld [vmem:[%s1 + $0xc38] sm:$0xf]
  %v937 = vld [vmem:[%s1 + $0xc3c] sm:$0xf]
  %v938 = vld [vmem:[%s1 + $0xc40] sm:$0xf]
  %v939 = vld [vmem:[%s1 + $0xc44] sm:$0xf]
  %v940 = vld [vmem:[%s1 + $0xc48] sm:$0xf]
  %v941 = vld [vmem:[%s1 + $0xc4c] sm:$0xf]
  %v942 = vld [vmem:[%s1 + $0xc50] sm:$0xf]
  %v943 = vld [vmem:[%s1 + $0xc54] sm:$0xf]
  %v944 = vld [vmem:[%s1 + $0xc58] sm:$0xf]
  %v945 = vld [vmem:[%s1 + $0xc5c] sm:$0xf]
  %v946 = vld [vmem:[%s1 + $0xc60] sm:$0xf]
  %v947 = vld [vmem:[%s1 + $0xc64] sm:$0xf]
  %v948 = vld [vmem:[%s1 + $0xc68] sm:$0xf]
  %v949 = vld [vmem:[%s1 + $0xc6c] sm:$0xf]
  %v950 = vld [vmem:[%s1 + $0xc70] sm:$0xf]
  %v951 = vld [vmem:[%s1 + $0xc74] sm:$0xf]
  %v952 = vld [vmem:[%s1 + $0xc78] sm:$0xf]
  %v953 = vld [vmem:[%s1 + $0xc7c] sm:$0xf]
  %v954 = vld [vmem:[%s1 + $0xc80] sm:$0xf]
  %v955 = vld [vmem:[%s1 + $0xc84] sm:$0xf]
  %v956 = vld [vmem:[%s1 + $0xc88] sm:$0xf]
  %v957 = vld [vmem:[%s1 + $0xc8c] sm:$0xf]
  %v958 = vld [vmem:[%s1 + $0xc90] sm:$0xf]
  %v959 = vld [vmem:[%s1 + $0xc94] sm:$0xf]
  %v960 = vld [vmem:[%s1 + $0xc98] sm:$0xf]
  %v961 = vld [vmem:[%s1 + $0xc9c] sm:$0xf]
  %v962 = vld [vmem:[%s1 + $0xca0] sm:$0xf]
  %v963 = vld [vmem:[%s1 + $0xca4] sm:$0xf]
  %v964 = vld [vmem:[%s1 + $0xca8] sm:$0xf]
  %v965 = vld [vmem:[%s1 + $0xcac] sm:$0xf]
  %v966 = vld [vmem:[%s1 + $0xcb0] sm:$0xf]
  %v967 = vld [vmem:[%s1 + $0xcb4] sm:$0xf]
  %v968 = vld [vmem:[%s1 + $0xcb8] sm:$0xf]
  %v969 = vld [vmem:[%s1 + $0xcbc] sm:$0xf]
  %v970 = vld [vmem:[%s1 + $0xcc0] sm:$0xf]
  %v971 = vld [vmem:[%s1 + $0xcc4] sm:$0xf]
  %v972 = vld [vmem:[%s1 + $0xcc8] sm:$0xf]
  %v973 = vld [vmem:[%s1 + $0xccc] sm:$0xf]
  %v974 = vld [vmem:[%s1 + $0xcd0] sm:$0xf]
  %v975 = vld [vmem:[%s1 + $0xcd4] sm:$0xf]
  %v976 = vld [vmem:[%s1 + $0xcd8] sm:$0xf]
  %v977 = vld [vmem:[%s1 + $0xcdc] sm:$0xf]
  %v978 = vld [vmem:[%s1 + $0xce0] sm:$0xf]
  %v979 = vld [vmem:[%s1 + $0xce4] sm:$0xf]
  %v980 = vld [vmem:[%s1 + $0xce8] sm:$0xf]
  %v981 = vld [vmem:[%s1 + $0xcec] sm:$0xf]
  %v982 = vld [vmem:[%s1 + $0xcf0] sm:$0xf]
  %v983 = vld [vmem:[%s1 + $0xcf4] sm:$0xf]
  %v984 = vld [vmem:[%s1 + $0xcf8] sm:$0xf]
  %v985 = vld [vmem:[%s1 + $0xcfc] sm:$0xf]
  %v986 = vld [vmem:[%s1 + $0xd00] sm:$0xf]
  %v987 = vld [vmem:[%s1 + $0xd04] sm:$0xf]
  %v988 = vld [vmem:[%s1 + $0xd08] sm:$0xf]
  %v989 = vld [vmem:[%s1 + $0xd0c] sm:$0xf]
  %v990 = vld [vmem:[%s1 + $0xd10] sm:$0xf]
  %v991 = vld [vmem:[%s1 + $0xd14] sm:$0xf]
  %v992 = vld [vmem:[%s1 + $0xd18] sm:$0xf]
  %v993 = vld [vmem:[%s1 + $0xd1c] sm:$0xf]
  %v994 = vld [vmem:[%s1 + $0xd20] sm:$0xf]
  %v995 = vld [vmem:[%s1 + $0xd24] sm:$0xf]
  %v996 = vld [vmem:[%s1 + $0xd28] sm:$0xf]
  %v997 = vld [vmem:[%s1 + $0xd2c] sm:$0xf]
  %v998 = vld [vmem:[%s1 + $0xd30] sm:$0xf]
  %v999 = vld [vmem:[%s1 + $0xd34] sm:$0xf]
  %v1000 = vld [vmem:[%s1 + $0xd38] sm:$0xf]
  %v1001 = vld [vmem:[%s1 + $0xd3c] sm:$0xf]
  %v1002 = vld [vmem:[%s1 + $0xd40] sm:$0xf]
  %v1003 = vld [vmem:[%s1 + $0xd44] sm:$0xf]
  %v1004 = vld [vmem:[%s1 + $0xd48] sm:$0xf]
  %v1005 = vld [vmem:[%s1 + $0xd4c] sm:$0xf]
  %v1006 = vld [vmem:[%s1 + $0xd50] sm:$0xf]
  %v1007 = vld [vmem:[%s1 + $0xd54] sm:$0xf]
  %v1008 = vld [vmem:[%s1 + $0xd58] sm:$0xf]
  %v1009 = vld [vmem:[%s1 + $0xd5c] sm:$0xf]
  %v1010 = vld [vmem:[%s1 + $0xd60] sm:$0xf]
  %v1011 = vld [vmem:[%s1 + $0xd64] sm:$0xf]
  %v1012 = vld [vmem:[%s1 + $0xd68] sm:$0xf]
  %v1013 = vld [vmem:[%s1 + $0xd6c] sm:$0xf]
  %v1014 = vld [vmem:[%s1 + $0xd70] sm:$0xf]
  %v1015 = vld [vmem:[%s1 + $0xd74] sm:$0xf]
  %v1016 = vld [vmem:[%s1 + $0xd78] sm:$0xf]
  %v1017 = vld [vmem:[%s1 + $0xd7c] sm:$0xf]
  %v1018 = vld [vmem:[%s1 + $0xd80] sm:$0xf]
  %v1019 = vld [vmem:[%s1 + $0xd84] sm:$0xf]
  %v1020 = vld [vmem:[%s1 + $0xd88] sm:$0xf]
  %v1021 = vld [vmem:[%s1 + $0xd8c] sm:$0xf]
  %v1022 = vld [vmem:[%s1 + $0xd90] sm:$0xf]
  %v1023 = vld [vmem:[%s1 + $0xd94] sm:$0xf]
  %v1024 = vld [vmem:[%s1 + $0xd98] sm:$0xf]
  %v1025 = vld [vmem:[%s1 + $0xd9c] sm:$0xf]
  %v1026 = vld [vmem:[%s1 + $0xda0] sm:$0xf]
  %v1027 = vld [vmem:[%s1 + $0xda4] sm:$0xf]
  %v1028 = vld [vmem:[%s1 + $0xda8] sm:$0xf]
  %v1029 = vld [vmem:[%s1 + $0xdac] sm:$0xf]
  %v1030 = vld [vmem:[%s1 + $0xdb0] sm:$0xf]
  %v1031 = vld [vmem:[%s1 + $0xdb4] sm:$0xf]
  %v1032 = vld [vmem:[%s1 + $0xdb8] sm:$0xf]
  %v1033 = vld [vmem:[%s1 + $0xdbc] sm:$0xf]
  %v1034 = vld [vmem:[%s1 + $0xdc0] sm:$0xf]
  %v1035 = vld [vmem:[%s1 + $0xdc4] sm:$0xf]
  %v1036 = vld [vmem:[%s1 + $0xdc8] sm:$0xf]
  %v1037 = vld [vmem:[%s1 + $0xdcc] sm:$0xf]
  %v1038 = vld [vmem:[%s1 + $0xdd0] sm:$0xf]
  %v1039 = vld [vmem:[%s1 + $0xdd4] sm:$0xf]
  %v1040 = vld [vmem:[%s1 + $0xdd8] sm:$0xf]
  %v1041 = vld [vmem:[%s1 + $0xddc] sm:$0xf]
  %v1042 = vld [vmem:[%s1 + $0xde0] sm:$0xf]
  %v1043 = vld [vmem:[%s1 + $0xde4] sm:$0xf]
  %v1044 = vld [vmem:[%s1 + $0xde8] sm:$0xf]
  %v1045 = vld [vmem:[%s1 + $0xdec] sm:$0xf]
  %v1046 = vld [vmem:[%s1 + $0xdf0] sm:$0xf]
  %v1047 = vld [vmem:[%s1 + $0xdf4] sm:$0xf]
  %v1048 = vld [vmem:[%s1 + $0xdf8] sm:$0xf]
  %v1049 = vld [vmem:[%s1 + $0xdfc] sm:$0xf]
  %v1050 = vld [vmem:[%s1 + $0xe00] sm:$0xf]
  %v1051 = vld [vmem:[%s1 + $0xe04] sm:$0xf]
  %v1052 = vld [vmem:[%s1 + $0xe08] sm:$0xf]
  %v1053 = vld [vmem:[%s1 + $0xe0c] sm:$0xf]
  %v1054 = vld [vmem:[%s1 + $0xe10] sm:$0xf]
  %v1055 = vld [vmem:[%s1 + $0xe14] sm:$0xf]
  %v1056 = vld [vmem:[%s1 + $0xe18] sm:$0xf]
  %v1057 = vld [vmem:[%s1 + $0xe1c] sm:$0xf]
  %v1058 = vld [vmem:[%s1 + $0xe20] sm:$0xf]
  %v1059 = vld [vmem:[%s1 + $0xe24] sm:$0xf]
  %v1060 = vld [vmem:[%s1 + $0xe28] sm:$0xf]
  %v1061 = vld [vmem:[%s1 + $0xe2c] sm:$0xf]
  %v1062 = vld [vmem:[%s1 + $0xe30] sm:$0xf]
  %v1063 = vld [vmem:[%s1 + $0xe34] sm:$0xf]
  %v1064 = vld [vmem:[%s1 + $0xe38] sm:$0xf]
  %v1065 = vld [vmem:[%s1 + $0xe3c] sm:$0xf]
  %v1066 = vld [vmem:[%s1 + $0xe40] sm:$0xf]
  %v1067 = vld [vmem:[%s1 + $0xe44] sm:$0xf]
  %v1068 = vld [vmem:[%s1 + $0xe48] sm:$0xf]
  %v1069 = vld [vmem:[%s1 + $0xe4c] sm:$0xf]
  %v1070 = vld [vmem:[%s1 + $0xe50] sm:$0xf]
  %v1071 = vld [vmem:[%s1 + $0xe54] sm:$0xf]
  %v1072 = vld [vmem:[%s1 + $0xe58] sm:$0xf]
  %v1073 = vld [vmem:[%s1 + $0xe5c] sm:$0xf]
  %v1074 = vld [vmem:[%s1 + $0xe60] sm:$0xf]
  %v1075 = vld [vmem:[%s1 + $0xe64] sm:$0xf]
  %v1076 = vld [vmem:[%s1 + $0xe68] sm:$0xf]
  %v1077 = vld [vmem:[%s1 + $0xe6c] sm:$0xf]
  %v1078 = vld [vmem:[%s1 + $0xe70] sm:$0xf]
  %v1079 = vld [vmem:[%s1 + $0xe74] sm:$0xf]
  %v1080 = vld [vmem:[%s1 + $0xe78] sm:$0xf]
  %v1081 = vld [vmem:[%s1 + $0xe7c] sm:$0xf]
  %v1082 = vld [vmem:[%s1 + $0xe80] sm:$0xf]
  %v1083 = vld [vmem:[%s1 + $0xe84] sm:$0xf]
  %v1084 = vld [vmem:[%s1 + $0xe88] sm:$0xf]
  %v1085 = vld [vmem:[%s1 + $0xe8c] sm:$0xf]
  %v1086 = vld [vmem:[%s1 + $0xe90] sm:$0xf]
  %v1087 = vld [vmem:[%s1 + $0xe94] sm:$0xf]
  %v1088 = vld [vmem:[%s1 + $0xe98] sm:$0xf]
  %v1089 = vld [vmem:[%s1 + $0xe9c] sm:$0xf]
  %v1090 = vld [vmem:[%s1 + $0xea0] sm:$0xf]
  %v1091 = vld [vmem:[%s1 + $0xea4] sm:$0xf]
  %v1092 = vld [vmem:[%s1 + $0xea8] sm:$0xf]
  %v1093 = vld [vmem:[%s1 + $0xeac] sm:$0xf]
  %v1094 = vld [vmem:[%s1 + $0xeb0] sm:$0xf]
  %v1095 = vld [vmem:[%s1 + $0xeb4] sm:$0xf]
  %v1096 = vld [vmem:[%s1 + $0xeb8] sm:$0xf]
  %v1097 = vld [vmem:[%s1 + $0xebc] sm:$0xf]
  %v1098 = vld [vmem:[%s1 + $0xec0] sm:$0xf]
  %v1099 = vld [vmem:[%s1 + $0xec4] sm:$0xf]
  %v1100 = vld [vmem:[%s1 + $0xec8] sm:$0xf]
  %v1101 = vld [vmem:[%s1 + $0xecc] sm:$0xf]
  %v1102 = vld [vmem:[%s1 + $0xed0] sm:$0xf]
  %v1103 = vld [vmem:[%s1 + $0xed4] sm:$0xf]
  %v1104 = vld [vmem:[%s1 + $0xed8] sm:$0xf]
  %v1105 = vld [vmem:[%s1 + $0xedc] sm:$0xf]
  %v1106 = vld [vmem:[%s1 + $0xee0] sm:$0xf]
  %v1107 = vld [vmem:[%s1 + $0xee4] sm:$0xf]
  %v1108 = vld [vmem:[%s1 + $0xee8] sm:$0xf]
  %v1109 = vld [vmem:[%s1 + $0xeec] sm:$0xf]
  %v1110 = vld [vmem:[%s1 + $0xef0] sm:$0xf]
  %v1111 = vld [vmem:[%s1 + $0xef4] sm:$0xf]
  %v1112 = vld [vmem:[%s1 + $0xef8] sm:$0xf]
  %v1113 = vld [vmem:[%s1 + $0xefc] sm:$0xf]
  %v1114 = vld [vmem:[%s1 + $0xf00] sm:$0xf]
  %v1115 = vld [vmem:[%s1 + $0xf04] sm:$0xf]
  %v1116 = vld [vmem:[%s1 + $0xf08] sm:$0xf]
  %v1117 = vld [vmem:[%s1 + $0xf0c] sm:$0xf]
  %v1118 = vld [vmem:[%s1 + $0xf10] sm:$0xf]
  %v1119 = vld [vmem:[%s1 + $0xf14] sm:$0xf]
  %v1120 = vld [vmem:[%s1 + $0xf18] sm:$0xf]
  %v1121 = vld [vmem:[%s1 + $0xf1c] sm:$0xf]
  %v1122 = vld [vmem:[%s1 + $0xf20] sm:$0xf]
  %v1123 = vld [vmem:[%s1 + $0xf24] sm:$0xf]
  %v1124 = vld [vmem:[%s1 + $0xf28] sm:$0xf]
  %v1125 = vld [vmem:[%s1 + $0xf2c] sm:$0xf]
  %v1126 = vld [vmem:[%s1 + $0xf30] sm:$0xf]
  %v1127 = vld [vmem:[%s1 + $0xf34] sm:$0xf]
  %v1128 = vld [vmem:[%s1 + $0xf38] sm:$0xf]
  %v1129 = vld [vmem:[%s1 + $0xf3c] sm:$0xf]
  %v1130 = vld [vmem:[%s1 + $0xf40] sm:$0xf]
  %v1131 = vld [vmem:[%s1 + $0xf44] sm:$0xf]
  %v1132 = vld [vmem:[%s1 + $0xf48] sm:$0xf]
  %v1133 = vld [vmem:[%s1 + $0xf4c] sm:$0xf]
  %v1134 = vld [vmem:[%s1 + $0xf50] sm:$0xf]
  %v1135 = vld [vmem:[%s1 + $0xf54] sm:$0xf]
  %v1136 = vld [vmem:[%s1 + $0xf58] sm:$0xf]
  %v1137 = vld [vmem:[%s1 + $0xf5c] sm:$0xf]
  %v1138 = vld [vmem:[%s1 + $0xf60] sm:$0xf]
  %v1139 = vld [vmem:[%s1 + $0xf64] sm:$0xf]
  %v1140 = vld [vmem:[%s1 + $0xf68] sm:$0xf]
  %v1141 = vld [vmem:[%s1 + $0xf6c] sm:$0xf]
  %v1142 = vld [vmem:[%s1 + $0xf70] sm:$0xf]
  %v1143 = vld [vmem:[%s1 + $0xf74] sm:$0xf]
  %v1144 = vld [vmem:[%s1 + $0xf78] sm:$0xf]
  %v1145 = vld [vmem:[%s1 + $0xf7c] sm:$0xf]
  %v1146 = vld [vmem:[%s1 + $0xf80] sm:$0xf]
  %v1147 = vld [vmem:[%s1 + $0xf84] sm:$0xf]
  %v1148 = vld [vmem:[%s1 + $0xf88] sm:$0xf]
  %v1149 = vld [vmem:[%s1 + $0xf8c] sm:$0xf]
  %v1150 = vld [vmem:[%s1 + $0xf90] sm:$0xf]
  %v1151 = vld [vmem:[%s1 + $0xf94] sm:$0xf]
  %v1152 = vld [vmem:[%s1 + $0xf98] sm:$0xf]
  %v1153 = vld [vmem:[%s1 + $0xf9c] sm:$0xf]
  %v1154 = vld [vmem:[%s1 + $0xfa0] sm:$0xf]
  %v1155 = vld [vmem:[%s1 + $0xfa4] sm:$0xf]
  %v1156 = vld [vmem:[%s1 + $0xfa8] sm:$0xf]
  %v1157 = vld [vmem:[%s1 + $0xfac] sm:$0xf]
  %v1158 = vld [vmem:[%s1 + $0xfb0] sm:$0xf]
  %v1159 = vld [vmem:[%s1 + $0xfb4] sm:$0xf]
  %v1160 = vld [vmem:[%s1 + $0xfb8] sm:$0xf]
  %v1161 = vld [vmem:[%s1 + $0xfbc] sm:$0xf]
  %v1162 = vld [vmem:[%s1 + $0xfc0] sm:$0xf]
  %v1163 = vld [vmem:[%s1 + $0xfc4] sm:$0xf]
  %v1164 = vld [vmem:[%s1 + $0xfc8] sm:$0xf]
  %v1165 = vld [vmem:[%s1 + $0xfcc] sm:$0xf]
  %v1166 = vld [vmem:[%s1 + $0xfd0] sm:$0xf]
  %v1167 = vld [vmem:[%s1 + $0xfd4] sm:$0xf]
  %v1168 = vld [vmem:[%s1 + $0xfd8] sm:$0xf]
  %v1169 = vld [vmem:[%s1 + $0xfdc] sm:$0xf]
  %v1170 = vld [vmem:[%s1 + $0xfe0] sm:$0xf]
  %v1171 = vld [vmem:[%s1 + $0xfe4] sm:$0xf]
  %v1172 = vld [vmem:[%s1 + $0xfe8] sm:$0xf]
  %v1173 = vld [vmem:[%s1 + $0xfec] sm:$0xf]
  %v1174 = vld [vmem:[%s1 + $0xff0] sm:$0xf]
  %v1175 = vld [vmem:[%s1 + $0xff4] sm:$0xf]
  %v1176 = vld [vmem:[%s1 + $0xff8] sm:$0xf]
  %v1177 = vld [vmem:[%s1 + $0xffc] sm:$0xf]
  %v1178 = vld [vmem:[%s1 + $0x1000] sm:$0xf]
  %v1179 = vld [vmem:[%s1 + $0x1004] sm:$0xf]
  %v1180 = vld [vmem:[%s1 + $0x1008] sm:$0xf]
  %v1181 = vld [vmem:[%s1 + $0x100c] sm:$0xf]
  %v1182 = vld [vmem:[%s1 + $0x1010] sm:$0xf]
  %v1183 = vld [vmem:[%s1 + $0x1014] sm:$0xf]
  %v1184 = vld [vmem:[%s1 + $0x1018] sm:$0xf]
  %v1185 = vld [vmem:[%s1 + $0x101c] sm:$0xf]
  %v1186 = vld [vmem:[%s1 + $0x1020] sm:$0xf]
  %v1187 = vld [vmem:[%s1 + $0x1024] sm:$0xf]
  %v1188 = vld [vmem:[%s1 + $0x1028] sm:$0xf]
  %v1189 = vld [vmem:[%s1 + $0x102c] sm:$0xf]
  %v1190 = vld [vmem:[%s1 + $0x1030] sm:$0xf]
  %v1191 = vld [vmem:[%s1 + $0x1034] sm:$0xf]
  %v1192 = vld [vmem:[%s1 + $0x1038] sm:$0xf]
  %v1193 = vld [vmem:[%s1 + $0x103c] sm:$0xf]
  %v1194 = vld [vmem:[%s1 + $0x1040] sm:$0xf]
  %v1195 = vld [vmem:[%s1 + $0x1044] sm:$0xf]
  %v1196 = vld [vmem:[%s1 + $0x1048] sm:$0xf]
  %v1197 = vld [vmem:[%s1 + $0x104c] sm:$0xf]
  %v1198 = vld [vmem:[%s1 + $0x1050] sm:$0xf]
  %v1199 = vld [vmem:[%s1 + $0x1054] sm:$0xf]
  %v1200 = vld [vmem:[%s1 + $0x1058] sm:$0xf]
  %v1201 = vld [vmem:[%s1 + $0x105c] sm:$0xf]
  %v1202 = vld [vmem:[%s1 + $0x1060] sm:$0xf]
  %v1203 = vld [vmem:[%s1 + $0x1064] sm:$0xf]
  %v1204 = vld [vmem:[%s1 + $0x1068] sm:$0xf]
  %v1205 = vld [vmem:[%s1 + $0x106c] sm:$0xf]
  %v1206 = vld [vmem:[%s1 + $0x1070] sm:$0xf]
  %v1207 = vld [vmem:[%s1 + $0x1074] sm:$0xf]
  %v1208 = vld [vmem:[%s1 + $0x1078] sm:$0xf]
  %v1209 = vld [vmem:[%s1 + $0x107c] sm:$0xf]
  %v1210 = vld [vmem:[%s1 + $0x1080] sm:$0xf]
  %v1211 = vld [vmem:[%s1 + $0x1084] sm:$0xf]
  %v1212 = vld [vmem:[%s1 + $0x1088] sm:$0xf]
  %v1213 = vld [vmem:[%s1 + $0x108c] sm:$0xf]
  %v1214 = vld [vmem:[%s1 + $0x1090] sm:$0xf]
  %v1215 = vld [vmem:[%s1 + $0x1094] sm:$0xf]
  %v1216 = vld [vmem:[%s1 + $0x1098] sm:$0xf]
  %v1217 = vld [vmem:[%s1 + $0x109c] sm:$0xf]
  %v1218 = vld [vmem:[%s1 + $0x10a0] sm:$0xf]
  %v1219 = vld [vmem:[%s1 + $0x10a4] sm:$0xf]
  %v1220 = vld [vmem:[%s1 + $0x10a8] sm:$0xf]
  %v1221 = vld [vmem:[%s1 + $0x10ac] sm:$0xf]
  %v1222 = vld [vmem:[%s1 + $0x10b0] sm:$0xf]
  %v1223 = vld [vmem:[%s1 + $0x10b4] sm:$0xf]
  %v1224 = vld [vmem:[%s1 + $0x10b8] sm:$0xf]
  %v1225 = vld [vmem:[%s1 + $0x10bc] sm:$0xf]
  %v1226 = vld [vmem:[%s1 + $0x10c0] sm:$0xf]
  %v1227 = vld [vmem:[%s1 + $0x10c4] sm:$0xf]
  %v1228 = vld [vmem:[%s1 + $0x10c8] sm:$0xf]
  %v1229 = vld [vmem:[%s1 + $0x10cc] sm:$0xf]
  %v1230 = vld [vmem:[%s1 + $0x10d0] sm:$0xf]
  %v1231 = vld [vmem:[%s1 + $0x10d4] sm:$0xf]
  %v1232 = vld [vmem:[%s1 + $0x10d8] sm:$0xf]
  %v1233 = vld [vmem:[%s1 + $0x10dc] sm:$0xf]
  %v1234 = vld [vmem:[%s1 + $0x10e0] sm:$0xf]
  %v1235 = vld [vmem:[%s1 + $0x10e4] sm:$0xf]
  %v1236 = vld [vmem:[%s1 + $0x10e8] sm:$0xf]
  %v1237 = vld [vmem:[%s1 + $0x10ec] sm:$0xf]
  %v1238 = vld [vmem:[%s1 + $0x10f0] sm:$0xf]
  %v1239 = vld [vmem:[%s1 + $0x10f4] sm:$0xf]
  %v1240 = vld [vmem:[%s1 + $0x10f8] sm:$0xf]
  %v1241 = vld [vmem:[%s1 + $0x10fc] sm:$0xf]
  %v1242 = vld [vmem:[%s1 + $0x1100] sm:$0xf]
  %v1243 = vld [vmem:[%s1 + $0x1104] sm:$0xf]
  %v1244 = vld [vmem:[%s1 + $0x1108] sm:$0xf]
  %v1245 = vld [vmem:[%s1 + $0x110c] sm:$0xf]
  %v1246 = vld [vmem:[%s1 + $0x1110] sm:$0xf]
  %v1247 = vld [vmem:[%s1 + $0x1114] sm:$0xf]
  %v1248 = vld [vmem:[%s1 + $0x1118] sm:$0xf]
  %v1249 = vld [vmem:[%s1 + $0x111c] sm:$0xf]
  %v1250 = vld [vmem:[%s1 + $0x1120] sm:$0xf]
  %v1251 = vld [vmem:[%s1 + $0x1124] sm:$0xf]
  %v1252 = vld [vmem:[%s1 + $0x1128] sm:$0xf]
  %v1253 = vld [vmem:[%s1 + $0x112c] sm:$0xf]
  %v1254 = vld [vmem:[%s1 + $0x1130] sm:$0xf]
  %v1255 = vld [vmem:[%s1 + $0x1134] sm:$0xf]
  %v1256 = vld [vmem:[%s1 + $0x1138] sm:$0xf]
  %v1257 = vld [vmem:[%s1 + $0x113c] sm:$0xf]
  %v1258 = vld [vmem:[%s1 + $0x1140] sm:$0xf]
  %v1259 = vld [vmem:[%s1 + $0x1144] sm:$0xf]
  %v1260 = vld [vmem:[%s1 + $0x1148] sm:$0xf]
  %v1261 = vld [vmem:[%s1 + $0x114c] sm:$0xf]
  %v1262 = vld [vmem:[%s1 + $0x1150] sm:$0xf]
  %v1263 = vld [vmem:[%s1 + $0x1154] sm:$0xf]
  %v1264 = vld [vmem:[%s1 + $0x1158] sm:$0xf]
  %v1265 = vld [vmem:[%s1 + $0x115c] sm:$0xf]
  %v1266 = vld [vmem:[%s1 + $0x1160] sm:$0xf]
  %v1267 = vld [vmem:[%s1 + $0x1164] sm:$0xf]
  %v1268 = vld [vmem:[%s1 + $0x1168] sm:$0xf]
  %v1269 = vld [vmem:[%s1 + $0x116c] sm:$0xf]
  %v1270 = vld [vmem:[%s1 + $0x1170] sm:$0xf]
  %v1271 = vld [vmem:[%s1 + $0x1174] sm:$0xf]
  %v1272 = vld [vmem:[%s1 + $0x1178] sm:$0xf]
  %v1273 = vld [vmem:[%s1 + $0x117c] sm:$0xf]
  %v1274 = vld [vmem:[%s1 + $0x1180] sm:$0xf]
  %v1275 = vld [vmem:[%s1 + $0x1184] sm:$0xf]
  %v1276 = vld [vmem:[%s1 + $0x1188] sm:$0xf]
  %v1277 = vld [vmem:[%s1 + $0x118c] sm:$0xf]
  %v1278 = vld [vmem:[%s1 + $0x1190] sm:$0xf]
  %v1279 = vld [vmem:[%s1 + $0x1194] sm:$0xf]
  %v1280 = vld [vmem:[%s1 + $0x1198] sm:$0xf]
  %v1281 = vld [vmem:[%s1 + $0x119c] sm:$0xf]
  %v1282 = vld [vmem:[%s1 + $0x11a0] sm:$0xf]
  %v1283 = vld [vmem:[%s1 + $0x11a4] sm:$0xf]
  %v1284 = vld [vmem:[%s1 + $0x11a8] sm:$0xf]
  %v1285 = vld [vmem:[%s1 + $0x11ac] sm:$0xf]
  %v1286 = vld [vmem:[%s1 + $0x11b0] sm:$0xf]
  %v1287 = vld [vmem:[%s1 + $0x11b4] sm:$0xf]
  %v1288 = vld [vmem:[%s1 + $0x11b8] sm:$0xf]
  %v1289 = vld [vmem:[%s1 + $0x11bc] sm:$0xf]
  %v1290 = vld [vmem:[%s1 + $0x11c0] sm:$0xf]
  %v1291 = vld [vmem:[%s1 + $0x11c4] sm:$0xf]
  %v1292 = vld [vmem:[%s1 + $0x11c8] sm:$0xf]
  %v1293 = vld [vmem:[%s1 + $0x11cc] sm:$0xf]
  %v1294 = vld [vmem:[%s1 + $0x11d0] sm:$0xf]
  %v1295 = vld [vmem:[%s1 + $0x11d4] sm:$0xf]
  %v1296 = vld [vmem:[%s1 + $0x11d8] sm:$0xf]
  %v1297 = vld [vmem:[%s1 + $0x11dc] sm:$0xf]
  %v1298 = vld [vmem:[%s1 + $0x11e0] sm:$0xf]
  %v1299 = vld [vmem:[%s1 + $0x11e4] sm:$0xf]
  %v1300 = vld [vmem:[%s1 + $0x11e8] sm:$0xf]
  %v1301 = vld [vmem:[%s1 + $0x11ec] sm:$0xf]
  %v1302 = vld [vmem:[%s1 + $0x11f0] sm:$0xf]
  %v1303 = vld [vmem:[%s1 + $0x11f4] sm:$0xf]
  %v1304 = vld [vmem:[%s1 + $0x11f8] sm:$0xf]
  %v1305 = vld [vmem:[%s1 + $0x11fc] sm:$0xf]
  %v1306 = vld [vmem:[%s1 + $0x1200] sm:$0xf]
  %v1307 = vld [vmem:[%s1 + $0x1204] sm:$0xf]
  %v1308 = vld [vmem:[%s1 + $0x1208] sm:$0xf]
  %v1309 = vld [vmem:[%s1 + $0x120c] sm:$0xf]
  %v1310 = vld [vmem:[%s1 + $0x1210] sm:$0xf]
  %v1311 = vld [vmem:[%s1 + $0x1214] sm:$0xf]
  %v1312 = vld [vmem:[%s1 + $0x1218] sm:$0xf]
  %v1313 = vld [vmem:[%s1 + $0x121c] sm:$0xf]
  %v1314 = vld [vmem:[%s1 + $0x1220] sm:$0xf]
  %v1315 = vld [vmem:[%s1 + $0x1224] sm:$0xf]
  %v1316 = vld [vmem:[%s1 + $0x1228] sm:$0xf]
  %v1317 = vld [vmem:[%s1 + $0x122c] sm:$0xf]
  %v1318 = vld [vmem:[%s1 + $0x1230] sm:$0xf]
  %v1319 = vld [vmem:[%s1 + $0x1234] sm:$0xf]
  %v1320 = vld [vmem:[%s1 + $0x1238] sm:$0xf]
  %v1321 = vld [vmem:[%s1 + $0x123c] sm:$0xf]
  %v1322 = vld [vmem:[%s1 + $0x1240] sm:$0xf]
  %v1323 = vld [vmem:[%s1 + $0x1244] sm:$0xf]
  %v1324 = vld [vmem:[%s1 + $0x1248] sm:$0xf]
  %v1325 = vld [vmem:[%s1 + $0x124c] sm:$0xf]
  %v1326 = vld [vmem:[%s1 + $0x1250] sm:$0xf]
  %v1327 = vld [vmem:[%s1 + $0x1254] sm:$0xf]
  %v1328 = vld [vmem:[%s1 + $0x1258] sm:$0xf]
  %v1329 = vld [vmem:[%s1 + $0x125c] sm:$0xf]
  %v1330 = vld [vmem:[%s1 + $0x1260] sm:$0xf]
  %v1331 = vld [vmem:[%s1 + $0x1264] sm:$0xf]
  %v1332 = vld [vmem:[%s1 + $0x1268] sm:$0xf]
  %v1333 = vld [vmem:[%s1 + $0x126c] sm:$0xf]
  %v1334 = vld [vmem:[%s1 + $0x1270] sm:$0xf]
  %v1335 = vld [vmem:[%s1 + $0x1274] sm:$0xf]
  %v1336 = vld [vmem:[%s1 + $0x1278] sm:$0xf]
  %v1337 = vld [vmem:[%s1 + $0x127c] sm:$0xf]
  %v1338 = vld [vmem:[%s1 + $0x1280] sm:$0xf]
  %v1339 = vld [vmem:[%s1 + $0x1284] sm:$0xf]
  %v1340 = vld [vmem:[%s1 + $0x1288] sm:$0xf]
  %v1341 = vld [vmem:[%s1 + $0x128c] sm:$0xf]
  %v1342 = vld [vmem:[%s1 + $0x1290] sm:$0xf]
  %v1343 = vld [vmem:[%s1 + $0x1294] sm:$0xf]
  %v1344 = vld [vmem:[%s1 + $0x1298] sm:$0xf]
  %v1345 = vld [vmem:[%s1 + $0x129c] sm:$0xf]
  %v1346 = vld [vmem:[%s1 + $0x12a0] sm:$0xf]
  %v1347 = vld [vmem:[%s1 + $0x12a4] sm:$0xf]
  %v1348 = vld [vmem:[%s1 + $0x12a8] sm:$0xf]
  %v1349 = vld [vmem:[%s1 + $0x12ac] sm:$0xf]
  %v1350 = vld [vmem:[%s1 + $0x12b0] sm:$0xf]
  %v1351 = vld [vmem:[%s1 + $0x12b4] sm:$0xf]
  %v1352 = vld [vmem:[%s1 + $0x12b8] sm:$0xf]
  %v1353 = vld [vmem:[%s1 + $0x12bc] sm:$0xf]
  %v1354 = vld [vmem:[%s1 + $0x12c0] sm:$0xf]
  %v1355 = vld [vmem:[%s1 + $0x12c4] sm:$0xf]
  %v1356 = vld [vmem:[%s1 + $0x12c8] sm:$0xf]
  %v1357 = vld [vmem:[%s1 + $0x12cc] sm:$0xf]
  %v1358 = vld [vmem:[%s1 + $0x12d0] sm:$0xf]
  %v1359 = vld [vmem:[%s1 + $0x12d4] sm:$0xf]
  %v1360 = vld [vmem:[%s1 + $0x12d8] sm:$0xf]
  %v1361 = vld [vmem:[%s1 + $0x12dc] sm:$0xf]
  %v1362 = vld [vmem:[%s1 + $0x12e0] sm:$0xf]
  %v1363 = vld [vmem:[%s1 + $0x12e4] sm:$0xf]
  %v1364 = vld [vmem:[%s1 + $0x12e8] sm:$0xf]
  %v1365 = vld [vmem:[%s1 + $0x12ec] sm:$0xf]
  %v1366 = vld [vmem:[%s1 + $0x12f0] sm:$0xf]
  %v1367 = vld [vmem:[%s1 + $0x12f4] sm:$0xf]
  %v1368 = vld [vmem:[%s1 + $0x12f8] sm:$0xf]
  %v1369 = vld [vmem:[%s1 + $0x12fc] sm:$0xf]
  %v1370 = vld [vmem:[%s1 + $0x1300] sm:$0xf]
  %v1371 = vld [vmem:[%s1 + $0x1304] sm:$0xf]
  %v1372 = vld [vmem:[%s1 + $0x1308] sm:$0xf]
  %v1373 = vld [vmem:[%s1 + $0x130c] sm:$0xf]
  %v1374 = vld [vmem:[%s1 + $0x1310] sm:$0xf]
  %v1375 = vld [vmem:[%s1 + $0x1314] sm:$0xf]
  %v1376 = vld [vmem:[%s1 + $0x1318] sm:$0xf]
  %v1377 = vld [vmem:[%s1 + $0x131c] sm:$0xf]
  %v1378 = vld [vmem:[%s1 + $0x1320] sm:$0xf]
  %v1379 = vld [vmem:[%s1 + $0x1324] sm:$0xf]
  %v1380 = vld [vmem:[%s1 + $0x1328] sm:$0xf]
  %v1381 = vld [vmem:[%s1 + $0x132c] sm:$0xf]
  %v1382 = vld [vmem:[%s1 + $0x1330] sm:$0xf]
  %v1383 = vld [vmem:[%s1 + $0x1334] sm:$0xf]
  %v1384 = vld [vmem:[%s1 + $0x1338] sm:$0xf]
  %v1385 = vld [vmem:[%s1 + $0x133c] sm:$0xf]
  %v1386 = vld [vmem:[%s1 + $0x1340] sm:$0xf]
  %v1387 = vld [vmem:[%s1 + $0x1344] sm:$0xf]
  %v1388 = vld [vmem:[%s1 + $0x1348] sm:$0xf]
  %v1389 = vld [vmem:[%s1 + $0x134c] sm:$0xf]
  %v1390 = vld [vmem:[%s1 + $0x1350] sm:$0xf]
  %v1391 = vld [vmem:[%s1 + $0x1354] sm:$0xf]
  %v1392 = vld [vmem:[%s1 + $0x1358] sm:$0xf]
  %v1393 = vld [vmem:[%s1 + $0x135c] sm:$0xf]
  %v1394 = vld [vmem:[%s1 + $0x1360] sm:$0xf]
  %v1395 = vld [vmem:[%s1 + $0x1364] sm:$0xf]
  %v1396 = vld [vmem:[%s1 + $0x1368] sm:$0xf]
  %v1397 = vld [vmem:[%s1 + $0x136c] sm:$0xf]
  %v1398 = vld [vmem:[%s1 + $0x1370] sm:$0xf]
  %v1399 = vld [vmem:[%s1 + $0x1374] sm:$0xf]
  %v1400 = vld [vmem:[%s1 + $0x1378] sm:$0xf]
  %v1401 = vld [vmem:[%s1 + $0x137c] sm:$0xf]
  %v1402 = vld [vmem:[%s1 + $0x1380] sm:$0xf]
  %v1403 = vld [vmem:[%s1 + $0x1384] sm:$0xf]
  %v1404 = vld [vmem:[%s1 + $0x1388] sm:$0xf]
  %v1405 = vld [vmem:[%s1 + $0x138c] sm:$0xf]
  %v1406 = vld [vmem:[%s1 + $0x1390] sm:$0xf]
  %v1407 = vld [vmem:[%s1 + $0x1394] sm:$0xf]
  %v1408 = vld [vmem:[%s1 + $0x1398] sm:$0xf]
  %v1409 = vld [vmem:[%s1 + $0x139c] sm:$0xf]
  %v1410 = vld [vmem:[%s1 + $0x13a0] sm:$0xf]
  %v1411 = vld [vmem:[%s1 + $0x13a4] sm:$0xf]
  %v1412 = vld [vmem:[%s1 + $0x13a8] sm:$0xf]
  %v1413 = vld [vmem:[%s1 + $0x13ac] sm:$0xf]
  %v1414 = vld [vmem:[%s1 + $0x13b0] sm:$0xf]
  %v1415 = vld [vmem:[%s1 + $0x13b4] sm:$0xf]
  %v1416 = vld [vmem:[%s1 + $0x13b8] sm:$0xf]
  %v1417 = vld [vmem:[%s1 + $0x13bc] sm:$0xf]
  %v1418 = vld [vmem:[%s1 + $0x13c0] sm:$0xf]
  %v1419 = vld [vmem:[%s1 + $0x13c4] sm:$0xf]
  %v1420 = vld [vmem:[%s1 + $0x13c8] sm:$0xf]
  %v1421 = vld [vmem:[%s1 + $0x13cc] sm:$0xf]
  %v1422 = vld [vmem:[%s1 + $0x13d0] sm:$0xf]
  %v1423 = vld [vmem:[%s1 + $0x13d4] sm:$0xf]
  %v1424 = vld [vmem:[%s1 + $0x13d8] sm:$0xf]
  %v1425 = vld [vmem:[%s1 + $0x13dc] sm:$0xf]
  %v1426 = vld [vmem:[%s1 + $0x13e0] sm:$0xf]
  %v1427 = vld [vmem:[%s1 + $0x13e4] sm:$0xf]
  %v1428 = vld [vmem:[%s1 + $0x13e8] sm:$0xf]
  %v1429 = vld [vmem:[%s1 + $0x13ec] sm:$0xf]
  %v1430 = vld [vmem:[%s1 + $0x13f0] sm:$0xf]
  %v1431 = vld [vmem:[%s1 + $0x13f4] sm:$0xf]
  %v1432 = vld [vmem:[%s1 + $0x13f8] sm:$0xf]
  %v1433 = vld [vmem:[%s1 + $0x13fc] sm:$0xf]
  %v1434 = vld [vmem:[%s1 + $0x1400] sm:$0xf]
  %v1435 = vld [vmem:[%s1 + $0x1404] sm:$0xf]
  %v1436 = vld [vmem:[%s1 + $0x1408] sm:$0xf]
  %v1437 = vld [vmem:[%s1 + $0x140c] sm:$0xf]
  %v1438 = vld [vmem:[%s1 + $0x1410] sm:$0xf]
  %v1439 = vld [vmem:[%s1 + $0x1414] sm:$0xf]
  %v1440 = vld [vmem:[%s1 + $0x1418] sm:$0xf]
  %v1441 = vld [vmem:[%s1 + $0x141c] sm:$0xf]
  %v1442 = vld [vmem:[%s1 + $0x1420] sm:$0xf]
  %v1443 = vld [vmem:[%s1 + $0x1424] sm:$0xf]
  %v1444 = vld [vmem:[%s1 + $0x1428] sm:$0xf]
  %v1445 = vld [vmem:[%s1 + $0x142c] sm:$0xf]
  %v1446 = vld [vmem:[%s1 + $0x1430] sm:$0xf]
  %v1447 = vld [vmem:[%s1 + $0x1434] sm:$0xf]
  %v1448 = vld [vmem:[%s1 + $0x1438] sm:$0xf]
  %v1449 = vld [vmem:[%s1 + $0x143c] sm:$0xf]
  %v1450 = vld [vmem:[%s1 + $0x1440] sm:$0xf]
  %v1451 = vld [vmem:[%s1 + $0x1444] sm:$0xf]
  %v1452 = vld [vmem:[%s1 + $0x1448] sm:$0xf]
  %v1453 = vld [vmem:[%s1 + $0x144c] sm:$0xf]
  %v1454 = vld [vmem:[%s1 + $0x1450] sm:$0xf]
  %v1455 = vld [vmem:[%s1 + $0x1454] sm:$0xf]
  %v1456 = vld [vmem:[%s1 + $0x1458] sm:$0xf]
  %v1457 = vld [vmem:[%s1 + $0x145c] sm:$0xf]
  %v1458 = vld [vmem:[%s1 + $0x1460] sm:$0xf]
  %v1459 = vld [vmem:[%s1 + $0x1464] sm:$0xf]
  %v1460 = vld [vmem:[%s1 + $0x1468] sm:$0xf]
  %v1461 = vld [vmem:[%s1 + $0x146c] sm:$0xf]
  %v1462 = vld [vmem:[%s1 + $0x1470] sm:$0xf]
  %v1463 = vld [vmem:[%s1 + $0x1474] sm:$0xf]
  %v1464 = vld [vmem:[%s1 + $0x1478] sm:$0xf]
  %v1465 = vld [vmem:[%s1 + $0x147c] sm:$0xf]
  %v1466 = vld [vmem:[%s1 + $0x1480] sm:$0xf]
  %v1467 = vld [vmem:[%s1 + $0x1484] sm:$0xf]
  %v1468 = vld [vmem:[%s1 + $0x1488] sm:$0xf]
  %v1469 = vld [vmem:[%s1 + $0x148c] sm:$0xf]
  %v1470 = vld [vmem:[%s1 + $0x1490] sm:$0xf]
  %v1471 = vld [vmem:[%s1 + $0x1494] sm:$0xf]
  %v1472 = vld [vmem:[%s1 + $0x1498] sm:$0xf]
  %v1473 = vld [vmem:[%s1 + $0x149c] sm:$0xf]
  %v1474 = vld [vmem:[%s1 + $0x14a0] sm:$0xf]
  %v1475 = vld [vmem:[%s1 + $0x14a4] sm:$0xf]
  %v1476 = vld [vmem:[%s1 + $0x14a8] sm:$0xf]
  %v1477 = vld [vmem:[%s1 + $0x14ac] sm:$0xf]
  %v1478 = vld [vmem:[%s1 + $0x14b0] sm:$0xf]
  %v1479 = vld [vmem:[%s1 + $0x14b4] sm:$0xf]
  %v1480 = vld [vmem:[%s1 + $0x14b8] sm:$0xf]
  %v1481 = vld [vmem:[%s1 + $0x14bc] sm:$0xf]
  %v1482 = vld [vmem:[%s1 + $0x14c0] sm:$0xf]
  %v1483 = vld [vmem:[%s1 + $0x14c4] sm:$0xf]
  %v1484 = vld [vmem:[%s1 + $0x14c8] sm:$0xf]
  %v1485 = vld [vmem:[%s1 + $0x14cc] sm:$0xf]
  %v1486 = vld [vmem:[%s1 + $0x14d0] sm:$0xf]
  %v1487 = vld [vmem:[%s1 + $0x14d4] sm:$0xf]
  %v1488 = vld [vmem:[%s1 + $0x14d8] sm:$0xf]
  %v1489 = vld [vmem:[%s1 + $0x14dc] sm:$0xf]
  %v1490 = vld [vmem:[%s1 + $0x14e0] sm:$0xf]
  %v1491 = vld [vmem:[%s1 + $0x14e4] sm:$0xf]
  %v1492 = vld [vmem:[%s1 + $0x14e8] sm:$0xf]
  %v1493 = vld [vmem:[%s1 + $0x14ec] sm:$0xf]
  %v1494 = vld [vmem:[%s1 + $0x14f0] sm:$0xf]
  %v1495 = vld [vmem:[%s1 + $0x14f4] sm:$0xf]
  %v1496 = vld [vmem:[%s1 + $0x14f8] sm:$0xf]
  %v1497 = vld [vmem:[%s1 + $0x14fc] sm:$0xf]
  %v1498 = vld [vmem:[%s1 + $0x1500] sm:$0xf]
  %v1499 = vld [vmem:[%s1 + $0x1504] sm:$0xf]
  %v1500 = vld [vmem:[%s1 + $0x1508] sm:$0xf]
  %v1501 = vld [vmem:[%s1 + $0x150c] sm:$0xf]
  %v1502 = vld [vmem:[%s1 + $0x1510] sm:$0xf]
  %v1503 = vld [vmem:[%s1 + $0x1514] sm:$0xf]
  %v1504 = vld [vmem:[%s1 + $0x1518] sm:$0xf]
  %v1505 = vld [vmem:[%s1 + $0x151c] sm:$0xf]
  %v1506 = vld [vmem:[%s1 + $0x1520] sm:$0xf]
  %v1507 = vld [vmem:[%s1 + $0x1524] sm:$0xf]
  %v1508 = vld [vmem:[%s1 + $0x1528] sm:$0xf]
  %v1509 = vld [vmem:[%s1 + $0x152c] sm:$0xf]
  %v1510 = vld [vmem:[%s1 + $0x1530] sm:$0xf]
  %v1511 = vld [vmem:[%s1 + $0x1534] sm:$0xf]
  %v1512 = vld [vmem:[%s1 + $0x1538] sm:$0xf]
  %v1513 = vld [vmem:[%s1 + $0x153c] sm:$0xf]
  %v1514 = vld [vmem:[%s1 + $0x1540] sm:$0xf]
  %v1515 = vld [vmem:[%s1 + $0x1544] sm:$0xf]
  %v1516 = vld [vmem:[%s1 + $0x1548] sm:$0xf]
  %v1517 = vld [vmem:[%s1 + $0x154c] sm:$0xf]
  %v1518 = vld [vmem:[%s1 + $0x1550] sm:$0xf]
  %v1519 = vld [vmem:[%s1 + $0x1554] sm:$0xf]
  %v1520 = vld [vmem:[%s1 + $0x1558] sm:$0xf]
  %v1521 = vld [vmem:[%s1 + $0x155c] sm:$0xf]
  %v1522 = vld [vmem:[%s1 + $0x1560] sm:$0xf]
  %v1523 = vld [vmem:[%s1 + $0x1564] sm:$0xf]
  %v1524 = vld [vmem:[%s1 + $0x1568] sm:$0xf]
  %v1525 = vld [vmem:[%s1 + $0x156c] sm:$0xf]
  %v1526 = vld [vmem:[%s1 + $0x1570] sm:$0xf]
  %v1527 = vld [vmem:[%s1 + $0x1574] sm:$0xf]
  %v1528 = vld [vmem:[%s1 + $0x1578] sm:$0xf]
  %v1529 = vld [vmem:[%s1 + $0x157c] sm:$0xf]
  %v1530 = vld [vmem:[%s1 + $0x1580] sm:$0xf]
  %v1531 = vld [vmem:[%s1 + $0x1584] sm:$0xf]
  %v1532 = vld [vmem:[%s1 + $0x1588] sm:$0xf]
  %v1533 = vld [vmem:[%s1 + $0x158c] sm:$0xf]
  %v1534 = vld [vmem:[%s1 + $0x1590] sm:$0xf]
  %v1535 = vld [vmem:[%s1 + $0x1594] sm:$0xf]
  %v1536 = vld [vmem:[%s1 + $0x1598] sm:$0xf]
  %v1537 = vld [vmem:[%s1 + $0x159c] sm:$0xf]
  %v1538 = vld [vmem:[%s1 + $0x15a0] sm:$0xf]
  %v1539 = vld [vmem:[%s1 + $0x15a4] sm:$0xf]
  %v1540 = vld [vmem:[%s1 + $0x15a8] sm:$0xf]
  %v1541 = vld [vmem:[%s1 + $0x15ac] sm:$0xf]
  %v1542 = vld [vmem:[%s1 + $0x15b0] sm:$0xf]
  %v1543 = vld [vmem:[%s1 + $0x15b4] sm:$0xf]
  %v1544 = vld [vmem:[%s1 + $0x15b8] sm:$0xf]
  %v1545 = vld [vmem:[%s1 + $0x15bc] sm:$0xf]
  %v1546 = vld [vmem:[%s1 + $0x15c0] sm:$0xf]
  %v1547 = vld [vmem:[%s1 + $0x15c4] sm:$0xf]
  %v1548 = vld [vmem:[%s1 + $0x15c8] sm:$0xf]
  %v1549 = vld [vmem:[%s1 + $0x15cc] sm:$0xf]
  %v1550 = vld [vmem:[%s1 + $0x15d0] sm:$0xf]
  %v1551 = vld [vmem:[%s1 + $0x15d4] sm:$0xf]
  %v1552 = vld [vmem:[%s1 + $0x15d8] sm:$0xf]
  %v1553 = vld [vmem:[%s1 + $0x15dc] sm:$0xf]
  %v1554 = vld [vmem:[%s1 + $0x15e0] sm:$0xf]
  %v1555 = vld [vmem:[%s1 + $0x15e4] sm:$0xf]
  %v1556 = vld [vmem:[%s1 + $0x15e8] sm:$0xf]
  %v1557 = vld [vmem:[%s1 + $0x15ec] sm:$0xf]
  %v1558 = vld [vmem:[%s1 + $0x15f0] sm:$0xf]
  %v1559 = vld [vmem:[%s1 + $0x15f4] sm:$0xf]
  %v1560 = vld [vmem:[%s1 + $0x15f8] sm:$0xf]
  %v1561 = vld [vmem:[%s1 + $0x15fc] sm:$0xf]
  %v1562 = vld [vmem:[%s1 + $0x1600] sm:$0xf]
  %v1563 = vld [vmem:[%s1 + $0x1604] sm:$0xf]
  %v1564 = vld [vmem:[%s1 + $0x1608] sm:$0xf]
  %v1565 = vld [vmem:[%s1 + $0x160c] sm:$0xf]
  %v1566 = vld [vmem:[%s1 + $0x1610] sm:$0xf]
  %v1567 = vld [vmem:[%s1 + $0x1614] sm:$0xf]
  %v1568 = vld [vmem:[%s1 + $0x1618] sm:$0xf]
  %v1569 = vld [vmem:[%s1 + $0x161c] sm:$0xf]
  %v1570 = vld [vmem:[%s1 + $0x1620] sm:$0xf]
  %v1571 = vld [vmem:[%s1 + $0x1624] sm:$0xf]
  %v1572 = vld [vmem:[%s1 + $0x1628] sm:$0xf]
  %v1573 = vld [vmem:[%s1 + $0x162c] sm:$0xf]
  %v1574 = vld [vmem:[%s1 + $0x1630] sm:$0xf]
  %v1575 = vld [vmem:[%s1 + $0x1634] sm:$0xf]
  %v1576 = vld [vmem:[%s1 + $0x1638] sm:$0xf]
  %v1577 = vld [vmem:[%s1 + $0x163c] sm:$0xf]
  %v1578 = vld [vmem:[%s1 + $0x1640] sm:$0xf]
  %v1579 = vld [vmem:[%s1 + $0x1644] sm:$0xf]
  %v1580 = vld [vmem:[%s1 + $0x1648] sm:$0xf]
  %v1581 = vld [vmem:[%s1 + $0x164c] sm:$0xf]
  %v1582 = vld [vmem:[%s1 + $0x1650] sm:$0xf]
  %v1583 = vld [vmem:[%s1 + $0x1654] sm:$0xf]
  %v1584 = vld [vmem:[%s1 + $0x1658] sm:$0xf]
  %v1585 = vld [vmem:[%s1 + $0x165c] sm:$0xf]
  %v1586 = vld [vmem:[%s1 + $0x1660] sm:$0xf]
  %v1587 = vld [vmem:[%s1 + $0x1664] sm:$0xf]
  %v1588 = vld [vmem:[%s1 + $0x1668] sm:$0xf]
  %v1589 = vld [vmem:[%s1 + $0x166c] sm:$0xf]
  %v1590 = vld [vmem:[%s1 + $0x1670] sm:$0xf]
  %v1591 = vld [vmem:[%s1 + $0x1674] sm:$0xf]
  %v1592 = vld [vmem:[%s1 + $0x1678] sm:$0xf]
  %v1593 = vld [vmem:[%s1 + $0x167c] sm:$0xf]
  %v1594 = vld [vmem:[%s1 + $0x1680] sm:$0xf]
  %v1595 = vld [vmem:[%s1 + $0x1684] sm:$0xf]
  %v1596 = vld [vmem:[%s1 + $0x1688] sm:$0xf]
  %v1597 = vld [vmem:[%s1 + $0x168c] sm:$0xf]
  %v1598 = vld [vmem:[%s1 + $0x1690] sm:$0xf]
  %v1599 = vld [vmem:[%s1 + $0x1694] sm:$0xf]
  %v1600 = vld [vmem:[%s1 + $0x1698] sm:$0xf]
  %v1601 = vld [vmem:[%s1 + $0x169c] sm:$0xf]
  %v1602 = vld [vmem:[%s1 + $0x16a0] sm:$0xf]
  %v1603 = vld [vmem:[%s1 + $0x16a4] sm:$0xf]
  %v1604 = vld [vmem:[%s1 + $0x16a8] sm:$0xf]
  %v1605 = vld [vmem:[%s1 + $0x16ac] sm:$0xf]
  %v1606 = vld [vmem:[%s1 + $0x16b0] sm:$0xf]
  %v1607 = vld [vmem:[%s1 + $0x16b4] sm:$0xf]
  %v1608 = vld [vmem:[%s1 + $0x16b8] sm:$0xf]
  %v1609 = vld [vmem:[%s1 + $0x16bc] sm:$0xf]
  %v1610 = vld [vmem:[%s1 + $0x16c0] sm:$0xf]
  %v1611 = vld [vmem:[%s1 + $0x16c4] sm:$0xf]
  %v1612 = vld [vmem:[%s1 + $0x16c8] sm:$0xf]
  %v1613 = vld [vmem:[%s1 + $0x16cc] sm:$0xf]
  %v1614 = vld [vmem:[%s1 + $0x16d0] sm:$0xf]
  %v1615 = vld [vmem:[%s1 + $0x16d4] sm:$0xf]
  %v1616 = vld [vmem:[%s1 + $0x16d8] sm:$0xf]
  %v1617 = vld [vmem:[%s1 + $0x16dc] sm:$0xf]
  %v1618 = vld [vmem:[%s1 + $0x16e0] sm:$0xf]
  %v1619 = vld [vmem:[%s1 + $0x16e4] sm:$0xf]
  %v1620 = vld [vmem:[%s1 + $0x16e8] sm:$0xf]
  %v1621 = vld [vmem:[%s1 + $0x16ec] sm:$0xf]
  %v1622 = vld [vmem:[%s1 + $0x16f0] sm:$0xf]
  %v1623 = vld [vmem:[%s1 + $0x16f4] sm:$0xf]
  %v1624 = vld [vmem:[%s1 + $0x16f8] sm:$0xf]
  %v1625 = vld [vmem:[%s1 + $0x16fc] sm:$0xf]
  %v1626 = vld [vmem:[%s1 + $0x1700] sm:$0xf]
  %v1627 = vld [vmem:[%s1 + $0x1704] sm:$0xf]
  %v1628 = vld [vmem:[%s1 + $0x1708] sm:$0xf]
  %v1629 = vld [vmem:[%s1 + $0x170c] sm:$0xf]
  %v1630 = vld [vmem:[%s1 + $0x1710] sm:$0xf]
  %v1631 = vld [vmem:[%s1 + $0x1714] sm:$0xf]
  %v1632 = vld [vmem:[%s1 + $0x1718] sm:$0xf]
  %v1633 = vld [vmem:[%s1 + $0x171c] sm:$0xf]
  %v1634 = vld [vmem:[%s1 + $0x1720] sm:$0xf]
  %v1635 = vld [vmem:[%s1 + $0x1724] sm:$0xf]
  %v1636 = vld [vmem:[%s1 + $0x1728] sm:$0xf]
  %v1637 = vld [vmem:[%s1 + $0x172c] sm:$0xf]
  %v1638 = vld [vmem:[%s1 + $0x1730] sm:$0xf]
  %v1639 = vld [vmem:[%s1 + $0x1734] sm:$0xf]
  %v1640 = vld [vmem:[%s1 + $0x1738] sm:$0xf]
  %v1641 = vld [vmem:[%s1 + $0x173c] sm:$0xf]
  %v1642 = vld [vmem:[%s1 + $0x1740] sm:$0xf]
  %v1643 = vld [vmem:[%s1 + $0x1744] sm:$0xf]
  %v1644 = vld [vmem:[%s1 + $0x1748] sm:$0xf]
  %v1645 = vld [vmem:[%s1 + $0x174c] sm:$0xf]
  %v1646 = vld [vmem:[%s1 + $0x1750] sm:$0xf]
  %v1647 = vld [vmem:[%s1 + $0x1754] sm:$0xf]
  %v1648 = vld [vmem:[%s1 + $0x1758] sm:$0xf]
  %v1649 = vld [vmem:[%s1 + $0x175c] sm:$0xf]
  %v1650 = vld [vmem:[%s1 + $0x1760] sm:$0xf]
  %v1651 = vld [vmem:[%s1 + $0x1764] sm:$0xf]
  %v1652 = vld [vmem:[%s1 + $0x1768] sm:$0xf]
  %v1653 = vld [vmem:[%s1 + $0x176c] sm:$0xf]
  %v1654 = vld [vmem:[%s1 + $0x1770] sm:$0xf]
  %v1655 = vld [vmem:[%s1 + $0x1774] sm:$0xf]
  %v1656 = vld [vmem:[%s1 + $0x1778] sm:$0xf]
  %v1657 = vld [vmem:[%s1 + $0x177c] sm:$0xf]
  %v1658 = vld [vmem:[%s1 + $0x1780] sm:$0xf]
  %v1659 = vld [vmem:[%s1 + $0x1784] sm:$0xf]
  %v1660 = vld [vmem:[%s1 + $0x1788] sm:$0xf]
  %v1661 = vld [vmem:[%s1 + $0x178c] sm:$0xf]
  %v1662 = vld [vmem:[%s1 + $0x1790] sm:$0xf]
  %v1663 = vld [vmem:[%s1 + $0x1794] sm:$0xf]
  %v1664 = vld [vmem:[%s1 + $0x1798] sm:$0xf]
  %v1665 = vld [vmem:[%s1 + $0x179c] sm:$0xf]
  %v1666 = vld [vmem:[%s1 + $0x17a0] sm:$0xf]
  %v1667 = vld [vmem:[%s1 + $0x17a4] sm:$0xf]
  %v1668 = vld [vmem:[%s1 + $0x17a8] sm:$0xf]
  %v1669 = vld [vmem:[%s1 + $0x17ac] sm:$0xf]
  %v1670 = vld [vmem:[%s1 + $0x17b0] sm:$0xf]
  %v1671 = vld [vmem:[%s1 + $0x17b4] sm:$0xf]
  %v1672 = vld [vmem:[%s1 + $0x17b8] sm:$0xf]
  %v1673 = vld [vmem:[%s1 + $0x17bc] sm:$0xf]
  %v1674 = vld [vmem:[%s1 + $0x17c0] sm:$0xf]
  %v1675 = vld [vmem:[%s1 + $0x17c4] sm:$0xf]
  %v1676 = vld [vmem:[%s1 + $0x17c8] sm:$0xf]
  %v1677 = vld [vmem:[%s1 + $0x17cc] sm:$0xf]
  %v1678 = vld [vmem:[%s1 + $0x17d0] sm:$0xf]
  %v1679 = vld [vmem:[%s1 + $0x17d4] sm:$0xf]
  %v1680 = vld [vmem:[%s1 + $0x17d8] sm:$0xf]
  %v1681 = vld [vmem:[%s1 + $0x17dc] sm:$0xf]
  %v1682 = vld [vmem:[%s1 + $0x17e0] sm:$0xf]
  %v1683 = vld [vmem:[%s1 + $0x17e4] sm:$0xf]
  %v1684 = vld [vmem:[%s1 + $0x17e8] sm:$0xf]
  %v1685 = vld [vmem:[%s1 + $0x17ec] sm:$0xf]
  %v1686 = vld [vmem:[%s1 + $0x17f0] sm:$0xf]
  %v1687 = vld [vmem:[%s1 + $0x17f4] sm:$0xf]
  %v1688 = vld [vmem:[%s1 + $0x17f8] sm:$0xf]
  %v1689 = vld [vmem:[%s1 + $0x17fc] sm:$0xf]
  %v1690 = vld [vmem:[%s1 + $0x1800] sm:$0xf]
  %v1691 = vld [vmem:[%s1 + $0x1804] sm:$0xf]
  %v1692 = vld [vmem:[%s1 + $0x1808] sm:$0xf]
  %v1693 = vld [vmem:[%s1 + $0x180c] sm:$0xf]
  %v1694 = vld [vmem:[%s1 + $0x1810] sm:$0xf]
  %v1695 = vld [vmem:[%s1 + $0x1814] sm:$0xf]
  %v1696 = vld [vmem:[%s1 + $0x1818] sm:$0xf]
  %v1697 = vld [vmem:[%s1 + $0x181c] sm:$0xf]
  %v1698 = vld [vmem:[%s1 + $0x1820] sm:$0xf]
  %v1699 = vld [vmem:[%s1 + $0x1824] sm:$0xf]
  %v1700 = vld [vmem:[%s1 + $0x1828] sm:$0xf]
  %v1701 = vld [vmem:[%s1 + $0x182c] sm:$0xf]
  %v1702 = vld [vmem:[%s1 + $0x1830] sm:$0xf]
  %v1703 = vld [vmem:[%s1 + $0x1834] sm:$0xf]
  %v1704 = vld [vmem:[%s1 + $0x1838] sm:$0xf]
  %v1705 = vld [vmem:[%s1 + $0x183c] sm:$0xf]
  %v1706 = vld [vmem:[%s1 + $0x1840] sm:$0xf]
  %v1707 = vld [vmem:[%s1 + $0x1844] sm:$0xf]
  %v1708 = vld [vmem:[%s1 + $0x1848] sm:$0xf]
  %v1709 = vld [vmem:[%s1 + $0x184c] sm:$0xf]
  %v1710 = vld [vmem:[%s1 + $0x1850] sm:$0xf]
  %v1711 = vld [vmem:[%s1 + $0x1854] sm:$0xf]
  %v1712 = vld [vmem:[%s1 + $0x1858] sm:$0xf]
  %v1713 = vld [vmem:[%s1 + $0x185c] sm:$0xf]
  %v1714 = vld [vmem:[%s1 + $0x1860] sm:$0xf]
  %v1715 = vld [vmem:[%s1 + $0x1864] sm:$0xf]
  %v1716 = vld [vmem:[%s1 + $0x1868] sm:$0xf]
  %v1717 = vld [vmem:[%s1 + $0x186c] sm:$0xf]
  %v1718 = vld [vmem:[%s1 + $0x1870] sm:$0xf]
  %v1719 = vld [vmem:[%s1 + $0x1874] sm:$0xf]
  %v1720 = vld [vmem:[%s1 + $0x1878] sm:$0xf]
  %v1721 = vld [vmem:[%s1 + $0x187c] sm:$0xf]
  %v1722 = vld [vmem:[%s1 + $0x1880] sm:$0xf]
  %v1723 = vld [vmem:[%s1 + $0x1884] sm:$0xf]
  %v1724 = vld [vmem:[%s1 + $0x1888] sm:$0xf]
  %v1725 = vld [vmem:[%s1 + $0x188c] sm:$0xf]
  %v1726 = vld [vmem:[%s1 + $0x1890] sm:$0xf]
  %v1727 = vld [vmem:[%s1 + $0x1894] sm:$0xf]
  %v1728 = vld [vmem:[%s1 + $0x1898] sm:$0xf]
  %v1729 = vld [vmem:[%s1 + $0x189c] sm:$0xf]
  %v1730 = vld [vmem:[%s1 + $0x18a0] sm:$0xf]
  %v1731 = vld [vmem:[%s1 + $0x18a4] sm:$0xf]
  %v1732 = vld [vmem:[%s1 + $0x18a8] sm:$0xf]
  %v1733 = vld [vmem:[%s1 + $0x18ac] sm:$0xf]
  %v1734 = vld [vmem:[%s1 + $0x18b0] sm:$0xf]
  %v1735 = vld [vmem:[%s1 + $0x18b4] sm:$0xf]
  %v1736 = vld [vmem:[%s1 + $0x18b8] sm:$0xf]
  %v1737 = vld [vmem:[%s1 + $0x18bc] sm:$0xf]
  %v1738 = vld [vmem:[%s1 + $0x18c0] sm:$0xf]
  %v1739 = vld [vmem:[%s1 + $0x18c4] sm:$0xf]
  %v1740 = vld [vmem:[%s1 + $0x18c8] sm:$0xf]
  %v1741 = vld [vmem:[%s1 + $0x18cc] sm:$0xf]
  %v1742 = vld [vmem:[%s1 + $0x18d0] sm:$0xf]
  %v1743 = vld [vmem:[%s1 + $0x18d4] sm:$0xf]
  %v1744 = vld [vmem:[%s1 + $0x18d8] sm:$0xf]
  %v1745 = vld [vmem:[%s1 + $0x18dc] sm:$0xf]
  %v1746 = vld [vmem:[%s1 + $0x18e0] sm:$0xf]
  %v1747 = vld [vmem:[%s1 + $0x18e4] sm:$0xf]
  %v1748 = vld [vmem:[%s1 + $0x18e8] sm:$0xf]
  %v1749 = vld [vmem:[%s1 + $0x18ec] sm:$0xf]
  %v1750 = vld [vmem:[%s1 + $0x18f0] sm:$0xf]
  %v1751 = vld [vmem:[%s1 + $0x18f4] sm:$0xf]
  %v1752 = vld [vmem:[%s1 + $0x18f8] sm:$0xf]
  %v1753 = vld [vmem:[%s1 + $0x18fc] sm:$0xf]
  %v1754 = vld [vmem:[%s1 + $0x1900] sm:$0xf]
  %v1755 = vld [vmem:[%s1 + $0x1904] sm:$0xf]
  %v1756 = vld [vmem:[%s1 + $0x1908] sm:$0xf]
  %v1757 = vld [vmem:[%s1 + $0x190c] sm:$0xf]
  %v1758 = vld [vmem:[%s1 + $0x1910] sm:$0xf]
  %v1759 = vld [vmem:[%s1 + $0x1914] sm:$0xf]
  %v1760 = vld [vmem:[%s1 + $0x1918] sm:$0xf]
  %v1761 = vld [vmem:[%s1 + $0x191c] sm:$0xf]
  %v1762 = vld [vmem:[%s1 + $0x1920] sm:$0xf]
  %v1763 = vld [vmem:[%s1 + $0x1924] sm:$0xf]
  %v1764 = vld [vmem:[%s1 + $0x1928] sm:$0xf]
  %v1765 = vld [vmem:[%s1 + $0x192c] sm:$0xf]
  %v1766 = vld [vmem:[%s1 + $0x1930] sm:$0xf]
  %v1767 = vld [vmem:[%s1 + $0x1934] sm:$0xf]
  %v1768 = vld [vmem:[%s1 + $0x1938] sm:$0xf]
  %v1769 = vld [vmem:[%s1 + $0x193c] sm:$0xf]
  %v1770 = vld [vmem:[%s1 + $0x1940] sm:$0xf]
  %v1771 = vld [vmem:[%s1 + $0x1944] sm:$0xf]
  %v1772 = vld [vmem:[%s1 + $0x1948] sm:$0xf]
  %v1773 = vld [vmem:[%s1 + $0x194c] sm:$0xf]
  %v1774 = vld [vmem:[%s1 + $0x1950] sm:$0xf]
  %v1775 = vld [vmem:[%s1 + $0x1954] sm:$0xf]
  %v1776 = vld [vmem:[%s1 + $0x1958] sm:$0xf]
  %v1777 = vld [vmem:[%s1 + $0x195c] sm:$0xf]
  %v1778 = vld [vmem:[%s1 + $0x1960] sm:$0xf]
  %v1779 = vld [vmem:[%s1 + $0x1964] sm:$0xf]
  %v1780 = vld [vmem:[%s1 + $0x1968] sm:$0xf]
  %v1781 = vld [vmem:[%s1 + $0x196c] sm:$0xf]
  %v1782 = vld [vmem:[%s1 + $0x1970] sm:$0xf]
  %v1783 = vld [vmem:[%s1 + $0x1974] sm:$0xf]
  %v1784 = vld [vmem:[%s1 + $0x1978] sm:$0xf]
  %v1785 = vld [vmem:[%s1 + $0x197c] sm:$0xf]
  %v1786 = vld [vmem:[%s1 + $0x1980] sm:$0xf]
  %v1787 = vld [vmem:[%s1 + $0x1984] sm:$0xf]
  %v1788 = vld [vmem:[%s1 + $0x1988] sm:$0xf]
  %v1789 = vld [vmem:[%s1 + $0x198c] sm:$0xf]
  %v1790 = vld [vmem:[%s1 + $0x1990] sm:$0xf]
  %v1791 = vld [vmem:[%s1 + $0x1994] sm:$0xf]
  %v1792 = vld [vmem:[%s1 + $0x1998] sm:$0xf]
  %v1793 = vld [vmem:[%s1 + $0x199c] sm:$0xf]
  %v1794 = vld [vmem:[%s1 + $0x19a0] sm:$0xf]
  %v1795 = vld [vmem:[%s1 + $0x19a4] sm:$0xf]
  %v1796 = vld [vmem:[%s1 + $0x19a8] sm:$0xf]
  %v1797 = vld [vmem:[%s1 + $0x19ac] sm:$0xf]
  %v1798 = vld [vmem:[%s1 + $0x19b0] sm:$0xf]
  %v1799 = vld [vmem:[%s1 + $0x19b4] sm:$0xf]
  %v1800 = vld [vmem:[%s1 + $0x19b8] sm:$0xf]
  %v1801 = vld [vmem:[%s1 + $0x19bc] sm:$0xf]
  %v1802 = vld [vmem:[%s1 + $0x19c0] sm:$0xf]
  %v1803 = vld [vmem:[%s1 + $0x19c4] sm:$0xf]
  %v1804 = vld [vmem:[%s1 + $0x19c8] sm:$0xf]
  %v1805 = vld [vmem:[%s1 + $0x19cc] sm:$0xf]
  %v1806 = vld [vmem:[%s1 + $0x19d0] sm:$0xf]
  %v1807 = vld [vmem:[%s1 + $0x19d4] sm:$0xf]
  %v1808 = vld [vmem:[%s1 + $0x19d8] sm:$0xf]
  %v1809 = vld [vmem:[%s1 + $0x19dc] sm:$0xf]
  %v1810 = vld [vmem:[%s1 + $0x19e0] sm:$0xf]
  %v1811 = vld [vmem:[%s1 + $0x19e4] sm:$0xf]
  %v1812 = vld [vmem:[%s1 + $0x19e8] sm:$0xf]
  %v1813 = vld [vmem:[%s1 + $0x19ec] sm:$0xf]
  %v1814 = vld [vmem:[%s1 + $0x19f0] sm:$0xf]
  %v1815 = vld [vmem:[%s1 + $0x19f4] sm:$0xf]
  %v1816 = vld [vmem:[%s1 + $0x19f8] sm:$0xf]
  %v1817 = vld [vmem:[%s1 + $0x19fc] sm:$0xf]
  %v1818 = vld [vmem:[%s1 + $0x1a00] sm:$0xf]
  %v1819 = vld [vmem:[%s1 + $0x1a04] sm:$0xf]
  %v1820 = vld [vmem:[%s1 + $0x1a08] sm:$0xf]
  %v1821 = vld [vmem:[%s1 + $0x1a0c] sm:$0xf]
  %v1822 = vld [vmem:[%s1 + $0x1a10] sm:$0xf]
  %v1823 = vld [vmem:[%s1 + $0x1a14] sm:$0xf]
  %v1824 = vld [vmem:[%s1 + $0x1a18] sm:$0xf]
  %v1825 = vld [vmem:[%s1 + $0x1a1c] sm:$0xf]
  %v1826 = vld [vmem:[%s1 + $0x1a20] sm:$0xf]
  %v1827 = vld [vmem:[%s1 + $0x1a24] sm:$0xf]
  %v1828 = vld [vmem:[%s1 + $0x1a28] sm:$0xf]
  %v1829 = vld [vmem:[%s1 + $0x1a2c] sm:$0xf]
  %v1830 = vld [vmem:[%s1 + $0x1a30] sm:$0xf]
  %v1831 = vld [vmem:[%s1 + $0x1a34] sm:$0xf]
  %v1832 = vld [vmem:[%s1 + $0x1a38] sm:$0xf]
  %v1833 = vld [vmem:[%s1 + $0x1a3c] sm:$0xf]
  %v1834 = vld [vmem:[%s1 + $0x1a40] sm:$0xf]
  %v1835 = vld [vmem:[%s1 + $0x1a44] sm:$0xf]
  %v1836 = vld [vmem:[%s1 + $0x1a48] sm:$0xf]
  %v1837 = vld [vmem:[%s1 + $0x1a4c] sm:$0xf]
  %v1838 = vld [vmem:[%s1 + $0x1a50] sm:$0xf]
  %v1839 = vld [vmem:[%s1 + $0x1a54] sm:$0xf]
  %v1840 = vld [vmem:[%s1 + $0x1a58] sm:$0xf]
  %v1841 = vld [vmem:[%s1 + $0x1a5c] sm:$0xf]
  %v1842 = vld [vmem:[%s1 + $0x1a60] sm:$0xf]
  %v1843 = vld [vmem:[%s1 + $0x1a64] sm:$0xf]
  %v1844 = vld [vmem:[%s1 + $0x1a68] sm:$0xf]
  %v1845 = vld [vmem:[%s1 + $0x1a6c] sm:$0xf]
  %v1846 = vld [vmem:[%s1 + $0x1a70] sm:$0xf]
  %v1847 = vld [vmem:[%s1 + $0x1a74] sm:$0xf]
  %v1848 = vld [vmem:[%s1 + $0x1a78] sm:$0xf]
  %v1849 = vld [vmem:[%s1 + $0x1a7c] sm:$0xf]
  %v1850 = vld [vmem:[%s1 + $0x1a80] sm:$0xf]
  %v1851 = vld [vmem:[%s1 + $0x1a84] sm:$0xf]
  %v1852 = vld [vmem:[%s1 + $0x1a88] sm:$0xf]
  %v1853 = vld [vmem:[%s1 + $0x1a8c] sm:$0xf]
  %v1854 = vld [vmem:[%s1 + $0x1a90] sm:$0xf]
  %v1855 = vld [vmem:[%s1 + $0x1a94] sm:$0xf]
  %v1856 = vld [vmem:[%s1 + $0x1a98] sm:$0xf]
  %v1857 = vld [vmem:[%s1 + $0x1a9c] sm:$0xf]
  %v1858 = vld [vmem:[%s1 + $0x1aa0] sm:$0xf]
  %v1859 = vld [vmem:[%s1 + $0x1aa4] sm:$0xf]
  %v1860 = vld [vmem:[%s1 + $0x1aa8] sm:$0xf]
  %v1861 = vld [vmem:[%s1 + $0x1aac] sm:$0xf]
  %v1862 = vld [vmem:[%s1 + $0x1ab0] sm:$0xf]
  %v1863 = vld [vmem:[%s1 + $0x1ab4] sm:$0xf]
  %v1864 = vld [vmem:[%s1 + $0x1ab8] sm:$0xf]
  %v1865 = vld [vmem:[%s1 + $0x1abc] sm:$0xf]
  %v1866 = vld [vmem:[%s1 + $0x1ac0] sm:$0xf]
  %v1867 = vld [vmem:[%s1 + $0x1ac4] sm:$0xf]
  %v1868 = vld [vmem:[%s1 + $0x1ac8] sm:$0xf]
  %v1869 = vld [vmem:[%s1 + $0x1acc] sm:$0xf]
  %v1870 = vld [vmem:[%s1 + $0x1ad0] sm:$0xf]
  %v1871 = vld [vmem:[%s1 + $0x1ad4] sm:$0xf]
  %v1872 = vld [vmem:[%s1 + $0x1ad8] sm:$0xf]
  %v1873 = vld [vmem:[%s1 + $0x1adc] sm:$0xf]
  %v1874 = vld [vmem:[%s1 + $0x1ae0] sm:$0xf]
  %v1875 = vld [vmem:[%s1 + $0x1ae4] sm:$0xf]
  %v1876 = vld [vmem:[%s1 + $0x1ae8] sm:$0xf]
  %v1877 = vld [vmem:[%s1 + $0x1aec] sm:$0xf]
  %v1878 = vld [vmem:[%s1 + $0x1af0] sm:$0xf]
  %v1879 = vld [vmem:[%s1 + $0x1af4] sm:$0xf]
  %v1880 = vld [vmem:[%s1 + $0x1af8] sm:$0xf]
  %v1881 = vld [vmem:[%s1 + $0x1afc] sm:$0xf]
  %v1882 = vld [vmem:[%s1 + $0x1b00] sm:$0xf]
  %v1883 = vld [vmem:[%s1 + $0x1b04] sm:$0xf]
  %v1884 = vld [vmem:[%s1 + $0x1b08] sm:$0xf]
  %v1885 = vld [vmem:[%s1 + $0x1b0c] sm:$0xf]
  %v1886 = vld [vmem:[%s1 + $0x1b10] sm:$0xf]
  %v1887 = vld [vmem:[%s1 + $0x1b14] sm:$0xf]
  %v1888 = vld [vmem:[%s1 + $0x1b18] sm:$0xf]
  %v1889 = vld [vmem:[%s1 + $0x1b1c] sm:$0xf]
  %v1890 = vld [vmem:[%s1 + $0x1b20] sm:$0xf]
  %v1891 = vld [vmem:[%s1 + $0x1b24] sm:$0xf]
  %v1892 = vld [vmem:[%s1 + $0x1b28] sm:$0xf]
  %v1893 = vld [vmem:[%s1 + $0x1b2c] sm:$0xf]
  %v1894 = vld [vmem:[%s1 + $0x1b30] sm:$0xf]
  %v1895 = vld [vmem:[%s1 + $0x1b34] sm:$0xf]
  %v1896 = vld [vmem:[%s1 + $0x1b38] sm:$0xf]
  %v1897 = vld [vmem:[%s1 + $0x1b3c] sm:$0xf]
  %v1898 = vld [vmem:[%s1 + $0x1b40] sm:$0xf]
  %v1899 = vld [vmem:[%s1 + $0x1b44] sm:$0xf]
  %v1900 = vld [vmem:[%s1 + $0x1b48] sm:$0xf]
  %v1901 = vld [vmem:[%s1 + $0x1b4c] sm:$0xf]
  %v1902 = vld [vmem:[%s1 + $0x1b50] sm:$0xf]
  %v1903 = vld [vmem:[%s1 + $0x1b54] sm:$0xf]
  %v1904 = vld [vmem:[%s1 + $0x1b58] sm:$0xf]
  %v1905 = vld [vmem:[%s1 + $0x1b5c] sm:$0xf]
  %v1906 = vld [vmem:[%s1 + $0x1b60] sm:$0xf]
  %v1907 = vld [vmem:[%s1 + $0x1b64] sm:$0xf]
  %v1908 = vld [vmem:[%s1 + $0x1b68] sm:$0xf]
  %v1909 = vld [vmem:[%s1 + $0x1b6c] sm:$0xf]
  %v1910 = vld [vmem:[%s1 + $0x1b70] sm:$0xf]
  %v1911 = vld [vmem:[%s1 + $0x1b74] sm:$0xf]
  %v1912 = vld [vmem:[%s1 + $0x1b78] sm:$0xf]
  %v1913 = vld [vmem:[%s1 + $0x1b7c] sm:$0xf]
  %v1914 = vld [vmem:[%s1 + $0x1b80] sm:$0xf]
  %v1915 = vld [vmem:[%s1 + $0x1b84] sm:$0xf]
  %v1916 = vld [vmem:[%s1 + $0x1b88] sm:$0xf]
  %v1917 = vld [vmem:[%s1 + $0x1b8c] sm:$0xf]
  %v1918 = vld [vmem:[%s1 + $0x1b90] sm:$0xf]
  %v1919 = vld [vmem:[%s1 + $0x1b94] sm:$0xf]
  %v1920 = vld [vmem:[%s1 + $0x1b98] sm:$0xf]
  %v1921 = vld [vmem:[%s1 + $0x1b9c] sm:$0xf]
  %v1922 = vld [vmem:[%s1 + $0x1ba0] sm:$0xf]
  %v1923 = vld [vmem:[%s1 + $0x1ba4] sm:$0xf]
  %v1924 = vld [vmem:[%s1 + $0x1ba8] sm:$0xf]
  %v1925 = vld [vmem:[%s1 + $0x1bac] sm:$0xf]
  %v1926 = vld [vmem:[%s1 + $0x1bb0] sm:$0xf]
  %v1927 = vld [vmem:[%s1 + $0x1bb4] sm:$0xf]
  %v1928 = vld [vmem:[%s1 + $0x1bb8] sm:$0xf]
  %v1929 = vld [vmem:[%s1 + $0x1bbc] sm:$0xf]
  %v1930 = vld [vmem:[%s1 + $0x1bc0] sm:$0xf]
  %v1931 = vld [vmem:[%s1 + $0x1bc4] sm:$0xf]
  %v1932 = vld [vmem:[%s1 + $0x1bc8] sm:$0xf]
  %v1933 = vld [vmem:[%s1 + $0x1bcc] sm:$0xf]
  %v1934 = vld [vmem:[%s1 + $0x1bd0] sm:$0xf]
  %v1935 = vld [vmem:[%s1 + $0x1bd4] sm:$0xf]
  %v1936 = vld [vmem:[%s1 + $0x1bd8] sm:$0xf]
  %v1937 = vld [vmem:[%s1 + $0x1bdc] sm:$0xf]
  %v1938 = vld [vmem:[%s1 + $0x1be0] sm:$0xf]
  %v1939 = vld [vmem:[%s1 + $0x1be4] sm:$0xf]
  %v1940 = vld [vmem:[%s1 + $0x1be8] sm:$0xf]
  %v1941 = vld [vmem:[%s1 + $0x1bec] sm:$0xf]
  %v1942 = vld [vmem:[%s1 + $0x1bf0] sm:$0xf]
  %v1943 = vld [vmem:[%s1 + $0x1bf4] sm:$0xf]
  %v1944 = vld [vmem:[%s1 + $0x1bf8] sm:$0xf]
  %v1945 = vld [vmem:[%s1 + $0x1bfc] sm:$0xf]
  %v1946 = vld [vmem:[%s1 + $0x1c00] sm:$0xf]
  %v1947 = vld [vmem:[%s1 + $0x1c04] sm:$0xf]
  %v1948 = vld [vmem:[%s1 + $0x1c08] sm:$0xf]
  %v1949 = vld [vmem:[%s1 + $0x1c0c] sm:$0xf]
  %v1950 = vld [vmem:[%s1 + $0x1c10] sm:$0xf]
  %v1951 = vld [vmem:[%s1 + $0x1c14] sm:$0xf]
  %v1952 = vld [vmem:[%s1 + $0x1c18] sm:$0xf]
  %v1953 = vld [vmem:[%s1 + $0x1c1c] sm:$0xf]
  %v1954 = vld [vmem:[%s1 + $0x1c20] sm:$0xf]
  %v1955 = vld [vmem:[%s1 + $0x1c24] sm:$0xf]
  %v1956 = vld [vmem:[%s1 + $0x1c28] sm:$0xf]
  %v1957 = vld [vmem:[%s1 + $0x1c2c] sm:$0xf]
  %v1958 = vld [vmem:[%s1 + $0x1c30] sm:$0xf]
  %v1959 = vld [vmem:[%s1 + $0x1c34] sm:$0xf]
  %v1960 = vld [vmem:[%s1 + $0x1c38] sm:$0xf]
  %v1961 = vld [vmem:[%s1 + $0x1c3c] sm:$0xf]
  %v1962 = vld [vmem:[%s1 + $0x1c40] sm:$0xf]
  %v1963 = vld [vmem:[%s1 + $0x1c44] sm:$0xf]
  %v1964 = vld [vmem:[%s1 + $0x1c48] sm:$0xf]
  %v1965 = vld [vmem:[%s1 + $0x1c4c] sm:$0xf]
  %v1966 = vld [vmem:[%s1 + $0x1c50] sm:$0xf]
  %v1967 = vld [vmem:[%s1 + $0x1c54] sm:$0xf]
  %v1968 = vld [vmem:[%s1 + $0x1c58] sm:$0xf]
  %v1969 = vld [vmem:[%s1 + $0x1c5c] sm:$0xf]
  %v1970 = vld [vmem:[%s1 + $0x1c60] sm:$0xf]
  %v1971 = vld [vmem:[%s1 + $0x1c64] sm:$0xf]
  %v1972 = vld [vmem:[%s1 + $0x1c68] sm:$0xf]
  %v1973 = vld [vmem:[%s1 + $0x1c6c] sm:$0xf]
  %v1974 = vld [vmem:[%s1 + $0x1c70] sm:$0xf]
  %v1975 = vld [vmem:[%s1 + $0x1c74] sm:$0xf]
  %v1976 = vld [vmem:[%s1 + $0x1c78] sm:$0xf]
  %v1977 = vld [vmem:[%s1 + $0x1c7c] sm:$0xf]
  %v1978 = vld [vmem:[%s1 + $0x1c80] sm:$0xf]
  %v1979 = vld [vmem:[%s1 + $0x1c84] sm:$0xf]
  %v1980 = vld [vmem:[%s1 + $0x1c88] sm:$0xf]
  %v1981 = vld [vmem:[%s1 + $0x1c8c] sm:$0xf]
  %v1982 = vld [vmem:[%s1 + $0x1c90] sm:$0xf]
  %v1983 = vld [vmem:[%s1 + $0x1c94] sm:$0xf]
  %v1984 = vld [vmem:[%s1 + $0x1c98] sm:$0xf]
  %v1985 = vld [vmem:[%s1 + $0x1c9c] sm:$0xf]
  %v1986 = vld [vmem:[%s1 + $0x1ca0] sm:$0xf]
  %v1987 = vld [vmem:[%s1 + $0x1ca4] sm:$0xf]
  %v1988 = vld [vmem:[%s1 + $0x1ca8] sm:$0xf]
  %v1989 = vld [vmem:[%s1 + $0x1cac] sm:$0xf]
  %v1990 = vld [vmem:[%s1 + $0x1cb0] sm:$0xf]
  %v1991 = vld [vmem:[%s1 + $0x1cb4] sm:$0xf]
  %v1992 = vld [vmem:[%s1 + $0x1cb8] sm:$0xf]
  %v1993 = vld [vmem:[%s1 + $0x1cbc] sm:$0xf]
  %v1994 = vld [vmem:[%s1 + $0x1cc0] sm:$0xf]
  %v1995 = vld [vmem:[%s1 + $0x1cc4] sm:$0xf]
  %v1996 = vld [vmem:[%s1 + $0x1cc8] sm:$0xf]
  %v1997 = vld [vmem:[%s1 + $0x1ccc] sm:$0xf]
  %v1998 = vld [vmem:[%s1 + $0x1cd0] sm:$0xf]
  %v1999 = vld [vmem:[%s1 + $0x1cd4] sm:$0xf]
  %v2000 = vld [vmem:[%s1 + $0x1cd8] sm:$0xf]
  %v2001 = vld [vmem:[%s1 + $0x1cdc] sm:$0xf]
  %v2002 = vld [vmem:[%s1 + $0x1ce0] sm:$0xf]
  %v2003 = vld [vmem:[%s1 + $0x1ce4] sm:$0xf]
  %v2004 = vld [vmem:[%s1 + $0x1ce8] sm:$0xf]
  %v2005 = vld [vmem:[%s1 + $0x1cec] sm:$0xf]
  %v2006 = vld [vmem:[%s1 + $0x1cf0] sm:$0xf]
  %v2007 = vld [vmem:[%s1 + $0x1cf4] sm:$0xf]
  %v2008 = vld [vmem:[%s1 + $0x1cf8] sm:$0xf]
  %v2009 = vld [vmem:[%s1 + $0x1cfc] sm:$0xf]
  %v2010 = vld [vmem:[%s1 + $0x1d00] sm:$0xf]
  %v2011 = vld [vmem:[%s1 + $0x1d04] sm:$0xf]
  %v2012 = vld [vmem:[%s1 + $0x1d08] sm:$0xf]
  %v2013 = vld [vmem:[%s1 + $0x1d0c] sm:$0xf]
  %v2014 = vld [vmem:[%s1 + $0x1d10] sm:$0xf]
  %v2015 = vld [vmem:[%s1 + $0x1d14] sm:$0xf]
  %v2016 = vld [vmem:[%s1 + $0x1d18] sm:$0xf]
  %v2017 = vld [vmem:[%s1 + $0x1d1c] sm:$0xf]
  %v2018 = vld [vmem:[%s1 + $0x1d20] sm:$0xf]
  %v2019 = vld [vmem:[%s1 + $0x1d24] sm:$0xf]
  %v2020 = vld [vmem:[%s1 + $0x1d28] sm:$0xf]
  %v2021 = vld [vmem:[%s1 + $0x1d2c] sm:$0xf]
  %v2022 = vld [vmem:[%s1 + $0x1d30] sm:$0xf]
  %v2023 = vld [vmem:[%s1 + $0x1d34] sm:$0xf]
  %v2024 = vld [vmem:[%s1 + $0x1d38] sm:$0xf]
  %v2025 = vld [vmem:[%s1 + $0x1d3c] sm:$0xf]
  %v2026 = vld [vmem:[%s1 + $0x1d40] sm:$0xf]
  %v2027 = vld [vmem:[%s1 + $0x1d44] sm:$0xf]
  %v2028 = vld [vmem:[%s1 + $0x1d48] sm:$0xf]
  %v2029 = vld [vmem:[%s1 + $0x1d4c] sm:$0xf]
  %v2030 = vld [vmem:[%s1 + $0x1d50] sm:$0xf]
  %v2031 = vld [vmem:[%s1 + $0x1d54] sm:$0xf]
  %v2032 = vld [vmem:[%s1 + $0x1d58] sm:$0xf]
  %v2033 = vld [vmem:[%s1 + $0x1d5c] sm:$0xf]
  %v2034 = vld [vmem:[%s1 + $0x1d60] sm:$0xf]
  %v2035 = vld [vmem:[%s1 + $0x1d64] sm:$0xf]
  %v2036 = vld [vmem:[%s1 + $0x1d68] sm:$0xf]
  %v2037 = vld [vmem:[%s1 + $0x1d6c] sm:$0xf]
  %v2038 = vld [vmem:[%s1 + $0x1d70] sm:$0xf]
  %v2039 = vld [vmem:[%s1 + $0x1d74] sm:$0xf]
  %v2040 = vld [vmem:[%s1 + $0x1d78] sm:$0xf]
  %v2041 = vld [vmem:[%s1 + $0x1d7c] sm:$0xf]
  %v2042 = vld [vmem:[%s1 + $0x1d80] sm:$0xf]
  %v2043 = vld [vmem:[%s1 + $0x1d84] sm:$0xf]
  %v2044 = vld [vmem:[%s1 + $0x1d88] sm:$0xf]
  %v2045 = vld [vmem:[%s1 + $0x1d8c] sm:$0xf]
  %v2046 = vld [vmem:[%s1 + $0x1d90] sm:$0xf]
  %v2047 = vld [vmem:[%s1 + $0x1d94] sm:$0xf]
  %v2048 = vld [vmem:[%s1 + $0x1d98] sm:$0xf]
  %v2049 = vld [vmem:[%s1 + $0x1d9c] sm:$0xf]
  %v2050 = vld [vmem:[%s1 + $0x1da0] sm:$0xf]
  %v2051 = vld [vmem:[%s1 + $0x1da4] sm:$0xf]
  %v2052 = vld [vmem:[%s1 + $0x1da8] sm:$0xf]
  %v2053 = vld [vmem:[%s1 + $0x1dac] sm:$0xf]
  %v2054 = vld [vmem:[%s1 + $0x1db0] sm:$0xf]
  %v2055 = vld [vmem:[%s1 + $0x1db4] sm:$0xf]
  %v2056 = vld [vmem:[%s1 + $0x1db8] sm:$0xf]
  %v2057 = vld [vmem:[%s1 + $0x1dbc] sm:$0xf]
  %v2058 = vld [vmem:[%s1 + $0x1dc0] sm:$0xf]
  %v2059 = vld [vmem:[%s1 + $0x1dc4] sm:$0xf]
  %v2060 = vld [vmem:[%s1 + $0x1dc8] sm:$0xf]
  %v2061 = vld [vmem:[%s1 + $0x1dcc] sm:$0xf]
  %v2062 = vld [vmem:[%s1 + $0x1dd0] sm:$0xf]
  %v2063 = vld [vmem:[%s1 + $0x1dd4] sm:$0xf]
  %v2064 = vld [vmem:[%s1 + $0x1dd8] sm:$0xf]
  %v2065 = vld [vmem:[%s1 + $0x1ddc] sm:$0xf]
  %v2066 = vld [vmem:[%s1 + $0x1de0] sm:$0xf]
  %v2067 = vld [vmem:[%s1 + $0x1de4] sm:$0xf]
  %v2068 = vld [vmem:[%s1 + $0x1de8] sm:$0xf]
  %v2069 = vld [vmem:[%s1 + $0x1dec] sm:$0xf]
  %v2070 = vld [vmem:[%s1 + $0x1df0] sm:$0xf]
  %v2071 = vld [vmem:[%s1 + $0x1df4] sm:$0xf]
  %v2072 = vld [vmem:[%s1 + $0x1df8] sm:$0xf]
  %v2073 = vld [vmem:[%s1 + $0x1dfc] sm:$0xf]
  %v2074 = vld [vmem:[%s1 + $0x1e00] sm:$0xf]
  %v2075 = vld [vmem:[%s1 + $0x1e04] sm:$0xf]
  %v2076 = vld [vmem:[%s1 + $0x1e08] sm:$0xf]
  %v2077 = vld [vmem:[%s1 + $0x1e0c] sm:$0xf]
  %v2078 = vld [vmem:[%s1 + $0x1e10] sm:$0xf]
  %v2079 = vld [vmem:[%s1 + $0x1e14] sm:$0xf]
  %v2080 = vld [vmem:[%s1 + $0x1e18] sm:$0xf]
  %v2081 = vld [vmem:[%s1 + $0x1e1c] sm:$0xf]
  %v2082 = vld [vmem:[%s1 + $0x1e20] sm:$0xf]
  %v2083 = vld [vmem:[%s1 + $0x1e24] sm:$0xf]
  %v2084 = vld [vmem:[%s1 + $0x1e28] sm:$0xf]
  %v2085 = vld [vmem:[%s1 + $0x1e2c] sm:$0xf]
  %v2086 = vld [vmem:[%s1 + $0x1e30] sm:$0xf]
  %v2087 = vld [vmem:[%s1 + $0x1e34] sm:$0xf]
  %v2088 = vld [vmem:[%s1 + $0x1e38] sm:$0xf]
  %v2089 = vld [vmem:[%s1 + $0x1e3c] sm:$0xf]
  %v2090 = vld [vmem:[%s1 + $0x1e40] sm:$0xf]
  %v2091 = vld [vmem:[%s1 + $0x1e44] sm:$0xf]
  %v2092 = vld [vmem:[%s1 + $0x1e48] sm:$0xf]
  %v2093 = vld [vmem:[%s1 + $0x1e4c] sm:$0xf]
  %v2094 = vld [vmem:[%s1 + $0x1e50] sm:$0xf]
  %v2095 = vld [vmem:[%s1 + $0x1e54] sm:$0xf]
  %v2096 = vld [vmem:[%s1 + $0x1e58] sm:$0xf]
  %v2097 = vld [vmem:[%s1 + $0x1e5c] sm:$0xf]
  %v2098 = vld [vmem:[%s1 + $0x1e60] sm:$0xf]
  %v2099 = vld [vmem:[%s1 + $0x1e64] sm:$0xf]
  %v2100 = vld [vmem:[%s1 + $0x1e68] sm:$0xf]
  %v2101 = vld [vmem:[%s1 + $0x1e6c] sm:$0xf]
  %v2102 = vld [vmem:[%s1 + $0x1e70] sm:$0xf]
  %v2103 = vld [vmem:[%s1 + $0x1e74] sm:$0xf]
  %v2104 = vld [vmem:[%s1 + $0x1e78] sm:$0xf]
  %v2105 = vld [vmem:[%s1 + $0x1e7c] sm:$0xf]
  %v2106 = vld [vmem:[%s1 + $0x1e80] sm:$0xf]
  %v2107 = vld [vmem:[%s1 + $0x1e84] sm:$0xf]
  %v2108 = vld [vmem:[%s1 + $0x1e88] sm:$0xf]
  %v2109 = vld [vmem:[%s1 + $0x1e8c] sm:$0xf]
  %v2110 = vld [vmem:[%s1 + $0x1e90] sm:$0xf]
  %v2111 = vld [vmem:[%s1 + $0x1e94] sm:$0xf]
  %v2112 = vld [vmem:[%s1 + $0x1e98] sm:$0xf]
  %v2113 = vld [vmem:[%s1 + $0x1e9c] sm:$0xf]
  %v2114 = vld [vmem:[%s1 + $0x1ea0] sm:$0xf]
  %v2115 = vld [vmem:[%s1 + $0x1ea4] sm:$0xf]
  %v2116 = vld [vmem:[%s1 + $0x1ea8] sm:$0xf]
  %v2117 = vld [vmem:[%s1 + $0x1eac] sm:$0xf]
  %v2118 = vld [vmem:[%s1 + $0x1eb0] sm:$0xf]
  %v2119 = vld [vmem:[%s1 + $0x1eb4] sm:$0xf]
  %v2120 = vld [vmem:[%s1 + $0x1eb8] sm:$0xf]
  %v2121 = vld [vmem:[%s1 + $0x1ebc] sm:$0xf]
  %v2122 = vld [vmem:[%s1 + $0x1ec0] sm:$0xf]
  %v2123 = vld [vmem:[%s1 + $0x1ec4] sm:$0xf]
  %v2124 = vld [vmem:[%s1 + $0x1ec8] sm:$0xf]
  %v2125 = vld [vmem:[%s1 + $0x1ecc] sm:$0xf]
  %v2126 = vld [vmem:[%s1 + $0x1ed0] sm:$0xf]
  %v2127 = vld [vmem:[%s1 + $0x1ed4] sm:$0xf]
  %v2128 = vld [vmem:[%s1 + $0x1ed8] sm:$0xf]
  %v2129 = vld [vmem:[%s1 + $0x1edc] sm:$0xf]
  %v2130 = vld [vmem:[%s1 + $0x1ee0] sm:$0xf]
  %v2131 = vld [vmem:[%s1 + $0x1ee4] sm:$0xf]
  %v2132 = vld [vmem:[%s1 + $0x1ee8] sm:$0xf]
  %v2133 = vld [vmem:[%s1 + $0x1eec] sm:$0xf]
  %v2134 = vld [vmem:[%s1 + $0x1ef0] sm:$0xf]
  %v2135 = vld [vmem:[%s1 + $0x1ef4] sm:$0xf]
  %v2136 = vld [vmem:[%s1 + $0x1ef8] sm:$0xf]
  %v2137 = vld [vmem:[%s1 + $0x1efc] sm:$0xf]
  %v2138 = vld [vmem:[%s1 + $0x1f00] sm:$0xf]
  %v2139 = vld [vmem:[%s1 + $0x1f04] sm:$0xf]
  %v2140 = vld [vmem:[%s1 + $0x1f08] sm:$0xf]
  %v2141 = vld [vmem:[%s1 + $0x1f0c] sm:$0xf]
  %v2142 = vld [vmem:[%s1 + $0x1f10] sm:$0xf]
  %v2143 = vld [vmem:[%s1 + $0x1f14] sm:$0xf]
  %v2144 = vld [vmem:[%s1 + $0x1f18] sm:$0xf]
  %v2145 = vld [vmem:[%s1 + $0x1f1c] sm:$0xf]
  %v2146 = vld [vmem:[%s1 + $0x1f20] sm:$0xf]
  %v2147 = vld [vmem:[%s1 + $0x1f24] sm:$0xf]
  %v2148 = vld [vmem:[%s1 + $0x1f28] sm:$0xf]
  %v2149 = vld [vmem:[%s1 + $0x1f2c] sm:$0xf]
  %v2150 = vld [vmem:[%s1 + $0x1f30] sm:$0xf]
  %v2151 = vld [vmem:[%s1 + $0x1f34] sm:$0xf]
  %v2152 = vld [vmem:[%s1 + $0x1f38] sm:$0xf]
  %v2153 = vld [vmem:[%s1 + $0x1f3c] sm:$0xf]
  %v2154 = vld [vmem:[%s1 + $0x1f40] sm:$0xf]
  %v2155 = vld [vmem:[%s1 + $0x1f44] sm:$0xf]
  %v2156 = vld [vmem:[%s1 + $0x1f48] sm:$0xf]
  %v2157 = vld [vmem:[%s1 + $0x1f4c] sm:$0xf]
  %v2158 = vld [vmem:[%s1 + $0x1f50] sm:$0xf]
  %v2159 = vld [vmem:[%s1 + $0x1f54] sm:$0xf]
  %v2160 = vld [vmem:[%s1 + $0x1f58] sm:$0xf]
  %v2161 = vld [vmem:[%s1 + $0x1f5c] sm:$0xf]
  %v2162 = vld [vmem:[%s1 + $0x1f60] sm:$0xf]
  %v2163 = vld [vmem:[%s1 + $0x1f64] sm:$0xf]
  %v2164 = vld [vmem:[%s1 + $0x1f68] sm:$0xf]
  %v2165 = vld [vmem:[%s1 + $0x1f6c] sm:$0xf]
  %v2166 = vld [vmem:[%s1 + $0x1f70] sm:$0xf]
  %v2167 = vld [vmem:[%s1 + $0x1f74] sm:$0xf]
  %v2168 = vld [vmem:[%s1 + $0x1f78] sm:$0xf]
  %v2169 = vld [vmem:[%s1 + $0x1f7c] sm:$0xf]
  %v2170 = vld [vmem:[%s1 + $0x1f80] sm:$0xf]
  %v2171 = vld [vmem:[%s1 + $0x1f84] sm:$0xf]
  %v2172 = vld [vmem:[%s1 + $0x1f88] sm:$0xf]
  %v2173 = vld [vmem:[%s1 + $0x1f8c] sm:$0xf]
  %v2174 = vld [vmem:[%s1 + $0x1f90] sm:$0xf]
  %v2175 = vld [vmem:[%s1 + $0x1f94] sm:$0xf]
  %v2176 = vld [vmem:[%s1 + $0x1f98] sm:$0xf]
  %v2177 = vld [vmem:[%s1 + $0x1f9c] sm:$0xf]
  %v2178 = vld [vmem:[%s1 + $0x1fa0] sm:$0xf]
  %v2179 = vld [vmem:[%s1 + $0x1fa4] sm:$0xf]
  %v2180 = vld [vmem:[%s1 + $0x1fa8] sm:$0xf]
  %v2181 = vld [vmem:[%s1 + $0x1fac] sm:$0xf]
  %v2182 = vld [vmem:[%s1 + $0x1fb0] sm:$0xf]
  %v2183 = vld [vmem:[%s1 + $0x1fb4] sm:$0xf]
  %v2184 = vld [vmem:[%s1 + $0x1fb8] sm:$0xf]
  %v2185 = vld [vmem:[%s1 + $0x1fbc] sm:$0xf]
  %v2186 = vld [vmem:[%s1 + $0x1fc0] sm:$0xf]
  %v2187 = vld [vmem:[%s1 + $0x1fc4] sm:$0xf]
  %v2188 = vld [vmem:[%s1 + $0x1fc8] sm:$0xf]
  %v2189 = vld [vmem:[%s1 + $0x1fcc] sm:$0xf]
  %v2190 = vld [vmem:[%s1 + $0x1fd0] sm:$0xf]
  %v2191 = vld [vmem:[%s1 + $0x1fd4] sm:$0xf]
  %v2192 = vld [vmem:[%s1 + $0x1fd8] sm:$0xf]
  %v2193 = vld [vmem:[%s1 + $0x1fdc] sm:$0xf]
  %v2194 = vld [vmem:[%s1 + $0x1fe0] sm:$0xf]
  %v2195 = vld [vmem:[%s1 + $0x1fe4] sm:$0xf]
  %v2196 = vld [vmem:[%s1 + $0x1fe8] sm:$0xf]
  %v2197 = vld [vmem:[%s1 + $0x1fec] sm:$0xf]
  %v2198 = vld [vmem:[%s1 + $0x1ff0] sm:$0xf]
  %v2199 = vld [vmem:[%s1 + $0x1ff4] sm:$0xf]
  %v2200 = vld [vmem:[%s1 + $0x1ff8] sm:$0xf]
  %v2201 = vld [vmem:[%s1 + $0x1ffc] sm:$0xf]
  %v2202 = vld [vmem:[%s1 + $0x2000] sm:$0xf]
  %v2203 = vld [vmem:[%s1 + $0x2004] sm:$0xf]
  %v2204 = vld [vmem:[%s1 + $0x2008] sm:$0xf]
  %v2205 = vld [vmem:[%s1 + $0x200c] sm:$0xf]
  %v2206 = vld [vmem:[%s1 + $0x2010] sm:$0xf]
  %v2207 = vld [vmem:[%s1 + $0x2014] sm:$0xf]
  %v2208 = vld [vmem:[%s1 + $0x2018] sm:$0xf]
  %v2209 = vld [vmem:[%s1 + $0x201c] sm:$0xf]
  %v2210 = vld [vmem:[%s1 + $0x2020] sm:$0xf]
  %v2211 = vld [vmem:[%s1 + $0x2024] sm:$0xf]
  %v2212 = vld [vmem:[%s1 + $0x2028] sm:$0xf]
  %v2213 = vld [vmem:[%s1 + $0x202c] sm:$0xf]
  %v2214 = vld [vmem:[%s1 + $0x2030] sm:$0xf]
  %v2215 = vld [vmem:[%s1 + $0x2034] sm:$0xf]
  %v2216 = vld [vmem:[%s1 + $0x2038] sm:$0xf]
  %v2217 = vld [vmem:[%s1 + $0x203c] sm:$0xf]
  %v2218 = vld [vmem:[%s1 + $0x2040] sm:$0xf]
  %v2219 = vld [vmem:[%s1 + $0x2044] sm:$0xf]
  %v2220 = vld [vmem:[%s1 + $0x2048] sm:$0xf]
  %v2221 = vld [vmem:[%s1 + $0x204c] sm:$0xf]
  %v2222 = vld [vmem:[%s1 + $0x2050] sm:$0xf]
  %v2223 = vld [vmem:[%s1 + $0x2054] sm:$0xf]
  %v2224 = vld [vmem:[%s1 + $0x2058] sm:$0xf]
  %v2225 = vld [vmem:[%s1 + $0x205c] sm:$0xf]
  %v2226 = vld [vmem:[%s1 + $0x2060] sm:$0xf]
  %v2227 = vld [vmem:[%s1 + $0x2064] sm:$0xf]
  %v2228 = vld [vmem:[%s1 + $0x2068] sm:$0xf]
  %v2229 = vld [vmem:[%s1 + $0x206c] sm:$0xf]
  %v2230 = vld [vmem:[%s1 + $0x2070] sm:$0xf]
  %v2231 = vld [vmem:[%s1 + $0x2074] sm:$0xf]
  %v2232 = vld [vmem:[%s1 + $0x2078] sm:$0xf]
  %v2233 = vld [vmem:[%s1 + $0x207c] sm:$0xf]
  %v2234 = vld [vmem:[%s1 + $0x2080] sm:$0xf]
  %v2235 = vld [vmem:[%s1 + $0x2084] sm:$0xf]
  %v2236 = vld [vmem:[%s1 + $0x2088] sm:$0xf]
  %v2237 = vld [vmem:[%s1 + $0x208c] sm:$0xf]
  %v2238 = vld [vmem:[%s1 + $0x2090] sm:$0xf]
  %v2239 = vld [vmem:[%s1 + $0x2094] sm:$0xf]
  %v2240 = vld [vmem:[%s1 + $0x2098] sm:$0xf]
  %v2241 = vld [vmem:[%s1 + $0x209c] sm:$0xf]
  %v2242 = vld [vmem:[%s1 + $0x20a0] sm:$0xf]
  %v2243 = vld [vmem:[%s1 + $0x20a4] sm:$0xf]
  %v2244 = vld [vmem:[%s1 + $0x20a8] sm:$0xf]
  %v2245 = vld [vmem:[%s1 + $0x20ac] sm:$0xf]
  %v2246 = vld [vmem:[%s1 + $0x20b0] sm:$0xf]
  %v2247 = vld [vmem:[%s1 + $0x20b4] sm:$0xf]
  %v2248 = vld [vmem:[%s1 + $0x20b8] sm:$0xf]
  %v2249 = vld [vmem:[%s1 + $0x20bc] sm:$0xf]
  %v2250 = vld [vmem:[%s1 + $0x20c0] sm:$0xf]
  %v2251 = vld [vmem:[%s1 + $0x20c4] sm:$0xf]
  %v2252 = vld [vmem:[%s1 + $0x20c8] sm:$0xf]
  %v2253 = vld [vmem:[%s1 + $0x20cc] sm:$0xf]
  %v2254 = vld [vmem:[%s1 + $0x20d0] sm:$0xf]
  %v2255 = vld [vmem:[%s1 + $0x20d4] sm:$0xf]
  %v2256 = vld [vmem:[%s1 + $0x20d8] sm:$0xf]
  %v2257 = vld [vmem:[%s1 + $0x20dc] sm:$0xf]
  %v2258 = vld [vmem:[%s1 + $0x20e0] sm:$0xf]
  %v2259 = vld [vmem:[%s1 + $0x20e4] sm:$0xf]
  %v2260 = vld [vmem:[%s1 + $0x20e8] sm:$0xf]
  %v2261 = vld [vmem:[%s1 + $0x20ec] sm:$0xf]
  %v2262 = vld [vmem:[%s1 + $0x20f0] sm:$0xf]
  %v2263 = vld [vmem:[%s1 + $0x20f4] sm:$0xf]
  %v2264 = vld [vmem:[%s1 + $0x20f8] sm:$0xf]
  %v2265 = vld [vmem:[%s1 + $0x20fc] sm:$0xf]
  %v2266 = vld [vmem:[%s1 + $0x2100] sm:$0xf]
  %v2267 = vld [vmem:[%s1 + $0x2104] sm:$0xf]
  %v2268 = vld [vmem:[%s1 + $0x2108] sm:$0xf]
  %v2269 = vld [vmem:[%s1 + $0x210c] sm:$0xf]
  %v2270 = vld [vmem:[%s1 + $0x2110] sm:$0xf]
  %v2271 = vld [vmem:[%s1 + $0x2114] sm:$0xf]
  %v2272 = vld [vmem:[%s1 + $0x2118] sm:$0xf]
  %v2273 = vld [vmem:[%s1 + $0x211c] sm:$0xf]
  %v2274 = vld [vmem:[%s1 + $0x2120] sm:$0xf]
  %v2275 = vld [vmem:[%s1 + $0x2124] sm:$0xf]
  %v2276 = vld [vmem:[%s1 + $0x2128] sm:$0xf]
  %v2277 = vld [vmem:[%s1 + $0x212c] sm:$0xf]
  %v2278 = vld [vmem:[%s1 + $0x2130] sm:$0xf]
  %v2279 = vld [vmem:[%s1 + $0x2134] sm:$0xf]
  %v2280 = vld [vmem:[%s1 + $0x2138] sm:$0xf]
  %v2281 = vld [vmem:[%s1 + $0x213c] sm:$0xf]
  %v2282 = vld [vmem:[%s2] sm:$0x1]
  %v2284 = vperm.slane %v2282, 0
  %v2420 = vunpack.c.l.b16 %v20
  %v2421 = vunpack.c.h.b16 %v20
  %v2422 = vunpack.c.l.b16 %v21
  %v2423 = vunpack.c.h.b16 %v21
  %v2424 = vunpack.c.l.b16 %v22
  %v2425 = vunpack.c.h.b16 %v22
  %v2426 = vunpack.c.l.b16 %v23
  %v2427 = vunpack.c.h.b16 %v23
  %v2428 = vunpack.c.l.b16 %v24
  %v2429 = vunpack.c.h.b16 %v24
  %v2430 = vunpack.c.l.b16 %v25
  %v2431 = vunpack.c.h.b16 %v25
  %v2432 = vunpack.c.l.b16 %v26
  %v2433 = vunpack.c.h.b16 %v26
  %v2434 = vunpack.c.l.b16 %v27
  %v2435 = vunpack.c.h.b16 %v27
  %v2436 = vunpack.c.l.b16 %v28
  %v2437 = vunpack.c.h.b16 %v28
  %v2438 = vunpack.c.l.b16 %v29
  %v2439 = vunpack.c.h.b16 %v29
  %v2440 = vunpack.c.l.b16 %v30
  %v2441 = vunpack.c.h.b16 %v30
  %v2442 = vunpack.c.l.b16 %v31
  %v2443 = vunpack.c.h.b16 %v31
  %v2444 = vunpack.c.l.b16 %v32
  %v2445 = vunpack.c.h.b16 %v32
  %v2446 = vunpack.c.l.b16 %v33
  %v2447 = vunpack.c.h.b16 %v33
  %v2448 = vunpack.c.l.b16 %v34
  %v2449 = vunpack.c.h.b16 %v34
  %v2450 = vunpack.c.l.b16 %v35
  %v2451 = vunpack.c.h.b16 %v35
  %v2452 = vunpack.c.l.b16 %v36
  %v2453 = vunpack.c.h.b16 %v36
  %v2454 = vunpack.c.l.b16 %v37
  %v2455 = vunpack.c.h.b16 %v37
  %v2456 = vunpack.c.l.b16 %v38
  %v2457 = vunpack.c.h.b16 %v38
  %v2458 = vunpack.c.l.b16 %v39
  %v2459 = vunpack.c.h.b16 %v39
  %v2460 = vunpack.c.l.b16 %v40
  %v2461 = vunpack.c.h.b16 %v40
  %v2462 = vunpack.c.l.b16 %v41
  %v2463 = vunpack.c.h.b16 %v41
  %v2464 = vunpack.c.l.b16 %v42
  %v2465 = vunpack.c.h.b16 %v42
  %v2466 = vunpack.c.l.b16 %v43
  %v2467 = vunpack.c.h.b16 %v43
  %v2468 = vunpack.c.l.b16 %v44
  %v2469 = vunpack.c.h.b16 %v44
  %v2470 = vunpack.c.l.b16 %v45
  %v2471 = vunpack.c.h.b16 %v45
  %v2472 = vunpack.c.l.b16 %v46
  %v2473 = vunpack.c.h.b16 %v46
  %v2474 = vunpack.c.l.b16 %v47
  %v2475 = vunpack.c.h.b16 %v47
  %v2476 = vunpack.c.l.b16 %v48
  %v2477 = vunpack.c.h.b16 %v48
  %v2478 = vunpack.c.l.b16 %v49
  %v2479 = vunpack.c.h.b16 %v49
  %v2480 = vunpack.c.l.b16 %v50
  %v2481 = vunpack.c.h.b16 %v50
  %v2482 = vunpack.c.l.b16 %v51
  %v2483 = vunpack.c.h.b16 %v51
  %v2484 = vunpack.c.l.b16 %v52
  %v2485 = vunpack.c.h.b16 %v52
  %v2486 = vunpack.c.l.b16 %v53
  %v2487 = vunpack.c.h.b16 %v53
  %v2488 = vunpack.c.l.b16 %v54
  %v2489 = vunpack.c.h.b16 %v54
  %v2490 = vunpack.c.l.b16 %v55
  %v2491 = vunpack.c.h.b16 %v55
  %v2492 = vunpack.c.l.b16 %v56
  %v2493 = vunpack.c.h.b16 %v56
  %v2494 = vunpack.c.l.b16 %v57
  %v2495 = vunpack.c.h.b16 %v57
  %v2496 = vunpack.c.l.b16 %v58
  %v2497 = vunpack.c.h.b16 %v58
  %v2498 = vunpack.c.l.b16 %v59
  %v2499 = vunpack.c.h.b16 %v59
  %v2500 = vunpack.c.l.b16 %v60
  %v2501 = vunpack.c.h.b16 %v60
  %v2502 = vunpack.c.l.b16 %v61
  %v2503 = vunpack.c.h.b16 %v61
  %v2504 = vunpack.c.l.b16 %v62
  %v2505 = vunpack.c.h.b16 %v62
  %v2506 = vunpack.c.l.b16 %v63
  %v2507 = vunpack.c.h.b16 %v63
  %v2508 = vunpack.c.l.b16 %v64
  %v2509 = vunpack.c.h.b16 %v64
  %v2510 = vunpack.c.l.b16 %v65
  %v2511 = vunpack.c.h.b16 %v65
  %v2512 = vunpack.c.l.b16 %v66
  %v2513 = vunpack.c.h.b16 %v66
  %v2514 = vunpack.c.l.b16 %v67
  %v2515 = vunpack.c.h.b16 %v67
  %v2516 = vunpack.c.l.b16 %v68
  %v2517 = vunpack.c.h.b16 %v68
  %v2518 = vunpack.c.l.b16 %v69
  %v2519 = vunpack.c.h.b16 %v69
  %v2520 = vunpack.c.l.b16 %v70
  %v2521 = vunpack.c.h.b16 %v70
  %v2522 = vunpack.c.l.b16 %v71
  %v2523 = vunpack.c.h.b16 %v71
  %v2524 = vunpack.c.l.b16 %v72
  %v2525 = vunpack.c.h.b16 %v72
  %v2526 = vunpack.c.l.b16 %v73
  %v2527 = vunpack.c.h.b16 %v73
  %v2528 = vunpack.c.l.b16 %v74
  %v2529 = vunpack.c.h.b16 %v74
  %v2530 = vunpack.c.l.b16 %v75
  %v2531 = vunpack.c.h.b16 %v75
  %v2532 = vunpack.c.l.b16 %v76
  %v2533 = vunpack.c.h.b16 %v76
  %v2534 = vunpack.c.l.b16 %v77
  %v2535 = vunpack.c.h.b16 %v77
  %v2536 = vunpack.c.l.b16 %v78
  %v2537 = vunpack.c.h.b16 %v78
  %v2538 = vunpack.c.l.b16 %v79
  %v2539 = vunpack.c.h.b16 %v79
  %v2540 = vunpack.c.l.b16 %v80
  %v2541 = vunpack.c.h.b16 %v80
  %v2542 = vunpack.c.l.b16 %v81
  %v2543 = vunpack.c.h.b16 %v81
  %v2544 = vunpack.c.l.b16 %v82
  %v2545 = vunpack.c.h.b16 %v82
  %v2546 = vunpack.c.l.b16 %v83
  %v2547 = vunpack.c.h.b16 %v83
  %v2548 = vunpack.c.l.b16 %v84
  %v2549 = vunpack.c.h.b16 %v84
  %v2550 = vunpack.c.l.b16 %v85
  %v2551 = vunpack.c.h.b16 %v85
  %v2552 = vunpack.c.l.b16 %v86
  %v2553 = vunpack.c.l.b16 %v87
  %v2554 = vunpack.c.h.b16 %v87
  %v2555 = vunpack.c.l.b16 %v88
  %v2556 = vunpack.c.h.b16 %v88
  %v2557 = vunpack.c.l.b16 %v89
  %v2558 = vunpack.c.h.b16 %v89
  %v2559 = vunpack.c.l.b16 %v90
  %v2560 = vunpack.c.h.b16 %v90
  %v2561 = vunpack.c.l.b16 %v91
  %v2562 = vunpack.c.h.b16 %v91
  %v2563 = vunpack.c.l.b16 %v92
  %v2564 = vunpack.c.h.b16 %v92
  %v2565 = vunpack.c.l.b16 %v93
  %v2566 = vunpack.c.h.b16 %v93
  %v2567 = vunpack.c.l.b16 %v94
  %v2568 = vunpack.c.h.b16 %v94
  %v2569 = vunpack.c.l.b16 %v95
  %v2570 = vunpack.c.h.b16 %v95
  %v2571 = vunpack.c.l.b16 %v96
  %v2572 = vunpack.c.h.b16 %v96
  %v2573 = vunpack.c.l.b16 %v97
  %v2574 = vunpack.c.h.b16 %v97
  %v2575 = vunpack.c.l.b16 %v98
  %v2576 = vunpack.c.h.b16 %v98
  %v2577 = vunpack.c.l.b16 %v99
  %v2578 = vunpack.c.h.b16 %v99
  %v2579 = vunpack.c.l.b16 %v100
  %v2580 = vunpack.c.h.b16 %v100
  %v2581 = vunpack.c.l.b16 %v101
  %v2582 = vunpack.c.h.b16 %v101
  %v2583 = vunpack.c.l.b16 %v102
  %v2584 = vunpack.c.h.b16 %v102
  %v2585 = vunpack.c.l.b16 %v103
  %v2586 = vunpack.c.h.b16 %v103
  %v2587 = vunpack.c.l.b16 %v104
  %v2588 = vunpack.c.h.b16 %v104
  %v2589 = vunpack.c.l.b16 %v105
  %v2590 = vunpack.c.h.b16 %v105
  %v2591 = vunpack.c.l.b16 %v106
  %v2592 = vunpack.c.h.b16 %v106
  %v2593 = vunpack.c.l.b16 %v107
  %v2594 = vunpack.c.h.b16 %v107
  %v2595 = vunpack.c.l.b16 %v108
  %v2596 = vunpack.c.h.b16 %v108
  %v2597 = vunpack.c.l.b16 %v109
  %v2598 = vunpack.c.h.b16 %v109
  %v2599 = vunpack.c.l.b16 %v110
  %v2600 = vunpack.c.h.b16 %v110
  %v2601 = vunpack.c.l.b16 %v111
  %v2602 = vunpack.c.h.b16 %v111
  %v2603 = vunpack.c.l.b16 %v112
  %v2604 = vunpack.c.h.b16 %v112
  %v2605 = vunpack.c.l.b16 %v113
  %v2606 = vunpack.c.h.b16 %v113
  %v2607 = vunpack.c.l.b16 %v114
  %v2608 = vunpack.c.h.b16 %v114
  %v2609 = vunpack.c.l.b16 %v115
  %v2610 = vunpack.c.h.b16 %v115
  %v2611 = vunpack.c.l.b16 %v116
  %v2612 = vunpack.c.h.b16 %v116
  %v2613 = vunpack.c.l.b16 %v117
  %v2614 = vunpack.c.h.b16 %v117
  %v2615 = vunpack.c.l.b16 %v118
  %v2616 = vunpack.c.h.b16 %v118
  %v2617 = vunpack.c.l.b16 %v119
  %v2618 = vunpack.c.h.b16 %v119
  %v2619 = vunpack.c.l.b16 %v120
  %v2620 = vunpack.c.h.b16 %v120
  %v2621 = vunpack.c.l.b16 %v121
  %v2622 = vunpack.c.h.b16 %v121
  %v2623 = vunpack.c.l.b16 %v122
  %v2624 = vunpack.c.h.b16 %v122
  %v2625 = vunpack.c.l.b16 %v123
  %v2626 = vunpack.c.h.b16 %v123
  %v2627 = vunpack.c.l.b16 %v124
  %v2628 = vunpack.c.h.b16 %v124
  %v2629 = vunpack.c.l.b16 %v125
  %v2630 = vunpack.c.h.b16 %v125
  %v2631 = vunpack.c.l.b16 %v126
  %v2632 = vunpack.c.h.b16 %v126
  %v2633 = vunpack.c.l.b16 %v127
  %v2634 = vunpack.c.h.b16 %v127
  %v2635 = vunpack.c.l.b16 %v128
  %v2636 = vunpack.c.h.b16 %v128
  %v2637 = vunpack.c.l.b16 %v129
  %v2638 = vunpack.c.h.b16 %v129
  %v2639 = vunpack.c.l.b16 %v130
  %v2640 = vunpack.c.h.b16 %v130
  %v2641 = vunpack.c.l.b16 %v131
  %v2642 = vunpack.c.h.b16 %v131
  %v2643 = vunpack.c.l.b16 %v132
  %v2644 = vunpack.c.h.b16 %v132
  %v2645 = vunpack.c.l.b16 %v133
  %v2646 = vunpack.c.h.b16 %v133
  %v2647 = vunpack.c.l.b16 %v134
  %v2648 = vunpack.c.h.b16 %v134
  %v2649 = vunpack.c.l.b16 %v135
  %v2650 = vunpack.c.h.b16 %v135
  %v2651 = vunpack.c.l.b16 %v136
  %v2652 = vunpack.c.h.b16 %v136
  %v2653 = vunpack.c.l.b16 %v137
  %v2654 = vunpack.c.h.b16 %v137
  %v2655 = vunpack.c.l.b16 %v138
  %v2656 = vunpack.c.h.b16 %v138
  %v2657 = vunpack.c.l.b16 %v139
  %v2658 = vunpack.c.h.b16 %v139
  %v2659 = vunpack.c.l.b16 %v140
  %v2660 = vunpack.c.h.b16 %v140
  %v2661 = vunpack.c.l.b16 %v141
  %v2662 = vunpack.c.h.b16 %v141
  %v2663 = vunpack.c.l.b16 %v142
  %v2664 = vunpack.c.h.b16 %v142
  %v2665 = vunpack.c.l.b16 %v143
  %v2666 = vunpack.c.h.b16 %v143
  %v2667 = vunpack.c.l.b16 %v144
  %v2668 = vunpack.c.h.b16 %v144
  %v2669 = vunpack.c.l.b16 %v145
  %v2670 = vunpack.c.h.b16 %v145
  %v2671 = vunpack.c.l.b16 %v146
  %v2672 = vunpack.c.h.b16 %v146
  %v2673 = vunpack.c.l.b16 %v147
  %v2674 = vunpack.c.h.b16 %v147
  %v2675 = vunpack.c.l.b16 %v148
  %v2676 = vunpack.c.h.b16 %v148
  %v2677 = vunpack.c.l.b16 %v149
  %v2678 = vunpack.c.h.b16 %v149
  %v2679 = vunpack.c.l.b16 %v150
  %v2680 = vunpack.c.h.b16 %v150
  %v2681 = vunpack.c.l.b16 %v151
  %v2682 = vunpack.c.h.b16 %v151
  %v2683 = vunpack.c.l.b16 %v152
  %v2684 = vunpack.c.h.b16 %v152
  %v2685 = vunpack.c.l.b16 %v153
  %v2686 = vpack.c.b16 %v2553, %v2420
  %v2687 = vpack.c.b16 %v2554, %v2421
  %v2688 = vpack.c.b16 %v2555, %v2422
  %v2689 = vpack.c.b16 %v2556, %v2423
  %v2690 = vpack.c.b16 %v2557, %v2424
  %v2691 = vpack.c.b16 %v2558, %v2425
  %v2692 = vpack.c.b16 %v2559, %v2426
  %v2693 = vpack.c.b16 %v2560, %v2427
  %v2694 = vpack.c.b16 %v2561, %v2428
  %v2695 = vpack.c.b16 %v2562, %v2429
  %v2696 = vpack.c.b16 %v2563, %v2430
  %v2697 = vpack.c.b16 %v2564, %v2431
  %v2698 = vpack.c.b16 %v2565, %v2432
  %v2699 = vpack.c.b16 %v2566, %v2433
  %v2700 = vpack.c.b16 %v2567, %v2434
  %v2701 = vpack.c.b16 %v2568, %v2435
  %v2702 = vpack.c.b16 %v2569, %v2436
  %v2703 = vpack.c.b16 %v2570, %v2437
  %v2704 = vpack.c.b16 %v2571, %v2438
  %v2705 = vpack.c.b16 %v2572, %v2439
  %v2706 = vpack.c.b16 %v2573, %v2440
  %v2707 = vpack.c.b16 %v2574, %v2441
  %v2708 = vpack.c.b16 %v2575, %v2442
  %v2709 = vpack.c.b16 %v2576, %v2443
  %v2710 = vpack.c.b16 %v2577, %v2444
  %v2711 = vpack.c.b16 %v2578, %v2445
  %v2712 = vpack.c.b16 %v2579, %v2446
  %v2713 = vpack.c.b16 %v2580, %v2447
  %v2714 = vpack.c.b16 %v2581, %v2448
  %v2715 = vpack.c.b16 %v2582, %v2449
  %v2716 = vpack.c.b16 %v2583, %v2450
  %v2717 = vpack.c.b16 %v2584, %v2451
  %v2718 = vpack.c.b16 %v2585, %v2452
  %v2719 = vpack.c.b16 %v2586, %v2453
  %v2720 = vpack.c.b16 %v2587, %v2454
  %v2721 = vpack.c.b16 %v2588, %v2455
  %v2722 = vpack.c.b16 %v2589, %v2456
  %v2723 = vpack.c.b16 %v2590, %v2457
  %v2724 = vpack.c.b16 %v2591, %v2458
  %v2725 = vpack.c.b16 %v2592, %v2459
  %v2726 = vpack.c.b16 %v2593, %v2460
  %v2727 = vpack.c.b16 %v2594, %v2461
  %v2728 = vpack.c.b16 %v2595, %v2462
  %v2729 = vpack.c.b16 %v2596, %v2463
  %v2730 = vpack.c.b16 %v2597, %v2464
  %v2731 = vpack.c.b16 %v2598, %v2465
  %v2732 = vpack.c.b16 %v2599, %v2466
  %v2733 = vpack.c.b16 %v2600, %v2467
  %v2734 = vpack.c.b16 %v2601, %v2468
  %v2735 = vpack.c.b16 %v2602, %v2469
  %v2736 = vpack.c.b16 %v2603, %v2470
  %v2737 = vpack.c.b16 %v2604, %v2471
  %v2738 = vpack.c.b16 %v2605, %v2472
  %v2739 = vpack.c.b16 %v2606, %v2473
  %v2740 = vpack.c.b16 %v2607, %v2474
  %v2741 = vpack.c.b16 %v2608, %v2475
  %v2742 = vpack.c.b16 %v2609, %v2476
  %v2743 = vpack.c.b16 %v2610, %v2477
  %v2744 = vpack.c.b16 %v2611, %v2478
  %v2745 = vpack.c.b16 %v2612, %v2479
  %v2746 = vpack.c.b16 %v2613, %v2480
  %v2747 = vpack.c.b16 %v2614, %v2481
  %v2748 = vpack.c.b16 %v2615, %v2482
  %v2749 = vpack.c.b16 %v2616, %v2483
  %v2750 = vpack.c.b16 %v2617, %v2484
  %v2751 = vpack.c.b16 %v2618, %v2485
  %v2752 = vpack.c.b16 %v2619, %v2486
  %v2753 = vpack.c.b16 %v2620, %v2487
  %v2754 = vpack.c.b16 %v2621, %v2488
  %v2755 = vpack.c.b16 %v2622, %v2489
  %v2756 = vpack.c.b16 %v2623, %v2490
  %v2757 = vpack.c.b16 %v2624, %v2491
  %v2758 = vpack.c.b16 %v2625, %v2492
  %v2759 = vpack.c.b16 %v2626, %v2493
  %v2760 = vpack.c.b16 %v2627, %v2494
  %v2761 = vpack.c.b16 %v2628, %v2495
  %v2762 = vpack.c.b16 %v2629, %v2496
  %v2763 = vpack.c.b16 %v2630, %v2497
  %v2764 = vpack.c.b16 %v2631, %v2498
  %v2765 = vpack.c.b16 %v2632, %v2499
  %v2766 = vpack.c.b16 %v2633, %v2500
  %v2767 = vpack.c.b16 %v2634, %v2501
  %v2768 = vpack.c.b16 %v2635, %v2502
  %v2769 = vpack.c.b16 %v2636, %v2503
  %v2770 = vpack.c.b16 %v2637, %v2504
  %v2771 = vpack.c.b16 %v2638, %v2505
  %v2772 = vpack.c.b16 %v2639, %v2506
  %v2773 = vpack.c.b16 %v2640, %v2507
  %v2774 = vpack.c.b16 %v2641, %v2508
  %v2775 = vpack.c.b16 %v2642, %v2509
  %v2776 = vpack.c.b16 %v2643, %v2510
  %v2777 = vpack.c.b16 %v2644, %v2511
  %v2778 = vpack.c.b16 %v2645, %v2512
  %v2779 = vpack.c.b16 %v2646, %v2513
  %v2780 = vpack.c.b16 %v2647, %v2514
  %v2781 = vpack.c.b16 %v2648, %v2515
  %v2782 = vpack.c.b16 %v2649, %v2516
  %v2783 = vpack.c.b16 %v2650, %v2517
  %v2784 = vpack.c.b16 %v2651, %v2518
  %v2785 = vpack.c.b16 %v2652, %v2519
  %v2786 = vpack.c.b16 %v2653, %v2520
  %v2787 = vpack.c.b16 %v2654, %v2521
  %v2788 = vpack.c.b16 %v2655, %v2522
  %v2789 = vpack.c.b16 %v2656, %v2523
  %v2790 = vpack.c.b16 %v2657, %v2524
  %v2791 = vpack.c.b16 %v2658, %v2525
  %v2792 = vpack.c.b16 %v2659, %v2526
  %v2793 = vpack.c.b16 %v2660, %v2527
  %v2794 = vpack.c.b16 %v2661, %v2528
  %v2795 = vpack.c.b16 %v2662, %v2529
  %v2796 = vpack.c.b16 %v2663, %v2530
  %v2797 = vpack.c.b16 %v2664, %v2531
  %v2798 = vpack.c.b16 %v2665, %v2532
  %v2799 = vpack.c.b16 %v2666, %v2533
  %v2800 = vpack.c.b16 %v2667, %v2534
  %v2801 = vpack.c.b16 %v2668, %v2535
  %v2802 = vpack.c.b16 %v2669, %v2536
  %v2803 = vpack.c.b16 %v2670, %v2537
  %v2804 = vpack.c.b16 %v2671, %v2538
  %v2805 = vpack.c.b16 %v2672, %v2539
  %v2806 = vpack.c.b16 %v2673, %v2540
  %v2807 = vpack.c.b16 %v2674, %v2541
  %v2808 = vpack.c.b16 %v2675, %v2542
  %v2809 = vpack.c.b16 %v2676, %v2543
  %v2810 = vpack.c.b16 %v2677, %v2544
  %v2811 = vpack.c.b16 %v2678, %v2545
  %v2812 = vpack.c.b16 %v2679, %v2546
  %v2813 = vpack.c.b16 %v2680, %v2547
  %v2814 = vpack.c.b16 %v2681, %v2548
  %v2815 = vpack.c.b16 %v2682, %v2549
  %v2816 = vpack.c.b16 %v2683, %v2550
  %v2817 = vpack.c.b16 %v2684, %v2551
  %v2818 = vpack.c.b16 %v2685, %v2552
  %v5080 = vunpack.c.l.b16 %v154
  %v5081 = vunpack.c.l.b16 %v155
  %v5082 = vunpack.c.l.b16 %v156
  %v5083 = vunpack.c.l.b16 %v157
  %v5084 = vunpack.c.l.b16 %v158
  %v5085 = vunpack.c.l.b16 %v159
  %v5086 = vunpack.c.l.b16 %v160
  %v5087 = vunpack.c.l.b16 %v161
  %v5088 = vunpack.c.l.b16 %v162
  %v5089 = vunpack.c.l.b16 %v163
  %v5090 = vunpack.c.l.b16 %v164
  %v5091 = vunpack.c.l.b16 %v165
  %v5092 = vunpack.c.l.b16 %v166
  %v5093 = vunpack.c.l.b16 %v167
  %v5094 = vunpack.c.l.b16 %v168
  %v5095 = vunpack.c.l.b16 %v169
  %v5096 = vunpack.c.l.b16 %v170
  %v5097 = vunpack.c.l.b16 %v171
  %v5098 = vunpack.c.l.b16 %v172
  %v5099 = vunpack.c.l.b16 %v173
  %v5100 = vunpack.c.l.b16 %v174
  %v5101 = vunpack.c.l.b16 %v175
  %v5102 = vunpack.c.l.b16 %v176
  %v5103 = vunpack.c.l.b16 %v177
  %v5104 = vunpack.c.l.b16 %v178
  %v5105 = vunpack.c.l.b16 %v179
  %v5106 = vunpack.c.l.b16 %v180
  %v5107 = vunpack.c.l.b16 %v181
  %v5108 = vunpack.c.l.b16 %v182
  %v5109 = vunpack.c.l.b16 %v183
  %v5110 = vunpack.c.l.b16 %v184
  %v5111 = vunpack.c.l.b16 %v185
  %v5112 = vunpack.c.l.b16 %v186
  %v5113 = vunpack.c.l.b16 %v187
  %v5114 = vunpack.c.l.b16 %v188
  %v5115 = vunpack.c.l.b16 %v189
  %v5116 = vunpack.c.l.b16 %v190
  %v5117 = vunpack.c.l.b16 %v191
  %v5118 = vunpack.c.l.b16 %v192
  %v5119 = vunpack.c.l.b16 %v193
  %v5120 = vunpack.c.l.b16 %v194
  %v5121 = vunpack.c.l.b16 %v195
  %v5122 = vunpack.c.l.b16 %v196
  %v5123 = vunpack.c.l.b16 %v197
  %v5124 = vunpack.c.l.b16 %v198
  %v5125 = vunpack.c.l.b16 %v199
  %v5126 = vunpack.c.l.b16 %v200
  %v5127 = vunpack.c.l.b16 %v201
  %v5128 = vunpack.c.l.b16 %v202
  %v5129 = vunpack.c.l.b16 %v203
  %v5130 = vunpack.c.l.b16 %v204
  %v5131 = vunpack.c.l.b16 %v205
  %v5132 = vunpack.c.l.b16 %v206
  %v5133 = vunpack.c.l.b16 %v207
  %v5134 = vunpack.c.l.b16 %v208
  %v5135 = vunpack.c.l.b16 %v209
  %v5136 = vunpack.c.l.b16 %v210
  %v5137 = vunpack.c.l.b16 %v211
  %v5138 = vunpack.c.l.b16 %v212
  %v5139 = vunpack.c.l.b16 %v213
  %v5140 = vunpack.c.l.b16 %v214
  %v5141 = vunpack.c.l.b16 %v215
  %v5142 = vunpack.c.l.b16 %v216
  %v5143 = vunpack.c.l.b16 %v217
  %v5144 = vunpack.c.l.b16 %v218
  %v5145 = vunpack.c.l.b16 %v219
  %v5146 = vunpack.c.l.b16 %v220
  %v5147 = vunpack.c.l.b16 %v221
  %v5148 = vunpack.c.l.b16 %v222
  %v5149 = vunpack.c.l.b16 %v223
  %v5150 = vunpack.c.l.b16 %v224
  %v5151 = vunpack.c.l.b16 %v225
  %v5152 = vunpack.c.l.b16 %v226
  %v5153 = vunpack.c.l.b16 %v227
  %v5154 = vunpack.c.l.b16 %v228
  %v5155 = vunpack.c.l.b16 %v229
  %v5156 = vunpack.c.l.b16 %v230
  %v5157 = vunpack.c.l.b16 %v231
  %v5158 = vunpack.c.l.b16 %v232
  %v5159 = vunpack.c.l.b16 %v233
  %v5160 = vunpack.c.l.b16 %v234
  %v5161 = vunpack.c.l.b16 %v235
  %v5162 = vunpack.c.l.b16 %v236
  %v5163 = vunpack.c.l.b16 %v237
  %v5164 = vunpack.c.l.b16 %v238
  %v5165 = vunpack.c.l.b16 %v239
  %v5166 = vunpack.c.l.b16 %v240
  %v5167 = vunpack.c.l.b16 %v241
  %v5168 = vunpack.c.l.b16 %v242
  %v5169 = vunpack.c.l.b16 %v243
  %v5170 = vunpack.c.l.b16 %v244
  %v5171 = vunpack.c.l.b16 %v245
  %v5172 = vunpack.c.l.b16 %v246
  %v5173 = vunpack.c.l.b16 %v247
  %v5174 = vunpack.c.l.b16 %v248
  %v5175 = vunpack.c.l.b16 %v249
  %v5176 = vunpack.c.l.b16 %v250
  %v5177 = vunpack.c.l.b16 %v251
  %v5178 = vunpack.c.l.b16 %v252
  %v5179 = vunpack.c.l.b16 %v253
  %v5180 = vunpack.c.l.b16 %v254
  %v5181 = vunpack.c.l.b16 %v255
  %v5182 = vunpack.c.l.b16 %v256
  %v5183 = vunpack.c.l.b16 %v257
  %v5184 = vunpack.c.l.b16 %v258
  %v5185 = vunpack.c.l.b16 %v259
  %v5186 = vunpack.c.l.b16 %v260
  %v5187 = vunpack.c.l.b16 %v261
  %v5188 = vunpack.c.l.b16 %v262
  %v5189 = vunpack.c.l.b16 %v263
  %v5190 = vunpack.c.l.b16 %v264
  %v5191 = vunpack.c.l.b16 %v265
  %v5192 = vunpack.c.l.b16 %v266
  %v5193 = vunpack.c.l.b16 %v267
  %v5194 = vunpack.c.l.b16 %v268
  %v5195 = vunpack.c.l.b16 %v269
  %v5196 = vunpack.c.l.b16 %v270
  %v5197 = vunpack.c.l.b16 %v271
  %v5198 = vunpack.c.l.b16 %v272
  %v5199 = vunpack.c.l.b16 %v273
  %v5200 = vunpack.c.l.b16 %v274
  %v5201 = vunpack.c.l.b16 %v275
  %v5202 = vunpack.c.l.b16 %v276
  %v5203 = vunpack.c.l.b16 %v277
  %v5204 = vunpack.c.l.b16 %v278
  %v5205 = vunpack.c.l.b16 %v279
  %v5206 = vunpack.c.l.b16 %v280
  %v5207 = vunpack.c.l.b16 %v281
  %v5208 = vunpack.c.l.b16 %v282
  %v5209 = vunpack.c.l.b16 %v283
  %v5210 = vunpack.c.l.b16 %v284
  %v5211 = vunpack.c.l.b16 %v285
  %v5212 = vunpack.c.l.b16 %v286
  %v5213 = vunpack.c.l.b16 %v287
  %v5214 = vunpack.c.l.b16 %v288
  %v5215 = vunpack.c.l.b16 %v289
  %v5216 = vunpack.c.l.b16 %v290
  %v5217 = vunpack.c.l.b16 %v291
  %v5218 = vunpack.c.l.b16 %v292
  %v5219 = vunpack.c.l.b16 %v293
  %v5220 = vunpack.c.l.b16 %v294
  %v5221 = vunpack.c.l.b16 %v295
  %v5222 = vunpack.c.l.b16 %v296
  %v5223 = vunpack.c.l.b16 %v297
  %v5224 = vunpack.c.l.b16 %v298
  %v5225 = vunpack.c.l.b16 %v299
  %v5226 = vunpack.c.l.b16 %v300
  %v5227 = vunpack.c.l.b16 %v301
  %v5228 = vunpack.c.l.b16 %v302
  %v5229 = vunpack.c.l.b16 %v303
  %v5230 = vunpack.c.l.b16 %v304
  %v5231 = vunpack.c.l.b16 %v305
  %v5232 = vunpack.c.l.b16 %v306
  %v5233 = vunpack.c.l.b16 %v307
  %v5234 = vunpack.c.l.b16 %v308
  %v5235 = vunpack.c.l.b16 %v309
  %v5236 = vunpack.c.l.b16 %v310
  %v5237 = vunpack.c.l.b16 %v311
  %v5238 = vunpack.c.l.b16 %v312
  %v5239 = vunpack.c.l.b16 %v313
  %v5240 = vunpack.c.l.b16 %v314
  %v5241 = vunpack.c.l.b16 %v315
  %v5242 = vunpack.c.l.b16 %v316
  %v5243 = vunpack.c.l.b16 %v317
  %v5244 = vunpack.c.l.b16 %v318
  %v5245 = vunpack.c.l.b16 %v319
  %v5246 = vunpack.c.l.b16 %v320
  %v5247 = vunpack.c.l.b16 %v321
  %v5248 = vunpack.c.l.b16 %v322
  %v5249 = vunpack.c.l.b16 %v323
  %v5250 = vunpack.c.l.b16 %v324
  %v5251 = vunpack.c.l.b16 %v325
  %v5252 = vunpack.c.l.b16 %v326
  %v5253 = vunpack.c.l.b16 %v327
  %v5254 = vunpack.c.l.b16 %v328
  %v5255 = vunpack.c.l.b16 %v329
  %v5256 = vunpack.c.l.b16 %v330
  %v5257 = vunpack.c.l.b16 %v331
  %v5258 = vunpack.c.l.b16 %v332
  %v5259 = vunpack.c.l.b16 %v333
  %v5260 = vunpack.c.l.b16 %v334
  %v5261 = vunpack.c.l.b16 %v335
  %v5262 = vunpack.c.l.b16 %v336
  %v5263 = vunpack.c.l.b16 %v337
  %v5264 = vunpack.c.l.b16 %v338
  %v5265 = vunpack.c.l.b16 %v339
  %v5266 = vunpack.c.l.b16 %v340
  %v5267 = vunpack.c.l.b16 %v341
  %v5268 = vunpack.c.l.b16 %v342
  %v5269 = vunpack.c.l.b16 %v343
  %v5270 = vunpack.c.l.b16 %v344
  %v5271 = vunpack.c.l.b16 %v345
  %v5272 = vunpack.c.l.b16 %v346
  %v5273 = vunpack.c.l.b16 %v347
  %v5274 = vunpack.c.l.b16 %v348
  %v5275 = vunpack.c.l.b16 %v349
  %v5276 = vunpack.c.l.b16 %v350
  %v5277 = vunpack.c.l.b16 %v351
  %v5278 = vunpack.c.l.b16 %v352
  %v5279 = vunpack.c.l.b16 %v353
  %v5280 = vunpack.c.l.b16 %v354
  %v5281 = vunpack.c.l.b16 %v355
  %v5282 = vunpack.c.l.b16 %v356
  %v5283 = vunpack.c.l.b16 %v357
  %v5284 = vunpack.c.l.b16 %v358
  %v5285 = vunpack.c.l.b16 %v359
  %v5286 = vunpack.c.l.b16 %v360
  %v5287 = vunpack.c.l.b16 %v361
  %v5288 = vunpack.c.l.b16 %v362
  %v5289 = vunpack.c.l.b16 %v363
  %v5290 = vunpack.c.l.b16 %v364
  %v5291 = vunpack.c.l.b16 %v365
  %v5292 = vunpack.c.l.b16 %v366
  %v5293 = vunpack.c.l.b16 %v367
  %v5294 = vunpack.c.l.b16 %v368
  %v5295 = vunpack.c.l.b16 %v369
  %v5296 = vunpack.c.l.b16 %v370
  %v5297 = vunpack.c.l.b16 %v371
  %v5298 = vunpack.c.l.b16 %v372
  %v5299 = vunpack.c.l.b16 %v373
  %v5300 = vunpack.c.l.b16 %v374
  %v5301 = vunpack.c.l.b16 %v375
  %v5302 = vunpack.c.l.b16 %v376
  %v5303 = vunpack.c.l.b16 %v377
  %v5304 = vunpack.c.l.b16 %v378
  %v5305 = vunpack.c.l.b16 %v379
  %v5306 = vunpack.c.l.b16 %v380
  %v5307 = vunpack.c.l.b16 %v381
  %v5308 = vunpack.c.l.b16 %v382
  %v5309 = vunpack.c.l.b16 %v383
  %v5310 = vunpack.c.l.b16 %v384
  %v5311 = vunpack.c.l.b16 %v385
  %v5312 = vunpack.c.l.b16 %v386
  %v5313 = vunpack.c.l.b16 %v387
  %v5314 = vunpack.c.l.b16 %v388
  %v5315 = vunpack.c.l.b16 %v389
  %v5316 = vunpack.c.l.b16 %v390
  %v5317 = vunpack.c.l.b16 %v391
  %v5318 = vunpack.c.l.b16 %v392
  %v5319 = vunpack.c.l.b16 %v393
  %v5320 = vunpack.c.l.b16 %v394
  %v5321 = vunpack.c.l.b16 %v395
  %v5322 = vunpack.c.l.b16 %v396
  %v5323 = vunpack.c.l.b16 %v397
  %v5324 = vunpack.c.l.b16 %v398
  %v5325 = vunpack.c.l.b16 %v399
  %v5326 = vunpack.c.l.b16 %v400
  %v5327 = vunpack.c.l.b16 %v401
  %v5328 = vunpack.c.l.b16 %v402
  %v5329 = vunpack.c.l.b16 %v403
  %v5330 = vunpack.c.l.b16 %v404
  %v5331 = vunpack.c.l.b16 %v405
  %v5332 = vunpack.c.l.b16 %v406
  %v5333 = vunpack.c.l.b16 %v407
  %v5334 = vunpack.c.l.b16 %v408
  %v5335 = vunpack.c.l.b16 %v409
  %v5336 = vunpack.c.l.b16 %v410
  %v5337 = vunpack.c.l.b16 %v411
  %v5338 = vunpack.c.l.b16 %v412
  %v5339 = vunpack.c.l.b16 %v413
  %v5340 = vunpack.c.l.b16 %v414
  %v5341 = vunpack.c.l.b16 %v415
  %v5342 = vunpack.c.l.b16 %v416
  %v5343 = vunpack.c.l.b16 %v417
  %v5344 = vunpack.c.l.b16 %v418
  %v5345 = vunpack.c.l.b16 %v419
  %v5346 = vunpack.c.l.b16 %v420
  %v5347 = vunpack.c.l.b16 %v421
  %v5348 = vunpack.c.l.b16 %v422
  %v5349 = vunpack.c.l.b16 %v423
  %v5350 = vunpack.c.l.b16 %v424
  %v5351 = vunpack.c.l.b16 %v425
  %v5352 = vunpack.c.l.b16 %v426
  %v5353 = vunpack.c.l.b16 %v427
  %v5354 = vunpack.c.l.b16 %v428
  %v5355 = vunpack.c.l.b16 %v429
  %v5356 = vunpack.c.l.b16 %v430
  %v5357 = vunpack.c.l.b16 %v431
  %v5358 = vunpack.c.l.b16 %v432
  %v5359 = vunpack.c.l.b16 %v433
  %v5360 = vunpack.c.l.b16 %v434
  %v5361 = vunpack.c.l.b16 %v435
  %v5362 = vunpack.c.l.b16 %v436
  %v5363 = vunpack.c.l.b16 %v437
  %v5364 = vunpack.c.l.b16 %v438
  %v5365 = vunpack.c.l.b16 %v439
  %v5366 = vunpack.c.l.b16 %v440
  %v5367 = vunpack.c.l.b16 %v441
  %v5368 = vunpack.c.l.b16 %v442
  %v5369 = vunpack.c.l.b16 %v443
  %v5370 = vunpack.c.l.b16 %v444
  %v5371 = vunpack.c.l.b16 %v445
  %v5372 = vunpack.c.l.b16 %v446
  %v5373 = vunpack.c.l.b16 %v447
  %v5374 = vunpack.c.l.b16 %v448
  %v5375 = vunpack.c.l.b16 %v449
  %v5376 = vunpack.c.l.b16 %v450
  %v5377 = vunpack.c.l.b16 %v451
  %v5378 = vunpack.c.l.b16 %v452
  %v5379 = vunpack.c.l.b16 %v453
  %v5380 = vunpack.c.l.b16 %v454
  %v5381 = vunpack.c.l.b16 %v455
  %v5382 = vunpack.c.l.b16 %v456
  %v5383 = vunpack.c.l.b16 %v457
  %v5384 = vunpack.c.l.b16 %v458
  %v5385 = vunpack.c.l.b16 %v459
  %v5386 = vunpack.c.l.b16 %v460
  %v5387 = vunpack.c.l.b16 %v461
  %v5388 = vunpack.c.l.b16 %v462
  %v5389 = vunpack.c.l.b16 %v463
  %v5390 = vunpack.c.l.b16 %v464
  %v5391 = vunpack.c.l.b16 %v465
  %v5392 = vunpack.c.l.b16 %v466
  %v5393 = vunpack.c.l.b16 %v467
  %v5394 = vunpack.c.l.b16 %v468
  %v5395 = vunpack.c.l.b16 %v469
  %v5396 = vunpack.c.l.b16 %v470
  %v5397 = vunpack.c.l.b16 %v471
  %v5398 = vunpack.c.l.b16 %v472
  %v5399 = vunpack.c.l.b16 %v473
  %v5400 = vunpack.c.l.b16 %v474
  %v5401 = vunpack.c.l.b16 %v475
  %v5402 = vunpack.c.l.b16 %v476
  %v5403 = vunpack.c.l.b16 %v477
  %v5404 = vunpack.c.l.b16 %v478
  %v5405 = vunpack.c.l.b16 %v479
  %v5406 = vunpack.c.l.b16 %v480
  %v5407 = vunpack.c.l.b16 %v481
  %v5408 = vunpack.c.l.b16 %v482
  %v5409 = vunpack.c.l.b16 %v483
  %v5410 = vunpack.c.l.b16 %v484
  %v5411 = vunpack.c.l.b16 %v485
  %v5412 = vunpack.c.l.b16 %v486
  %v5413 = vunpack.c.l.b16 %v487
  %v5414 = vunpack.c.l.b16 %v488
  %v5415 = vunpack.c.l.b16 %v489
  %v5416 = vunpack.c.l.b16 %v490
  %v5417 = vunpack.c.l.b16 %v491
  %v5418 = vunpack.c.l.b16 %v492
  %v5419 = vunpack.c.l.b16 %v493
  %v5420 = vunpack.c.l.b16 %v494
  %v5421 = vunpack.c.l.b16 %v495
  %v5422 = vunpack.c.l.b16 %v496
  %v5423 = vunpack.c.l.b16 %v497
  %v5424 = vunpack.c.l.b16 %v498
  %v5425 = vunpack.c.l.b16 %v499
  %v5426 = vunpack.c.l.b16 %v500
  %v5427 = vunpack.c.l.b16 %v501
  %v5428 = vunpack.c.l.b16 %v502
  %v5429 = vunpack.c.l.b16 %v503
  %v5430 = vunpack.c.l.b16 %v504
  %v5431 = vunpack.c.l.b16 %v505
  %v5432 = vunpack.c.l.b16 %v506
  %v5433 = vunpack.c.l.b16 %v507
  %v5434 = vunpack.c.l.b16 %v508
  %v5435 = vunpack.c.l.b16 %v509
  %v5436 = vunpack.c.l.b16 %v510
  %v5437 = vunpack.c.l.b16 %v511
  %v5438 = vunpack.c.l.b16 %v512
  %v5439 = vunpack.c.l.b16 %v513
  %v5440 = vunpack.c.l.b16 %v514
  %v5441 = vunpack.c.l.b16 %v515
  %v5442 = vunpack.c.l.b16 %v516
  %v5443 = vunpack.c.l.b16 %v517
  %v5444 = vunpack.c.l.b16 %v518
  %v5445 = vunpack.c.l.b16 %v519
  %v5446 = vunpack.c.l.b16 %v520
  %v5447 = vunpack.c.l.b16 %v521
  %v5448 = vunpack.c.l.b16 %v522
  %v5449 = vunpack.c.l.b16 %v523
  %v5450 = vunpack.c.l.b16 %v524
  %v5451 = vunpack.c.l.b16 %v525
  %v5452 = vunpack.c.l.b16 %v526
  %v5453 = vunpack.c.l.b16 %v527
  %v5454 = vunpack.c.l.b16 %v528
  %v5455 = vunpack.c.l.b16 %v529
  %v5456 = vunpack.c.l.b16 %v530
  %v5457 = vunpack.c.l.b16 %v531
  %v5458 = vunpack.c.l.b16 %v532
  %v5459 = vunpack.c.l.b16 %v533
  %v5460 = vunpack.c.l.b16 %v534
  %v5461 = vunpack.c.l.b16 %v535
  %v5462 = vunpack.c.l.b16 %v536
  %v5463 = vunpack.c.l.b16 %v537
  %v5464 = vunpack.c.l.b16 %v538
  %v5465 = vunpack.c.l.b16 %v539
  %v5466 = vunpack.c.l.b16 %v540
  %v5467 = vunpack.c.l.b16 %v541
  %v5468 = vunpack.c.l.b16 %v542
  %v5469 = vunpack.c.l.b16 %v543
  %v5470 = vunpack.c.l.b16 %v544
  %v5471 = vunpack.c.l.b16 %v545
  %v5472 = vunpack.c.l.b16 %v546
  %v5473 = vunpack.c.l.b16 %v547
  %v5474 = vunpack.c.l.b16 %v548
  %v5475 = vunpack.c.l.b16 %v549
  %v5476 = vunpack.c.l.b16 %v550
  %v5477 = vunpack.c.l.b16 %v551
  %v5478 = vunpack.c.l.b16 %v552
  %v5479 = vunpack.c.l.b16 %v553
  %v5480 = vunpack.c.l.b16 %v554
  %v5481 = vunpack.c.l.b16 %v555
  %v5482 = vunpack.c.l.b16 %v556
  %v5483 = vunpack.c.l.b16 %v557
  %v5484 = vunpack.c.l.b16 %v558
  %v5485 = vunpack.c.l.b16 %v559
  %v5486 = vunpack.c.l.b16 %v560
  %v5487 = vunpack.c.l.b16 %v561
  %v5488 = vunpack.c.l.b16 %v562
  %v5489 = vunpack.c.l.b16 %v563
  %v5490 = vunpack.c.l.b16 %v564
  %v5491 = vunpack.c.l.b16 %v565
  %v5492 = vunpack.c.l.b16 %v566
  %v5493 = vunpack.c.l.b16 %v567
  %v5494 = vunpack.c.l.b16 %v568
  %v5495 = vunpack.c.l.b16 %v569
  %v5496 = vunpack.c.l.b16 %v570
  %v5497 = vunpack.c.l.b16 %v571
  %v5498 = vunpack.c.l.b16 %v572
  %v5499 = vunpack.c.l.b16 %v573
  %v5500 = vunpack.c.l.b16 %v574
  %v5501 = vunpack.c.l.b16 %v575
  %v5502 = vunpack.c.l.b16 %v576
  %v5503 = vunpack.c.l.b16 %v577
  %v5504 = vunpack.c.l.b16 %v578
  %v5505 = vunpack.c.l.b16 %v579
  %v5506 = vunpack.c.l.b16 %v580
  %v5507 = vunpack.c.l.b16 %v581
  %v5508 = vunpack.c.l.b16 %v582
  %v5509 = vunpack.c.l.b16 %v583
  %v5510 = vunpack.c.l.b16 %v584
  %v5511 = vunpack.c.l.b16 %v585
  %v5512 = vunpack.c.l.b16 %v586
  %v5513 = vunpack.c.l.b16 %v587
  %v5514 = vunpack.c.l.b16 %v588
  %v5515 = vunpack.c.l.b16 %v589
  %v5516 = vunpack.c.l.b16 %v590
  %v5517 = vunpack.c.l.b16 %v591
  %v5518 = vunpack.c.l.b16 %v592
  %v5519 = vunpack.c.l.b16 %v593
  %v5520 = vunpack.c.l.b16 %v594
  %v5521 = vunpack.c.l.b16 %v595
  %v5522 = vunpack.c.l.b16 %v596
  %v5523 = vunpack.c.l.b16 %v597
  %v5524 = vunpack.c.l.b16 %v598
  %v5525 = vunpack.c.l.b16 %v599
  %v5526 = vunpack.c.l.b16 %v600
  %v5527 = vunpack.c.l.b16 %v601
  %v5528 = vunpack.c.l.b16 %v602
  %v5529 = vunpack.c.l.b16 %v603
  %v5530 = vunpack.c.l.b16 %v604
  %v5531 = vunpack.c.l.b16 %v605
  %v5532 = vunpack.c.l.b16 %v606
  %v5533 = vunpack.c.l.b16 %v607
  %v5534 = vunpack.c.l.b16 %v608
  %v5535 = vunpack.c.l.b16 %v609
  %v5536 = vunpack.c.l.b16 %v610
  %v5537 = vunpack.c.l.b16 %v611
  %v5538 = vunpack.c.l.b16 %v612
  %v5539 = vunpack.c.l.b16 %v613
  %v5540 = vunpack.c.l.b16 %v614
  %v5541 = vunpack.c.l.b16 %v615
  %v5542 = vunpack.c.l.b16 %v616
  %v5543 = vunpack.c.l.b16 %v617
  %v5544 = vunpack.c.l.b16 %v618
  %v5545 = vunpack.c.l.b16 %v619
  %v5546 = vunpack.c.l.b16 %v620
  %v5547 = vunpack.c.l.b16 %v621
  %v5548 = vunpack.c.l.b16 %v622
  %v5549 = vunpack.c.l.b16 %v623
  %v5550 = vunpack.c.l.b16 %v624
  %v5551 = vunpack.c.l.b16 %v625
  %v5552 = vunpack.c.l.b16 %v626
  %v5553 = vunpack.c.l.b16 %v627
  %v5554 = vunpack.c.l.b16 %v628
  %v5555 = vunpack.c.l.b16 %v629
  %v5556 = vunpack.c.l.b16 %v630
  %v5557 = vunpack.c.l.b16 %v631
  %v5558 = vunpack.c.l.b16 %v632
  %v5559 = vunpack.c.l.b16 %v633
  %v5560 = vunpack.c.l.b16 %v634
  %v5561 = vunpack.c.l.b16 %v635
  %v5562 = vunpack.c.l.b16 %v636
  %v5563 = vunpack.c.l.b16 %v637
  %v5564 = vunpack.c.l.b16 %v638
  %v5565 = vunpack.c.l.b16 %v639
  %v5566 = vunpack.c.l.b16 %v640
  %v5567 = vunpack.c.l.b16 %v641
  %v5568 = vunpack.c.l.b16 %v642
  %v5569 = vunpack.c.l.b16 %v643
  %v5570 = vunpack.c.l.b16 %v644
  %v5571 = vunpack.c.l.b16 %v645
  %v5572 = vunpack.c.l.b16 %v646
  %v5573 = vunpack.c.l.b16 %v647
  %v5574 = vunpack.c.l.b16 %v648
  %v5575 = vunpack.c.l.b16 %v649
  %v5576 = vunpack.c.l.b16 %v650
  %v5577 = vunpack.c.l.b16 %v651
  %v5578 = vunpack.c.l.b16 %v652
  %v5579 = vunpack.c.l.b16 %v653
  %v5580 = vunpack.c.l.b16 %v654
  %v5581 = vunpack.c.l.b16 %v655
  %v5582 = vunpack.c.l.b16 %v656
  %v5583 = vunpack.c.l.b16 %v657
  %v5584 = vunpack.c.l.b16 %v658
  %v5585 = vunpack.c.l.b16 %v659
  %v5586 = vunpack.c.l.b16 %v660
  %v5587 = vunpack.c.l.b16 %v661
  %v5588 = vunpack.c.l.b16 %v662
  %v5589 = vunpack.c.l.b16 %v663
  %v5590 = vunpack.c.l.b16 %v664
  %v5591 = vunpack.c.l.b16 %v665
  %v5592 = vunpack.c.l.b16 %v666
  %v5593 = vunpack.c.l.b16 %v667
  %v5594 = vunpack.c.l.b16 %v668
  %v5595 = vunpack.c.l.b16 %v669
  %v5596 = vunpack.c.l.b16 %v670
  %v5597 = vunpack.c.l.b16 %v671
  %v5598 = vunpack.c.l.b16 %v672
  %v5599 = vunpack.c.l.b16 %v673
  %v5600 = vunpack.c.l.b16 %v674
  %v5601 = vunpack.c.l.b16 %v675
  %v5602 = vunpack.c.l.b16 %v676
  %v5603 = vunpack.c.l.b16 %v677
  %v5604 = vunpack.c.l.b16 %v678
  %v5605 = vunpack.c.l.b16 %v679
  %v5606 = vunpack.c.l.b16 %v680
  %v5607 = vunpack.c.l.b16 %v681
  %v5608 = vunpack.c.l.b16 %v682
  %v5609 = vunpack.c.l.b16 %v683
  %v5610 = vunpack.c.l.b16 %v684
  %v5611 = vunpack.c.l.b16 %v685
  %v5612 = vunpack.c.l.b16 %v686
  %v5613 = vunpack.c.l.b16 %v687
  %v5614 = vunpack.c.l.b16 %v688
  %v5615 = vunpack.c.l.b16 %v689
  %v5616 = vunpack.c.l.b16 %v690
  %v5617 = vunpack.c.l.b16 %v691
  %v5618 = vunpack.c.l.b16 %v692
  %v5619 = vunpack.c.l.b16 %v693
  %v5620 = vunpack.c.l.b16 %v694
  %v5621 = vunpack.c.l.b16 %v695
  %v5622 = vunpack.c.l.b16 %v696
  %v5623 = vunpack.c.l.b16 %v697
  %v5624 = vunpack.c.l.b16 %v698
  %v5625 = vunpack.c.l.b16 %v699
  %v5626 = vunpack.c.l.b16 %v700
  %v5627 = vunpack.c.l.b16 %v701
  %v5628 = vunpack.c.l.b16 %v702
  %v5629 = vunpack.c.l.b16 %v703
  %v5630 = vunpack.c.l.b16 %v704
  %v5631 = vunpack.c.l.b16 %v705
  %v5632 = vunpack.c.l.b16 %v706
  %v5633 = vunpack.c.l.b16 %v707
  %v5634 = vunpack.c.l.b16 %v708
  %v5635 = vunpack.c.l.b16 %v709
  %v5636 = vunpack.c.l.b16 %v710
  %v5637 = vunpack.c.l.b16 %v711
  %v5638 = vunpack.c.l.b16 %v712
  %v5639 = vunpack.c.l.b16 %v713
  %v5640 = vunpack.c.l.b16 %v714
  %v5641 = vunpack.c.l.b16 %v715
  %v5642 = vunpack.c.l.b16 %v716
  %v5643 = vunpack.c.l.b16 %v717
  %v5644 = vunpack.c.l.b16 %v718
  %v5645 = vunpack.c.l.b16 %v719
  %v5646 = vunpack.c.l.b16 %v720
  %v5647 = vunpack.c.l.b16 %v721
  %v5648 = vunpack.c.l.b16 %v722
  %v5649 = vunpack.c.l.b16 %v723
  %v5650 = vunpack.c.l.b16 %v724
  %v5651 = vunpack.c.l.b16 %v725
  %v5652 = vunpack.c.l.b16 %v726
  %v5653 = vunpack.c.l.b16 %v727
  %v5654 = vunpack.c.l.b16 %v728
  %v5655 = vunpack.c.l.b16 %v729
  %v5656 = vunpack.c.l.b16 %v730
  %v5657 = vunpack.c.l.b16 %v731
  %v5658 = vunpack.c.l.b16 %v732
  %v5659 = vunpack.c.l.b16 %v733
  %v5660 = vunpack.c.l.b16 %v734
  %v5661 = vunpack.c.l.b16 %v735
  %v5662 = vunpack.c.l.b16 %v736
  %v5663 = vunpack.c.l.b16 %v737
  %v5664 = vunpack.c.l.b16 %v738
  %v5665 = vunpack.c.l.b16 %v739
  %v5666 = vunpack.c.l.b16 %v740
  %v5667 = vunpack.c.l.b16 %v741
  %v5668 = vunpack.c.l.b16 %v742
  %v5669 = vunpack.c.l.b16 %v743
  %v5670 = vunpack.c.l.b16 %v744
  %v5671 = vunpack.c.l.b16 %v745
  %v5672 = vunpack.c.l.b16 %v746
  %v5673 = vunpack.c.l.b16 %v747
  %v5674 = vunpack.c.l.b16 %v748
  %v5675 = vunpack.c.l.b16 %v749
  %v5676 = vunpack.c.l.b16 %v750
  %v5677 = vunpack.c.l.b16 %v751
  %v5678 = vunpack.c.l.b16 %v752
  %v5679 = vunpack.c.l.b16 %v753
  %v5680 = vunpack.c.l.b16 %v754
  %v5681 = vunpack.c.l.b16 %v755
  %v5682 = vunpack.c.l.b16 %v756
  %v5683 = vunpack.c.l.b16 %v757
  %v5684 = vunpack.c.l.b16 %v758
  %v5685 = vunpack.c.l.b16 %v759
  %v5686 = vunpack.c.l.b16 %v760
  %v5687 = vunpack.c.l.b16 %v761
  %v5688 = vunpack.c.l.b16 %v762
  %v5689 = vunpack.c.l.b16 %v763
  %v5690 = vunpack.c.l.b16 %v764
  %v5691 = vunpack.c.l.b16 %v765
  %v5692 = vunpack.c.l.b16 %v766
  %v5693 = vunpack.c.l.b16 %v767
  %v5694 = vunpack.c.l.b16 %v768
  %v5695 = vunpack.c.l.b16 %v769
  %v5696 = vunpack.c.l.b16 %v770
  %v5697 = vunpack.c.l.b16 %v771
  %v5698 = vunpack.c.l.b16 %v772
  %v5699 = vunpack.c.l.b16 %v773
  %v5700 = vunpack.c.l.b16 %v774
  %v5701 = vunpack.c.l.b16 %v775
  %v5702 = vunpack.c.l.b16 %v776
  %v5703 = vunpack.c.l.b16 %v777
  %v5704 = vunpack.c.l.b16 %v778
  %v5705 = vunpack.c.l.b16 %v779
  %v5706 = vunpack.c.l.b16 %v780
  %v5707 = vunpack.c.l.b16 %v781
  %v5708 = vunpack.c.l.b16 %v782
  %v5709 = vunpack.c.l.b16 %v783
  %v5710 = vunpack.c.l.b16 %v784
  %v5711 = vunpack.c.l.b16 %v785
  %v5712 = vunpack.c.l.b16 %v786
  %v5713 = vunpack.c.l.b16 %v787
  %v5714 = vunpack.c.l.b16 %v788
  %v5715 = vunpack.c.l.b16 %v789
  %v5716 = vunpack.c.l.b16 %v790
  %v5717 = vunpack.c.l.b16 %v791
  %v5718 = vunpack.c.l.b16 %v792
  %v5719 = vunpack.c.l.b16 %v793
  %v5720 = vunpack.c.l.b16 %v794
  %v5721 = vunpack.c.l.b16 %v795
  %v5722 = vunpack.c.l.b16 %v796
  %v5723 = vunpack.c.l.b16 %v797
  %v5724 = vunpack.c.l.b16 %v798
  %v5725 = vunpack.c.l.b16 %v799
  %v5726 = vunpack.c.l.b16 %v800
  %v5727 = vunpack.c.l.b16 %v801
  %v5728 = vunpack.c.l.b16 %v802
  %v5729 = vunpack.c.l.b16 %v803
  %v5730 = vunpack.c.l.b16 %v804
  %v5731 = vunpack.c.l.b16 %v805
  %v5732 = vunpack.c.l.b16 %v806
  %v5733 = vunpack.c.l.b16 %v807
  %v5734 = vunpack.c.l.b16 %v808
  %v5735 = vunpack.c.l.b16 %v809
  %v5736 = vunpack.c.l.b16 %v810
  %v5737 = vunpack.c.l.b16 %v811
  %v5738 = vunpack.c.l.b16 %v812
  %v5739 = vunpack.c.l.b16 %v813
  %v5740 = vunpack.c.l.b16 %v814
  %v5741 = vunpack.c.l.b16 %v815
  %v5742 = vunpack.c.l.b16 %v816
  %v5743 = vunpack.c.l.b16 %v817
  %v5744 = vunpack.c.l.b16 %v818
  %v5745 = vunpack.c.l.b16 %v819
  %v5746 = vunpack.c.l.b16 %v820
  %v5747 = vunpack.c.l.b16 %v821
  %v5748 = vunpack.c.l.b16 %v822
  %v5749 = vunpack.c.l.b16 %v823
  %v5750 = vunpack.c.l.b16 %v824
  %v5751 = vunpack.c.l.b16 %v825
  %v5752 = vunpack.c.l.b16 %v826
  %v5753 = vunpack.c.l.b16 %v827
  %v5754 = vunpack.c.l.b16 %v828
  %v5755 = vunpack.c.l.b16 %v829
  %v5756 = vunpack.c.l.b16 %v830
  %v5757 = vunpack.c.l.b16 %v831
  %v5758 = vunpack.c.l.b16 %v832
  %v5759 = vunpack.c.l.b16 %v833
  %v5760 = vunpack.c.l.b16 %v834
  %v5761 = vunpack.c.l.b16 %v835
  %v5762 = vunpack.c.l.b16 %v836
  %v5763 = vunpack.c.l.b16 %v837
  %v5764 = vunpack.c.l.b16 %v838
  %v5765 = vunpack.c.l.b16 %v839
  %v5766 = vunpack.c.l.b16 %v840
  %v5767 = vunpack.c.l.b16 %v841
  %v5768 = vunpack.c.l.b16 %v842
  %v5769 = vunpack.c.l.b16 %v843
  %v5770 = vunpack.c.l.b16 %v844
  %v5771 = vunpack.c.l.b16 %v845
  %v5772 = vunpack.c.l.b16 %v846
  %v5773 = vunpack.c.l.b16 %v847
  %v5774 = vunpack.c.l.b16 %v848
  %v5775 = vunpack.c.l.b16 %v849
  %v5776 = vunpack.c.l.b16 %v850
  %v5777 = vunpack.c.l.b16 %v851
  %v5778 = vunpack.c.l.b16 %v852
  %v5779 = vunpack.c.l.b16 %v853
  %v5780 = vunpack.c.l.b16 %v854
  %v5781 = vunpack.c.l.b16 %v855
  %v5782 = vunpack.c.l.b16 %v856
  %v5783 = vunpack.c.l.b16 %v857
  %v5784 = vunpack.c.l.b16 %v858
  %v5785 = vunpack.c.l.b16 %v859
  %v5786 = vunpack.c.l.b16 %v860
  %v5787 = vunpack.c.l.b16 %v861
  %v5788 = vunpack.c.l.b16 %v862
  %v5789 = vunpack.c.l.b16 %v863
  %v5790 = vunpack.c.l.b16 %v864
  %v5791 = vunpack.c.l.b16 %v865
  %v5792 = vunpack.c.l.b16 %v866
  %v5793 = vunpack.c.l.b16 %v867
  %v5794 = vunpack.c.l.b16 %v868
  %v5795 = vunpack.c.l.b16 %v869
  %v5796 = vunpack.c.l.b16 %v870
  %v5797 = vunpack.c.l.b16 %v871
  %v5798 = vunpack.c.l.b16 %v872
  %v5799 = vunpack.c.l.b16 %v873
  %v5800 = vunpack.c.l.b16 %v874
  %v5801 = vunpack.c.l.b16 %v875
  %v5802 = vunpack.c.l.b16 %v876
  %v5803 = vunpack.c.l.b16 %v877
  %v5804 = vunpack.c.l.b16 %v878
  %v5805 = vunpack.c.l.b16 %v879
  %v5806 = vunpack.c.l.b16 %v880
  %v5807 = vunpack.c.l.b16 %v881
  %v5808 = vunpack.c.l.b16 %v882
  %v5809 = vunpack.c.l.b16 %v883
  %v5810 = vunpack.c.l.b16 %v884
  %v5811 = vunpack.c.l.b16 %v885
  %v5812 = vunpack.c.l.b16 %v886
  %v5813 = vunpack.c.l.b16 %v887
  %v5814 = vunpack.c.l.b16 %v888
  %v5815 = vunpack.c.l.b16 %v889
  %v5816 = vunpack.c.l.b16 %v890
  %v5817 = vunpack.c.l.b16 %v891
  %v5818 = vunpack.c.l.b16 %v892
  %v5819 = vunpack.c.l.b16 %v893
  %v5820 = vunpack.c.l.b16 %v894
  %v5821 = vunpack.c.l.b16 %v895
  %v5822 = vunpack.c.l.b16 %v896
  %v5823 = vunpack.c.l.b16 %v897
  %v5824 = vunpack.c.l.b16 %v898
  %v5825 = vunpack.c.l.b16 %v899
  %v5826 = vunpack.c.l.b16 %v900
  %v5827 = vunpack.c.l.b16 %v901
  %v5828 = vunpack.c.l.b16 %v902
  %v5829 = vunpack.c.l.b16 %v903
  %v5830 = vunpack.c.l.b16 %v904
  %v5831 = vunpack.c.l.b16 %v905
  %v5832 = vunpack.c.l.b16 %v906
  %v5833 = vunpack.c.l.b16 %v907
  %v5834 = vunpack.c.l.b16 %v908
  %v5835 = vunpack.c.l.b16 %v909
  %v5836 = vunpack.c.l.b16 %v910
  %v5837 = vunpack.c.l.b16 %v911
  %v5838 = vunpack.c.l.b16 %v912
  %v5839 = vunpack.c.l.b16 %v913
  %v5840 = vunpack.c.l.b16 %v914
  %v5841 = vunpack.c.l.b16 %v915
  %v5842 = vunpack.c.l.b16 %v916
  %v5843 = vunpack.c.l.b16 %v917
  %v5844 = vunpack.c.l.b16 %v918
  %v5845 = vunpack.c.l.b16 %v919
  %v5846 = vunpack.c.l.b16 %v920
  %v5847 = vunpack.c.l.b16 %v921
  %v5848 = vunpack.c.l.b16 %v922
  %v5849 = vunpack.c.l.b16 %v923
  %v5850 = vunpack.c.l.b16 %v924
  %v5851 = vunpack.c.l.b16 %v925
  %v5852 = vunpack.c.l.b16 %v926
  %v5853 = vunpack.c.l.b16 %v927
  %v5854 = vunpack.c.l.b16 %v928
  %v5855 = vunpack.c.l.b16 %v929
  %v5856 = vunpack.c.l.b16 %v930
  %v5857 = vunpack.c.l.b16 %v931
  %v5858 = vunpack.c.l.b16 %v932
  %v5859 = vunpack.c.l.b16 %v933
  %v5860 = vunpack.c.l.b16 %v934
  %v5861 = vunpack.c.l.b16 %v935
  %v5862 = vunpack.c.l.b16 %v936
  %v5863 = vunpack.c.l.b16 %v937
  %v5864 = vunpack.c.l.b16 %v938
  %v5865 = vunpack.c.l.b16 %v939
  %v5866 = vunpack.c.l.b16 %v940
  %v5867 = vunpack.c.l.b16 %v941
  %v5868 = vunpack.c.l.b16 %v942
  %v5869 = vunpack.c.l.b16 %v943
  %v5870 = vunpack.c.l.b16 %v944
  %v5871 = vunpack.c.l.b16 %v945
  %v5872 = vunpack.c.l.b16 %v946
  %v5873 = vunpack.c.l.b16 %v947
  %v5874 = vunpack.c.l.b16 %v948
  %v5875 = vunpack.c.l.b16 %v949
  %v5876 = vunpack.c.l.b16 %v950
  %v5877 = vunpack.c.l.b16 %v951
  %v5878 = vunpack.c.l.b16 %v952
  %v5879 = vunpack.c.l.b16 %v953
  %v5880 = vunpack.c.l.b16 %v954
  %v5881 = vunpack.c.l.b16 %v955
  %v5882 = vunpack.c.l.b16 %v956
  %v5883 = vunpack.c.l.b16 %v957
  %v5884 = vunpack.c.l.b16 %v958
  %v5885 = vunpack.c.l.b16 %v959
  %v5886 = vunpack.c.l.b16 %v960
  %v5887 = vunpack.c.l.b16 %v961
  %v5888 = vunpack.c.l.b16 %v962
  %v5889 = vunpack.c.l.b16 %v963
  %v5890 = vunpack.c.l.b16 %v964
  %v5891 = vunpack.c.l.b16 %v965
  %v5892 = vunpack.c.l.b16 %v966
  %v5893 = vunpack.c.l.b16 %v967
  %v5894 = vunpack.c.l.b16 %v968
  %v5895 = vunpack.c.l.b16 %v969
  %v5896 = vunpack.c.l.b16 %v970
  %v5897 = vunpack.c.l.b16 %v971
  %v5898 = vunpack.c.l.b16 %v972
  %v5899 = vunpack.c.l.b16 %v973
  %v5900 = vunpack.c.l.b16 %v974
  %v5901 = vunpack.c.l.b16 %v975
  %v5902 = vunpack.c.l.b16 %v976
  %v5903 = vunpack.c.l.b16 %v977
  %v5904 = vunpack.c.l.b16 %v978
  %v5905 = vunpack.c.l.b16 %v979
  %v5906 = vunpack.c.l.b16 %v980
  %v5907 = vunpack.c.l.b16 %v981
  %v5908 = vunpack.c.l.b16 %v982
  %v5909 = vunpack.c.l.b16 %v983
  %v5910 = vunpack.c.l.b16 %v984
  %v5911 = vunpack.c.l.b16 %v985
  %v5912 = vunpack.c.l.b16 %v986
  %v5913 = vunpack.c.l.b16 %v987
  %v5914 = vunpack.c.l.b16 %v988
  %v5915 = vunpack.c.l.b16 %v989
  %v5916 = vunpack.c.l.b16 %v990
  %v5917 = vunpack.c.l.b16 %v991
  %v5918 = vunpack.c.l.b16 %v992
  %v5919 = vunpack.c.l.b16 %v993
  %v5920 = vunpack.c.l.b16 %v994
  %v5921 = vunpack.c.l.b16 %v995
  %v5922 = vunpack.c.l.b16 %v996
  %v5923 = vunpack.c.l.b16 %v997
  %v5924 = vunpack.c.l.b16 %v998
  %v5925 = vunpack.c.l.b16 %v999
  %v5926 = vunpack.c.l.b16 %v1000
  %v5927 = vunpack.c.l.b16 %v1001
  %v5928 = vunpack.c.l.b16 %v1002
  %v5929 = vunpack.c.l.b16 %v1003
  %v5930 = vunpack.c.l.b16 %v1004
  %v5931 = vunpack.c.l.b16 %v1005
  %v5932 = vunpack.c.l.b16 %v1006
  %v5933 = vunpack.c.l.b16 %v1007
  %v5934 = vunpack.c.l.b16 %v1008
  %v5935 = vunpack.c.l.b16 %v1009
  %v5936 = vunpack.c.l.b16 %v1010
  %v5937 = vunpack.c.l.b16 %v1011
  %v5938 = vunpack.c.l.b16 %v1012
  %v5939 = vunpack.c.l.b16 %v1013
  %v5940 = vunpack.c.l.b16 %v1014
  %v5941 = vunpack.c.l.b16 %v1015
  %v5942 = vunpack.c.l.b16 %v1016
  %v5943 = vunpack.c.l.b16 %v1017
  %v5944 = vunpack.c.l.b16 %v1018
  %v5945 = vunpack.c.l.b16 %v1019
  %v5946 = vunpack.c.l.b16 %v1020
  %v5947 = vunpack.c.l.b16 %v1021
  %v5948 = vunpack.c.l.b16 %v1022
  %v5949 = vunpack.c.l.b16 %v1023
  %v5950 = vunpack.c.l.b16 %v1024
  %v5951 = vunpack.c.l.b16 %v1025
  %v5952 = vunpack.c.l.b16 %v1026
  %v5953 = vunpack.c.l.b16 %v1027
  %v5954 = vunpack.c.l.b16 %v1028
  %v5955 = vunpack.c.l.b16 %v1029
  %v5956 = vunpack.c.l.b16 %v1030
  %v5957 = vunpack.c.l.b16 %v1031
  %v5958 = vunpack.c.l.b16 %v1032
  %v5959 = vunpack.c.l.b16 %v1033
  %v5960 = vunpack.c.l.b16 %v1034
  %v5961 = vunpack.c.l.b16 %v1035
  %v5962 = vunpack.c.l.b16 %v1036
  %v5963 = vunpack.c.l.b16 %v1037
  %v5964 = vunpack.c.l.b16 %v1038
  %v5965 = vunpack.c.l.b16 %v1039
  %v5966 = vunpack.c.l.b16 %v1040
  %v5967 = vunpack.c.l.b16 %v1041
  %v5968 = vunpack.c.l.b16 %v1042
  %v5969 = vunpack.c.l.b16 %v1043
  %v5970 = vunpack.c.l.b16 %v1044
  %v5971 = vunpack.c.l.b16 %v1045
  %v5972 = vunpack.c.l.b16 %v1046
  %v5973 = vunpack.c.l.b16 %v1047
  %v5974 = vunpack.c.l.b16 %v1048
  %v5975 = vunpack.c.l.b16 %v1049
  %v5976 = vunpack.c.l.b16 %v1050
  %v5977 = vunpack.c.l.b16 %v1051
  %v5978 = vunpack.c.l.b16 %v1052
  %v5979 = vunpack.c.l.b16 %v1053
  %v5980 = vunpack.c.l.b16 %v1054
  %v5981 = vunpack.c.l.b16 %v1055
  %v5982 = vunpack.c.l.b16 %v1056
  %v5983 = vunpack.c.l.b16 %v1057
  %v5984 = vunpack.c.l.b16 %v1058
  %v5985 = vunpack.c.l.b16 %v1059
  %v5986 = vunpack.c.l.b16 %v1060
  %v5987 = vunpack.c.l.b16 %v1061
  %v5988 = vunpack.c.l.b16 %v1062
  %v5989 = vunpack.c.l.b16 %v1063
  %v5990 = vunpack.c.l.b16 %v1064
  %v5991 = vunpack.c.l.b16 %v1065
  %v5992 = vunpack.c.l.b16 %v1066
  %v5993 = vunpack.c.l.b16 %v1067
  %v5994 = vunpack.c.l.b16 %v1068
  %v5995 = vunpack.c.l.b16 %v1069
  %v5996 = vunpack.c.l.b16 %v1070
  %v5997 = vunpack.c.l.b16 %v1071
  %v5998 = vunpack.c.l.b16 %v1072
  %v5999 = vunpack.c.l.b16 %v1073
  %v6000 = vunpack.c.l.b16 %v1074
  %v6001 = vunpack.c.l.b16 %v1075
  %v6002 = vunpack.c.l.b16 %v1076
  %v6003 = vunpack.c.l.b16 %v1077
  %v6004 = vunpack.c.l.b16 %v1078
  %v6005 = vunpack.c.l.b16 %v1079
  %v6006 = vunpack.c.l.b16 %v1080
  %v6007 = vunpack.c.l.b16 %v1081
  %v6008 = vunpack.c.l.b16 %v1082
  %v6009 = vunpack.c.l.b16 %v1083
  %v6010 = vunpack.c.l.b16 %v1084
  %v6011 = vunpack.c.l.b16 %v1085
  %v6012 = vunpack.c.l.b16 %v1086
  %v6013 = vunpack.c.l.b16 %v1087
  %v6014 = vunpack.c.l.b16 %v1088
  %v6015 = vunpack.c.l.b16 %v1089
  %v6016 = vunpack.c.l.b16 %v1090
  %v6017 = vunpack.c.l.b16 %v1091
  %v6018 = vunpack.c.l.b16 %v1092
  %v6019 = vunpack.c.l.b16 %v1093
  %v6020 = vunpack.c.l.b16 %v1094
  %v6021 = vunpack.c.l.b16 %v1095
  %v6022 = vunpack.c.l.b16 %v1096
  %v6023 = vunpack.c.l.b16 %v1097
  %v6024 = vunpack.c.l.b16 %v1098
  %v6025 = vunpack.c.l.b16 %v1099
  %v6026 = vunpack.c.l.b16 %v1100
  %v6027 = vunpack.c.l.b16 %v1101
  %v6028 = vunpack.c.l.b16 %v1102
  %v6029 = vunpack.c.l.b16 %v1103
  %v6030 = vunpack.c.l.b16 %v1104
  %v6031 = vunpack.c.l.b16 %v1105
  %v6032 = vunpack.c.l.b16 %v1106
  %v6033 = vunpack.c.l.b16 %v1107
  %v6034 = vunpack.c.l.b16 %v1108
  %v6035 = vunpack.c.l.b16 %v1109
  %v6036 = vunpack.c.l.b16 %v1110
  %v6037 = vunpack.c.l.b16 %v1111
  %v6038 = vunpack.c.l.b16 %v1112
  %v6039 = vunpack.c.l.b16 %v1113
  %v6040 = vunpack.c.l.b16 %v1114
  %v6041 = vunpack.c.l.b16 %v1115
  %v6042 = vunpack.c.l.b16 %v1116
  %v6043 = vunpack.c.l.b16 %v1117
  %v6044 = vunpack.c.l.b16 %v1118
  %v6045 = vunpack.c.l.b16 %v1119
  %v6046 = vunpack.c.l.b16 %v1120
  %v6047 = vunpack.c.l.b16 %v1121
  %v6048 = vunpack.c.l.b16 %v1122
  %v6049 = vunpack.c.l.b16 %v1123
  %v6050 = vunpack.c.l.b16 %v1124
  %v6051 = vunpack.c.l.b16 %v1125
  %v6052 = vunpack.c.l.b16 %v1126
  %v6053 = vunpack.c.l.b16 %v1127
  %v6054 = vunpack.c.l.b16 %v1128
  %v6055 = vunpack.c.l.b16 %v1129
  %v6056 = vunpack.c.l.b16 %v1130
  %v6057 = vunpack.c.l.b16 %v1131
  %v6058 = vunpack.c.l.b16 %v1132
  %v6059 = vunpack.c.l.b16 %v1133
  %v6060 = vunpack.c.l.b16 %v1134
  %v6061 = vunpack.c.l.b16 %v1135
  %v6062 = vunpack.c.l.b16 %v1136
  %v6063 = vunpack.c.l.b16 %v1137
  %v6064 = vunpack.c.l.b16 %v1138
  %v6065 = vunpack.c.l.b16 %v1139
  %v6066 = vunpack.c.l.b16 %v1140
  %v6067 = vunpack.c.l.b16 %v1141
  %v6068 = vunpack.c.l.b16 %v1142
  %v6069 = vunpack.c.l.b16 %v1143
  %v6070 = vunpack.c.l.b16 %v1144
  %v6071 = vunpack.c.l.b16 %v1145
  %v6072 = vunpack.c.l.b16 %v1146
  %v6073 = vunpack.c.l.b16 %v1147
  %v6074 = vunpack.c.l.b16 %v1148
  %v6075 = vunpack.c.l.b16 %v1149
  %v6076 = vunpack.c.l.b16 %v1150
  %v6077 = vunpack.c.l.b16 %v1151
  %v6078 = vunpack.c.l.b16 %v1152
  %v6079 = vunpack.c.l.b16 %v1153
  %v6080 = vunpack.c.l.b16 %v1154
  %v6081 = vunpack.c.l.b16 %v1155
  %v6082 = vunpack.c.l.b16 %v1156
  %v6083 = vunpack.c.l.b16 %v1157
  %v6084 = vunpack.c.l.b16 %v1158
  %v6085 = vunpack.c.l.b16 %v1159
  %v6086 = vunpack.c.l.b16 %v1160
  %v6087 = vunpack.c.l.b16 %v1161
  %v6088 = vunpack.c.l.b16 %v1162
  %v6089 = vunpack.c.l.b16 %v1163
  %v6090 = vunpack.c.l.b16 %v1164
  %v6091 = vunpack.c.l.b16 %v1165
  %v6092 = vunpack.c.l.b16 %v1166
  %v6093 = vunpack.c.l.b16 %v1167
  %v6094 = vunpack.c.l.b16 %v1168
  %v6095 = vunpack.c.l.b16 %v1169
  %v6096 = vunpack.c.l.b16 %v1170
  %v6097 = vunpack.c.l.b16 %v1171
  %v6098 = vunpack.c.l.b16 %v1172
  %v6099 = vunpack.c.l.b16 %v1173
  %v6100 = vunpack.c.l.b16 %v1174
  %v6101 = vunpack.c.l.b16 %v1175
  %v6102 = vunpack.c.l.b16 %v1176
  %v6103 = vunpack.c.l.b16 %v1177
  %v6104 = vunpack.c.l.b16 %v1178
  %v6105 = vunpack.c.l.b16 %v1179
  %v6106 = vunpack.c.l.b16 %v1180
  %v6107 = vunpack.c.l.b16 %v1181
  %v6108 = vunpack.c.l.b16 %v1182
  %v6109 = vunpack.c.l.b16 %v1183
  %v6110 = vunpack.c.l.b16 %v1184
  %v6111 = vunpack.c.l.b16 %v1185
  %v6112 = vunpack.c.l.b16 %v1186
  %v6113 = vunpack.c.l.b16 %v1187
  %v6114 = vunpack.c.l.b16 %v1188
  %v6115 = vunpack.c.l.b16 %v1189
  %v6116 = vunpack.c.l.b16 %v1190
  %v6117 = vunpack.c.l.b16 %v1191
  %v6118 = vunpack.c.l.b16 %v1192
  %v6119 = vunpack.c.l.b16 %v1193
  %v6120 = vunpack.c.l.b16 %v1194
  %v6121 = vunpack.c.l.b16 %v1195
  %v6122 = vunpack.c.l.b16 %v1196
  %v6123 = vunpack.c.l.b16 %v1197
  %v6124 = vunpack.c.l.b16 %v1198
  %v6125 = vunpack.c.l.b16 %v1199
  %v6126 = vunpack.c.l.b16 %v1200
  %v6127 = vunpack.c.l.b16 %v1201
  %v6128 = vunpack.c.l.b16 %v1202
  %v6129 = vunpack.c.l.b16 %v1203
  %v6130 = vunpack.c.l.b16 %v1204
  %v6131 = vunpack.c.l.b16 %v1205
  %v6132 = vunpack.c.l.b16 %v1206
  %v6133 = vunpack.c.l.b16 %v1207
  %v6134 = vunpack.c.l.b16 %v1208
  %v6135 = vunpack.c.l.b16 %v1209
  %v6136 = vunpack.c.l.b16 %v1210
  %v6137 = vunpack.c.l.b16 %v1211
  %v6138 = vunpack.c.l.b16 %v1212
  %v6139 = vunpack.c.l.b16 %v1213
  %v6140 = vunpack.c.l.b16 %v1214
  %v6141 = vunpack.c.l.b16 %v1215
  %v6142 = vunpack.c.l.b16 %v1216
  %v6143 = vunpack.c.l.b16 %v1217
  %v6144 = vunpack.c.l.b16 %v1218
  %v6145 = vunpack.c.l.b16 %v1219
  %v6146 = vunpack.c.l.b16 %v1220
  %v6147 = vunpack.c.l.b16 %v1221
  %v6148 = vunpack.c.l.b16 %v1222
  %v6149 = vunpack.c.l.b16 %v1223
  %v6150 = vunpack.c.l.b16 %v1224
  %v6151 = vunpack.c.l.b16 %v1225
  %v6152 = vunpack.c.l.b16 %v1226
  %v6153 = vunpack.c.l.b16 %v1227
  %v6154 = vunpack.c.l.b16 %v1228
  %v6155 = vunpack.c.l.b16 %v1229
  %v6156 = vunpack.c.l.b16 %v1230
  %v6157 = vunpack.c.l.b16 %v1231
  %v6158 = vunpack.c.l.b16 %v1232
  %v6159 = vunpack.c.l.b16 %v1233
  %v6160 = vunpack.c.l.b16 %v1234
  %v6161 = vunpack.c.l.b16 %v1235
  %v6162 = vunpack.c.l.b16 %v1236
  %v6163 = vunpack.c.l.b16 %v1237
  %v6164 = vunpack.c.l.b16 %v1238
  %v6165 = vunpack.c.l.b16 %v1239
  %v6166 = vunpack.c.l.b16 %v1240
  %v6167 = vunpack.c.l.b16 %v1241
  %v6168 = vunpack.c.l.b16 %v1242
  %v6169 = vunpack.c.l.b16 %v1243
  %v6170 = vunpack.c.l.b16 %v1244
  %v6171 = vunpack.c.l.b16 %v1245
  %v6172 = vunpack.c.l.b16 %v1246
  %v6173 = vunpack.c.l.b16 %v1247
  %v6174 = vunpack.c.l.b16 %v1248
  %v6175 = vunpack.c.l.b16 %v1249
  %v6176 = vunpack.c.l.b16 %v1250
  %v6177 = vunpack.c.l.b16 %v1251
  %v6178 = vunpack.c.l.b16 %v1252
  %v6179 = vunpack.c.l.b16 %v1253
  %v6180 = vunpack.c.l.b16 %v1254
  %v6181 = vunpack.c.l.b16 %v1255
  %v6182 = vunpack.c.l.b16 %v1256
  %v6183 = vunpack.c.l.b16 %v1257
  %v6184 = vunpack.c.l.b16 %v1258
  %v6185 = vunpack.c.l.b16 %v1259
  %v6186 = vunpack.c.l.b16 %v1260
  %v6187 = vunpack.c.l.b16 %v1261
  %v6188 = vunpack.c.l.b16 %v1262
  %v6189 = vunpack.c.l.b16 %v1263
  %v6190 = vunpack.c.l.b16 %v1264
  %v6191 = vunpack.c.l.b16 %v1265
  %v6192 = vunpack.c.l.b16 %v1266
  %v6193 = vunpack.c.l.b16 %v1267
  %v6194 = vunpack.c.l.b16 %v1268
  %v6195 = vunpack.c.l.b16 %v1269
  %v6196 = vunpack.c.l.b16 %v1270
  %v6197 = vunpack.c.l.b16 %v1271
  %v6198 = vunpack.c.l.b16 %v1272
  %v6199 = vunpack.c.l.b16 %v1273
  %v6200 = vunpack.c.l.b16 %v1274
  %v6201 = vunpack.c.l.b16 %v1275
  %v6202 = vunpack.c.l.b16 %v1276
  %v6203 = vunpack.c.l.b16 %v1277
  %v6204 = vunpack.c.l.b16 %v1278
  %v6205 = vunpack.c.l.b16 %v1279
  %v6206 = vunpack.c.l.b16 %v1280
  %v6207 = vunpack.c.l.b16 %v1281
  %v6208 = vunpack.c.l.b16 %v1282
  %v6209 = vunpack.c.l.b16 %v1283
  %v6210 = vunpack.c.l.b16 %v1284
  %v6211 = vunpack.c.l.b16 %v1285
  %v6212 = vunpack.c.l.b16 %v1286
  %v6213 = vunpack.c.l.b16 %v1287
  %v6214 = vunpack.c.l.b16 %v1288
  %v6215 = vunpack.c.l.b16 %v1289
  %v6216 = vunpack.c.l.b16 %v1290
  %v6217 = vunpack.c.l.b16 %v1291
  %v6218 = vunpack.c.l.b16 %v1292
  %v6219 = vunpack.c.l.b16 %v1293
  %v6220 = vunpack.c.l.b16 %v1294
  %v6221 = vunpack.c.l.b16 %v1295
  %v6222 = vunpack.c.l.b16 %v1296
  %v6223 = vunpack.c.l.b16 %v1297
  %v6224 = vunpack.c.l.b16 %v1298
  %v6225 = vunpack.c.l.b16 %v1299
  %v6226 = vunpack.c.l.b16 %v1300
  %v6227 = vunpack.c.l.b16 %v1301
  %v6228 = vunpack.c.l.b16 %v1302
  %v6229 = vunpack.c.l.b16 %v1303
  %v6230 = vunpack.c.l.b16 %v1304
  %v6231 = vunpack.c.l.b16 %v1305
  %v6232 = vunpack.c.l.b16 %v1306
  %v6233 = vunpack.c.l.b16 %v1307
  %v6234 = vunpack.c.l.b16 %v1308
  %v6235 = vunpack.c.l.b16 %v1309
  %v6236 = vunpack.c.l.b16 %v1310
  %v6237 = vunpack.c.l.b16 %v1311
  %v6238 = vunpack.c.l.b16 %v1312
  %v6239 = vunpack.c.l.b16 %v1313
  %v6240 = vunpack.c.l.b16 %v1314
  %v6241 = vunpack.c.l.b16 %v1315
  %v6242 = vunpack.c.l.b16 %v1316
  %v6243 = vunpack.c.l.b16 %v1317
  %v6244 = vunpack.c.l.b16 %v1318
  %v6245 = vunpack.c.l.b16 %v1319
  %v6246 = vunpack.c.l.b16 %v1320
  %v6247 = vunpack.c.l.b16 %v1321
  %v6248 = vunpack.c.l.b16 %v1322
  %v6249 = vunpack.c.l.b16 %v1323
  %v6250 = vunpack.c.l.b16 %v1324
  %v6251 = vunpack.c.l.b16 %v1325
  %v6252 = vunpack.c.l.b16 %v1326
  %v6253 = vunpack.c.l.b16 %v1327
  %v6254 = vunpack.c.l.b16 %v1328
  %v6255 = vunpack.c.l.b16 %v1329
  %v6256 = vunpack.c.l.b16 %v1330
  %v6257 = vunpack.c.l.b16 %v1331
  %v6258 = vunpack.c.l.b16 %v1332
  %v6259 = vunpack.c.l.b16 %v1333
  %v6260 = vunpack.c.l.b16 %v1334
  %v6261 = vunpack.c.l.b16 %v1335
  %v6262 = vunpack.c.l.b16 %v1336
  %v6263 = vunpack.c.l.b16 %v1337
  %v6264 = vunpack.c.l.b16 %v1338
  %v6265 = vunpack.c.l.b16 %v1339
  %v6266 = vunpack.c.l.b16 %v1340
  %v6267 = vunpack.c.l.b16 %v1341
  %v6268 = vunpack.c.l.b16 %v1342
  %v6269 = vunpack.c.l.b16 %v1343
  %v6270 = vunpack.c.l.b16 %v1344
  %v6271 = vunpack.c.l.b16 %v1345
  %v6272 = vunpack.c.l.b16 %v1346
  %v6273 = vunpack.c.l.b16 %v1347
  %v6274 = vunpack.c.l.b16 %v1348
  %v6275 = vunpack.c.l.b16 %v1349
  %v6276 = vunpack.c.l.b16 %v1350
  %v6277 = vunpack.c.l.b16 %v1351
  %v6278 = vunpack.c.l.b16 %v1352
  %v6279 = vunpack.c.l.b16 %v1353
  %v6280 = vunpack.c.l.b16 %v1354
  %v6281 = vunpack.c.l.b16 %v1355
  %v6282 = vunpack.c.l.b16 %v1356
  %v6283 = vunpack.c.l.b16 %v1357
  %v6284 = vunpack.c.l.b16 %v1358
  %v6285 = vunpack.c.l.b16 %v1359
  %v6286 = vunpack.c.l.b16 %v1360
  %v6287 = vunpack.c.l.b16 %v1361
  %v6288 = vunpack.c.l.b16 %v1362
  %v6289 = vunpack.c.l.b16 %v1363
  %v6290 = vunpack.c.l.b16 %v1364
  %v6291 = vunpack.c.l.b16 %v1365
  %v6292 = vunpack.c.l.b16 %v1366
  %v6293 = vunpack.c.l.b16 %v1367
  %v6294 = vunpack.c.l.b16 %v1368
  %v6295 = vunpack.c.l.b16 %v1369
  %v6296 = vunpack.c.l.b16 %v1370
  %v6297 = vunpack.c.l.b16 %v1371
  %v6298 = vunpack.c.l.b16 %v1372
  %v6299 = vunpack.c.l.b16 %v1373
  %v6300 = vunpack.c.l.b16 %v1374
  %v6301 = vunpack.c.l.b16 %v1375
  %v6302 = vunpack.c.l.b16 %v1376
  %v6303 = vunpack.c.l.b16 %v1377
  %v6304 = vunpack.c.l.b16 %v1378
  %v6305 = vunpack.c.l.b16 %v1379
  %v6306 = vunpack.c.l.b16 %v1380
  %v6307 = vunpack.c.l.b16 %v1381
  %v6308 = vunpack.c.l.b16 %v1382
  %v6309 = vunpack.c.l.b16 %v1383
  %v6310 = vunpack.c.l.b16 %v1384
  %v6311 = vunpack.c.l.b16 %v1385
  %v6312 = vunpack.c.l.b16 %v1386
  %v6313 = vunpack.c.l.b16 %v1387
  %v6314 = vunpack.c.l.b16 %v1388
  %v6315 = vunpack.c.l.b16 %v1389
  %v6316 = vunpack.c.l.b16 %v1390
  %v6317 = vunpack.c.l.b16 %v1391
  %v6318 = vunpack.c.l.b16 %v1392
  %v6319 = vunpack.c.l.b16 %v1393
  %v6320 = vunpack.c.l.b16 %v1394
  %v6321 = vunpack.c.l.b16 %v1395
  %v6322 = vunpack.c.l.b16 %v1396
  %v6323 = vunpack.c.l.b16 %v1397
  %v6324 = vunpack.c.l.b16 %v1398
  %v6325 = vunpack.c.l.b16 %v1399
  %v6326 = vunpack.c.l.b16 %v1400
  %v6327 = vunpack.c.l.b16 %v1401
  %v6328 = vunpack.c.l.b16 %v1402
  %v6329 = vunpack.c.l.b16 %v1403
  %v6330 = vunpack.c.l.b16 %v1404
  %v6331 = vunpack.c.l.b16 %v1405
  %v6332 = vunpack.c.l.b16 %v1406
  %v6333 = vunpack.c.l.b16 %v1407
  %v6334 = vunpack.c.l.b16 %v1408
  %v6335 = vunpack.c.l.b16 %v1409
  %v6336 = vunpack.c.l.b16 %v1410
  %v6337 = vunpack.c.l.b16 %v1411
  %v6338 = vunpack.c.l.b16 %v1412
  %v6339 = vunpack.c.l.b16 %v1413
  %v6340 = vunpack.c.l.b16 %v1414
  %v6341 = vunpack.c.l.b16 %v1415
  %v6342 = vunpack.c.l.b16 %v1416
  %v6343 = vunpack.c.l.b16 %v1417
  %v6344 = vunpack.c.l.b16 %v1418
  %v6345 = vunpack.c.l.b16 %v1419
  %v6346 = vunpack.c.l.b16 %v1420
  %v6347 = vunpack.c.l.b16 %v1421
  %v6348 = vunpack.c.l.b16 %v1422
  %v6349 = vunpack.c.l.b16 %v1423
  %v6350 = vunpack.c.l.b16 %v1424
  %v6351 = vunpack.c.l.b16 %v1425
  %v6352 = vunpack.c.l.b16 %v1426
  %v6353 = vunpack.c.l.b16 %v1427
  %v6354 = vunpack.c.l.b16 %v1428
  %v6355 = vunpack.c.l.b16 %v1429
  %v6356 = vunpack.c.l.b16 %v1430
  %v6357 = vunpack.c.l.b16 %v1431
  %v6358 = vunpack.c.l.b16 %v1432
  %v6359 = vunpack.c.l.b16 %v1433
  %v6360 = vunpack.c.l.b16 %v1434
  %v6361 = vunpack.c.l.b16 %v1435
  %v6362 = vunpack.c.l.b16 %v1436
  %v6363 = vunpack.c.l.b16 %v1437
  %v6364 = vunpack.c.l.b16 %v1438
  %v6365 = vunpack.c.l.b16 %v1439
  %v6366 = vunpack.c.l.b16 %v1440
  %v6367 = vunpack.c.l.b16 %v1441
  %v6368 = vunpack.c.l.b16 %v1442
  %v6369 = vunpack.c.l.b16 %v1443
  %v6370 = vunpack.c.l.b16 %v1444
  %v6371 = vunpack.c.l.b16 %v1445
  %v6372 = vunpack.c.l.b16 %v1446
  %v6373 = vunpack.c.l.b16 %v1447
  %v6374 = vunpack.c.l.b16 %v1448
  %v6375 = vunpack.c.l.b16 %v1449
  %v6376 = vunpack.c.l.b16 %v1450
  %v6377 = vunpack.c.l.b16 %v1451
  %v6378 = vunpack.c.l.b16 %v1452
  %v6379 = vunpack.c.l.b16 %v1453
  %v6380 = vunpack.c.l.b16 %v1454
  %v6381 = vunpack.c.l.b16 %v1455
  %v6382 = vunpack.c.l.b16 %v1456
  %v6383 = vunpack.c.l.b16 %v1457
  %v6384 = vunpack.c.l.b16 %v1458
  %v6385 = vunpack.c.l.b16 %v1459
  %v6386 = vunpack.c.l.b16 %v1460
  %v6387 = vunpack.c.l.b16 %v1461
  %v6388 = vunpack.c.l.b16 %v1462
  %v6389 = vunpack.c.l.b16 %v1463
  %v6390 = vunpack.c.l.b16 %v1464
  %v6391 = vunpack.c.l.b16 %v1465
  %v6392 = vunpack.c.l.b16 %v1466
  %v6393 = vunpack.c.l.b16 %v1467
  %v6394 = vunpack.c.l.b16 %v1468
  %v6395 = vunpack.c.l.b16 %v1469
  %v6396 = vunpack.c.l.b16 %v1470
  %v6397 = vunpack.c.l.b16 %v1471
  %v6398 = vunpack.c.l.b16 %v1472
  %v6399 = vunpack.c.l.b16 %v1473
  %v6400 = vunpack.c.l.b16 %v1474
  %v6401 = vunpack.c.l.b16 %v1475
  %v6402 = vunpack.c.l.b16 %v1476
  %v6403 = vunpack.c.l.b16 %v1477
  %v6404 = vunpack.c.l.b16 %v1478
  %v6405 = vunpack.c.l.b16 %v1479
  %v6406 = vunpack.c.l.b16 %v1480
  %v6407 = vunpack.c.l.b16 %v1481
  %v6408 = vunpack.c.l.b16 %v1482
  %v6409 = vunpack.c.l.b16 %v1483
  %v6410 = vunpack.c.l.b16 %v1484
  %v6411 = vunpack.c.l.b16 %v1485
  %v6412 = vunpack.c.l.b16 %v1486
  %v6413 = vunpack.c.l.b16 %v1487
  %v6414 = vunpack.c.l.b16 %v1488
  %v6415 = vunpack.c.l.b16 %v1489
  %v6416 = vunpack.c.l.b16 %v1490
  %v6417 = vunpack.c.l.b16 %v1491
  %v6418 = vunpack.c.l.b16 %v1492
  %v6419 = vunpack.c.l.b16 %v1493
  %v6420 = vunpack.c.l.b16 %v1494
  %v6421 = vunpack.c.l.b16 %v1495
  %v6422 = vunpack.c.l.b16 %v1496
  %v6423 = vunpack.c.l.b16 %v1497
  %v6424 = vunpack.c.l.b16 %v1498
  %v6425 = vunpack.c.l.b16 %v1499
  %v6426 = vunpack.c.l.b16 %v1500
  %v6427 = vunpack.c.l.b16 %v1501
  %v6428 = vunpack.c.l.b16 %v1502
  %v6429 = vunpack.c.l.b16 %v1503
  %v6430 = vunpack.c.l.b16 %v1504
  %v6431 = vunpack.c.l.b16 %v1505
  %v6432 = vunpack.c.l.b16 %v1506
  %v6433 = vunpack.c.l.b16 %v1507
  %v6434 = vunpack.c.l.b16 %v1508
  %v6435 = vunpack.c.l.b16 %v1509
  %v6436 = vunpack.c.l.b16 %v1510
  %v6437 = vunpack.c.l.b16 %v1511
  %v6438 = vunpack.c.l.b16 %v1512
  %v6439 = vunpack.c.l.b16 %v1513
  %v6440 = vunpack.c.l.b16 %v1514
  %v6441 = vunpack.c.l.b16 %v1515
  %v6442 = vunpack.c.l.b16 %v1516
  %v6443 = vunpack.c.l.b16 %v1517
  %v6444 = vunpack.c.l.b16 %v1518
  %v6445 = vunpack.c.l.b16 %v1519
  %v6446 = vunpack.c.l.b16 %v1520
  %v6447 = vunpack.c.l.b16 %v1521
  %v6448 = vunpack.c.l.b16 %v1522
  %v6449 = vunpack.c.l.b16 %v1523
  %v6450 = vunpack.c.l.b16 %v1524
  %v6451 = vunpack.c.l.b16 %v1525
  %v6452 = vunpack.c.l.b16 %v1526
  %v6453 = vunpack.c.l.b16 %v1527
  %v6454 = vunpack.c.l.b16 %v1528
  %v6455 = vunpack.c.l.b16 %v1529
  %v6456 = vunpack.c.l.b16 %v1530
  %v6457 = vunpack.c.l.b16 %v1531
  %v6458 = vunpack.c.l.b16 %v1532
  %v6459 = vunpack.c.l.b16 %v1533
  %v6460 = vunpack.c.l.b16 %v1534
  %v6461 = vunpack.c.l.b16 %v1535
  %v6462 = vunpack.c.l.b16 %v1536
  %v6463 = vunpack.c.l.b16 %v1537
  %v6464 = vunpack.c.l.b16 %v1538
  %v6465 = vunpack.c.l.b16 %v1539
  %v6466 = vunpack.c.l.b16 %v1540
  %v6467 = vunpack.c.l.b16 %v1541
  %v6468 = vunpack.c.l.b16 %v1542
  %v6469 = vunpack.c.l.b16 %v1543
  %v6470 = vunpack.c.l.b16 %v1544
  %v6471 = vunpack.c.l.b16 %v1545
  %v6472 = vunpack.c.l.b16 %v1546
  %v6473 = vunpack.c.l.b16 %v1547
  %v6474 = vunpack.c.l.b16 %v1548
  %v6475 = vunpack.c.l.b16 %v1549
  %v6476 = vunpack.c.l.b16 %v1550
  %v6477 = vunpack.c.l.b16 %v1551
  %v6478 = vunpack.c.l.b16 %v1552
  %v6479 = vunpack.c.l.b16 %v1553
  %v6480 = vunpack.c.l.b16 %v1554
  %v6481 = vunpack.c.l.b16 %v1555
  %v6482 = vunpack.c.l.b16 %v1556
  %v6483 = vunpack.c.l.b16 %v1557
  %v6484 = vunpack.c.l.b16 %v1558
  %v6485 = vunpack.c.l.b16 %v1559
  %v6486 = vunpack.c.l.b16 %v1560
  %v6487 = vunpack.c.l.b16 %v1561
  %v6488 = vunpack.c.l.b16 %v1562
  %v6489 = vunpack.c.l.b16 %v1563
  %v6490 = vunpack.c.l.b16 %v1564
  %v6491 = vunpack.c.l.b16 %v1565
  %v6492 = vunpack.c.l.b16 %v1566
  %v6493 = vunpack.c.l.b16 %v1567
  %v6494 = vunpack.c.l.b16 %v1568
  %v6495 = vunpack.c.l.b16 %v1569
  %v6496 = vunpack.c.l.b16 %v1570
  %v6497 = vunpack.c.l.b16 %v1571
  %v6498 = vunpack.c.l.b16 %v1572
  %v6499 = vunpack.c.l.b16 %v1573
  %v6500 = vunpack.c.l.b16 %v1574
  %v6501 = vunpack.c.l.b16 %v1575
  %v6502 = vunpack.c.l.b16 %v1576
  %v6503 = vunpack.c.l.b16 %v1577
  %v6504 = vunpack.c.l.b16 %v1578
  %v6505 = vunpack.c.l.b16 %v1579
  %v6506 = vunpack.c.l.b16 %v1580
  %v6507 = vunpack.c.l.b16 %v1581
  %v6508 = vunpack.c.l.b16 %v1582
  %v6509 = vunpack.c.l.b16 %v1583
  %v6510 = vunpack.c.l.b16 %v1584
  %v6511 = vunpack.c.l.b16 %v1585
  %v6512 = vunpack.c.l.b16 %v1586
  %v6513 = vunpack.c.l.b16 %v1587
  %v6514 = vunpack.c.l.b16 %v1588
  %v6515 = vunpack.c.l.b16 %v1589
  %v6516 = vunpack.c.l.b16 %v1590
  %v6517 = vunpack.c.l.b16 %v1591
  %v6518 = vunpack.c.l.b16 %v1592
  %v6519 = vunpack.c.l.b16 %v1593
  %v6520 = vunpack.c.l.b16 %v1594
  %v6521 = vunpack.c.l.b16 %v1595
  %v6522 = vunpack.c.l.b16 %v1596
  %v6523 = vunpack.c.l.b16 %v1597
  %v6524 = vunpack.c.l.b16 %v1598
  %v6525 = vunpack.c.l.b16 %v1599
  %v6526 = vunpack.c.l.b16 %v1600
  %v6527 = vunpack.c.l.b16 %v1601
  %v6528 = vunpack.c.l.b16 %v1602
  %v6529 = vunpack.c.l.b16 %v1603
  %v6530 = vunpack.c.l.b16 %v1604
  %v6531 = vunpack.c.l.b16 %v1605
  %v6532 = vunpack.c.l.b16 %v1606
  %v6533 = vunpack.c.l.b16 %v1607
  %v6534 = vunpack.c.l.b16 %v1608
  %v6535 = vunpack.c.l.b16 %v1609
  %v6536 = vunpack.c.l.b16 %v1610
  %v6537 = vunpack.c.l.b16 %v1611
  %v6538 = vunpack.c.l.b16 %v1612
  %v6539 = vunpack.c.l.b16 %v1613
  %v6540 = vunpack.c.l.b16 %v1614
  %v6541 = vunpack.c.l.b16 %v1615
  %v6542 = vunpack.c.l.b16 %v1616
  %v6543 = vunpack.c.l.b16 %v1617
  %v6544 = vunpack.c.l.b16 %v1618
  %v6545 = vunpack.c.l.b16 %v1619
  %v6546 = vunpack.c.l.b16 %v1620
  %v6547 = vunpack.c.l.b16 %v1621
  %v6548 = vunpack.c.l.b16 %v1622
  %v6549 = vunpack.c.l.b16 %v1623
  %v6550 = vunpack.c.l.b16 %v1624
  %v6551 = vunpack.c.l.b16 %v1625
  %v6552 = vunpack.c.l.b16 %v1626
  %v6553 = vunpack.c.l.b16 %v1627
  %v6554 = vunpack.c.l.b16 %v1628
  %v6555 = vunpack.c.l.b16 %v1629
  %v6556 = vunpack.c.l.b16 %v1630
  %v6557 = vunpack.c.l.b16 %v1631
  %v6558 = vunpack.c.l.b16 %v1632
  %v6559 = vunpack.c.l.b16 %v1633
  %v6560 = vunpack.c.l.b16 %v1634
  %v6561 = vunpack.c.l.b16 %v1635
  %v6562 = vunpack.c.l.b16 %v1636
  %v6563 = vunpack.c.l.b16 %v1637
  %v6564 = vunpack.c.l.b16 %v1638
  %v6565 = vunpack.c.l.b16 %v1639
  %v6566 = vunpack.c.l.b16 %v1640
  %v6567 = vunpack.c.l.b16 %v1641
  %v6568 = vunpack.c.l.b16 %v1642
  %v6569 = vunpack.c.l.b16 %v1643
  %v6570 = vunpack.c.l.b16 %v1644
  %v6571 = vunpack.c.l.b16 %v1645
  %v6572 = vunpack.c.l.b16 %v1646
  %v6573 = vunpack.c.l.b16 %v1647
  %v6574 = vunpack.c.l.b16 %v1648
  %v6575 = vunpack.c.l.b16 %v1649
  %v6576 = vunpack.c.l.b16 %v1650
  %v6577 = vunpack.c.l.b16 %v1651
  %v6578 = vunpack.c.l.b16 %v1652
  %v6579 = vunpack.c.l.b16 %v1653
  %v6580 = vunpack.c.l.b16 %v1654
  %v6581 = vunpack.c.l.b16 %v1655
  %v6582 = vunpack.c.l.b16 %v1656
  %v6583 = vunpack.c.l.b16 %v1657
  %v6584 = vunpack.c.l.b16 %v1658
  %v6585 = vunpack.c.l.b16 %v1659
  %v6586 = vunpack.c.l.b16 %v1660
  %v6587 = vunpack.c.l.b16 %v1661
  %v6588 = vunpack.c.l.b16 %v1662
  %v6589 = vunpack.c.l.b16 %v1663
  %v6590 = vunpack.c.l.b16 %v1664
  %v6591 = vunpack.c.l.b16 %v1665
  %v6592 = vunpack.c.l.b16 %v1666
  %v6593 = vunpack.c.l.b16 %v1667
  %v6594 = vunpack.c.l.b16 %v1668
  %v6595 = vunpack.c.l.b16 %v1669
  %v6596 = vunpack.c.l.b16 %v1670
  %v6597 = vunpack.c.l.b16 %v1671
  %v6598 = vunpack.c.l.b16 %v1672
  %v6599 = vunpack.c.l.b16 %v1673
  %v6600 = vunpack.c.l.b16 %v1674
  %v6601 = vunpack.c.l.b16 %v1675
  %v6602 = vunpack.c.l.b16 %v1676
  %v6603 = vunpack.c.l.b16 %v1677
  %v6604 = vunpack.c.l.b16 %v1678
  %v6605 = vunpack.c.l.b16 %v1679
  %v6606 = vunpack.c.l.b16 %v1680
  %v6607 = vunpack.c.l.b16 %v1681
  %v6608 = vunpack.c.l.b16 %v1682
  %v6609 = vunpack.c.l.b16 %v1683
  %v6610 = vunpack.c.l.b16 %v1684
  %v6611 = vunpack.c.l.b16 %v1685
  %v6612 = vunpack.c.l.b16 %v1686
  %v6613 = vunpack.c.l.b16 %v1687
  %v6614 = vunpack.c.l.b16 %v1688
  %v6615 = vunpack.c.l.b16 %v1689
  %v6616 = vunpack.c.l.b16 %v1690
  %v6617 = vunpack.c.l.b16 %v1691
  %v6618 = vunpack.c.l.b16 %v1692
  %v6619 = vunpack.c.l.b16 %v1693
  %v6620 = vunpack.c.l.b16 %v1694
  %v6621 = vunpack.c.l.b16 %v1695
  %v6622 = vunpack.c.l.b16 %v1696
  %v6623 = vunpack.c.l.b16 %v1697
  %v6624 = vunpack.c.l.b16 %v1698
  %v6625 = vunpack.c.l.b16 %v1699
  %v6626 = vunpack.c.l.b16 %v1700
  %v6627 = vunpack.c.l.b16 %v1701
  %v6628 = vunpack.c.l.b16 %v1702
  %v6629 = vunpack.c.l.b16 %v1703
  %v6630 = vunpack.c.l.b16 %v1704
  %v6631 = vunpack.c.l.b16 %v1705
  %v6632 = vunpack.c.l.b16 %v1706
  %v6633 = vunpack.c.l.b16 %v1707
  %v6634 = vunpack.c.l.b16 %v1708
  %v6635 = vunpack.c.l.b16 %v1709
  %v6636 = vunpack.c.l.b16 %v1710
  %v6637 = vunpack.c.l.b16 %v1711
  %v6638 = vunpack.c.l.b16 %v1712
  %v6639 = vunpack.c.l.b16 %v1713
  %v6640 = vunpack.c.l.b16 %v1714
  %v6641 = vunpack.c.l.b16 %v1715
  %v6642 = vunpack.c.l.b16 %v1716
  %v6643 = vunpack.c.l.b16 %v1717
  %v6644 = vunpack.c.l.b16 %v1718
  %v6645 = vunpack.c.l.b16 %v1719
  %v6646 = vunpack.c.l.b16 %v1720
  %v6647 = vunpack.c.l.b16 %v1721
  %v6648 = vunpack.c.l.b16 %v1722
  %v6649 = vunpack.c.l.b16 %v1723
  %v6650 = vunpack.c.l.b16 %v1724
  %v6651 = vunpack.c.l.b16 %v1725
  %v6652 = vunpack.c.l.b16 %v1726
  %v6653 = vunpack.c.l.b16 %v1727
  %v6654 = vunpack.c.l.b16 %v1728
  %v6655 = vunpack.c.l.b16 %v1729
  %v6656 = vunpack.c.l.b16 %v1730
  %v6657 = vunpack.c.l.b16 %v1731
  %v6658 = vunpack.c.l.b16 %v1732
  %v6659 = vunpack.c.l.b16 %v1733
  %v6660 = vunpack.c.l.b16 %v1734
  %v6661 = vunpack.c.l.b16 %v1735
  %v6662 = vunpack.c.l.b16 %v1736
  %v6663 = vunpack.c.l.b16 %v1737
  %v6664 = vunpack.c.l.b16 %v1738
  %v6665 = vunpack.c.l.b16 %v1739
  %v6666 = vunpack.c.l.b16 %v1740
  %v6667 = vunpack.c.l.b16 %v1741
  %v6668 = vunpack.c.l.b16 %v1742
  %v6669 = vunpack.c.l.b16 %v1743
  %v6670 = vunpack.c.l.b16 %v1744
  %v6671 = vunpack.c.l.b16 %v1745
  %v6672 = vunpack.c.l.b16 %v1746
  %v6673 = vunpack.c.l.b16 %v1747
  %v6674 = vunpack.c.l.b16 %v1748
  %v6675 = vunpack.c.l.b16 %v1749
  %v6676 = vunpack.c.l.b16 %v1750
  %v6677 = vunpack.c.l.b16 %v1751
  %v6678 = vunpack.c.l.b16 %v1752
  %v6679 = vunpack.c.l.b16 %v1753
  %v6680 = vunpack.c.l.b16 %v1754
  %v6681 = vunpack.c.l.b16 %v1755
  %v6682 = vunpack.c.l.b16 %v1756
  %v6683 = vunpack.c.l.b16 %v1757
  %v6684 = vunpack.c.l.b16 %v1758
  %v6685 = vunpack.c.l.b16 %v1759
  %v6686 = vunpack.c.l.b16 %v1760
  %v6687 = vunpack.c.l.b16 %v1761
  %v6688 = vunpack.c.l.b16 %v1762
  %v6689 = vunpack.c.l.b16 %v1763
  %v6690 = vunpack.c.l.b16 %v1764
  %v6691 = vunpack.c.l.b16 %v1765
  %v6692 = vunpack.c.l.b16 %v1766
  %v6693 = vunpack.c.l.b16 %v1767
  %v6694 = vunpack.c.l.b16 %v1768
  %v6695 = vunpack.c.l.b16 %v1769
  %v6696 = vunpack.c.l.b16 %v1770
  %v6697 = vunpack.c.l.b16 %v1771
  %v6698 = vunpack.c.l.b16 %v1772
  %v6699 = vunpack.c.l.b16 %v1773
  %v6700 = vunpack.c.l.b16 %v1774
  %v6701 = vunpack.c.l.b16 %v1775
  %v6702 = vunpack.c.l.b16 %v1776
  %v6703 = vunpack.c.l.b16 %v1777
  %v6704 = vunpack.c.l.b16 %v1778
  %v6705 = vunpack.c.l.b16 %v1779
  %v6706 = vunpack.c.l.b16 %v1780
  %v6707 = vunpack.c.l.b16 %v1781
  %v6708 = vunpack.c.l.b16 %v1782
  %v6709 = vunpack.c.l.b16 %v1783
  %v6710 = vunpack.c.l.b16 %v1784
  %v6711 = vunpack.c.l.b16 %v1785
  %v6712 = vunpack.c.l.b16 %v1786
  %v6713 = vunpack.c.l.b16 %v1787
  %v6714 = vunpack.c.l.b16 %v1788
  %v6715 = vunpack.c.l.b16 %v1789
  %v6716 = vunpack.c.l.b16 %v1790
  %v6717 = vunpack.c.l.b16 %v1791
  %v6718 = vunpack.c.l.b16 %v1792
  %v6719 = vunpack.c.l.b16 %v1793
  %v6720 = vunpack.c.l.b16 %v1794
  %v6721 = vunpack.c.l.b16 %v1795
  %v6722 = vunpack.c.l.b16 %v1796
  %v6723 = vunpack.c.l.b16 %v1797
  %v6724 = vunpack.c.l.b16 %v1798
  %v6725 = vunpack.c.l.b16 %v1799
  %v6726 = vunpack.c.l.b16 %v1800
  %v6727 = vunpack.c.l.b16 %v1801
  %v6728 = vunpack.c.l.b16 %v1802
  %v6729 = vunpack.c.l.b16 %v1803
  %v6730 = vunpack.c.l.b16 %v1804
  %v6731 = vunpack.c.l.b16 %v1805
  %v6732 = vunpack.c.l.b16 %v1806
  %v6733 = vunpack.c.l.b16 %v1807
  %v6734 = vunpack.c.l.b16 %v1808
  %v6735 = vunpack.c.l.b16 %v1809
  %v6736 = vunpack.c.l.b16 %v1810
  %v6737 = vunpack.c.l.b16 %v1811
  %v6738 = vunpack.c.l.b16 %v1812
  %v6739 = vunpack.c.l.b16 %v1813
  %v6740 = vunpack.c.l.b16 %v1814
  %v6741 = vunpack.c.l.b16 %v1815
  %v6742 = vunpack.c.l.b16 %v1816
  %v6743 = vunpack.c.l.b16 %v1817
  %v6744 = vunpack.c.l.b16 %v1818
  %v6745 = vunpack.c.l.b16 %v1819
  %v6746 = vunpack.c.l.b16 %v1820
  %v6747 = vunpack.c.l.b16 %v1821
  %v6748 = vunpack.c.l.b16 %v1822
  %v6749 = vunpack.c.l.b16 %v1823
  %v6750 = vunpack.c.l.b16 %v1824
  %v6751 = vunpack.c.l.b16 %v1825
  %v6752 = vunpack.c.l.b16 %v1826
  %v6753 = vunpack.c.l.b16 %v1827
  %v6754 = vunpack.c.l.b16 %v1828
  %v6755 = vunpack.c.l.b16 %v1829
  %v6756 = vunpack.c.l.b16 %v1830
  %v6757 = vunpack.c.l.b16 %v1831
  %v6758 = vunpack.c.l.b16 %v1832
  %v6759 = vunpack.c.l.b16 %v1833
  %v6760 = vunpack.c.l.b16 %v1834
  %v6761 = vunpack.c.l.b16 %v1835
  %v6762 = vunpack.c.l.b16 %v1836
  %v6763 = vunpack.c.l.b16 %v1837
  %v6764 = vunpack.c.l.b16 %v1838
  %v6765 = vunpack.c.l.b16 %v1839
  %v6766 = vunpack.c.l.b16 %v1840
  %v6767 = vunpack.c.l.b16 %v1841
  %v6768 = vunpack.c.l.b16 %v1842
  %v6769 = vunpack.c.l.b16 %v1843
  %v6770 = vunpack.c.l.b16 %v1844
  %v6771 = vunpack.c.l.b16 %v1845
  %v6772 = vunpack.c.l.b16 %v1846
  %v6773 = vunpack.c.l.b16 %v1847
  %v6774 = vunpack.c.l.b16 %v1848
  %v6775 = vunpack.c.l.b16 %v1849
  %v6776 = vunpack.c.l.b16 %v1850
  %v6777 = vunpack.c.l.b16 %v1851
  %v6778 = vunpack.c.l.b16 %v1852
  %v6779 = vunpack.c.l.b16 %v1853
  %v6780 = vunpack.c.l.b16 %v1854
  %v6781 = vunpack.c.l.b16 %v1855
  %v6782 = vunpack.c.l.b16 %v1856
  %v6783 = vunpack.c.l.b16 %v1857
  %v6784 = vunpack.c.l.b16 %v1858
  %v6785 = vunpack.c.l.b16 %v1859
  %v6786 = vunpack.c.l.b16 %v1860
  %v6787 = vunpack.c.l.b16 %v1861
  %v6788 = vunpack.c.l.b16 %v1862
  %v6789 = vunpack.c.l.b16 %v1863
  %v6790 = vunpack.c.l.b16 %v1864
  %v6791 = vunpack.c.l.b16 %v1865
  %v6792 = vunpack.c.l.b16 %v1866
  %v6793 = vunpack.c.l.b16 %v1867
  %v6794 = vunpack.c.l.b16 %v1868
  %v6795 = vunpack.c.l.b16 %v1869
  %v6796 = vunpack.c.l.b16 %v1870
  %v6797 = vunpack.c.l.b16 %v1871
  %v6798 = vunpack.c.l.b16 %v1872
  %v6799 = vunpack.c.l.b16 %v1873
  %v6800 = vunpack.c.l.b16 %v1874
  %v6801 = vunpack.c.l.b16 %v1875
  %v6802 = vunpack.c.l.b16 %v1876
  %v6803 = vunpack.c.l.b16 %v1877
  %v6804 = vunpack.c.l.b16 %v1878
  %v6805 = vunpack.c.l.b16 %v1879
  %v6806 = vunpack.c.l.b16 %v1880
  %v6807 = vunpack.c.l.b16 %v1881
  %v6808 = vunpack.c.l.b16 %v1882
  %v6809 = vunpack.c.l.b16 %v1883
  %v6810 = vunpack.c.l.b16 %v1884
  %v6811 = vunpack.c.l.b16 %v1885
  %v6812 = vunpack.c.l.b16 %v1886
  %v6813 = vunpack.c.l.b16 %v1887
  %v6814 = vunpack.c.l.b16 %v1888
  %v6815 = vunpack.c.l.b16 %v1889
  %v6816 = vunpack.c.l.b16 %v1890
  %v6817 = vunpack.c.l.b16 %v1891
  %v6818 = vunpack.c.l.b16 %v1892
  %v6819 = vunpack.c.l.b16 %v1893
  %v6820 = vunpack.c.l.b16 %v1894
  %v6821 = vunpack.c.l.b16 %v1895
  %v6822 = vunpack.c.l.b16 %v1896
  %v6823 = vunpack.c.l.b16 %v1897
  %v6824 = vunpack.c.l.b16 %v1898
  %v6825 = vunpack.c.l.b16 %v1899
  %v6826 = vunpack.c.l.b16 %v1900
  %v6827 = vunpack.c.l.b16 %v1901
  %v6828 = vunpack.c.l.b16 %v1902
  %v6829 = vunpack.c.l.b16 %v1903
  %v6830 = vunpack.c.l.b16 %v1904
  %v6831 = vunpack.c.l.b16 %v1905
  %v6832 = vunpack.c.l.b16 %v1906
  %v6833 = vunpack.c.l.b16 %v1907
  %v6834 = vunpack.c.l.b16 %v1908
  %v6835 = vunpack.c.l.b16 %v1909
  %v6836 = vunpack.c.l.b16 %v1910
  %v6837 = vunpack.c.l.b16 %v1911
  %v6838 = vunpack.c.l.b16 %v1912
  %v6839 = vunpack.c.l.b16 %v1913
  %v6840 = vunpack.c.l.b16 %v1914
  %v6841 = vunpack.c.l.b16 %v1915
  %v6842 = vunpack.c.l.b16 %v1916
  %v6843 = vunpack.c.l.b16 %v1917
  %v6844 = vunpack.c.l.b16 %v1918
  %v6845 = vunpack.c.l.b16 %v1919
  %v6846 = vunpack.c.l.b16 %v1920
  %v6847 = vunpack.c.l.b16 %v1921
  %v6848 = vunpack.c.l.b16 %v1922
  %v6849 = vunpack.c.l.b16 %v1923
  %v6850 = vunpack.c.l.b16 %v1924
  %v6851 = vunpack.c.l.b16 %v1925
  %v6852 = vunpack.c.l.b16 %v1926
  %v6853 = vunpack.c.l.b16 %v1927
  %v6854 = vunpack.c.l.b16 %v1928
  %v6855 = vunpack.c.l.b16 %v1929
  %v6856 = vunpack.c.l.b16 %v1930
  %v6857 = vunpack.c.l.b16 %v1931
  %v6858 = vunpack.c.l.b16 %v1932
  %v6859 = vunpack.c.l.b16 %v1933
  %v6860 = vunpack.c.l.b16 %v1934
  %v6861 = vunpack.c.l.b16 %v1935
  %v6862 = vunpack.c.l.b16 %v1936
  %v6863 = vunpack.c.l.b16 %v1937
  %v6864 = vunpack.c.l.b16 %v1938
  %v6865 = vunpack.c.l.b16 %v1939
  %v6866 = vunpack.c.l.b16 %v1940
  %v6867 = vunpack.c.l.b16 %v1941
  %v6868 = vunpack.c.l.b16 %v1942
  %v6869 = vunpack.c.l.b16 %v1943
  %v6870 = vunpack.c.l.b16 %v1944
  %v6871 = vunpack.c.l.b16 %v1945
  %v6872 = vunpack.c.l.b16 %v1946
  %v6873 = vunpack.c.l.b16 %v1947
  %v6874 = vunpack.c.l.b16 %v1948
  %v6875 = vunpack.c.l.b16 %v1949
  %v6876 = vunpack.c.l.b16 %v1950
  %v6877 = vunpack.c.l.b16 %v1951
  %v6878 = vunpack.c.l.b16 %v1952
  %v6879 = vunpack.c.l.b16 %v1953
  %v6880 = vunpack.c.l.b16 %v1954
  %v6881 = vunpack.c.l.b16 %v1955
  %v6882 = vunpack.c.l.b16 %v1956
  %v6883 = vunpack.c.l.b16 %v1957
  %v6884 = vunpack.c.l.b16 %v1958
  %v6885 = vunpack.c.l.b16 %v1959
  %v6886 = vunpack.c.l.b16 %v1960
  %v6887 = vunpack.c.l.b16 %v1961
  %v6888 = vunpack.c.l.b16 %v1962
  %v6889 = vunpack.c.l.b16 %v1963
  %v6890 = vunpack.c.l.b16 %v1964
  %v6891 = vunpack.c.l.b16 %v1965
  %v6892 = vunpack.c.l.b16 %v1966
  %v6893 = vunpack.c.l.b16 %v1967
  %v6894 = vunpack.c.l.b16 %v1968
  %v6895 = vunpack.c.l.b16 %v1969
  %v6896 = vunpack.c.l.b16 %v1970
  %v6897 = vunpack.c.l.b16 %v1971
  %v6898 = vunpack.c.l.b16 %v1972
  %v6899 = vunpack.c.l.b16 %v1973
  %v6900 = vunpack.c.l.b16 %v1974
  %v6901 = vunpack.c.l.b16 %v1975
  %v6902 = vunpack.c.l.b16 %v1976
  %v6903 = vunpack.c.l.b16 %v1977
  %v6904 = vunpack.c.l.b16 %v1978
  %v6905 = vunpack.c.l.b16 %v1979
  %v6906 = vunpack.c.l.b16 %v1980
  %v6907 = vunpack.c.l.b16 %v1981
  %v6908 = vunpack.c.l.b16 %v1982
  %v6909 = vunpack.c.l.b16 %v1983
  %v6910 = vunpack.c.l.b16 %v1984
  %v6911 = vunpack.c.l.b16 %v1985
  %v6912 = vunpack.c.l.b16 %v1986
  %v6913 = vunpack.c.l.b16 %v1987
  %v6914 = vunpack.c.l.b16 %v1988
  %v6915 = vunpack.c.l.b16 %v1989
  %v6916 = vunpack.c.l.b16 %v1990
  %v6917 = vunpack.c.l.b16 %v1991
  %v6918 = vunpack.c.l.b16 %v1992
  %v6919 = vunpack.c.l.b16 %v1993
  %v6920 = vunpack.c.l.b16 %v1994
  %v6921 = vunpack.c.l.b16 %v1995
  %v6922 = vunpack.c.l.b16 %v1996
  %v6923 = vunpack.c.l.b16 %v1997
  %v6924 = vunpack.c.l.b16 %v1998
  %v6925 = vunpack.c.l.b16 %v1999
  %v6926 = vunpack.c.l.b16 %v2000
  %v6927 = vunpack.c.l.b16 %v2001
  %v6928 = vunpack.c.l.b16 %v2002
  %v6929 = vunpack.c.l.b16 %v2003
  %v6930 = vunpack.c.l.b16 %v2004
  %v6931 = vunpack.c.l.b16 %v2005
  %v6932 = vunpack.c.l.b16 %v2006
  %v6933 = vunpack.c.l.b16 %v2007
  %v6934 = vunpack.c.l.b16 %v2008
  %v6935 = vunpack.c.l.b16 %v2009
  %v6936 = vunpack.c.l.b16 %v2010
  %v6937 = vunpack.c.l.b16 %v2011
  %v6938 = vunpack.c.l.b16 %v2012
  %v6939 = vunpack.c.l.b16 %v2013
  %v6940 = vunpack.c.l.b16 %v2014
  %v6941 = vunpack.c.l.b16 %v2015
  %v6942 = vunpack.c.l.b16 %v2016
  %v6943 = vunpack.c.l.b16 %v2017
  %v6944 = vunpack.c.l.b16 %v2018
  %v6945 = vunpack.c.l.b16 %v2019
  %v6946 = vunpack.c.l.b16 %v2020
  %v6947 = vunpack.c.l.b16 %v2021
  %v6948 = vunpack.c.l.b16 %v2022
  %v6949 = vunpack.c.l.b16 %v2023
  %v6950 = vunpack.c.l.b16 %v2024
  %v6951 = vunpack.c.l.b16 %v2025
  %v6952 = vunpack.c.l.b16 %v2026
  %v6953 = vunpack.c.l.b16 %v2027
  %v6954 = vunpack.c.l.b16 %v2028
  %v6955 = vunpack.c.l.b16 %v2029
  %v6956 = vunpack.c.l.b16 %v2030
  %v6957 = vunpack.c.l.b16 %v2031
  %v6958 = vunpack.c.l.b16 %v2032
  %v6959 = vunpack.c.l.b16 %v2033
  %v6960 = vunpack.c.l.b16 %v2034
  %v6961 = vunpack.c.l.b16 %v2035
  %v6962 = vunpack.c.l.b16 %v2036
  %v6963 = vunpack.c.l.b16 %v2037
  %v6964 = vunpack.c.l.b16 %v2038
  %v6965 = vunpack.c.l.b16 %v2039
  %v6966 = vunpack.c.l.b16 %v2040
  %v6967 = vunpack.c.l.b16 %v2041
  %v6968 = vunpack.c.l.b16 %v2042
  %v6969 = vunpack.c.l.b16 %v2043
  %v6970 = vunpack.c.l.b16 %v2044
  %v6971 = vunpack.c.l.b16 %v2045
  %v6972 = vunpack.c.l.b16 %v2046
  %v6973 = vunpack.c.l.b16 %v2047
  %v6974 = vunpack.c.l.b16 %v2048
  %v6975 = vunpack.c.l.b16 %v2049
  %v6976 = vunpack.c.l.b16 %v2050
  %v6977 = vunpack.c.l.b16 %v2051
  %v6978 = vunpack.c.l.b16 %v2052
  %v6979 = vunpack.c.l.b16 %v2053
  %v6980 = vunpack.c.l.b16 %v2054
  %v6981 = vunpack.c.l.b16 %v2055
  %v6982 = vunpack.c.l.b16 %v2056
  %v6983 = vunpack.c.l.b16 %v2057
  %v6984 = vunpack.c.l.b16 %v2058
  %v6985 = vunpack.c.l.b16 %v2059
  %v6986 = vunpack.c.l.b16 %v2060
  %v6987 = vunpack.c.l.b16 %v2061
  %v6988 = vunpack.c.l.b16 %v2062
  %v6989 = vunpack.c.l.b16 %v2063
  %v6990 = vunpack.c.l.b16 %v2064
  %v6991 = vunpack.c.l.b16 %v2065
  %v6992 = vunpack.c.l.b16 %v2066
  %v6993 = vunpack.c.l.b16 %v2067
  %v6994 = vunpack.c.l.b16 %v2068
  %v6995 = vunpack.c.l.b16 %v2069
  %v6996 = vunpack.c.l.b16 %v2070
  %v6997 = vunpack.c.l.b16 %v2071
  %v6998 = vunpack.c.l.b16 %v2072
  %v6999 = vunpack.c.l.b16 %v2073
  %v7000 = vunpack.c.l.b16 %v2074
  %v7001 = vunpack.c.l.b16 %v2075
  %v7002 = vunpack.c.l.b16 %v2076
  %v7003 = vunpack.c.l.b16 %v2077
  %v7004 = vunpack.c.l.b16 %v2078
  %v7005 = vunpack.c.l.b16 %v2079
  %v7006 = vunpack.c.l.b16 %v2080
  %v7007 = vunpack.c.l.b16 %v2081
  %v7008 = vunpack.c.l.b16 %v2082
  %v7009 = vunpack.c.l.b16 %v2083
  %v7010 = vunpack.c.l.b16 %v2084
  %v7011 = vunpack.c.l.b16 %v2085
  %v7012 = vunpack.c.l.b16 %v2086
  %v7013 = vunpack.c.l.b16 %v2087
  %v7014 = vunpack.c.l.b16 %v2088
  %v7015 = vunpack.c.l.b16 %v2089
  %v7016 = vunpack.c.l.b16 %v2090
  %v7017 = vunpack.c.l.b16 %v2091
  %v7018 = vunpack.c.l.b16 %v2092
  %v7019 = vunpack.c.l.b16 %v2093
  %v7020 = vunpack.c.l.b16 %v2094
  %v7021 = vunpack.c.l.b16 %v2095
  %v7022 = vunpack.c.l.b16 %v2096
  %v7023 = vunpack.c.l.b16 %v2097
  %v7024 = vunpack.c.l.b16 %v2098
  %v7025 = vunpack.c.l.b16 %v2099
  %v7026 = vunpack.c.l.b16 %v2100
  %v7027 = vunpack.c.l.b16 %v2101
  %v7028 = vunpack.c.l.b16 %v2102
  %v7029 = vunpack.c.l.b16 %v2103
  %v7030 = vunpack.c.l.b16 %v2104
  %v7031 = vunpack.c.l.b16 %v2105
  %v7032 = vunpack.c.l.b16 %v2106
  %v7033 = vunpack.c.l.b16 %v2107
  %v7034 = vunpack.c.l.b16 %v2108
  %v7035 = vunpack.c.l.b16 %v2109
  %v7036 = vunpack.c.l.b16 %v2110
  %v7037 = vunpack.c.l.b16 %v2111
  %v7038 = vunpack.c.l.b16 %v2112
  %v7039 = vunpack.c.l.b16 %v2113
  %v7040 = vunpack.c.l.b16 %v2114
  %v7041 = vunpack.c.l.b16 %v2115
  %v7042 = vunpack.c.l.b16 %v2116
  %v7043 = vunpack.c.l.b16 %v2117
  %v7044 = vunpack.c.l.b16 %v2118
  %v7045 = vunpack.c.l.b16 %v2119
  %v7046 = vunpack.c.l.b16 %v2120
  %v7047 = vunpack.c.l.b16 %v2121
  %v7048 = vunpack.c.l.b16 %v2122
  %v7049 = vunpack.c.l.b16 %v2123
  %v7050 = vunpack.c.l.b16 %v2124
  %v7051 = vunpack.c.l.b16 %v2125
  %v7052 = vunpack.c.l.b16 %v2126
  %v7053 = vunpack.c.l.b16 %v2127
  %v7054 = vunpack.c.l.b16 %v2128
  %v7055 = vunpack.c.l.b16 %v2129
  %v7056 = vunpack.c.l.b16 %v2130
  %v7057 = vunpack.c.l.b16 %v2131
  %v7058 = vunpack.c.l.b16 %v2132
  %v7059 = vunpack.c.l.b16 %v2133
  %v7060 = vunpack.c.l.b16 %v2134
  %v7061 = vunpack.c.l.b16 %v2135
  %v7062 = vunpack.c.l.b16 %v2136
  %v7063 = vunpack.c.l.b16 %v2137
  %v7064 = vunpack.c.l.b16 %v2138
  %v7065 = vunpack.c.l.b16 %v2139
  %v7066 = vunpack.c.l.b16 %v2140
  %v7067 = vunpack.c.l.b16 %v2141
  %v7068 = vunpack.c.l.b16 %v2142
  %v7069 = vunpack.c.l.b16 %v2143
  %v7070 = vunpack.c.l.b16 %v2144
  %v7071 = vunpack.c.l.b16 %v2145
  %v7072 = vunpack.c.l.b16 %v2146
  %v7073 = vunpack.c.l.b16 %v2147
  %v7074 = vunpack.c.l.b16 %v2148
  %v7075 = vunpack.c.l.b16 %v2149
  %v7076 = vunpack.c.l.b16 %v2150
  %v7077 = vunpack.c.l.b16 %v2151
  %v7078 = vunpack.c.l.b16 %v2152
  %v7079 = vunpack.c.l.b16 %v2153
  %v7080 = vunpack.c.l.b16 %v2154
  %v7081 = vunpack.c.l.b16 %v2155
  %v7082 = vunpack.c.l.b16 %v2156
  %v7083 = vunpack.c.l.b16 %v2157
  %v7084 = vunpack.c.l.b16 %v2158
  %v7085 = vunpack.c.l.b16 %v2159
  %v7086 = vunpack.c.l.b16 %v2160
  %v7087 = vunpack.c.l.b16 %v2161
  %v7088 = vunpack.c.l.b16 %v2162
  %v7089 = vunpack.c.l.b16 %v2163
  %v7090 = vunpack.c.l.b16 %v2164
  %v7091 = vunpack.c.l.b16 %v2165
  %v7092 = vunpack.c.l.b16 %v2166
  %v7093 = vunpack.c.l.b16 %v2167
  %v7094 = vunpack.c.l.b16 %v2168
  %v7095 = vunpack.c.l.b16 %v2169
  %v7096 = vunpack.c.l.b16 %v2170
  %v7097 = vunpack.c.l.b16 %v2171
  %v7098 = vunpack.c.l.b16 %v2172
  %v7099 = vunpack.c.l.b16 %v2173
  %v7100 = vunpack.c.l.b16 %v2174
  %v7101 = vunpack.c.l.b16 %v2175
  %v7102 = vunpack.c.l.b16 %v2176
  %v7103 = vunpack.c.l.b16 %v2177
  %v7104 = vunpack.c.l.b16 %v2178
  %v7105 = vunpack.c.l.b16 %v2179
  %v7106 = vunpack.c.l.b16 %v2180
  %v7107 = vunpack.c.l.b16 %v2181
  %v7108 = vunpack.c.l.b16 %v2182
  %v7109 = vunpack.c.l.b16 %v2183
  %v7110 = vunpack.c.l.b16 %v2184
  %v7111 = vunpack.c.l.b16 %v2185
  %v7112 = vunpack.c.l.b16 %v2186
  %v7113 = vunpack.c.l.b16 %v2187
  %v7114 = vunpack.c.l.b16 %v2188
  %v7115 = vunpack.c.l.b16 %v2189
  %v7116 = vunpack.c.l.b16 %v2190
  %v7117 = vunpack.c.l.b16 %v2191
  %v7118 = vunpack.c.l.b16 %v2192
  %v7119 = vunpack.c.l.b16 %v2193
  %v7120 = vunpack.c.l.b16 %v2194
  %v7121 = vunpack.c.l.b16 %v2195
  %v7122 = vunpack.c.l.b16 %v2196
  %v7123 = vunpack.c.l.b16 %v2197
  %v7124 = vunpack.c.l.b16 %v2198
  %v7125 = vunpack.c.l.b16 %v2199
  %v7126 = vunpack.c.l.b16 %v2200
  %v7127 = vunpack.c.l.b16 %v2201
  %v7128 = vunpack.c.l.b16 %v2202
  %v7129 = vunpack.c.l.b16 %v2203
  %v7130 = vunpack.c.l.b16 %v2204
  %v7131 = vunpack.c.l.b16 %v2205
  %v7132 = vunpack.c.l.b16 %v2206
  %v7133 = vunpack.c.l.b16 %v2207
  %v7134 = vunpack.c.l.b16 %v2208
  %v7135 = vunpack.c.l.b16 %v2209
  %v7136 = vunpack.c.l.b16 %v2210
  %v7137 = vunpack.c.l.b16 %v2211
  %v7138 = vunpack.c.l.b16 %v2212
  %v7139 = vunpack.c.l.b16 %v2213
  %v7140 = vunpack.c.l.b16 %v2214
  %v7141 = vunpack.c.l.b16 %v2215
  %v7142 = vunpack.c.l.b16 %v2216
  %v7143 = vunpack.c.l.b16 %v2217
  %v7144 = vunpack.c.l.b16 %v2218
  %v7145 = vunpack.c.l.b16 %v2219
  %v7146 = vunpack.c.l.b16 %v2220
  %v7147 = vunpack.c.l.b16 %v2221
  %v7148 = vunpack.c.l.b16 %v2222
  %v7149 = vunpack.c.l.b16 %v2223
  %v7150 = vunpack.c.l.b16 %v2224
  %v7151 = vunpack.c.l.b16 %v2225
  %v7152 = vunpack.c.l.b16 %v2226
  %v7153 = vunpack.c.l.b16 %v2227
  %v7154 = vunpack.c.l.b16 %v2228
  %v7155 = vunpack.c.l.b16 %v2229
  %v7156 = vunpack.c.l.b16 %v2230
  %v7157 = vunpack.c.l.b16 %v2231
  %v7158 = vunpack.c.l.b16 %v2232
  %v7159 = vunpack.c.l.b16 %v2233
  %v7160 = vunpack.c.l.b16 %v2234
  %v7161 = vunpack.c.l.b16 %v2235
  %v7162 = vunpack.c.l.b16 %v2236
  %v7163 = vunpack.c.l.b16 %v2237
  %v7164 = vunpack.c.l.b16 %v2238
  %v7165 = vunpack.c.l.b16 %v2239
  %v7166 = vunpack.c.l.b16 %v2240
  %v7167 = vunpack.c.l.b16 %v2241
  %v7168 = vunpack.c.l.b16 %v2242
  %v7169 = vunpack.c.l.b16 %v2243
  %v7170 = vunpack.c.l.b16 %v2244
  %v7171 = vunpack.c.l.b16 %v2245
  %v7172 = vunpack.c.l.b16 %v2246
  %v7173 = vunpack.c.l.b16 %v2247
  %v7174 = vunpack.c.l.b16 %v2248
  %v7175 = vunpack.c.l.b16 %v2249
  %v7176 = vunpack.c.l.b16 %v2250
  %v7177 = vunpack.c.l.b16 %v2251
  %v7178 = vunpack.c.l.b16 %v2252
  %v7179 = vunpack.c.l.b16 %v2253
  %v7180 = vunpack.c.l.b16 %v2254
  %v7181 = vunpack.c.l.b16 %v2255
  %v7182 = vunpack.c.l.b16 %v2256
  %v7183 = vunpack.c.l.b16 %v2257
  %v7184 = vunpack.c.l.b16 %v2258
  %v7185 = vunpack.c.l.b16 %v2259
  %v7186 = vunpack.c.l.b16 %v2260
  %v7187 = vunpack.c.l.b16 %v2261
  %v7188 = vunpack.c.l.b16 %v2262
  %v7189 = vunpack.c.l.b16 %v2263
  %v7190 = vunpack.c.l.b16 %v2264
  %v7191 = vunpack.c.l.b16 %v2265
  %v7192 = vunpack.c.l.b16 %v2266
  %v7193 = vunpack.c.l.b16 %v2267
  %v7194 = vunpack.c.l.b16 %v2268
  %v7195 = vunpack.c.l.b16 %v2269
  %v7196 = vunpack.c.l.b16 %v2270
  %v7197 = vunpack.c.l.b16 %v2271
  %v7198 = vunpack.c.l.b16 %v2272
  %v7199 = vunpack.c.l.b16 %v2273
  %v7200 = vunpack.c.l.b16 %v2274
  %v7201 = vunpack.c.l.b16 %v2275
  %v7202 = vunpack.c.l.b16 %v2276
  %v7203 = vunpack.c.l.b16 %v2277
  %v7204 = vunpack.c.l.b16 %v2278
  %v7205 = vunpack.c.l.b16 %v2279
  %v7206 = vunpack.c.l.b16 %v2280
  %v7207 = vunpack.c.l.b16 %v2281
  %v7208 = vpack.c.b16 %v5081, %v5080
  %v7209 = vpack.c.b16 %v5083, %v5082
  %v7210 = vpack.c.b16 %v5085, %v5084
  %v7211 = vpack.c.b16 %v5087, %v5086
  %v7212 = vpack.c.b16 %v5089, %v5088
  %v7213 = vpack.c.b16 %v5091, %v5090
  %v7214 = vpack.c.b16 %v5093, %v5092
  %v7215 = vpack.c.b16 %v5095, %v5094
  %v7216 = vpack.c.b16 %v5097, %v5096
  %v7217 = vpack.c.b16 %v5099, %v5098
  %v7218 = vpack.c.b16 %v5101, %v5100
  %v7219 = vpack.c.b16 %v5103, %v5102
  %v7220 = vpack.c.b16 %v5105, %v5104
  %v7221 = vpack.c.b16 %v5107, %v5106
  %v7222 = vpack.c.b16 %v5109, %v5108
  %v7223 = vpack.c.b16 %v5111, %v5110
  %v7224 = vpack.c.b16 %v5113, %v5112
  %v7225 = vpack.c.b16 %v5115, %v5114
  %v7226 = vpack.c.b16 %v5117, %v5116
  %v7227 = vpack.c.b16 %v5119, %v5118
  %v7228 = vpack.c.b16 %v5121, %v5120
  %v7229 = vpack.c.b16 %v5123, %v5122
  %v7230 = vpack.c.b16 %v5125, %v5124
  %v7231 = vpack.c.b16 %v5127, %v5126
  %v7232 = vpack.c.b16 %v5129, %v5128
  %v7233 = vpack.c.b16 %v5131, %v5130
  %v7234 = vpack.c.b16 %v5133, %v5132
  %v7235 = vpack.c.b16 %v5135, %v5134
  %v7236 = vpack.c.b16 %v5137, %v5136
  %v7237 = vpack.c.b16 %v5139, %v5138
  %v7238 = vpack.c.b16 %v5141, %v5140
  %v7239 = vpack.c.b16 %v5143, %v5142
  %v7240 = vpack.c.b16 %v5145, %v5144
  %v7241 = vpack.c.b16 %v5147, %v5146
  %v7242 = vpack.c.b16 %v5149, %v5148
  %v7243 = vpack.c.b16 %v5151, %v5150
  %v7244 = vpack.c.b16 %v5153, %v5152
  %v7245 = vpack.c.b16 %v5155, %v5154
  %v7246 = vpack.c.b16 %v5157, %v5156
  %v7247 = vpack.c.b16 %v5159, %v5158
  %v7248 = vpack.c.b16 %v5161, %v5160
  %v7249 = vpack.c.b16 %v5163, %v5162
  %v7250 = vpack.c.b16 %v5165, %v5164
  %v7251 = vpack.c.b16 %v5167, %v5166
  %v7252 = vpack.c.b16 %v5169, %v5168
  %v7253 = vpack.c.b16 %v5171, %v5170
  %v7254 = vpack.c.b16 %v5173, %v5172
  %v7255 = vpack.c.b16 %v5175, %v5174
  %v7256 = vpack.c.b16 %v5177, %v5176
  %v7257 = vpack.c.b16 %v5179, %v5178
  %v7258 = vpack.c.b16 %v5181, %v5180
  %v7259 = vpack.c.b16 %v5183, %v5182
  %v7260 = vpack.c.b16 %v5185, %v5184
  %v7261 = vpack.c.b16 %v5187, %v5186
  %v7262 = vpack.c.b16 %v5189, %v5188
  %v7263 = vpack.c.b16 %v5191, %v5190
  %v7264 = vpack.c.b16 %v5193, %v5192
  %v7265 = vpack.c.b16 %v5195, %v5194
  %v7266 = vpack.c.b16 %v5197, %v5196
  %v7267 = vpack.c.b16 %v5199, %v5198
  %v7268 = vpack.c.b16 %v5201, %v5200
  %v7269 = vpack.c.b16 %v5203, %v5202
  %v7270 = vpack.c.b16 %v5205, %v5204
  %v7271 = vpack.c.b16 %v5207, %v5206
  %v7272 = vpack.c.b16 %v5209, %v5208
  %v7273 = vpack.c.b16 %v5211, %v5210
  %v7274 = vpack.c.b16 %v5213, %v5212
  %v7275 = vpack.c.b16 %v5215, %v5214
  %v7276 = vpack.c.b16 %v5217, %v5216
  %v7277 = vpack.c.b16 %v5219, %v5218
  %v7278 = vpack.c.b16 %v5221, %v5220
  %v7279 = vpack.c.b16 %v5223, %v5222
  %v7280 = vpack.c.b16 %v5225, %v5224
  %v7281 = vpack.c.b16 %v5227, %v5226
  %v7282 = vpack.c.b16 %v5229, %v5228
  %v7283 = vpack.c.b16 %v5231, %v5230
  %v7284 = vpack.c.b16 %v5233, %v5232
  %v7285 = vpack.c.b16 %v5235, %v5234
  %v7286 = vpack.c.b16 %v5237, %v5236
  %v7287 = vpack.c.b16 %v5239, %v5238
  %v7288 = vpack.c.b16 %v5241, %v5240
  %v7289 = vpack.c.b16 %v5243, %v5242
  %v7290 = vpack.c.b16 %v5245, %v5244
  %v7291 = vpack.c.b16 %v5247, %v5246
  %v7292 = vpack.c.b16 %v5249, %v5248
  %v7293 = vpack.c.b16 %v5251, %v5250
  %v7294 = vpack.c.b16 %v5253, %v5252
  %v7295 = vpack.c.b16 %v5255, %v5254
  %v7296 = vpack.c.b16 %v5257, %v5256
  %v7297 = vpack.c.b16 %v5259, %v5258
  %v7298 = vpack.c.b16 %v5261, %v5260
  %v7299 = vpack.c.b16 %v5263, %v5262
  %v7300 = vpack.c.b16 %v5265, %v5264
  %v7301 = vpack.c.b16 %v5267, %v5266
  %v7302 = vpack.c.b16 %v5269, %v5268
  %v7303 = vpack.c.b16 %v5271, %v5270
  %v7304 = vpack.c.b16 %v5273, %v5272
  %v7305 = vpack.c.b16 %v5275, %v5274
  %v7306 = vpack.c.b16 %v5277, %v5276
  %v7307 = vpack.c.b16 %v5279, %v5278
  %v7308 = vpack.c.b16 %v5281, %v5280
  %v7309 = vpack.c.b16 %v5283, %v5282
  %v7310 = vpack.c.b16 %v5285, %v5284
  %v7311 = vpack.c.b16 %v5287, %v5286
  %v7312 = vpack.c.b16 %v5289, %v5288
  %v7313 = vpack.c.b16 %v5291, %v5290
  %v7314 = vpack.c.b16 %v5293, %v5292
  %v7315 = vpack.c.b16 %v5295, %v5294
  %v7316 = vpack.c.b16 %v5297, %v5296
  %v7317 = vpack.c.b16 %v5299, %v5298
  %v7318 = vpack.c.b16 %v5301, %v5300
  %v7319 = vpack.c.b16 %v5303, %v5302
  %v7320 = vpack.c.b16 %v5305, %v5304
  %v7321 = vpack.c.b16 %v5307, %v5306
  %v7322 = vpack.c.b16 %v5309, %v5308
  %v7323 = vpack.c.b16 %v5311, %v5310
  %v7324 = vpack.c.b16 %v5313, %v5312
  %v7325 = vpack.c.b16 %v5315, %v5314
  %v7326 = vpack.c.b16 %v5317, %v5316
  %v7327 = vpack.c.b16 %v5319, %v5318
  %v7328 = vpack.c.b16 %v5321, %v5320
  %v7329 = vpack.c.b16 %v5323, %v5322
  %v7330 = vpack.c.b16 %v5325, %v5324
  %v7331 = vpack.c.b16 %v5327, %v5326
  %v7332 = vpack.c.b16 %v5329, %v5328
  %v7333 = vpack.c.b16 %v5331, %v5330
  %v7334 = vpack.c.b16 %v5333, %v5332
  %v7335 = vpack.c.b16 %v5335, %v5334
  %v7336 = vpack.c.b16 %v5337, %v5336
  %v7337 = vpack.c.b16 %v5339, %v5338
  %v7338 = vpack.c.b16 %v5341, %v5340
  %v7339 = vpack.c.b16 %v5343, %v5342
  %v7340 = vpack.c.b16 %v5345, %v5344
  %v7341 = vpack.c.b16 %v5347, %v5346
  %v7342 = vpack.c.b16 %v5349, %v5348
  %v7343 = vpack.c.b16 %v5351, %v5350
  %v7344 = vpack.c.b16 %v5353, %v5352
  %v7345 = vpack.c.b16 %v5355, %v5354
  %v7346 = vpack.c.b16 %v5357, %v5356
  %v7347 = vpack.c.b16 %v5359, %v5358
  %v7348 = vpack.c.b16 %v5361, %v5360
  %v7349 = vpack.c.b16 %v5363, %v5362
  %v7350 = vpack.c.b16 %v5365, %v5364
  %v7351 = vpack.c.b16 %v5367, %v5366
  %v7352 = vpack.c.b16 %v5369, %v5368
  %v7353 = vpack.c.b16 %v5371, %v5370
  %v7354 = vpack.c.b16 %v5373, %v5372
  %v7355 = vpack.c.b16 %v5375, %v5374
  %v7356 = vpack.c.b16 %v5377, %v5376
  %v7357 = vpack.c.b16 %v5379, %v5378
  %v7358 = vpack.c.b16 %v5381, %v5380
  %v7359 = vpack.c.b16 %v5383, %v5382
  %v7360 = vpack.c.b16 %v5385, %v5384
  %v7361 = vpack.c.b16 %v5387, %v5386
  %v7362 = vpack.c.b16 %v5389, %v5388
  %v7363 = vpack.c.b16 %v5391, %v5390
  %v7364 = vpack.c.b16 %v5393, %v5392
  %v7365 = vpack.c.b16 %v5395, %v5394
  %v7366 = vpack.c.b16 %v5397, %v5396
  %v7367 = vpack.c.b16 %v5399, %v5398
  %v7368 = vpack.c.b16 %v5401, %v5400
  %v7369 = vpack.c.b16 %v5403, %v5402
  %v7370 = vpack.c.b16 %v5405, %v5404
  %v7371 = vpack.c.b16 %v5407, %v5406
  %v7372 = vpack.c.b16 %v5409, %v5408
  %v7373 = vpack.c.b16 %v5411, %v5410
  %v7374 = vpack.c.b16 %v5413, %v5412
  %v7375 = vpack.c.b16 %v5415, %v5414
  %v7376 = vpack.c.b16 %v5417, %v5416
  %v7377 = vpack.c.b16 %v5419, %v5418
  %v7378 = vpack.c.b16 %v5421, %v5420
  %v7379 = vpack.c.b16 %v5423, %v5422
  %v7380 = vpack.c.b16 %v5425, %v5424
  %v7381 = vpack.c.b16 %v5427, %v5426
  %v7382 = vpack.c.b16 %v5429, %v5428
  %v7383 = vpack.c.b16 %v5431, %v5430
  %v7384 = vpack.c.b16 %v5433, %v5432
  %v7385 = vpack.c.b16 %v5435, %v5434
  %v7386 = vpack.c.b16 %v5437, %v5436
  %v7387 = vpack.c.b16 %v5439, %v5438
  %v7388 = vpack.c.b16 %v5441, %v5440
  %v7389 = vpack.c.b16 %v5443, %v5442
  %v7390 = vpack.c.b16 %v5445, %v5444
  %v7391 = vpack.c.b16 %v5447, %v5446
  %v7392 = vpack.c.b16 %v5449, %v5448
  %v7393 = vpack.c.b16 %v5451, %v5450
  %v7394 = vpack.c.b16 %v5453, %v5452
  %v7395 = vpack.c.b16 %v5455, %v5454
  %v7396 = vpack.c.b16 %v5457, %v5456
  %v7397 = vpack.c.b16 %v5459, %v5458
  %v7398 = vpack.c.b16 %v5461, %v5460
  %v7399 = vpack.c.b16 %v5463, %v5462
  %v7400 = vpack.c.b16 %v5465, %v5464
  %v7401 = vpack.c.b16 %v5467, %v5466
  %v7402 = vpack.c.b16 %v5469, %v5468
  %v7403 = vpack.c.b16 %v5471, %v5470
  %v7404 = vpack.c.b16 %v5473, %v5472
  %v7405 = vpack.c.b16 %v5475, %v5474
  %v7406 = vpack.c.b16 %v5477, %v5476
  %v7407 = vpack.c.b16 %v5479, %v5478
  %v7408 = vpack.c.b16 %v5481, %v5480
  %v7409 = vpack.c.b16 %v5483, %v5482
  %v7410 = vpack.c.b16 %v5485, %v5484
  %v7411 = vpack.c.b16 %v5487, %v5486
  %v7412 = vpack.c.b16 %v5489, %v5488
  %v7413 = vpack.c.b16 %v5491, %v5490
  %v7414 = vpack.c.b16 %v5493, %v5492
  %v7415 = vpack.c.b16 %v5495, %v5494
  %v7416 = vpack.c.b16 %v5497, %v5496
  %v7417 = vpack.c.b16 %v5499, %v5498
  %v7418 = vpack.c.b16 %v5501, %v5500
  %v7419 = vpack.c.b16 %v5503, %v5502
  %v7420 = vpack.c.b16 %v5505, %v5504
  %v7421 = vpack.c.b16 %v5507, %v5506
  %v7422 = vpack.c.b16 %v5509, %v5508
  %v7423 = vpack.c.b16 %v5511, %v5510
  %v7424 = vpack.c.b16 %v5513, %v5512
  %v7425 = vpack.c.b16 %v5515, %v5514
  %v7426 = vpack.c.b16 %v5517, %v5516
  %v7427 = vpack.c.b16 %v5519, %v5518
  %v7428 = vpack.c.b16 %v5521, %v5520
  %v7429 = vpack.c.b16 %v5523, %v5522
  %v7430 = vpack.c.b16 %v5525, %v5524
  %v7431 = vpack.c.b16 %v5527, %v5526
  %v7432 = vpack.c.b16 %v5529, %v5528
  %v7433 = vpack.c.b16 %v5531, %v5530
  %v7434 = vpack.c.b16 %v5533, %v5532
  %v7435 = vpack.c.b16 %v5535, %v5534
  %v7436 = vpack.c.b16 %v5537, %v5536
  %v7437 = vpack.c.b16 %v5539, %v5538
  %v7438 = vpack.c.b16 %v5541, %v5540
  %v7439 = vpack.c.b16 %v5543, %v5542
  %v7440 = vpack.c.b16 %v5545, %v5544
  %v7441 = vpack.c.b16 %v5547, %v5546
  %v7442 = vpack.c.b16 %v5549, %v5548
  %v7443 = vpack.c.b16 %v5551, %v5550
  %v7444 = vpack.c.b16 %v5553, %v5552
  %v7445 = vpack.c.b16 %v5555, %v5554
  %v7446 = vpack.c.b16 %v5557, %v5556
  %v7447 = vpack.c.b16 %v5559, %v5558
  %v7448 = vpack.c.b16 %v5561, %v5560
  %v7449 = vpack.c.b16 %v5563, %v5562
  %v7450 = vpack.c.b16 %v5565, %v5564
  %v7451 = vpack.c.b16 %v5567, %v5566
  %v7452 = vpack.c.b16 %v5569, %v5568
  %v7453 = vpack.c.b16 %v5571, %v5570
  %v7454 = vpack.c.b16 %v5573, %v5572
  %v7455 = vpack.c.b16 %v5575, %v5574
  %v7456 = vpack.c.b16 %v5577, %v5576
  %v7457 = vpack.c.b16 %v5579, %v5578
  %v7458 = vpack.c.b16 %v5581, %v5580
  %v7459 = vpack.c.b16 %v5583, %v5582
  %v7460 = vpack.c.b16 %v5585, %v5584
  %v7461 = vpack.c.b16 %v5587, %v5586
  %v7462 = vpack.c.b16 %v5589, %v5588
  %v7463 = vpack.c.b16 %v5591, %v5590
  %v7464 = vpack.c.b16 %v5593, %v5592
  %v7465 = vpack.c.b16 %v5595, %v5594
  %v7466 = vpack.c.b16 %v5597, %v5596
  %v7467 = vpack.c.b16 %v5599, %v5598
  %v7468 = vpack.c.b16 %v5601, %v5600
  %v7469 = vpack.c.b16 %v5603, %v5602
  %v7470 = vpack.c.b16 %v5605, %v5604
  %v7471 = vpack.c.b16 %v5607, %v5606
  %v7472 = vpack.c.b16 %v5609, %v5608
  %v7473 = vpack.c.b16 %v5611, %v5610
  %v7474 = vpack.c.b16 %v5613, %v5612
  %v7475 = vpack.c.b16 %v5615, %v5614
  %v7476 = vpack.c.b16 %v5617, %v5616
  %v7477 = vpack.c.b16 %v5619, %v5618
  %v7478 = vpack.c.b16 %v5621, %v5620
  %v7479 = vpack.c.b16 %v5623, %v5622
  %v7480 = vpack.c.b16 %v5625, %v5624
  %v7481 = vpack.c.b16 %v5627, %v5626
  %v7482 = vpack.c.b16 %v5629, %v5628
  %v7483 = vpack.c.b16 %v5631, %v5630
  %v7484 = vpack.c.b16 %v5633, %v5632
  %v7485 = vpack.c.b16 %v5635, %v5634
  %v7486 = vpack.c.b16 %v5637, %v5636
  %v7487 = vpack.c.b16 %v5639, %v5638
  %v7488 = vpack.c.b16 %v5641, %v5640
  %v7489 = vpack.c.b16 %v5643, %v5642
  %v7490 = vpack.c.b16 %v5645, %v5644
  %v7491 = vpack.c.b16 %v5647, %v5646
  %v7492 = vpack.c.b16 %v5649, %v5648
  %v7493 = vpack.c.b16 %v5651, %v5650
  %v7494 = vpack.c.b16 %v5653, %v5652
  %v7495 = vpack.c.b16 %v5655, %v5654
  %v7496 = vpack.c.b16 %v5657, %v5656
  %v7497 = vpack.c.b16 %v5659, %v5658
  %v7498 = vpack.c.b16 %v5661, %v5660
  %v7499 = vpack.c.b16 %v5663, %v5662
  %v7500 = vpack.c.b16 %v5665, %v5664
  %v7501 = vpack.c.b16 %v5667, %v5666
  %v7502 = vpack.c.b16 %v5669, %v5668
  %v7503 = vpack.c.b16 %v5671, %v5670
  %v7504 = vpack.c.b16 %v5673, %v5672
  %v7505 = vpack.c.b16 %v5675, %v5674
  %v7506 = vpack.c.b16 %v5677, %v5676
  %v7507 = vpack.c.b16 %v5679, %v5678
  %v7508 = vpack.c.b16 %v5681, %v5680
  %v7509 = vpack.c.b16 %v5683, %v5682
  %v7510 = vpack.c.b16 %v5685, %v5684
  %v7511 = vpack.c.b16 %v5687, %v5686
  %v7512 = vpack.c.b16 %v5689, %v5688
  %v7513 = vpack.c.b16 %v5691, %v5690
  %v7514 = vpack.c.b16 %v5693, %v5692
  %v7515 = vpack.c.b16 %v5695, %v5694
  %v7516 = vpack.c.b16 %v5697, %v5696
  %v7517 = vpack.c.b16 %v5699, %v5698
  %v7518 = vpack.c.b16 %v5701, %v5700
  %v7519 = vpack.c.b16 %v5703, %v5702
  %v7520 = vpack.c.b16 %v5705, %v5704
  %v7521 = vpack.c.b16 %v5707, %v5706
  %v7522 = vpack.c.b16 %v5709, %v5708
  %v7523 = vpack.c.b16 %v5711, %v5710
  %v7524 = vpack.c.b16 %v5713, %v5712
  %v7525 = vpack.c.b16 %v5715, %v5714
  %v7526 = vpack.c.b16 %v5717, %v5716
  %v7527 = vpack.c.b16 %v5719, %v5718
  %v7528 = vpack.c.b16 %v5721, %v5720
  %v7529 = vpack.c.b16 %v5723, %v5722
  %v7530 = vpack.c.b16 %v5725, %v5724
  %v7531 = vpack.c.b16 %v5727, %v5726
  %v7532 = vpack.c.b16 %v5729, %v5728
  %v7533 = vpack.c.b16 %v5731, %v5730
  %v7534 = vpack.c.b16 %v5733, %v5732
  %v7535 = vpack.c.b16 %v5735, %v5734
  %v7536 = vpack.c.b16 %v5737, %v5736
  %v7537 = vpack.c.b16 %v5739, %v5738
  %v7538 = vpack.c.b16 %v5741, %v5740
  %v7539 = vpack.c.b16 %v5743, %v5742
  %v7540 = vpack.c.b16 %v5745, %v5744
  %v7541 = vpack.c.b16 %v5747, %v5746
  %v7542 = vpack.c.b16 %v5749, %v5748
  %v7543 = vpack.c.b16 %v5751, %v5750
  %v7544 = vpack.c.b16 %v5753, %v5752
  %v7545 = vpack.c.b16 %v5755, %v5754
  %v7546 = vpack.c.b16 %v5757, %v5756
  %v7547 = vpack.c.b16 %v5759, %v5758
  %v7548 = vpack.c.b16 %v5761, %v5760
  %v7549 = vpack.c.b16 %v5763, %v5762
  %v7550 = vpack.c.b16 %v5765, %v5764
  %v7551 = vpack.c.b16 %v5767, %v5766
  %v7552 = vpack.c.b16 %v5769, %v5768
  %v7553 = vpack.c.b16 %v5771, %v5770
  %v7554 = vpack.c.b16 %v5773, %v5772
  %v7555 = vpack.c.b16 %v5775, %v5774
  %v7556 = vpack.c.b16 %v5777, %v5776
  %v7557 = vpack.c.b16 %v5779, %v5778
  %v7558 = vpack.c.b16 %v5781, %v5780
  %v7559 = vpack.c.b16 %v5783, %v5782
  %v7560 = vpack.c.b16 %v5785, %v5784
  %v7561 = vpack.c.b16 %v5787, %v5786
  %v7562 = vpack.c.b16 %v5789, %v5788
  %v7563 = vpack.c.b16 %v5791, %v5790
  %v7564 = vpack.c.b16 %v5793, %v5792
  %v7565 = vpack.c.b16 %v5795, %v5794
  %v7566 = vpack.c.b16 %v5797, %v5796
  %v7567 = vpack.c.b16 %v5799, %v5798
  %v7568 = vpack.c.b16 %v5801, %v5800
  %v7569 = vpack.c.b16 %v5803, %v5802
  %v7570 = vpack.c.b16 %v5805, %v5804
  %v7571 = vpack.c.b16 %v5807, %v5806
  %v7572 = vpack.c.b16 %v5809, %v5808
  %v7573 = vpack.c.b16 %v5811, %v5810
  %v7574 = vpack.c.b16 %v5813, %v5812
  %v7575 = vpack.c.b16 %v5815, %v5814
  %v7576 = vpack.c.b16 %v5817, %v5816
  %v7577 = vpack.c.b16 %v5819, %v5818
  %v7578 = vpack.c.b16 %v5821, %v5820
  %v7579 = vpack.c.b16 %v5823, %v5822
  %v7580 = vpack.c.b16 %v5825, %v5824
  %v7581 = vpack.c.b16 %v5827, %v5826
  %v7582 = vpack.c.b16 %v5829, %v5828
  %v7583 = vpack.c.b16 %v5831, %v5830
  %v7584 = vpack.c.b16 %v5833, %v5832
  %v7585 = vpack.c.b16 %v5835, %v5834
  %v7586 = vpack.c.b16 %v5837, %v5836
  %v7587 = vpack.c.b16 %v5839, %v5838
  %v7588 = vpack.c.b16 %v5841, %v5840
  %v7589 = vpack.c.b16 %v5843, %v5842
  %v7590 = vpack.c.b16 %v5845, %v5844
  %v7591 = vpack.c.b16 %v5847, %v5846
  %v7592 = vpack.c.b16 %v5849, %v5848
  %v7593 = vpack.c.b16 %v5851, %v5850
  %v7594 = vpack.c.b16 %v5853, %v5852
  %v7595 = vpack.c.b16 %v5855, %v5854
  %v7596 = vpack.c.b16 %v5857, %v5856
  %v7597 = vpack.c.b16 %v5859, %v5858
  %v7598 = vpack.c.b16 %v5861, %v5860
  %v7599 = vpack.c.b16 %v5863, %v5862
  %v7600 = vpack.c.b16 %v5865, %v5864
  %v7601 = vpack.c.b16 %v5867, %v5866
  %v7602 = vpack.c.b16 %v5869, %v5868
  %v7603 = vpack.c.b16 %v5871, %v5870
  %v7604 = vpack.c.b16 %v5873, %v5872
  %v7605 = vpack.c.b16 %v5875, %v5874
  %v7606 = vpack.c.b16 %v5877, %v5876
  %v7607 = vpack.c.b16 %v5879, %v5878
  %v7608 = vpack.c.b16 %v5881, %v5880
  %v7609 = vpack.c.b16 %v5883, %v5882
  %v7610 = vpack.c.b16 %v5885, %v5884
  %v7611 = vpack.c.b16 %v5887, %v5886
  %v7612 = vpack.c.b16 %v5889, %v5888
  %v7613 = vpack.c.b16 %v5891, %v5890
  %v7614 = vpack.c.b16 %v5893, %v5892
  %v7615 = vpack.c.b16 %v5895, %v5894
  %v7616 = vpack.c.b16 %v5897, %v5896
  %v7617 = vpack.c.b16 %v5899, %v5898
  %v7618 = vpack.c.b16 %v5901, %v5900
  %v7619 = vpack.c.b16 %v5903, %v5902
  %v7620 = vpack.c.b16 %v5905, %v5904
  %v7621 = vpack.c.b16 %v5907, %v5906
  %v7622 = vpack.c.b16 %v5909, %v5908
  %v7623 = vpack.c.b16 %v5911, %v5910
  %v7624 = vpack.c.b16 %v5913, %v5912
  %v7625 = vpack.c.b16 %v5915, %v5914
  %v7626 = vpack.c.b16 %v5917, %v5916
  %v7627 = vpack.c.b16 %v5919, %v5918
  %v7628 = vpack.c.b16 %v5921, %v5920
  %v7629 = vpack.c.b16 %v5923, %v5922
  %v7630 = vpack.c.b16 %v5925, %v5924
  %v7631 = vpack.c.b16 %v5927, %v5926
  %v7632 = vpack.c.b16 %v5929, %v5928
  %v7633 = vpack.c.b16 %v5931, %v5930
  %v7634 = vpack.c.b16 %v5933, %v5932
  %v7635 = vpack.c.b16 %v5935, %v5934
  %v7636 = vpack.c.b16 %v5937, %v5936
  %v7637 = vpack.c.b16 %v5939, %v5938
  %v7638 = vpack.c.b16 %v5941, %v5940
  %v7639 = vpack.c.b16 %v5943, %v5942
  %v7640 = vpack.c.b16 %v5945, %v5944
  %v7641 = vpack.c.b16 %v5947, %v5946
  %v7642 = vpack.c.b16 %v5949, %v5948
  %v7643 = vpack.c.b16 %v5951, %v5950
  %v7644 = vpack.c.b16 %v5953, %v5952
  %v7645 = vpack.c.b16 %v5955, %v5954
  %v7646 = vpack.c.b16 %v5957, %v5956
  %v7647 = vpack.c.b16 %v5959, %v5958
  %v7648 = vpack.c.b16 %v5961, %v5960
  %v7649 = vpack.c.b16 %v5963, %v5962
  %v7650 = vpack.c.b16 %v5965, %v5964
  %v7651 = vpack.c.b16 %v5967, %v5966
  %v7652 = vpack.c.b16 %v5969, %v5968
  %v7653 = vpack.c.b16 %v5971, %v5970
  %v7654 = vpack.c.b16 %v5973, %v5972
  %v7655 = vpack.c.b16 %v5975, %v5974
  %v7656 = vpack.c.b16 %v5977, %v5976
  %v7657 = vpack.c.b16 %v5979, %v5978
  %v7658 = vpack.c.b16 %v5981, %v5980
  %v7659 = vpack.c.b16 %v5983, %v5982
  %v7660 = vpack.c.b16 %v5985, %v5984
  %v7661 = vpack.c.b16 %v5987, %v5986
  %v7662 = vpack.c.b16 %v5989, %v5988
  %v7663 = vpack.c.b16 %v5991, %v5990
  %v7664 = vpack.c.b16 %v5993, %v5992
  %v7665 = vpack.c.b16 %v5995, %v5994
  %v7666 = vpack.c.b16 %v5997, %v5996
  %v7667 = vpack.c.b16 %v5999, %v5998
  %v7668 = vpack.c.b16 %v6001, %v6000
  %v7669 = vpack.c.b16 %v6003, %v6002
  %v7670 = vpack.c.b16 %v6005, %v6004
  %v7671 = vpack.c.b16 %v6007, %v6006
  %v7672 = vpack.c.b16 %v6009, %v6008
  %v7673 = vpack.c.b16 %v6011, %v6010
  %v7674 = vpack.c.b16 %v6013, %v6012
  %v7675 = vpack.c.b16 %v6015, %v6014
  %v7676 = vpack.c.b16 %v6017, %v6016
  %v7677 = vpack.c.b16 %v6019, %v6018
  %v7678 = vpack.c.b16 %v6021, %v6020
  %v7679 = vpack.c.b16 %v6023, %v6022
  %v7680 = vpack.c.b16 %v6025, %v6024
  %v7681 = vpack.c.b16 %v6027, %v6026
  %v7682 = vpack.c.b16 %v6029, %v6028
  %v7683 = vpack.c.b16 %v6031, %v6030
  %v7684 = vpack.c.b16 %v6033, %v6032
  %v7685 = vpack.c.b16 %v6035, %v6034
  %v7686 = vpack.c.b16 %v6037, %v6036
  %v7687 = vpack.c.b16 %v6039, %v6038
  %v7688 = vpack.c.b16 %v6041, %v6040
  %v7689 = vpack.c.b16 %v6043, %v6042
  %v7690 = vpack.c.b16 %v6045, %v6044
  %v7691 = vpack.c.b16 %v6047, %v6046
  %v7692 = vpack.c.b16 %v6049, %v6048
  %v7693 = vpack.c.b16 %v6051, %v6050
  %v7694 = vpack.c.b16 %v6053, %v6052
  %v7695 = vpack.c.b16 %v6055, %v6054
  %v7696 = vpack.c.b16 %v6057, %v6056
  %v7697 = vpack.c.b16 %v6059, %v6058
  %v7698 = vpack.c.b16 %v6061, %v6060
  %v7699 = vpack.c.b16 %v6063, %v6062
  %v7700 = vpack.c.b16 %v6065, %v6064
  %v7701 = vpack.c.b16 %v6067, %v6066
  %v7702 = vpack.c.b16 %v6069, %v6068
  %v7703 = vpack.c.b16 %v6071, %v6070
  %v7704 = vpack.c.b16 %v6073, %v6072
  %v7705 = vpack.c.b16 %v6075, %v6074
  %v7706 = vpack.c.b16 %v6077, %v6076
  %v7707 = vpack.c.b16 %v6079, %v6078
  %v7708 = vpack.c.b16 %v6081, %v6080
  %v7709 = vpack.c.b16 %v6083, %v6082
  %v7710 = vpack.c.b16 %v6085, %v6084
  %v7711 = vpack.c.b16 %v6087, %v6086
  %v7712 = vpack.c.b16 %v6089, %v6088
  %v7713 = vpack.c.b16 %v6091, %v6090
  %v7714 = vpack.c.b16 %v6093, %v6092
  %v7715 = vpack.c.b16 %v6095, %v6094
  %v7716 = vpack.c.b16 %v6097, %v6096
  %v7717 = vpack.c.b16 %v6099, %v6098
  %v7718 = vpack.c.b16 %v6101, %v6100
  %v7719 = vpack.c.b16 %v6103, %v6102
  %v7720 = vpack.c.b16 %v6105, %v6104
  %v7721 = vpack.c.b16 %v6107, %v6106
  %v7722 = vpack.c.b16 %v6109, %v6108
  %v7723 = vpack.c.b16 %v6111, %v6110
  %v7724 = vpack.c.b16 %v6113, %v6112
  %v7725 = vpack.c.b16 %v6115, %v6114
  %v7726 = vpack.c.b16 %v6117, %v6116
  %v7727 = vpack.c.b16 %v6119, %v6118
  %v7728 = vpack.c.b16 %v6121, %v6120
  %v7729 = vpack.c.b16 %v6123, %v6122
  %v7730 = vpack.c.b16 %v6125, %v6124
  %v7731 = vpack.c.b16 %v6127, %v6126
  %v7732 = vpack.c.b16 %v6129, %v6128
  %v7733 = vpack.c.b16 %v6131, %v6130
  %v7734 = vpack.c.b16 %v6133, %v6132
  %v7735 = vpack.c.b16 %v6135, %v6134
  %v7736 = vpack.c.b16 %v6137, %v6136
  %v7737 = vpack.c.b16 %v6139, %v6138
  %v7738 = vpack.c.b16 %v6141, %v6140
  %v7739 = vpack.c.b16 %v6143, %v6142
  %v7740 = vpack.c.b16 %v6145, %v6144
  %v7741 = vpack.c.b16 %v6147, %v6146
  %v7742 = vpack.c.b16 %v6149, %v6148
  %v7743 = vpack.c.b16 %v6151, %v6150
  %v7744 = vpack.c.b16 %v6153, %v6152
  %v7745 = vpack.c.b16 %v6155, %v6154
  %v7746 = vpack.c.b16 %v6157, %v6156
  %v7747 = vpack.c.b16 %v6159, %v6158
  %v7748 = vpack.c.b16 %v6161, %v6160
  %v7749 = vpack.c.b16 %v6163, %v6162
  %v7750 = vpack.c.b16 %v6165, %v6164
  %v7751 = vpack.c.b16 %v6167, %v6166
  %v7752 = vpack.c.b16 %v6169, %v6168
  %v7753 = vpack.c.b16 %v6171, %v6170
  %v7754 = vpack.c.b16 %v6173, %v6172
  %v7755 = vpack.c.b16 %v6175, %v6174
  %v7756 = vpack.c.b16 %v6177, %v6176
  %v7757 = vpack.c.b16 %v6179, %v6178
  %v7758 = vpack.c.b16 %v6181, %v6180
  %v7759 = vpack.c.b16 %v6183, %v6182
  %v7760 = vpack.c.b16 %v6185, %v6184
  %v7761 = vpack.c.b16 %v6187, %v6186
  %v7762 = vpack.c.b16 %v6189, %v6188
  %v7763 = vpack.c.b16 %v6191, %v6190
  %v7764 = vpack.c.b16 %v6193, %v6192
  %v7765 = vpack.c.b16 %v6195, %v6194
  %v7766 = vpack.c.b16 %v6197, %v6196
  %v7767 = vpack.c.b16 %v6199, %v6198
  %v7768 = vpack.c.b16 %v6201, %v6200
  %v7769 = vpack.c.b16 %v6203, %v6202
  %v7770 = vpack.c.b16 %v6205, %v6204
  %v7771 = vpack.c.b16 %v6207, %v6206
  %v7772 = vpack.c.b16 %v6209, %v6208
  %v7773 = vpack.c.b16 %v6211, %v6210
  %v7774 = vpack.c.b16 %v6213, %v6212
  %v7775 = vpack.c.b16 %v6215, %v6214
  %v7776 = vpack.c.b16 %v6217, %v6216
  %v7777 = vpack.c.b16 %v6219, %v6218
  %v7778 = vpack.c.b16 %v6221, %v6220
  %v7779 = vpack.c.b16 %v6223, %v6222
  %v7780 = vpack.c.b16 %v6225, %v6224
  %v7781 = vpack.c.b16 %v6227, %v6226
  %v7782 = vpack.c.b16 %v6229, %v6228
  %v7783 = vpack.c.b16 %v6231, %v6230
  %v7784 = vpack.c.b16 %v6233, %v6232
  %v7785 = vpack.c.b16 %v6235, %v6234
  %v7786 = vpack.c.b16 %v6237, %v6236
  %v7787 = vpack.c.b16 %v6239, %v6238
  %v7788 = vpack.c.b16 %v6241, %v6240
  %v7789 = vpack.c.b16 %v6243, %v6242
  %v7790 = vpack.c.b16 %v6245, %v6244
  %v7791 = vpack.c.b16 %v6247, %v6246
  %v7792 = vpack.c.b16 %v6249, %v6248
  %v7793 = vpack.c.b16 %v6251, %v6250
  %v7794 = vpack.c.b16 %v6253, %v6252
  %v7795 = vpack.c.b16 %v6255, %v6254
  %v7796 = vpack.c.b16 %v6257, %v6256
  %v7797 = vpack.c.b16 %v6259, %v6258
  %v7798 = vpack.c.b16 %v6261, %v6260
  %v7799 = vpack.c.b16 %v6263, %v6262
  %v7800 = vpack.c.b16 %v6265, %v6264
  %v7801 = vpack.c.b16 %v6267, %v6266
  %v7802 = vpack.c.b16 %v6269, %v6268
  %v7803 = vpack.c.b16 %v6271, %v6270
  %v7804 = vpack.c.b16 %v6273, %v6272
  %v7805 = vpack.c.b16 %v6275, %v6274
  %v7806 = vpack.c.b16 %v6277, %v6276
  %v7807 = vpack.c.b16 %v6279, %v6278
  %v7808 = vpack.c.b16 %v6281, %v6280
  %v7809 = vpack.c.b16 %v6283, %v6282
  %v7810 = vpack.c.b16 %v6285, %v6284
  %v7811 = vpack.c.b16 %v6287, %v6286
  %v7812 = vpack.c.b16 %v6289, %v6288
  %v7813 = vpack.c.b16 %v6291, %v6290
  %v7814 = vpack.c.b16 %v6293, %v6292
  %v7815 = vpack.c.b16 %v6295, %v6294
  %v7816 = vpack.c.b16 %v6297, %v6296
  %v7817 = vpack.c.b16 %v6299, %v6298
  %v7818 = vpack.c.b16 %v6301, %v6300
  %v7819 = vpack.c.b16 %v6303, %v6302
  %v7820 = vpack.c.b16 %v6305, %v6304
  %v7821 = vpack.c.b16 %v6307, %v6306
  %v7822 = vpack.c.b16 %v6309, %v6308
  %v7823 = vpack.c.b16 %v6311, %v6310
  %v7824 = vpack.c.b16 %v6313, %v6312
  %v7825 = vpack.c.b16 %v6315, %v6314
  %v7826 = vpack.c.b16 %v6317, %v6316
  %v7827 = vpack.c.b16 %v6319, %v6318
  %v7828 = vpack.c.b16 %v6321, %v6320
  %v7829 = vpack.c.b16 %v6323, %v6322
  %v7830 = vpack.c.b16 %v6325, %v6324
  %v7831 = vpack.c.b16 %v6327, %v6326
  %v7832 = vpack.c.b16 %v6329, %v6328
  %v7833 = vpack.c.b16 %v6331, %v6330
  %v7834 = vpack.c.b16 %v6333, %v6332
  %v7835 = vpack.c.b16 %v6335, %v6334
  %v7836 = vpack.c.b16 %v6337, %v6336
  %v7837 = vpack.c.b16 %v6339, %v6338
  %v7838 = vpack.c.b16 %v6341, %v6340
  %v7839 = vpack.c.b16 %v6343, %v6342
  %v7840 = vpack.c.b16 %v6345, %v6344
  %v7841 = vpack.c.b16 %v6347, %v6346
  %v7842 = vpack.c.b16 %v6349, %v6348
  %v7843 = vpack.c.b16 %v6351, %v6350
  %v7844 = vpack.c.b16 %v6353, %v6352
  %v7845 = vpack.c.b16 %v6355, %v6354
  %v7846 = vpack.c.b16 %v6357, %v6356
  %v7847 = vpack.c.b16 %v6359, %v6358
  %v7848 = vpack.c.b16 %v6361, %v6360
  %v7849 = vpack.c.b16 %v6363, %v6362
  %v7850 = vpack.c.b16 %v6365, %v6364
  %v7851 = vpack.c.b16 %v6367, %v6366
  %v7852 = vpack.c.b16 %v6369, %v6368
  %v7853 = vpack.c.b16 %v6371, %v6370
  %v7854 = vpack.c.b16 %v6373, %v6372
  %v7855 = vpack.c.b16 %v6375, %v6374
  %v7856 = vpack.c.b16 %v6377, %v6376
  %v7857 = vpack.c.b16 %v6379, %v6378
  %v7858 = vpack.c.b16 %v6381, %v6380
  %v7859 = vpack.c.b16 %v6383, %v6382
  %v7860 = vpack.c.b16 %v6385, %v6384
  %v7861 = vpack.c.b16 %v6387, %v6386
  %v7862 = vpack.c.b16 %v6389, %v6388
  %v7863 = vpack.c.b16 %v6391, %v6390
  %v7864 = vpack.c.b16 %v6393, %v6392
  %v7865 = vpack.c.b16 %v6395, %v6394
  %v7866 = vpack.c.b16 %v6397, %v6396
  %v7867 = vpack.c.b16 %v6399, %v6398
  %v7868 = vpack.c.b16 %v6401, %v6400
  %v7869 = vpack.c.b16 %v6403, %v6402
  %v7870 = vpack.c.b16 %v6405, %v6404
  %v7871 = vpack.c.b16 %v6407, %v6406
  %v7872 = vpack.c.b16 %v6409, %v6408
  %v7873 = vpack.c.b16 %v6411, %v6410
  %v7874 = vpack.c.b16 %v6413, %v6412
  %v7875 = vpack.c.b16 %v6415, %v6414
  %v7876 = vpack.c.b16 %v6417, %v6416
  %v7877 = vpack.c.b16 %v6419, %v6418
  %v7878 = vpack.c.b16 %v6421, %v6420
  %v7879 = vpack.c.b16 %v6423, %v6422
  %v7880 = vpack.c.b16 %v6425, %v6424
  %v7881 = vpack.c.b16 %v6427, %v6426
  %v7882 = vpack.c.b16 %v6429, %v6428
  %v7883 = vpack.c.b16 %v6431, %v6430
  %v7884 = vpack.c.b16 %v6433, %v6432
  %v7885 = vpack.c.b16 %v6435, %v6434
  %v7886 = vpack.c.b16 %v6437, %v6436
  %v7887 = vpack.c.b16 %v6439, %v6438
  %v7888 = vpack.c.b16 %v6441, %v6440
  %v7889 = vpack.c.b16 %v6443, %v6442
  %v7890 = vpack.c.b16 %v6445, %v6444
  %v7891 = vpack.c.b16 %v6447, %v6446
  %v7892 = vpack.c.b16 %v6449, %v6448
  %v7893 = vpack.c.b16 %v6451, %v6450
  %v7894 = vpack.c.b16 %v6453, %v6452
  %v7895 = vpack.c.b16 %v6455, %v6454
  %v7896 = vpack.c.b16 %v6457, %v6456
  %v7897 = vpack.c.b16 %v6459, %v6458
  %v7898 = vpack.c.b16 %v6461, %v6460
  %v7899 = vpack.c.b16 %v6463, %v6462
  %v7900 = vpack.c.b16 %v6465, %v6464
  %v7901 = vpack.c.b16 %v6467, %v6466
  %v7902 = vpack.c.b16 %v6469, %v6468
  %v7903 = vpack.c.b16 %v6471, %v6470
  %v7904 = vpack.c.b16 %v6473, %v6472
  %v7905 = vpack.c.b16 %v6475, %v6474
  %v7906 = vpack.c.b16 %v6477, %v6476
  %v7907 = vpack.c.b16 %v6479, %v6478
  %v7908 = vpack.c.b16 %v6481, %v6480
  %v7909 = vpack.c.b16 %v6483, %v6482
  %v7910 = vpack.c.b16 %v6485, %v6484
  %v7911 = vpack.c.b16 %v6487, %v6486
  %v7912 = vpack.c.b16 %v6489, %v6488
  %v7913 = vpack.c.b16 %v6491, %v6490
  %v7914 = vpack.c.b16 %v6493, %v6492
  %v7915 = vpack.c.b16 %v6495, %v6494
  %v7916 = vpack.c.b16 %v6497, %v6496
  %v7917 = vpack.c.b16 %v6499, %v6498
  %v7918 = vpack.c.b16 %v6501, %v6500
  %v7919 = vpack.c.b16 %v6503, %v6502
  %v7920 = vpack.c.b16 %v6505, %v6504
  %v7921 = vpack.c.b16 %v6507, %v6506
  %v7922 = vpack.c.b16 %v6509, %v6508
  %v7923 = vpack.c.b16 %v6511, %v6510
  %v7924 = vpack.c.b16 %v6513, %v6512
  %v7925 = vpack.c.b16 %v6515, %v6514
  %v7926 = vpack.c.b16 %v6517, %v6516
  %v7927 = vpack.c.b16 %v6519, %v6518
  %v7928 = vpack.c.b16 %v6521, %v6520
  %v7929 = vpack.c.b16 %v6523, %v6522
  %v7930 = vpack.c.b16 %v6525, %v6524
  %v7931 = vpack.c.b16 %v6527, %v6526
  %v7932 = vpack.c.b16 %v6529, %v6528
  %v7933 = vpack.c.b16 %v6531, %v6530
  %v7934 = vpack.c.b16 %v6533, %v6532
  %v7935 = vpack.c.b16 %v6535, %v6534
  %v7936 = vpack.c.b16 %v6537, %v6536
  %v7937 = vpack.c.b16 %v6539, %v6538
  %v7938 = vpack.c.b16 %v6541, %v6540
  %v7939 = vpack.c.b16 %v6543, %v6542
  %v7940 = vpack.c.b16 %v6545, %v6544
  %v7941 = vpack.c.b16 %v6547, %v6546
  %v7942 = vpack.c.b16 %v6549, %v6548
  %v7943 = vpack.c.b16 %v6551, %v6550
  %v7944 = vpack.c.b16 %v6553, %v6552
  %v7945 = vpack.c.b16 %v6555, %v6554
  %v7946 = vpack.c.b16 %v6557, %v6556
  %v7947 = vpack.c.b16 %v6559, %v6558
  %v7948 = vpack.c.b16 %v6561, %v6560
  %v7949 = vpack.c.b16 %v6563, %v6562
  %v7950 = vpack.c.b16 %v6565, %v6564
  %v7951 = vpack.c.b16 %v6567, %v6566
  %v7952 = vpack.c.b16 %v6569, %v6568
  %v7953 = vpack.c.b16 %v6571, %v6570
  %v7954 = vpack.c.b16 %v6573, %v6572
  %v7955 = vpack.c.b16 %v6575, %v6574
  %v7956 = vpack.c.b16 %v6577, %v6576
  %v7957 = vpack.c.b16 %v6579, %v6578
  %v7958 = vpack.c.b16 %v6581, %v6580
  %v7959 = vpack.c.b16 %v6583, %v6582
  %v7960 = vpack.c.b16 %v6585, %v6584
  %v7961 = vpack.c.b16 %v6587, %v6586
  %v7962 = vpack.c.b16 %v6589, %v6588
  %v7963 = vpack.c.b16 %v6591, %v6590
  %v7964 = vpack.c.b16 %v6593, %v6592
  %v7965 = vpack.c.b16 %v6595, %v6594
  %v7966 = vpack.c.b16 %v6597, %v6596
  %v7967 = vpack.c.b16 %v6599, %v6598
  %v7968 = vpack.c.b16 %v6601, %v6600
  %v7969 = vpack.c.b16 %v6603, %v6602
  %v7970 = vpack.c.b16 %v6605, %v6604
  %v7971 = vpack.c.b16 %v6607, %v6606
  %v7972 = vpack.c.b16 %v6609, %v6608
  %v7973 = vpack.c.b16 %v6611, %v6610
  %v7974 = vpack.c.b16 %v6613, %v6612
  %v7975 = vpack.c.b16 %v6615, %v6614
  %v7976 = vpack.c.b16 %v6617, %v6616
  %v7977 = vpack.c.b16 %v6619, %v6618
  %v7978 = vpack.c.b16 %v6621, %v6620
  %v7979 = vpack.c.b16 %v6623, %v6622
  %v7980 = vpack.c.b16 %v6625, %v6624
  %v7981 = vpack.c.b16 %v6627, %v6626
  %v7982 = vpack.c.b16 %v6629, %v6628
  %v7983 = vpack.c.b16 %v6631, %v6630
  %v7984 = vpack.c.b16 %v6633, %v6632
  %v7985 = vpack.c.b16 %v6635, %v6634
  %v7986 = vpack.c.b16 %v6637, %v6636
  %v7987 = vpack.c.b16 %v6639, %v6638
  %v7988 = vpack.c.b16 %v6641, %v6640
  %v7989 = vpack.c.b16 %v6643, %v6642
  %v7990 = vpack.c.b16 %v6645, %v6644
  %v7991 = vpack.c.b16 %v6647, %v6646
  %v7992 = vpack.c.b16 %v6649, %v6648
  %v7993 = vpack.c.b16 %v6651, %v6650
  %v7994 = vpack.c.b16 %v6653, %v6652
  %v7995 = vpack.c.b16 %v6655, %v6654
  %v7996 = vpack.c.b16 %v6657, %v6656
  %v7997 = vpack.c.b16 %v6659, %v6658
  %v7998 = vpack.c.b16 %v6661, %v6660
  %v7999 = vpack.c.b16 %v6663, %v6662
  %v8000 = vpack.c.b16 %v6665, %v6664
  %v8001 = vpack.c.b16 %v6667, %v6666
  %v8002 = vpack.c.b16 %v6669, %v6668
  %v8003 = vpack.c.b16 %v6671, %v6670
  %v8004 = vpack.c.b16 %v6673, %v6672
  %v8005 = vpack.c.b16 %v6675, %v6674
  %v8006 = vpack.c.b16 %v6677, %v6676
  %v8007 = vpack.c.b16 %v6679, %v6678
  %v8008 = vpack.c.b16 %v6681, %v6680
  %v8009 = vpack.c.b16 %v6683, %v6682
  %v8010 = vpack.c.b16 %v6685, %v6684
  %v8011 = vpack.c.b16 %v6687, %v6686
  %v8012 = vpack.c.b16 %v6689, %v6688
  %v8013 = vpack.c.b16 %v6691, %v6690
  %v8014 = vpack.c.b16 %v6693, %v6692
  %v8015 = vpack.c.b16 %v6695, %v6694
  %v8016 = vpack.c.b16 %v6697, %v6696
  %v8017 = vpack.c.b16 %v6699, %v6698
  %v8018 = vpack.c.b16 %v6701, %v6700
  %v8019 = vpack.c.b16 %v6703, %v6702
  %v8020 = vpack.c.b16 %v6705, %v6704
  %v8021 = vpack.c.b16 %v6707, %v6706
  %v8022 = vpack.c.b16 %v6709, %v6708
  %v8023 = vpack.c.b16 %v6711, %v6710
  %v8024 = vpack.c.b16 %v6713, %v6712
  %v8025 = vpack.c.b16 %v6715, %v6714
  %v8026 = vpack.c.b16 %v6717, %v6716
  %v8027 = vpack.c.b16 %v6719, %v6718
  %v8028 = vpack.c.b16 %v6721, %v6720
  %v8029 = vpack.c.b16 %v6723, %v6722
  %v8030 = vpack.c.b16 %v6725, %v6724
  %v8031 = vpack.c.b16 %v6727, %v6726
  %v8032 = vpack.c.b16 %v6729, %v6728
  %v8033 = vpack.c.b16 %v6731, %v6730
  %v8034 = vpack.c.b16 %v6733, %v6732
  %v8035 = vpack.c.b16 %v6735, %v6734
  %v8036 = vpack.c.b16 %v6737, %v6736
  %v8037 = vpack.c.b16 %v6739, %v6738
  %v8038 = vpack.c.b16 %v6741, %v6740
  %v8039 = vpack.c.b16 %v6743, %v6742
  %v8040 = vpack.c.b16 %v6745, %v6744
  %v8041 = vpack.c.b16 %v6747, %v6746
  %v8042 = vpack.c.b16 %v6749, %v6748
  %v8043 = vpack.c.b16 %v6751, %v6750
  %v8044 = vpack.c.b16 %v6753, %v6752
  %v8045 = vpack.c.b16 %v6755, %v6754
  %v8046 = vpack.c.b16 %v6757, %v6756
  %v8047 = vpack.c.b16 %v6759, %v6758
  %v8048 = vpack.c.b16 %v6761, %v6760
  %v8049 = vpack.c.b16 %v6763, %v6762
  %v8050 = vpack.c.b16 %v6765, %v6764
  %v8051 = vpack.c.b16 %v6767, %v6766
  %v8052 = vpack.c.b16 %v6769, %v6768
  %v8053 = vpack.c.b16 %v6771, %v6770
  %v8054 = vpack.c.b16 %v6773, %v6772
  %v8055 = vpack.c.b16 %v6775, %v6774
  %v8056 = vpack.c.b16 %v6777, %v6776
  %v8057 = vpack.c.b16 %v6779, %v6778
  %v8058 = vpack.c.b16 %v6781, %v6780
  %v8059 = vpack.c.b16 %v6783, %v6782
  %v8060 = vpack.c.b16 %v6785, %v6784
  %v8061 = vpack.c.b16 %v6787, %v6786
  %v8062 = vpack.c.b16 %v6789, %v6788
  %v8063 = vpack.c.b16 %v6791, %v6790
  %v8064 = vpack.c.b16 %v6793, %v6792
  %v8065 = vpack.c.b16 %v6795, %v6794
  %v8066 = vpack.c.b16 %v6797, %v6796
  %v8067 = vpack.c.b16 %v6799, %v6798
  %v8068 = vpack.c.b16 %v6801, %v6800
  %v8069 = vpack.c.b16 %v6803, %v6802
  %v8070 = vpack.c.b16 %v6805, %v6804
  %v8071 = vpack.c.b16 %v6807, %v6806
  %v8072 = vpack.c.b16 %v6809, %v6808
  %v8073 = vpack.c.b16 %v6811, %v6810
  %v8074 = vpack.c.b16 %v6813, %v6812
  %v8075 = vpack.c.b16 %v6815, %v6814
  %v8076 = vpack.c.b16 %v6817, %v6816
  %v8077 = vpack.c.b16 %v6819, %v6818
  %v8078 = vpack.c.b16 %v6821, %v6820
  %v8079 = vpack.c.b16 %v6823, %v6822
  %v8080 = vpack.c.b16 %v6825, %v6824
  %v8081 = vpack.c.b16 %v6827, %v6826
  %v8082 = vpack.c.b16 %v6829, %v6828
  %v8083 = vpack.c.b16 %v6831, %v6830
  %v8084 = vpack.c.b16 %v6833, %v6832
  %v8085 = vpack.c.b16 %v6835, %v6834
  %v8086 = vpack.c.b16 %v6837, %v6836
  %v8087 = vpack.c.b16 %v6839, %v6838
  %v8088 = vpack.c.b16 %v6841, %v6840
  %v8089 = vpack.c.b16 %v6843, %v6842
  %v8090 = vpack.c.b16 %v6845, %v6844
  %v8091 = vpack.c.b16 %v6847, %v6846
  %v8092 = vpack.c.b16 %v6849, %v6848
  %v8093 = vpack.c.b16 %v6851, %v6850
  %v8094 = vpack.c.b16 %v6853, %v6852
  %v8095 = vpack.c.b16 %v6855, %v6854
  %v8096 = vpack.c.b16 %v6857, %v6856
  %v8097 = vpack.c.b16 %v6859, %v6858
  %v8098 = vpack.c.b16 %v6861, %v6860
  %v8099 = vpack.c.b16 %v6863, %v6862
  %v8100 = vpack.c.b16 %v6865, %v6864
  %v8101 = vpack.c.b16 %v6867, %v6866
  %v8102 = vpack.c.b16 %v6869, %v6868
  %v8103 = vpack.c.b16 %v6871, %v6870
  %v8104 = vpack.c.b16 %v6873, %v6872
  %v8105 = vpack.c.b16 %v6875, %v6874
  %v8106 = vpack.c.b16 %v6877, %v6876
  %v8107 = vpack.c.b16 %v6879, %v6878
  %v8108 = vpack.c.b16 %v6881, %v6880
  %v8109 = vpack.c.b16 %v6883, %v6882
  %v8110 = vpack.c.b16 %v6885, %v6884
  %v8111 = vpack.c.b16 %v6887, %v6886
  %v8112 = vpack.c.b16 %v6889, %v6888
  %v8113 = vpack.c.b16 %v6891, %v6890
  %v8114 = vpack.c.b16 %v6893, %v6892
  %v8115 = vpack.c.b16 %v6895, %v6894
  %v8116 = vpack.c.b16 %v6897, %v6896
  %v8117 = vpack.c.b16 %v6899, %v6898
  %v8118 = vpack.c.b16 %v6901, %v6900
  %v8119 = vpack.c.b16 %v6903, %v6902
  %v8120 = vpack.c.b16 %v6905, %v6904
  %v8121 = vpack.c.b16 %v6907, %v6906
  %v8122 = vpack.c.b16 %v6909, %v6908
  %v8123 = vpack.c.b16 %v6911, %v6910
  %v8124 = vpack.c.b16 %v6913, %v6912
  %v8125 = vpack.c.b16 %v6915, %v6914
  %v8126 = vpack.c.b16 %v6917, %v6916
  %v8127 = vpack.c.b16 %v6919, %v6918
  %v8128 = vpack.c.b16 %v6921, %v6920
  %v8129 = vpack.c.b16 %v6923, %v6922
  %v8130 = vpack.c.b16 %v6925, %v6924
  %v8131 = vpack.c.b16 %v6927, %v6926
  %v8132 = vpack.c.b16 %v6929, %v6928
  %v8133 = vpack.c.b16 %v6931, %v6930
  %v8134 = vpack.c.b16 %v6933, %v6932
  %v8135 = vpack.c.b16 %v6935, %v6934
  %v8136 = vpack.c.b16 %v6937, %v6936
  %v8137 = vpack.c.b16 %v6939, %v6938
  %v8138 = vpack.c.b16 %v6941, %v6940
  %v8139 = vpack.c.b16 %v6943, %v6942
  %v8140 = vpack.c.b16 %v6945, %v6944
  %v8141 = vpack.c.b16 %v6947, %v6946
  %v8142 = vpack.c.b16 %v6949, %v6948
  %v8143 = vpack.c.b16 %v6951, %v6950
  %v8144 = vpack.c.b16 %v6953, %v6952
  %v8145 = vpack.c.b16 %v6955, %v6954
  %v8146 = vpack.c.b16 %v6957, %v6956
  %v8147 = vpack.c.b16 %v6959, %v6958
  %v8148 = vpack.c.b16 %v6961, %v6960
  %v8149 = vpack.c.b16 %v6963, %v6962
  %v8150 = vpack.c.b16 %v6965, %v6964
  %v8151 = vpack.c.b16 %v6967, %v6966
  %v8152 = vpack.c.b16 %v6969, %v6968
  %v8153 = vpack.c.b16 %v6971, %v6970
  %v8154 = vpack.c.b16 %v6973, %v6972
  %v8155 = vpack.c.b16 %v6975, %v6974
  %v8156 = vpack.c.b16 %v6977, %v6976
  %v8157 = vpack.c.b16 %v6979, %v6978
  %v8158 = vpack.c.b16 %v6981, %v6980
  %v8159 = vpack.c.b16 %v6983, %v6982
  %v8160 = vpack.c.b16 %v6985, %v6984
  %v8161 = vpack.c.b16 %v6987, %v6986
  %v8162 = vpack.c.b16 %v6989, %v6988
  %v8163 = vpack.c.b16 %v6991, %v6990
  %v8164 = vpack.c.b16 %v6993, %v6992
  %v8165 = vpack.c.b16 %v6995, %v6994
  %v8166 = vpack.c.b16 %v6997, %v6996
  %v8167 = vpack.c.b16 %v6999, %v6998
  %v8168 = vpack.c.b16 %v7001, %v7000
  %v8169 = vpack.c.b16 %v7003, %v7002
  %v8170 = vpack.c.b16 %v7005, %v7004
  %v8171 = vpack.c.b16 %v7007, %v7006
  %v8172 = vpack.c.b16 %v7009, %v7008
  %v8173 = vpack.c.b16 %v7011, %v7010
  %v8174 = vpack.c.b16 %v7013, %v7012
  %v8175 = vpack.c.b16 %v7015, %v7014
  %v8176 = vpack.c.b16 %v7017, %v7016
  %v8177 = vpack.c.b16 %v7019, %v7018
  %v8178 = vpack.c.b16 %v7021, %v7020
  %v8179 = vpack.c.b16 %v7023, %v7022
  %v8180 = vpack.c.b16 %v7025, %v7024
  %v8181 = vpack.c.b16 %v7027, %v7026
  %v8182 = vpack.c.b16 %v7029, %v7028
  %v8183 = vpack.c.b16 %v7031, %v7030
  %v8184 = vpack.c.b16 %v7033, %v7032
  %v8185 = vpack.c.b16 %v7035, %v7034
  %v8186 = vpack.c.b16 %v7037, %v7036
  %v8187 = vpack.c.b16 %v7039, %v7038
  %v8188 = vpack.c.b16 %v7041, %v7040
  %v8189 = vpack.c.b16 %v7043, %v7042
  %v8190 = vpack.c.b16 %v7045, %v7044
  %v8191 = vpack.c.b16 %v7047, %v7046
  %v8192 = vpack.c.b16 %v7049, %v7048
  %v8193 = vpack.c.b16 %v7051, %v7050
  %v8194 = vpack.c.b16 %v7053, %v7052
  %v8195 = vpack.c.b16 %v7055, %v7054
  %v8196 = vpack.c.b16 %v7057, %v7056
  %v8197 = vpack.c.b16 %v7059, %v7058
  %v8198 = vpack.c.b16 %v7061, %v7060
  %v8199 = vpack.c.b16 %v7063, %v7062
  %v8200 = vpack.c.b16 %v7065, %v7064
  %v8201 = vpack.c.b16 %v7067, %v7066
  %v8202 = vpack.c.b16 %v7069, %v7068
  %v8203 = vpack.c.b16 %v7071, %v7070
  %v8204 = vpack.c.b16 %v7073, %v7072
  %v8205 = vpack.c.b16 %v7075, %v7074
  %v8206 = vpack.c.b16 %v7077, %v7076
  %v8207 = vpack.c.b16 %v7079, %v7078
  %v8208 = vpack.c.b16 %v7081, %v7080
  %v8209 = vpack.c.b16 %v7083, %v7082
  %v8210 = vpack.c.b16 %v7085, %v7084
  %v8211 = vpack.c.b16 %v7087, %v7086
  %v8212 = vpack.c.b16 %v7089, %v7088
  %v8213 = vpack.c.b16 %v7091, %v7090
  %v8214 = vpack.c.b16 %v7093, %v7092
  %v8215 = vpack.c.b16 %v7095, %v7094
  %v8216 = vpack.c.b16 %v7097, %v7096
  %v8217 = vpack.c.b16 %v7099, %v7098
  %v8218 = vpack.c.b16 %v7101, %v7100
  %v8219 = vpack.c.b16 %v7103, %v7102
  %v8220 = vpack.c.b16 %v7105, %v7104
  %v8221 = vpack.c.b16 %v7107, %v7106
  %v8222 = vpack.c.b16 %v7109, %v7108
  %v8223 = vpack.c.b16 %v7111, %v7110
  %v8224 = vpack.c.b16 %v7113, %v7112
  %v8225 = vpack.c.b16 %v7115, %v7114
  %v8226 = vpack.c.b16 %v7117, %v7116
  %v8227 = vpack.c.b16 %v7119, %v7118
  %v8228 = vpack.c.b16 %v7121, %v7120
  %v8229 = vpack.c.b16 %v7123, %v7122
  %v8230 = vpack.c.b16 %v7125, %v7124
  %v8231 = vpack.c.b16 %v7127, %v7126
  %v8232 = vpack.c.b16 %v7129, %v7128
  %v8233 = vpack.c.b16 %v7131, %v7130
  %v8234 = vpack.c.b16 %v7133, %v7132
  %v8235 = vpack.c.b16 %v7135, %v7134
  %v8236 = vpack.c.b16 %v7137, %v7136
  %v8237 = vpack.c.b16 %v7139, %v7138
  %v8238 = vpack.c.b16 %v7141, %v7140
  %v8239 = vpack.c.b16 %v7143, %v7142
  %v8240 = vpack.c.b16 %v7145, %v7144
  %v8241 = vpack.c.b16 %v7147, %v7146
  %v8242 = vpack.c.b16 %v7149, %v7148
  %v8243 = vpack.c.b16 %v7151, %v7150
  %v8244 = vpack.c.b16 %v7153, %v7152
  %v8245 = vpack.c.b16 %v7155, %v7154
  %v8246 = vpack.c.b16 %v7157, %v7156
  %v8247 = vpack.c.b16 %v7159, %v7158
  %v8248 = vpack.c.b16 %v7161, %v7160
  %v8249 = vpack.c.b16 %v7163, %v7162
  %v8250 = vpack.c.b16 %v7165, %v7164
  %v8251 = vpack.c.b16 %v7167, %v7166
  %v8252 = vpack.c.b16 %v7169, %v7168
  %v8253 = vpack.c.b16 %v7171, %v7170
  %v8254 = vpack.c.b16 %v7173, %v7172
  %v8255 = vpack.c.b16 %v7175, %v7174
  %v8256 = vpack.c.b16 %v7177, %v7176
  %v8257 = vpack.c.b16 %v7179, %v7178
  %v8258 = vpack.c.b16 %v7181, %v7180
  %v8259 = vpack.c.b16 %v7183, %v7182
  %v8260 = vpack.c.b16 %v7185, %v7184
  %v8261 = vpack.c.b16 %v7187, %v7186
  %v8262 = vpack.c.b16 %v7189, %v7188
  %v8263 = vpack.c.b16 %v7191, %v7190
  %v8264 = vpack.c.b16 %v7193, %v7192
  %v8265 = vpack.c.b16 %v7195, %v7194
  %v8266 = vpack.c.b16 %v7197, %v7196
  %v8267 = vpack.c.b16 %v7199, %v7198
  %v8268 = vpack.c.b16 %v7201, %v7200
  %v8269 = vpack.c.b16 %v7203, %v7202
  %v8270 = vpack.c.b16 %v7205, %v7204
  %v8271 = vpack.c.b16 %v7207, %v7206
  %9336 = vmatpush.bf16.msra.mxu0 %v7215
  %9337 = vmatpush.bf16.msra.mxu0 %v7214
  %9338 = vmatpush.bf16.msra.mxu0 %v7213
  %9339 = vmatpush.bf16.msra.mxu0 %v7212
  %9340 = vmatpush.bf16.msra.mxu0 %v7211
  %9341 = vmatpush.bf16.msra.mxu0 %v7210
  %9342 = vmatpush.bf16.msra.mxu0 %v7209
  %9343 = vmatpush.bf16.msra.mxu0 %v7208
  %9344 = vmatmul.bf16.gmra.mxu0 %v2686
  %v9345 = vpop.f32.mrf.mxu0
  %v9346 = vadd.f32 %v2284, %v9345
  %v9347 = vpop.f32.mrf.mxu0
  %v9348 = vadd.f32 %v2284, %v9347
  %9349 = vdwg.mxu0
  %9350 = vmatpush.bf16.msra.mxu0 %v7223
  %9351 = vmatpush.bf16.msra.mxu0 %v7222
  %9352 = vmatpush.bf16.msra.mxu0 %v7221
  %9353 = vmatpush.bf16.msra.mxu0 %v7220
  %9354 = vmatpush.bf16.msra.mxu0 %v7219
  %9355 = vmatpush.bf16.msra.mxu0 %v7218
  %9356 = vmatpush.bf16.msra.mxu0 %v7217
  %9357 = vmatpush.bf16.msra.mxu0 %v7216
  %9358 = vmatmul.bf16.gmra.mxu0 %v2687
  %v9359 = vpop.f32.mrf.mxu0
  %v9360 = vadd.f32 %v9346, %v9359
  %v9361 = vpop.f32.mrf.mxu0
  %v9362 = vadd.f32 %v9348, %v9361
  %9363 = vdwg.mxu0
  %9364 = vmatpush.bf16.msra.mxu0 %v7231
  %9365 = vmatpush.bf16.msra.mxu0 %v7230
  %9366 = vmatpush.bf16.msra.mxu0 %v7229
  %9367 = vmatpush.bf16.msra.mxu0 %v7228
  %9368 = vmatpush.bf16.msra.mxu0 %v7227
  %9369 = vmatpush.bf16.msra.mxu0 %v7226
  %9370 = vmatpush.bf16.msra.mxu0 %v7225
  %9371 = vmatpush.bf16.msra.mxu0 %v7224
  %9372 = vmatmul.bf16.gmra.mxu0 %v2688
  %v9373 = vpop.f32.mrf.mxu0
  %v9374 = vadd.f32 %v9360, %v9373
  %v9375 = vpop.f32.mrf.mxu0
  %v9376 = vadd.f32 %v9362, %v9375
  %9377 = vdwg.mxu0
  %9378 = vmatpush.bf16.msra.mxu0 %v7239
  %9379 = vmatpush.bf16.msra.mxu0 %v7238
  %9380 = vmatpush.bf16.msra.mxu0 %v7237
  %9381 = vmatpush.bf16.msra.mxu0 %v7236
  %9382 = vmatpush.bf16.msra.mxu0 %v7235
  %9383 = vmatpush.bf16.msra.mxu0 %v7234
  %9384 = vmatpush.bf16.msra.mxu0 %v7233
  %9385 = vmatpush.bf16.msra.mxu0 %v7232
  %9386 = vmatmul.bf16.gmra.mxu0 %v2689
  %v9387 = vpop.f32.mrf.mxu0
  %v9388 = vadd.f32 %v9374, %v9387
  %v9389 = vpop.f32.mrf.mxu0
  %v9390 = vadd.f32 %v9376, %v9389
  %9391 = vdwg.mxu0
  %9392 = vmatpush.bf16.msra.mxu0 %v7247
  %9393 = vmatpush.bf16.msra.mxu0 %v7246
  %9394 = vmatpush.bf16.msra.mxu0 %v7245
  %9395 = vmatpush.bf16.msra.mxu0 %v7244
  %9396 = vmatpush.bf16.msra.mxu0 %v7243
  %9397 = vmatpush.bf16.msra.mxu0 %v7242
  %9398 = vmatpush.bf16.msra.mxu0 %v7241
  %9399 = vmatpush.bf16.msra.mxu0 %v7240
  %9400 = vmatmul.bf16.gmra.mxu0 %v2690
  %v9401 = vpop.f32.mrf.mxu0
  %v9402 = vadd.f32 %v9388, %v9401
  %v9403 = vpop.f32.mrf.mxu0
  %v9404 = vadd.f32 %v9390, %v9403
  %9405 = vdwg.mxu0
  %9406 = vmatpush.bf16.msra.mxu0 %v7255
  %9407 = vmatpush.bf16.msra.mxu0 %v7254
  %9408 = vmatpush.bf16.msra.mxu0 %v7253
  %9409 = vmatpush.bf16.msra.mxu0 %v7252
  %9410 = vmatpush.bf16.msra.mxu0 %v7251
  %9411 = vmatpush.bf16.msra.mxu0 %v7250
  %9412 = vmatpush.bf16.msra.mxu0 %v7249
  %9413 = vmatpush.bf16.msra.mxu0 %v7248
  %9414 = vmatmul.bf16.gmra.mxu0 %v2691
  %v9415 = vpop.f32.mrf.mxu0
  %v9416 = vadd.f32 %v9402, %v9415
  %v9417 = vpop.f32.mrf.mxu0
  %v9418 = vadd.f32 %v9404, %v9417
  %9419 = vdwg.mxu0
  %9420 = vmatpush.bf16.msra.mxu0 %v7263
  %9421 = vmatpush.bf16.msra.mxu0 %v7262
  %9422 = vmatpush.bf16.msra.mxu0 %v7261
  %9423 = vmatpush.bf16.msra.mxu0 %v7260
  %9424 = vmatpush.bf16.msra.mxu0 %v7259
  %9425 = vmatpush.bf16.msra.mxu0 %v7258
  %9426 = vmatpush.bf16.msra.mxu0 %v7257
  %9427 = vmatpush.bf16.msra.mxu0 %v7256
  %9428 = vmatmul.bf16.gmra.mxu0 %v2692
  %v9429 = vpop.f32.mrf.mxu0
  %v9430 = vadd.f32 %v9416, %v9429
  %v9431 = vpop.f32.mrf.mxu0
  %v9432 = vadd.f32 %v9418, %v9431
  %9433 = vdwg.mxu0
  %9434 = vmatpush.bf16.msra.mxu0 %v7271
  %9435 = vmatpush.bf16.msra.mxu0 %v7270
  %9436 = vmatpush.bf16.msra.mxu0 %v7269
  %9437 = vmatpush.bf16.msra.mxu0 %v7268
  %9438 = vmatpush.bf16.msra.mxu0 %v7267
  %9439 = vmatpush.bf16.msra.mxu0 %v7266
  %9440 = vmatpush.bf16.msra.mxu0 %v7265
  %9441 = vmatpush.bf16.msra.mxu0 %v7264
  %9442 = vmatmul.bf16.gmra.mxu0 %v2693
  %v9443 = vpop.f32.mrf.mxu0
  %v9444 = vadd.f32 %v9430, %v9443
  %v9445 = vpop.f32.mrf.mxu0
  %v9446 = vadd.f32 %v9432, %v9445
  %9447 = vdwg.mxu0
  %9448 = vmatpush.bf16.msra.mxu0 %v7279
  %9449 = vmatpush.bf16.msra.mxu0 %v7278
  %9450 = vmatpush.bf16.msra.mxu0 %v7277
  %9451 = vmatpush.bf16.msra.mxu0 %v7276
  %9452 = vmatpush.bf16.msra.mxu0 %v7275
  %9453 = vmatpush.bf16.msra.mxu0 %v7274
  %9454 = vmatpush.bf16.msra.mxu0 %v7273
  %9455 = vmatpush.bf16.msra.mxu0 %v7272
  %9456 = vmatmul.bf16.gmra.mxu0 %v2694
  %v9457 = vpop.f32.mrf.mxu0
  %v9458 = vadd.f32 %v9444, %v9457
  %v9459 = vpop.f32.mrf.mxu0
  %v9460 = vadd.f32 %v9446, %v9459
  %9461 = vdwg.mxu0
  %9462 = vmatpush.bf16.msra.mxu0 %v7287
  %9463 = vmatpush.bf16.msra.mxu0 %v7286
  %9464 = vmatpush.bf16.msra.mxu0 %v7285
  %9465 = vmatpush.bf16.msra.mxu0 %v7284
  %9466 = vmatpush.bf16.msra.mxu0 %v7283
  %9467 = vmatpush.bf16.msra.mxu0 %v7282
  %9468 = vmatpush.bf16.msra.mxu0 %v7281
  %9469 = vmatpush.bf16.msra.mxu0 %v7280
  %9470 = vmatmul.bf16.gmra.mxu0 %v2695
  %v9471 = vpop.f32.mrf.mxu0
  %v9472 = vadd.f32 %v9458, %v9471
  %v9473 = vpop.f32.mrf.mxu0
  %v9474 = vadd.f32 %v9460, %v9473
  %9475 = vdwg.mxu0
  %9476 = vmatpush.bf16.msra.mxu0 %v7295
  %9477 = vmatpush.bf16.msra.mxu0 %v7294
  %9478 = vmatpush.bf16.msra.mxu0 %v7293
  %9479 = vmatpush.bf16.msra.mxu0 %v7292
  %9480 = vmatpush.bf16.msra.mxu0 %v7291
  %9481 = vmatpush.bf16.msra.mxu0 %v7290
  %9482 = vmatpush.bf16.msra.mxu0 %v7289
  %9483 = vmatpush.bf16.msra.mxu0 %v7288
  %9484 = vmatmul.bf16.gmra.mxu0 %v2696
  %v9485 = vpop.f32.mrf.mxu0
  %v9486 = vadd.f32 %v9472, %v9485
  %v9487 = vpop.f32.mrf.mxu0
  %v9488 = vadd.f32 %v9474, %v9487
  %9489 = vdwg.mxu0
  %9490 = vmatpush.bf16.msra.mxu0 %v7303
  %9491 = vmatpush.bf16.msra.mxu0 %v7302
  %9492 = vmatpush.bf16.msra.mxu0 %v7301
  %9493 = vmatpush.bf16.msra.mxu0 %v7300
  %9494 = vmatpush.bf16.msra.mxu0 %v7299
  %9495 = vmatpush.bf16.msra.mxu0 %v7298
  %9496 = vmatpush.bf16.msra.mxu0 %v7297
  %9497 = vmatpush.bf16.msra.mxu0 %v7296
  %9498 = vmatmul.bf16.gmra.mxu0 %v2697
  %v9499 = vpop.f32.mrf.mxu0
  %v9500 = vadd.f32 %v9486, %v9499
  %v9501 = vpop.f32.mrf.mxu0
  %v9502 = vadd.f32 %v9488, %v9501
  %9503 = vdwg.mxu0
  %9504 = vmatpush.bf16.msra.mxu0 %v7311
  %9505 = vmatpush.bf16.msra.mxu0 %v7310
  %9506 = vmatpush.bf16.msra.mxu0 %v7309
  %9507 = vmatpush.bf16.msra.mxu0 %v7308
  %9508 = vmatpush.bf16.msra.mxu0 %v7307
  %9509 = vmatpush.bf16.msra.mxu0 %v7306
  %9510 = vmatpush.bf16.msra.mxu0 %v7305
  %9511 = vmatpush.bf16.msra.mxu0 %v7304
  %9512 = vmatmul.bf16.gmra.mxu0 %v2698
  %v9513 = vpop.f32.mrf.mxu0
  %v9514 = vadd.f32 %v9500, %v9513
  %v9515 = vpop.f32.mrf.mxu0
  %v9516 = vadd.f32 %v9502, %v9515
  %9517 = vdwg.mxu0
  %9518 = vmatpush.bf16.msra.mxu0 %v7319
  %9519 = vmatpush.bf16.msra.mxu0 %v7318
  %9520 = vmatpush.bf16.msra.mxu0 %v7317
  %9521 = vmatpush.bf16.msra.mxu0 %v7316
  %9522 = vmatpush.bf16.msra.mxu0 %v7315
  %9523 = vmatpush.bf16.msra.mxu0 %v7314
  %9524 = vmatpush.bf16.msra.mxu0 %v7313
  %9525 = vmatpush.bf16.msra.mxu0 %v7312
  %9526 = vmatmul.bf16.gmra.mxu0 %v2699
  %v9527 = vpop.f32.mrf.mxu0
  %v9528 = vadd.f32 %v9514, %v9527
  %v9529 = vpop.f32.mrf.mxu0
  %v9530 = vadd.f32 %v9516, %v9529
  %9531 = vdwg.mxu0
  %9532 = vmatpush.bf16.msra.mxu0 %v7327
  %9533 = vmatpush.bf16.msra.mxu0 %v7326
  %9534 = vmatpush.bf16.msra.mxu0 %v7325
  %9535 = vmatpush.bf16.msra.mxu0 %v7324
  %9536 = vmatpush.bf16.msra.mxu0 %v7323
  %9537 = vmatpush.bf16.msra.mxu0 %v7322
  %9538 = vmatpush.bf16.msra.mxu0 %v7321
  %9539 = vmatpush.bf16.msra.mxu0 %v7320
  %9540 = vmatmul.bf16.gmra.mxu0 %v2700
  %v9541 = vpop.f32.mrf.mxu0
  %v9542 = vadd.f32 %v9528, %v9541
  %v9543 = vpop.f32.mrf.mxu0
  %v9544 = vadd.f32 %v9530, %v9543
  %9545 = vdwg.mxu0
  %9546 = vmatpush.bf16.msra.mxu0 %v7335
  %9547 = vmatpush.bf16.msra.mxu0 %v7334
  %9548 = vmatpush.bf16.msra.mxu0 %v7333
  %9549 = vmatpush.bf16.msra.mxu0 %v7332
  %9550 = vmatpush.bf16.msra.mxu0 %v7331
  %9551 = vmatpush.bf16.msra.mxu0 %v7330
  %9552 = vmatpush.bf16.msra.mxu0 %v7329
  %9553 = vmatpush.bf16.msra.mxu0 %v7328
  %9554 = vmatmul.bf16.gmra.mxu0 %v2701
  %v9555 = vpop.f32.mrf.mxu0
  %v9556 = vadd.f32 %v9542, %v9555
  %v9557 = vpop.f32.mrf.mxu0
  %v9558 = vadd.f32 %v9544, %v9557
  %9559 = vdwg.mxu0
  %9560 = vmatpush.bf16.msra.mxu0 %v7343
  %9561 = vmatpush.bf16.msra.mxu0 %v7342
  %9562 = vmatpush.bf16.msra.mxu0 %v7341
  %9563 = vmatpush.bf16.msra.mxu0 %v7340
  %9564 = vmatpush.bf16.msra.mxu0 %v7339
  %9565 = vmatpush.bf16.msra.mxu0 %v7338
  %9566 = vmatpush.bf16.msra.mxu0 %v7337
  %9567 = vmatpush.bf16.msra.mxu0 %v7336
  %9568 = vmatmul.bf16.gmra.mxu0 %v2702
  %v9569 = vpop.f32.mrf.mxu0
  %v9570 = vadd.f32 %v9556, %v9569
  %v9571 = vpop.f32.mrf.mxu0
  %v9572 = vadd.f32 %v9558, %v9571
  %9573 = vdwg.mxu0
  %9574 = vmatpush.bf16.msra.mxu0 %v7351
  %9575 = vmatpush.bf16.msra.mxu0 %v7350
  %9576 = vmatpush.bf16.msra.mxu0 %v7349
  %9577 = vmatpush.bf16.msra.mxu0 %v7348
  %9578 = vmatpush.bf16.msra.mxu0 %v7347
  %9579 = vmatpush.bf16.msra.mxu0 %v7346
  %9580 = vmatpush.bf16.msra.mxu0 %v7345
  %9581 = vmatpush.bf16.msra.mxu0 %v7344
  %9582 = vmatmul.bf16.gmra.mxu0 %v2703
  %v9583 = vpop.f32.mrf.mxu0
  %v9584 = vadd.f32 %v9570, %v9583
  %v9585 = vpop.f32.mrf.mxu0
  %v9586 = vadd.f32 %v9572, %v9585
  %9587 = vdwg.mxu0
  %9588 = vmatpush.bf16.msra.mxu0 %v7359
  %9589 = vmatpush.bf16.msra.mxu0 %v7358
  %9590 = vmatpush.bf16.msra.mxu0 %v7357
  %9591 = vmatpush.bf16.msra.mxu0 %v7356
  %9592 = vmatpush.bf16.msra.mxu0 %v7355
  %9593 = vmatpush.bf16.msra.mxu0 %v7354
  %9594 = vmatpush.bf16.msra.mxu0 %v7353
  %9595 = vmatpush.bf16.msra.mxu0 %v7352
  %9596 = vmatmul.bf16.gmra.mxu0 %v2704
  %v9597 = vpop.f32.mrf.mxu0
  %v9598 = vadd.f32 %v9584, %v9597
  %v9599 = vpop.f32.mrf.mxu0
  %v9600 = vadd.f32 %v9586, %v9599
  %9601 = vdwg.mxu0
  %9602 = vmatpush.bf16.msra.mxu0 %v7367
  %9603 = vmatpush.bf16.msra.mxu0 %v7366
  %9604 = vmatpush.bf16.msra.mxu0 %v7365
  %9605 = vmatpush.bf16.msra.mxu0 %v7364
  %9606 = vmatpush.bf16.msra.mxu0 %v7363
  %9607 = vmatpush.bf16.msra.mxu0 %v7362
  %9608 = vmatpush.bf16.msra.mxu0 %v7361
  %9609 = vmatpush.bf16.msra.mxu0 %v7360
  %9610 = vmatmul.bf16.gmra.mxu0 %v2705
  %v9611 = vpop.f32.mrf.mxu0
  %v9612 = vadd.f32 %v9598, %v9611
  %v9613 = vpop.f32.mrf.mxu0
  %v9614 = vadd.f32 %v9600, %v9613
  %9615 = vdwg.mxu0
  %9616 = vmatpush.bf16.msra.mxu0 %v7375
  %9617 = vmatpush.bf16.msra.mxu0 %v7374
  %9618 = vmatpush.bf16.msra.mxu0 %v7373
  %9619 = vmatpush.bf16.msra.mxu0 %v7372
  %9620 = vmatpush.bf16.msra.mxu0 %v7371
  %9621 = vmatpush.bf16.msra.mxu0 %v7370
  %9622 = vmatpush.bf16.msra.mxu0 %v7369
  %9623 = vmatpush.bf16.msra.mxu0 %v7368
  %9624 = vmatmul.bf16.gmra.mxu0 %v2706
  %v9625 = vpop.f32.mrf.mxu0
  %v9626 = vadd.f32 %v9612, %v9625
  %v9627 = vpop.f32.mrf.mxu0
  %v9628 = vadd.f32 %v9614, %v9627
  %9629 = vdwg.mxu0
  %9630 = vmatpush.bf16.msra.mxu0 %v7383
  %9631 = vmatpush.bf16.msra.mxu0 %v7382
  %9632 = vmatpush.bf16.msra.mxu0 %v7381
  %9633 = vmatpush.bf16.msra.mxu0 %v7380
  %9634 = vmatpush.bf16.msra.mxu0 %v7379
  %9635 = vmatpush.bf16.msra.mxu0 %v7378
  %9636 = vmatpush.bf16.msra.mxu0 %v7377
  %9637 = vmatpush.bf16.msra.mxu0 %v7376
  %9638 = vmatmul.bf16.gmra.mxu0 %v2707
  %v9639 = vpop.f32.mrf.mxu0
  %v9640 = vadd.f32 %v9626, %v9639
  %v9641 = vpop.f32.mrf.mxu0
  %v9642 = vadd.f32 %v9628, %v9641
  %9643 = vdwg.mxu0
  %9644 = vmatpush.bf16.msra.mxu0 %v7391
  %9645 = vmatpush.bf16.msra.mxu0 %v7390
  %9646 = vmatpush.bf16.msra.mxu0 %v7389
  %9647 = vmatpush.bf16.msra.mxu0 %v7388
  %9648 = vmatpush.bf16.msra.mxu0 %v7387
  %9649 = vmatpush.bf16.msra.mxu0 %v7386
  %9650 = vmatpush.bf16.msra.mxu0 %v7385
  %9651 = vmatpush.bf16.msra.mxu0 %v7384
  %9652 = vmatmul.bf16.gmra.mxu0 %v2708
  %v9653 = vpop.f32.mrf.mxu0
  %v9654 = vadd.f32 %v9640, %v9653
  %v9655 = vpop.f32.mrf.mxu0
  %v9656 = vadd.f32 %v9642, %v9655
  %9657 = vdwg.mxu0
  %9658 = vmatpush.bf16.msra.mxu0 %v7399
  %9659 = vmatpush.bf16.msra.mxu0 %v7398
  %9660 = vmatpush.bf16.msra.mxu0 %v7397
  %9661 = vmatpush.bf16.msra.mxu0 %v7396
  %9662 = vmatpush.bf16.msra.mxu0 %v7395
  %9663 = vmatpush.bf16.msra.mxu0 %v7394
  %9664 = vmatpush.bf16.msra.mxu0 %v7393
  %9665 = vmatpush.bf16.msra.mxu0 %v7392
  %9666 = vmatmul.bf16.gmra.mxu0 %v2709
  %v9667 = vpop.f32.mrf.mxu0
  %v9668 = vadd.f32 %v9654, %v9667
  %v9669 = vpop.f32.mrf.mxu0
  %v9670 = vadd.f32 %v9656, %v9669
  %9671 = vdwg.mxu0
  %9672 = vmatpush.bf16.msra.mxu0 %v7407
  %9673 = vmatpush.bf16.msra.mxu0 %v7406
  %9674 = vmatpush.bf16.msra.mxu0 %v7405
  %9675 = vmatpush.bf16.msra.mxu0 %v7404
  %9676 = vmatpush.bf16.msra.mxu0 %v7403
  %9677 = vmatpush.bf16.msra.mxu0 %v7402
  %9678 = vmatpush.bf16.msra.mxu0 %v7401
  %9679 = vmatpush.bf16.msra.mxu0 %v7400
  %9680 = vmatmul.bf16.gmra.mxu0 %v2710
  %v9681 = vpop.f32.mrf.mxu0
  %v9682 = vadd.f32 %v9668, %v9681
  %v9683 = vpop.f32.mrf.mxu0
  %v9684 = vadd.f32 %v9670, %v9683
  %9685 = vdwg.mxu0
  %9686 = vmatpush.bf16.msra.mxu0 %v7415
  %9687 = vmatpush.bf16.msra.mxu0 %v7414
  %9688 = vmatpush.bf16.msra.mxu0 %v7413
  %9689 = vmatpush.bf16.msra.mxu0 %v7412
  %9690 = vmatpush.bf16.msra.mxu0 %v7411
  %9691 = vmatpush.bf16.msra.mxu0 %v7410
  %9692 = vmatpush.bf16.msra.mxu0 %v7409
  %9693 = vmatpush.bf16.msra.mxu0 %v7408
  %9694 = vmatmul.bf16.gmra.mxu0 %v2711
  %v9695 = vpop.f32.mrf.mxu0
  %v9696 = vadd.f32 %v9682, %v9695
  %v9697 = vpop.f32.mrf.mxu0
  %v9698 = vadd.f32 %v9684, %v9697
  %9699 = vdwg.mxu0
  %9700 = vmatpush.bf16.msra.mxu0 %v7423
  %9701 = vmatpush.bf16.msra.mxu0 %v7422
  %9702 = vmatpush.bf16.msra.mxu0 %v7421
  %9703 = vmatpush.bf16.msra.mxu0 %v7420
  %9704 = vmatpush.bf16.msra.mxu0 %v7419
  %9705 = vmatpush.bf16.msra.mxu0 %v7418
  %9706 = vmatpush.bf16.msra.mxu0 %v7417
  %9707 = vmatpush.bf16.msra.mxu0 %v7416
  %9708 = vmatmul.bf16.gmra.mxu0 %v2712
  %v9709 = vpop.f32.mrf.mxu0
  %v9710 = vadd.f32 %v9696, %v9709
  %v9711 = vpop.f32.mrf.mxu0
  %v9712 = vadd.f32 %v9698, %v9711
  %9713 = vdwg.mxu0
  %9714 = vmatpush.bf16.msra.mxu0 %v7431
  %9715 = vmatpush.bf16.msra.mxu0 %v7430
  %9716 = vmatpush.bf16.msra.mxu0 %v7429
  %9717 = vmatpush.bf16.msra.mxu0 %v7428
  %9718 = vmatpush.bf16.msra.mxu0 %v7427
  %9719 = vmatpush.bf16.msra.mxu0 %v7426
  %9720 = vmatpush.bf16.msra.mxu0 %v7425
  %9721 = vmatpush.bf16.msra.mxu0 %v7424
  %9722 = vmatmul.bf16.gmra.mxu0 %v2713
  %v9723 = vpop.f32.mrf.mxu0
  %v9724 = vadd.f32 %v9710, %v9723
  %v9725 = vpop.f32.mrf.mxu0
  %v9726 = vadd.f32 %v9712, %v9725
  %9727 = vdwg.mxu0
  %9728 = vmatpush.bf16.msra.mxu0 %v7439
  %9729 = vmatpush.bf16.msra.mxu0 %v7438
  %9730 = vmatpush.bf16.msra.mxu0 %v7437
  %9731 = vmatpush.bf16.msra.mxu0 %v7436
  %9732 = vmatpush.bf16.msra.mxu0 %v7435
  %9733 = vmatpush.bf16.msra.mxu0 %v7434
  %9734 = vmatpush.bf16.msra.mxu0 %v7433
  %9735 = vmatpush.bf16.msra.mxu0 %v7432
  %9736 = vmatmul.bf16.gmra.mxu0 %v2714
  %v9737 = vpop.f32.mrf.mxu0
  %v9738 = vadd.f32 %v9724, %v9737
  %v9739 = vpop.f32.mrf.mxu0
  %v9740 = vadd.f32 %v9726, %v9739
  %9741 = vdwg.mxu0
  %9742 = vmatpush.bf16.msra.mxu0 %v7447
  %9743 = vmatpush.bf16.msra.mxu0 %v7446
  %9744 = vmatpush.bf16.msra.mxu0 %v7445
  %9745 = vmatpush.bf16.msra.mxu0 %v7444
  %9746 = vmatpush.bf16.msra.mxu0 %v7443
  %9747 = vmatpush.bf16.msra.mxu0 %v7442
  %9748 = vmatpush.bf16.msra.mxu0 %v7441
  %9749 = vmatpush.bf16.msra.mxu0 %v7440
  %9750 = vmatmul.bf16.gmra.mxu0 %v2715
  %v9751 = vpop.f32.mrf.mxu0
  %v9752 = vadd.f32 %v9738, %v9751
  %v9753 = vpop.f32.mrf.mxu0
  %v9754 = vadd.f32 %v9740, %v9753
  %9755 = vdwg.mxu0
  %9756 = vmatpush.bf16.msra.mxu0 %v7455
  %9757 = vmatpush.bf16.msra.mxu0 %v7454
  %9758 = vmatpush.bf16.msra.mxu0 %v7453
  %9759 = vmatpush.bf16.msra.mxu0 %v7452
  %9760 = vmatpush.bf16.msra.mxu0 %v7451
  %9761 = vmatpush.bf16.msra.mxu0 %v7450
  %9762 = vmatpush.bf16.msra.mxu0 %v7449
  %9763 = vmatpush.bf16.msra.mxu0 %v7448
  %9764 = vmatmul.bf16.gmra.mxu0 %v2716
  %v9765 = vpop.f32.mrf.mxu0
  %v9766 = vadd.f32 %v9752, %v9765
  %v9767 = vpop.f32.mrf.mxu0
  %v9768 = vadd.f32 %v9754, %v9767
  %9769 = vdwg.mxu0
  %9770 = vmatpush.bf16.msra.mxu0 %v7463
  %9771 = vmatpush.bf16.msra.mxu0 %v7462
  %9772 = vmatpush.bf16.msra.mxu0 %v7461
  %9773 = vmatpush.bf16.msra.mxu0 %v7460
  %9774 = vmatpush.bf16.msra.mxu0 %v7459
  %9775 = vmatpush.bf16.msra.mxu0 %v7458
  %9776 = vmatpush.bf16.msra.mxu0 %v7457
  %9777 = vmatpush.bf16.msra.mxu0 %v7456
  %9778 = vmatmul.bf16.gmra.mxu0 %v2717
  %v9779 = vpop.f32.mrf.mxu0
  %v9780 = vadd.f32 %v9766, %v9779
  %v9781 = vpop.f32.mrf.mxu0
  %v9782 = vadd.f32 %v9768, %v9781
  %9783 = vdwg.mxu0
  %9784 = vmatpush.bf16.msra.mxu0 %v7471
  %9785 = vmatpush.bf16.msra.mxu0 %v7470
  %9786 = vmatpush.bf16.msra.mxu0 %v7469
  %9787 = vmatpush.bf16.msra.mxu0 %v7468
  %9788 = vmatpush.bf16.msra.mxu0 %v7467
  %9789 = vmatpush.bf16.msra.mxu0 %v7466
  %9790 = vmatpush.bf16.msra.mxu0 %v7465
  %9791 = vmatpush.bf16.msra.mxu0 %v7464
  %9792 = vmatmul.bf16.gmra.mxu0 %v2718
  %v9793 = vpop.f32.mrf.mxu0
  %v9794 = vadd.f32 %v9780, %v9793
  %v9795 = vpop.f32.mrf.mxu0
  %v9796 = vadd.f32 %v9782, %v9795
  %9797 = vdwg.mxu0
  %9798 = vmatpush.bf16.msra.mxu0 %v7479
  %9799 = vmatpush.bf16.msra.mxu0 %v7478
  %9800 = vmatpush.bf16.msra.mxu0 %v7477
  %9801 = vmatpush.bf16.msra.mxu0 %v7476
  %9802 = vmatpush.bf16.msra.mxu0 %v7475
  %9803 = vmatpush.bf16.msra.mxu0 %v7474
  %9804 = vmatpush.bf16.msra.mxu0 %v7473
  %9805 = vmatpush.bf16.msra.mxu0 %v7472
  %9806 = vmatmul.bf16.gmra.mxu0 %v2719
  %v9807 = vpop.f32.mrf.mxu0
  %v9808 = vadd.f32 %v9794, %v9807
  %v9809 = vpop.f32.mrf.mxu0
  %v9810 = vadd.f32 %v9796, %v9809
  %9811 = vdwg.mxu0
  %9812 = vmatpush.bf16.msra.mxu0 %v7487
  %9813 = vmatpush.bf16.msra.mxu0 %v7486
  %9814 = vmatpush.bf16.msra.mxu0 %v7485
  %9815 = vmatpush.bf16.msra.mxu0 %v7484
  %9816 = vmatpush.bf16.msra.mxu0 %v7483
  %9817 = vmatpush.bf16.msra.mxu0 %v7482
  %9818 = vmatpush.bf16.msra.mxu0 %v7481
  %9819 = vmatpush.bf16.msra.mxu0 %v7480
  %9820 = vmatmul.bf16.gmra.mxu0 %v2720
  %v9821 = vpop.f32.mrf.mxu0
  %v9822 = vadd.f32 %v9808, %v9821
  %v9823 = vpop.f32.mrf.mxu0
  %v9824 = vadd.f32 %v9810, %v9823
  %9825 = vdwg.mxu0
  %9826 = vmatpush.bf16.msra.mxu0 %v7495
  %9827 = vmatpush.bf16.msra.mxu0 %v7494
  %9828 = vmatpush.bf16.msra.mxu0 %v7493
  %9829 = vmatpush.bf16.msra.mxu0 %v7492
  %9830 = vmatpush.bf16.msra.mxu0 %v7491
  %9831 = vmatpush.bf16.msra.mxu0 %v7490
  %9832 = vmatpush.bf16.msra.mxu0 %v7489
  %9833 = vmatpush.bf16.msra.mxu0 %v7488
  %9834 = vmatmul.bf16.gmra.mxu0 %v2721
  %v9835 = vpop.f32.mrf.mxu0
  %v9836 = vadd.f32 %v9822, %v9835
  %v9837 = vpop.f32.mrf.mxu0
  %v9838 = vadd.f32 %v9824, %v9837
  %9839 = vdwg.mxu0
  %9840 = vmatpush.bf16.msra.mxu0 %v7503
  %9841 = vmatpush.bf16.msra.mxu0 %v7502
  %9842 = vmatpush.bf16.msra.mxu0 %v7501
  %9843 = vmatpush.bf16.msra.mxu0 %v7500
  %9844 = vmatpush.bf16.msra.mxu0 %v7499
  %9845 = vmatpush.bf16.msra.mxu0 %v7498
  %9846 = vmatpush.bf16.msra.mxu0 %v7497
  %9847 = vmatpush.bf16.msra.mxu0 %v7496
  %9848 = vmatmul.bf16.gmra.mxu0 %v2722
  %v9849 = vpop.f32.mrf.mxu0
  %v9850 = vadd.f32 %v9836, %v9849
  %v9851 = vpop.f32.mrf.mxu0
  %v9852 = vadd.f32 %v9838, %v9851
  %9853 = vdwg.mxu0
  %9854 = vmatpush.bf16.msra.mxu0 %v7511
  %9855 = vmatpush.bf16.msra.mxu0 %v7510
  %9856 = vmatpush.bf16.msra.mxu0 %v7509
  %9857 = vmatpush.bf16.msra.mxu0 %v7508
  %9858 = vmatpush.bf16.msra.mxu0 %v7507
  %9859 = vmatpush.bf16.msra.mxu0 %v7506
  %9860 = vmatpush.bf16.msra.mxu0 %v7505
  %9861 = vmatpush.bf16.msra.mxu0 %v7504
  %9862 = vmatmul.bf16.gmra.mxu0 %v2723
  %v9863 = vpop.f32.mrf.mxu0
  %v9864 = vadd.f32 %v9850, %v9863
  %v9865 = vpop.f32.mrf.mxu0
  %v9866 = vadd.f32 %v9852, %v9865
  %9867 = vdwg.mxu0
  %9868 = vmatpush.bf16.msra.mxu0 %v7519
  %9869 = vmatpush.bf16.msra.mxu0 %v7518
  %9870 = vmatpush.bf16.msra.mxu0 %v7517
  %9871 = vmatpush.bf16.msra.mxu0 %v7516
  %9872 = vmatpush.bf16.msra.mxu0 %v7515
  %9873 = vmatpush.bf16.msra.mxu0 %v7514
  %9874 = vmatpush.bf16.msra.mxu0 %v7513
  %9875 = vmatpush.bf16.msra.mxu0 %v7512
  %9876 = vmatmul.bf16.gmra.mxu0 %v2724
  %v9877 = vpop.f32.mrf.mxu0
  %v9878 = vadd.f32 %v9864, %v9877
  %v9879 = vpop.f32.mrf.mxu0
  %v9880 = vadd.f32 %v9866, %v9879
  %9881 = vdwg.mxu0
  %9882 = vmatpush.bf16.msra.mxu0 %v7527
  %9883 = vmatpush.bf16.msra.mxu0 %v7526
  %9884 = vmatpush.bf16.msra.mxu0 %v7525
  %9885 = vmatpush.bf16.msra.mxu0 %v7524
  %9886 = vmatpush.bf16.msra.mxu0 %v7523
  %9887 = vmatpush.bf16.msra.mxu0 %v7522
  %9888 = vmatpush.bf16.msra.mxu0 %v7521
  %9889 = vmatpush.bf16.msra.mxu0 %v7520
  %9890 = vmatmul.bf16.gmra.mxu0 %v2725
  %v9891 = vpop.f32.mrf.mxu0
  %v9892 = vadd.f32 %v9878, %v9891
  %v9893 = vpop.f32.mrf.mxu0
  %v9894 = vadd.f32 %v9880, %v9893
  %9895 = vdwg.mxu0
  %9896 = vmatpush.bf16.msra.mxu0 %v7535
  %9897 = vmatpush.bf16.msra.mxu0 %v7534
  %9898 = vmatpush.bf16.msra.mxu0 %v7533
  %9899 = vmatpush.bf16.msra.mxu0 %v7532
  %9900 = vmatpush.bf16.msra.mxu0 %v7531
  %9901 = vmatpush.bf16.msra.mxu0 %v7530
  %9902 = vmatpush.bf16.msra.mxu0 %v7529
  %9903 = vmatpush.bf16.msra.mxu0 %v7528
  %9904 = vmatmul.bf16.gmra.mxu0 %v2726
  %v9905 = vpop.f32.mrf.mxu0
  %v9906 = vadd.f32 %v9892, %v9905
  %v9907 = vpop.f32.mrf.mxu0
  %v9908 = vadd.f32 %v9894, %v9907
  %9909 = vdwg.mxu0
  %9910 = vmatpush.bf16.msra.mxu0 %v7543
  %9911 = vmatpush.bf16.msra.mxu0 %v7542
  %9912 = vmatpush.bf16.msra.mxu0 %v7541
  %9913 = vmatpush.bf16.msra.mxu0 %v7540
  %9914 = vmatpush.bf16.msra.mxu0 %v7539
  %9915 = vmatpush.bf16.msra.mxu0 %v7538
  %9916 = vmatpush.bf16.msra.mxu0 %v7537
  %9917 = vmatpush.bf16.msra.mxu0 %v7536
  %9918 = vmatmul.bf16.gmra.mxu0 %v2727
  %v9919 = vpop.f32.mrf.mxu0
  %v9920 = vadd.f32 %v9906, %v9919
  %v9921 = vpop.f32.mrf.mxu0
  %v9922 = vadd.f32 %v9908, %v9921
  %9923 = vdwg.mxu0
  %9924 = vmatpush.bf16.msra.mxu0 %v7551
  %9925 = vmatpush.bf16.msra.mxu0 %v7550
  %9926 = vmatpush.bf16.msra.mxu0 %v7549
  %9927 = vmatpush.bf16.msra.mxu0 %v7548
  %9928 = vmatpush.bf16.msra.mxu0 %v7547
  %9929 = vmatpush.bf16.msra.mxu0 %v7546
  %9930 = vmatpush.bf16.msra.mxu0 %v7545
  %9931 = vmatpush.bf16.msra.mxu0 %v7544
  %9932 = vmatmul.bf16.gmra.mxu0 %v2728
  %v9933 = vpop.f32.mrf.mxu0
  %v9934 = vadd.f32 %v9920, %v9933
  %v9935 = vpop.f32.mrf.mxu0
  %v9936 = vadd.f32 %v9922, %v9935
  %9937 = vdwg.mxu0
  %9938 = vmatpush.bf16.msra.mxu0 %v7559
  %9939 = vmatpush.bf16.msra.mxu0 %v7558
  %9940 = vmatpush.bf16.msra.mxu0 %v7557
  %9941 = vmatpush.bf16.msra.mxu0 %v7556
  %9942 = vmatpush.bf16.msra.mxu0 %v7555
  %9943 = vmatpush.bf16.msra.mxu0 %v7554
  %9944 = vmatpush.bf16.msra.mxu0 %v7553
  %9945 = vmatpush.bf16.msra.mxu0 %v7552
  %9946 = vmatmul.bf16.gmra.mxu0 %v2729
  %v9947 = vpop.f32.mrf.mxu0
  %v9948 = vadd.f32 %v9934, %v9947
  %v9949 = vpop.f32.mrf.mxu0
  %v9950 = vadd.f32 %v9936, %v9949
  %9951 = vdwg.mxu0
  %9952 = vmatpush.bf16.msra.mxu0 %v7567
  %9953 = vmatpush.bf16.msra.mxu0 %v7566
  %9954 = vmatpush.bf16.msra.mxu0 %v7565
  %9955 = vmatpush.bf16.msra.mxu0 %v7564
  %9956 = vmatpush.bf16.msra.mxu0 %v7563
  %9957 = vmatpush.bf16.msra.mxu0 %v7562
  %9958 = vmatpush.bf16.msra.mxu0 %v7561
  %9959 = vmatpush.bf16.msra.mxu0 %v7560
  %9960 = vmatmul.bf16.gmra.mxu0 %v2730
  %v9961 = vpop.f32.mrf.mxu0
  %v9962 = vadd.f32 %v9948, %v9961
  %v9963 = vpop.f32.mrf.mxu0
  %v9964 = vadd.f32 %v9950, %v9963
  %9965 = vdwg.mxu0
  %9966 = vmatpush.bf16.msra.mxu0 %v7575
  %9967 = vmatpush.bf16.msra.mxu0 %v7574
  %9968 = vmatpush.bf16.msra.mxu0 %v7573
  %9969 = vmatpush.bf16.msra.mxu0 %v7572
  %9970 = vmatpush.bf16.msra.mxu0 %v7571
  %9971 = vmatpush.bf16.msra.mxu0 %v7570
  %9972 = vmatpush.bf16.msra.mxu0 %v7569
  %9973 = vmatpush.bf16.msra.mxu0 %v7568
  %9974 = vmatmul.bf16.gmra.mxu0 %v2731
  %v9975 = vpop.f32.mrf.mxu0
  %v9976 = vadd.f32 %v9962, %v9975
  %v9977 = vpop.f32.mrf.mxu0
  %v9978 = vadd.f32 %v9964, %v9977
  %9979 = vdwg.mxu0
  %9980 = vmatpush.bf16.msra.mxu0 %v7583
  %9981 = vmatpush.bf16.msra.mxu0 %v7582
  %9982 = vmatpush.bf16.msra.mxu0 %v7581
  %9983 = vmatpush.bf16.msra.mxu0 %v7580
  %9984 = vmatpush.bf16.msra.mxu0 %v7579
  %9985 = vmatpush.bf16.msra.mxu0 %v7578
  %9986 = vmatpush.bf16.msra.mxu0 %v7577
  %9987 = vmatpush.bf16.msra.mxu0 %v7576
  %9988 = vmatmul.bf16.gmra.mxu0 %v2732
  %v9989 = vpop.f32.mrf.mxu0
  %v9990 = vadd.f32 %v9976, %v9989
  %v9991 = vpop.f32.mrf.mxu0
  %v9992 = vadd.f32 %v9978, %v9991
  %9993 = vdwg.mxu0
  %9994 = vmatpush.bf16.msra.mxu0 %v7591
  %9995 = vmatpush.bf16.msra.mxu0 %v7590
  %9996 = vmatpush.bf16.msra.mxu0 %v7589
  %9997 = vmatpush.bf16.msra.mxu0 %v7588
  %9998 = vmatpush.bf16.msra.mxu0 %v7587
  %9999 = vmatpush.bf16.msra.mxu0 %v7586
  %10000 = vmatpush.bf16.msra.mxu0 %v7585
  %10001 = vmatpush.bf16.msra.mxu0 %v7584
  %10002 = vmatmul.bf16.gmra.mxu0 %v2733
  %v10003 = vpop.f32.mrf.mxu0
  %v10004 = vadd.f32 %v9990, %v10003
  %v10005 = vpop.f32.mrf.mxu0
  %v10006 = vadd.f32 %v9992, %v10005
  %10007 = vdwg.mxu0
  %10008 = vmatpush.bf16.msra.mxu0 %v7599
  %10009 = vmatpush.bf16.msra.mxu0 %v7598
  %10010 = vmatpush.bf16.msra.mxu0 %v7597
  %10011 = vmatpush.bf16.msra.mxu0 %v7596
  %10012 = vmatpush.bf16.msra.mxu0 %v7595
  %10013 = vmatpush.bf16.msra.mxu0 %v7594
  %10014 = vmatpush.bf16.msra.mxu0 %v7593
  %10015 = vmatpush.bf16.msra.mxu0 %v7592
  %10016 = vmatmul.bf16.gmra.mxu0 %v2734
  %v10017 = vpop.f32.mrf.mxu0
  %v10018 = vadd.f32 %v10004, %v10017
  %v10019 = vpop.f32.mrf.mxu0
  %v10020 = vadd.f32 %v10006, %v10019
  %10021 = vdwg.mxu0
  %10022 = vmatpush.bf16.msra.mxu0 %v7607
  %10023 = vmatpush.bf16.msra.mxu0 %v7606
  %10024 = vmatpush.bf16.msra.mxu0 %v7605
  %10025 = vmatpush.bf16.msra.mxu0 %v7604
  %10026 = vmatpush.bf16.msra.mxu0 %v7603
  %10027 = vmatpush.bf16.msra.mxu0 %v7602
  %10028 = vmatpush.bf16.msra.mxu0 %v7601
  %10029 = vmatpush.bf16.msra.mxu0 %v7600
  %10030 = vmatmul.bf16.gmra.mxu0 %v2735
  %v10031 = vpop.f32.mrf.mxu0
  %v10032 = vadd.f32 %v10018, %v10031
  %v10033 = vpop.f32.mrf.mxu0
  %v10034 = vadd.f32 %v10020, %v10033
  %10035 = vdwg.mxu0
  %10036 = vmatpush.bf16.msra.mxu0 %v7615
  %10037 = vmatpush.bf16.msra.mxu0 %v7614
  %10038 = vmatpush.bf16.msra.mxu0 %v7613
  %10039 = vmatpush.bf16.msra.mxu0 %v7612
  %10040 = vmatpush.bf16.msra.mxu0 %v7611
  %10041 = vmatpush.bf16.msra.mxu0 %v7610
  %10042 = vmatpush.bf16.msra.mxu0 %v7609
  %10043 = vmatpush.bf16.msra.mxu0 %v7608
  %10044 = vmatmul.bf16.gmra.mxu0 %v2736
  %v10045 = vpop.f32.mrf.mxu0
  %v10046 = vadd.f32 %v10032, %v10045
  %v10047 = vpop.f32.mrf.mxu0
  %v10048 = vadd.f32 %v10034, %v10047
  %10049 = vdwg.mxu0
  %10050 = vmatpush.bf16.msra.mxu0 %v7623
  %10051 = vmatpush.bf16.msra.mxu0 %v7622
  %10052 = vmatpush.bf16.msra.mxu0 %v7621
  %10053 = vmatpush.bf16.msra.mxu0 %v7620
  %10054 = vmatpush.bf16.msra.mxu0 %v7619
  %10055 = vmatpush.bf16.msra.mxu0 %v7618
  %10056 = vmatpush.bf16.msra.mxu0 %v7617
  %10057 = vmatpush.bf16.msra.mxu0 %v7616
  %10058 = vmatmul.bf16.gmra.mxu0 %v2737
  %v10059 = vpop.f32.mrf.mxu0
  %v10060 = vadd.f32 %v10046, %v10059
  %v10061 = vpop.f32.mrf.mxu0
  %v10062 = vadd.f32 %v10048, %v10061
  %10063 = vdwg.mxu0
  %10064 = vmatpush.bf16.msra.mxu0 %v7631
  %10065 = vmatpush.bf16.msra.mxu0 %v7630
  %10066 = vmatpush.bf16.msra.mxu0 %v7629
  %10067 = vmatpush.bf16.msra.mxu0 %v7628
  %10068 = vmatpush.bf16.msra.mxu0 %v7627
  %10069 = vmatpush.bf16.msra.mxu0 %v7626
  %10070 = vmatpush.bf16.msra.mxu0 %v7625
  %10071 = vmatpush.bf16.msra.mxu0 %v7624
  %10072 = vmatmul.bf16.gmra.mxu0 %v2738
  %v10073 = vpop.f32.mrf.mxu0
  %v10074 = vadd.f32 %v10060, %v10073
  %v10075 = vpop.f32.mrf.mxu0
  %v10076 = vadd.f32 %v10062, %v10075
  %10077 = vdwg.mxu0
  %10078 = vmatpush.bf16.msra.mxu0 %v7639
  %10079 = vmatpush.bf16.msra.mxu0 %v7638
  %10080 = vmatpush.bf16.msra.mxu0 %v7637
  %10081 = vmatpush.bf16.msra.mxu0 %v7636
  %10082 = vmatpush.bf16.msra.mxu0 %v7635
  %10083 = vmatpush.bf16.msra.mxu0 %v7634
  %10084 = vmatpush.bf16.msra.mxu0 %v7633
  %10085 = vmatpush.bf16.msra.mxu0 %v7632
  %10086 = vmatmul.bf16.gmra.mxu0 %v2739
  %v10087 = vpop.f32.mrf.mxu0
  %v10088 = vadd.f32 %v10074, %v10087
  %v10089 = vpop.f32.mrf.mxu0
  %v10090 = vadd.f32 %v10076, %v10089
  %10091 = vdwg.mxu0
  %10092 = vmatpush.bf16.msra.mxu0 %v7647
  %10093 = vmatpush.bf16.msra.mxu0 %v7646
  %10094 = vmatpush.bf16.msra.mxu0 %v7645
  %10095 = vmatpush.bf16.msra.mxu0 %v7644
  %10096 = vmatpush.bf16.msra.mxu0 %v7643
  %10097 = vmatpush.bf16.msra.mxu0 %v7642
  %10098 = vmatpush.bf16.msra.mxu0 %v7641
  %10099 = vmatpush.bf16.msra.mxu0 %v7640
  %10100 = vmatmul.bf16.gmra.mxu0 %v2740
  %v10101 = vpop.f32.mrf.mxu0
  %v10102 = vadd.f32 %v10088, %v10101
  %v10103 = vpop.f32.mrf.mxu0
  %v10104 = vadd.f32 %v10090, %v10103
  %10105 = vdwg.mxu0
  %10106 = vmatpush.bf16.msra.mxu0 %v7655
  %10107 = vmatpush.bf16.msra.mxu0 %v7654
  %10108 = vmatpush.bf16.msra.mxu0 %v7653
  %10109 = vmatpush.bf16.msra.mxu0 %v7652
  %10110 = vmatpush.bf16.msra.mxu0 %v7651
  %10111 = vmatpush.bf16.msra.mxu0 %v7650
  %10112 = vmatpush.bf16.msra.mxu0 %v7649
  %10113 = vmatpush.bf16.msra.mxu0 %v7648
  %10114 = vmatmul.bf16.gmra.mxu0 %v2741
  %v10115 = vpop.f32.mrf.mxu0
  %v10116 = vadd.f32 %v10102, %v10115
  %v10117 = vpop.f32.mrf.mxu0
  %v10118 = vadd.f32 %v10104, %v10117
  %10119 = vdwg.mxu0
  %10120 = vmatpush.bf16.msra.mxu0 %v7663
  %10121 = vmatpush.bf16.msra.mxu0 %v7662
  %10122 = vmatpush.bf16.msra.mxu0 %v7661
  %10123 = vmatpush.bf16.msra.mxu0 %v7660
  %10124 = vmatpush.bf16.msra.mxu0 %v7659
  %10125 = vmatpush.bf16.msra.mxu0 %v7658
  %10126 = vmatpush.bf16.msra.mxu0 %v7657
  %10127 = vmatpush.bf16.msra.mxu0 %v7656
  %10128 = vmatmul.bf16.gmra.mxu0 %v2742
  %v10129 = vpop.f32.mrf.mxu0
  %v10130 = vadd.f32 %v10116, %v10129
  %v10131 = vpop.f32.mrf.mxu0
  %v10132 = vadd.f32 %v10118, %v10131
  %10133 = vdwg.mxu0
  %10134 = vmatpush.bf16.msra.mxu0 %v7671
  %10135 = vmatpush.bf16.msra.mxu0 %v7670
  %10136 = vmatpush.bf16.msra.mxu0 %v7669
  %10137 = vmatpush.bf16.msra.mxu0 %v7668
  %10138 = vmatpush.bf16.msra.mxu0 %v7667
  %10139 = vmatpush.bf16.msra.mxu0 %v7666
  %10140 = vmatpush.bf16.msra.mxu0 %v7665
  %10141 = vmatpush.bf16.msra.mxu0 %v7664
  %10142 = vmatmul.bf16.gmra.mxu0 %v2743
  %v10143 = vpop.f32.mrf.mxu0
  %v10144 = vadd.f32 %v10130, %v10143
  %v10145 = vpop.f32.mrf.mxu0
  %v10146 = vadd.f32 %v10132, %v10145
  %10147 = vdwg.mxu0
  %10148 = vmatpush.bf16.msra.mxu0 %v7679
  %10149 = vmatpush.bf16.msra.mxu0 %v7678
  %10150 = vmatpush.bf16.msra.mxu0 %v7677
  %10151 = vmatpush.bf16.msra.mxu0 %v7676
  %10152 = vmatpush.bf16.msra.mxu0 %v7675
  %10153 = vmatpush.bf16.msra.mxu0 %v7674
  %10154 = vmatpush.bf16.msra.mxu0 %v7673
  %10155 = vmatpush.bf16.msra.mxu0 %v7672
  %10156 = vmatmul.bf16.gmra.mxu0 %v2744
  %v10157 = vpop.f32.mrf.mxu0
  %v10158 = vadd.f32 %v10144, %v10157
  %v10159 = vpop.f32.mrf.mxu0
  %v10160 = vadd.f32 %v10146, %v10159
  %10161 = vdwg.mxu0
  %10162 = vmatpush.bf16.msra.mxu0 %v7687
  %10163 = vmatpush.bf16.msra.mxu0 %v7686
  %10164 = vmatpush.bf16.msra.mxu0 %v7685
  %10165 = vmatpush.bf16.msra.mxu0 %v7684
  %10166 = vmatpush.bf16.msra.mxu0 %v7683
  %10167 = vmatpush.bf16.msra.mxu0 %v7682
  %10168 = vmatpush.bf16.msra.mxu0 %v7681
  %10169 = vmatpush.bf16.msra.mxu0 %v7680
  %10170 = vmatmul.bf16.gmra.mxu0 %v2745
  %v10171 = vpop.f32.mrf.mxu0
  %v10172 = vadd.f32 %v10158, %v10171
  %v10173 = vpop.f32.mrf.mxu0
  %v10174 = vadd.f32 %v10160, %v10173
  %10175 = vdwg.mxu0
  %10176 = vmatpush.bf16.msra.mxu0 %v7695
  %10177 = vmatpush.bf16.msra.mxu0 %v7694
  %10178 = vmatpush.bf16.msra.mxu0 %v7693
  %10179 = vmatpush.bf16.msra.mxu0 %v7692
  %10180 = vmatpush.bf16.msra.mxu0 %v7691
  %10181 = vmatpush.bf16.msra.mxu0 %v7690
  %10182 = vmatpush.bf16.msra.mxu0 %v7689
  %10183 = vmatpush.bf16.msra.mxu0 %v7688
  %10184 = vmatmul.bf16.gmra.mxu0 %v2746
  %v10185 = vpop.f32.mrf.mxu0
  %v10186 = vadd.f32 %v10172, %v10185
  %v10187 = vpop.f32.mrf.mxu0
  %v10188 = vadd.f32 %v10174, %v10187
  %10189 = vdwg.mxu0
  %10190 = vmatpush.bf16.msra.mxu0 %v7703
  %10191 = vmatpush.bf16.msra.mxu0 %v7702
  %10192 = vmatpush.bf16.msra.mxu0 %v7701
  %10193 = vmatpush.bf16.msra.mxu0 %v7700
  %10194 = vmatpush.bf16.msra.mxu0 %v7699
  %10195 = vmatpush.bf16.msra.mxu0 %v7698
  %10196 = vmatpush.bf16.msra.mxu0 %v7697
  %10197 = vmatpush.bf16.msra.mxu0 %v7696
  %10198 = vmatmul.bf16.gmra.mxu0 %v2747
  %v10199 = vpop.f32.mrf.mxu0
  %v10200 = vadd.f32 %v10186, %v10199
  %v10201 = vpop.f32.mrf.mxu0
  %v10202 = vadd.f32 %v10188, %v10201
  %10203 = vdwg.mxu0
  %10204 = vmatpush.bf16.msra.mxu0 %v7711
  %10205 = vmatpush.bf16.msra.mxu0 %v7710
  %10206 = vmatpush.bf16.msra.mxu0 %v7709
  %10207 = vmatpush.bf16.msra.mxu0 %v7708
  %10208 = vmatpush.bf16.msra.mxu0 %v7707
  %10209 = vmatpush.bf16.msra.mxu0 %v7706
  %10210 = vmatpush.bf16.msra.mxu0 %v7705
  %10211 = vmatpush.bf16.msra.mxu0 %v7704
  %10212 = vmatmul.bf16.gmra.mxu0 %v2748
  %v10213 = vpop.f32.mrf.mxu0
  %v10214 = vadd.f32 %v10200, %v10213
  %v10215 = vpop.f32.mrf.mxu0
  %v10216 = vadd.f32 %v10202, %v10215
  %10217 = vdwg.mxu0
  %10218 = vmatpush.bf16.msra.mxu0 %v7719
  %10219 = vmatpush.bf16.msra.mxu0 %v7718
  %10220 = vmatpush.bf16.msra.mxu0 %v7717
  %10221 = vmatpush.bf16.msra.mxu0 %v7716
  %10222 = vmatpush.bf16.msra.mxu0 %v7715
  %10223 = vmatpush.bf16.msra.mxu0 %v7714
  %10224 = vmatpush.bf16.msra.mxu0 %v7713
  %10225 = vmatpush.bf16.msra.mxu0 %v7712
  %10226 = vmatmul.bf16.gmra.mxu0 %v2749
  %v10227 = vpop.f32.mrf.mxu0
  %v10228 = vadd.f32 %v10214, %v10227
  %v10229 = vpop.f32.mrf.mxu0
  %v10230 = vadd.f32 %v10216, %v10229
  %10231 = vdwg.mxu0
  %10232 = vmatpush.bf16.msra.mxu0 %v7727
  %10233 = vmatpush.bf16.msra.mxu0 %v7726
  %10234 = vmatpush.bf16.msra.mxu0 %v7725
  %10235 = vmatpush.bf16.msra.mxu0 %v7724
  %10236 = vmatpush.bf16.msra.mxu0 %v7723
  %10237 = vmatpush.bf16.msra.mxu0 %v7722
  %10238 = vmatpush.bf16.msra.mxu0 %v7721
  %10239 = vmatpush.bf16.msra.mxu0 %v7720
  %10240 = vmatmul.bf16.gmra.mxu0 %v2750
  %v10241 = vpop.f32.mrf.mxu0
  %v10242 = vadd.f32 %v10228, %v10241
  %v10243 = vpop.f32.mrf.mxu0
  %v10244 = vadd.f32 %v10230, %v10243
  %10245 = vdwg.mxu0
  %10246 = vmatpush.bf16.msra.mxu0 %v7735
  %10247 = vmatpush.bf16.msra.mxu0 %v7734
  %10248 = vmatpush.bf16.msra.mxu0 %v7733
  %10249 = vmatpush.bf16.msra.mxu0 %v7732
  %10250 = vmatpush.bf16.msra.mxu0 %v7731
  %10251 = vmatpush.bf16.msra.mxu0 %v7730
  %10252 = vmatpush.bf16.msra.mxu0 %v7729
  %10253 = vmatpush.bf16.msra.mxu0 %v7728
  %10254 = vmatmul.bf16.gmra.mxu0 %v2751
  %v10255 = vpop.f32.mrf.mxu0
  %v10256 = vadd.f32 %v10242, %v10255
  %v10257 = vpop.f32.mrf.mxu0
  %v10258 = vadd.f32 %v10244, %v10257
  %10259 = vdwg.mxu0
  %10260 = vmatpush.bf16.msra.mxu0 %v7743
  %10261 = vmatpush.bf16.msra.mxu0 %v7742
  %10262 = vmatpush.bf16.msra.mxu0 %v7741
  %10263 = vmatpush.bf16.msra.mxu0 %v7740
  %10264 = vmatpush.bf16.msra.mxu0 %v7739
  %10265 = vmatpush.bf16.msra.mxu0 %v7738
  %10266 = vmatpush.bf16.msra.mxu0 %v7737
  %10267 = vmatpush.bf16.msra.mxu0 %v7736
  %10268 = vmatmul.bf16.gmra.mxu0 %v2752
  %v10269 = vpop.f32.mrf.mxu0
  %v10270 = vadd.f32 %v10256, %v10269
  %v10271 = vpop.f32.mrf.mxu0
  %v10272 = vadd.f32 %v10258, %v10271
  %10273 = vdwg.mxu0
  %10274 = vmatpush.bf16.msra.mxu0 %v7751
  %10275 = vmatpush.bf16.msra.mxu0 %v7750
  %10276 = vmatpush.bf16.msra.mxu0 %v7749
  %10277 = vmatpush.bf16.msra.mxu0 %v7748
  %10278 = vmatpush.bf16.msra.mxu0 %v7747
  %10279 = vmatpush.bf16.msra.mxu0 %v7746
  %10280 = vmatpush.bf16.msra.mxu0 %v7745
  %10281 = vmatpush.bf16.msra.mxu0 %v7744
  %10282 = vmatmul.bf16.gmra.mxu0 %v2753
  %v10283 = vpop.f32.mrf.mxu0
  %v10284 = vadd.f32 %v10270, %v10283
  %v10285 = vpop.f32.mrf.mxu0
  %v10286 = vadd.f32 %v10272, %v10285
  %10287 = vdwg.mxu0
  %10288 = vmatpush.bf16.msra.mxu0 %v7759
  %10289 = vmatpush.bf16.msra.mxu0 %v7758
  %10290 = vmatpush.bf16.msra.mxu0 %v7757
  %10291 = vmatpush.bf16.msra.mxu0 %v7756
  %10292 = vmatpush.bf16.msra.mxu0 %v7755
  %10293 = vmatpush.bf16.msra.mxu0 %v7754
  %10294 = vmatpush.bf16.msra.mxu0 %v7753
  %10295 = vmatpush.bf16.msra.mxu0 %v7752
  %10296 = vmatmul.bf16.gmra.mxu0 %v2754
  %v10297 = vpop.f32.mrf.mxu0
  %v10298 = vadd.f32 %v10284, %v10297
  %v10299 = vpop.f32.mrf.mxu0
  %v10300 = vadd.f32 %v10286, %v10299
  %10301 = vdwg.mxu0
  %10302 = vmatpush.bf16.msra.mxu0 %v7767
  %10303 = vmatpush.bf16.msra.mxu0 %v7766
  %10304 = vmatpush.bf16.msra.mxu0 %v7765
  %10305 = vmatpush.bf16.msra.mxu0 %v7764
  %10306 = vmatpush.bf16.msra.mxu0 %v7763
  %10307 = vmatpush.bf16.msra.mxu0 %v7762
  %10308 = vmatpush.bf16.msra.mxu0 %v7761
  %10309 = vmatpush.bf16.msra.mxu0 %v7760
  %10310 = vmatmul.bf16.gmra.mxu0 %v2755
  %v10311 = vpop.f32.mrf.mxu0
  %v10312 = vadd.f32 %v10298, %v10311
  %v10313 = vpop.f32.mrf.mxu0
  %v10314 = vadd.f32 %v10300, %v10313
  %10315 = vdwg.mxu0
  %10316 = vmatpush.bf16.msra.mxu0 %v7775
  %10317 = vmatpush.bf16.msra.mxu0 %v7774
  %10318 = vmatpush.bf16.msra.mxu0 %v7773
  %10319 = vmatpush.bf16.msra.mxu0 %v7772
  %10320 = vmatpush.bf16.msra.mxu0 %v7771
  %10321 = vmatpush.bf16.msra.mxu0 %v7770
  %10322 = vmatpush.bf16.msra.mxu0 %v7769
  %10323 = vmatpush.bf16.msra.mxu0 %v7768
  %10324 = vmatmul.bf16.gmra.mxu0 %v2756
  %v10325 = vpop.f32.mrf.mxu0
  %v10326 = vadd.f32 %v10312, %v10325
  %v10327 = vpop.f32.mrf.mxu0
  %v10328 = vadd.f32 %v10314, %v10327
  %10329 = vdwg.mxu0
  %10330 = vmatpush.bf16.msra.mxu0 %v7783
  %10331 = vmatpush.bf16.msra.mxu0 %v7782
  %10332 = vmatpush.bf16.msra.mxu0 %v7781
  %10333 = vmatpush.bf16.msra.mxu0 %v7780
  %10334 = vmatpush.bf16.msra.mxu0 %v7779
  %10335 = vmatpush.bf16.msra.mxu0 %v7778
  %10336 = vmatpush.bf16.msra.mxu0 %v7777
  %10337 = vmatpush.bf16.msra.mxu0 %v7776
  %10338 = vmatmul.bf16.gmra.mxu0 %v2757
  %v10339 = vpop.f32.mrf.mxu0
  %v10340 = vadd.f32 %v10326, %v10339
  %v10341 = vpop.f32.mrf.mxu0
  %v10342 = vadd.f32 %v10328, %v10341
  %10343 = vdwg.mxu0
  %10344 = vmatpush.bf16.msra.mxu0 %v7791
  %10345 = vmatpush.bf16.msra.mxu0 %v7790
  %10346 = vmatpush.bf16.msra.mxu0 %v7789
  %10347 = vmatpush.bf16.msra.mxu0 %v7788
  %10348 = vmatpush.bf16.msra.mxu0 %v7787
  %10349 = vmatpush.bf16.msra.mxu0 %v7786
  %10350 = vmatpush.bf16.msra.mxu0 %v7785
  %10351 = vmatpush.bf16.msra.mxu0 %v7784
  %10352 = vmatmul.bf16.gmra.mxu0 %v2758
  %v10353 = vpop.f32.mrf.mxu0
  %v10354 = vadd.f32 %v10340, %v10353
  %v10355 = vpop.f32.mrf.mxu0
  %v10356 = vadd.f32 %v10342, %v10355
  %10357 = vdwg.mxu0
  %10358 = vmatpush.bf16.msra.mxu0 %v7799
  %10359 = vmatpush.bf16.msra.mxu0 %v7798
  %10360 = vmatpush.bf16.msra.mxu0 %v7797
  %10361 = vmatpush.bf16.msra.mxu0 %v7796
  %10362 = vmatpush.bf16.msra.mxu0 %v7795
  %10363 = vmatpush.bf16.msra.mxu0 %v7794
  %10364 = vmatpush.bf16.msra.mxu0 %v7793
  %10365 = vmatpush.bf16.msra.mxu0 %v7792
  %10366 = vmatmul.bf16.gmra.mxu0 %v2759
  %v10367 = vpop.f32.mrf.mxu0
  %v10368 = vadd.f32 %v10354, %v10367
  %v10369 = vpop.f32.mrf.mxu0
  %v10370 = vadd.f32 %v10356, %v10369
  %10371 = vdwg.mxu0
  %10372 = vmatpush.bf16.msra.mxu0 %v7807
  %10373 = vmatpush.bf16.msra.mxu0 %v7806
  %10374 = vmatpush.bf16.msra.mxu0 %v7805
  %10375 = vmatpush.bf16.msra.mxu0 %v7804
  %10376 = vmatpush.bf16.msra.mxu0 %v7803
  %10377 = vmatpush.bf16.msra.mxu0 %v7802
  %10378 = vmatpush.bf16.msra.mxu0 %v7801
  %10379 = vmatpush.bf16.msra.mxu0 %v7800
  %10380 = vmatmul.bf16.gmra.mxu0 %v2760
  %v10381 = vpop.f32.mrf.mxu0
  %v10382 = vadd.f32 %v10368, %v10381
  %v10383 = vpop.f32.mrf.mxu0
  %v10384 = vadd.f32 %v10370, %v10383
  %10385 = vdwg.mxu0
  %10386 = vmatpush.bf16.msra.mxu0 %v7815
  %10387 = vmatpush.bf16.msra.mxu0 %v7814
  %10388 = vmatpush.bf16.msra.mxu0 %v7813
  %10389 = vmatpush.bf16.msra.mxu0 %v7812
  %10390 = vmatpush.bf16.msra.mxu0 %v7811
  %10391 = vmatpush.bf16.msra.mxu0 %v7810
  %10392 = vmatpush.bf16.msra.mxu0 %v7809
  %10393 = vmatpush.bf16.msra.mxu0 %v7808
  %10394 = vmatmul.bf16.gmra.mxu0 %v2761
  %v10395 = vpop.f32.mrf.mxu0
  %v10396 = vadd.f32 %v10382, %v10395
  %v10397 = vpop.f32.mrf.mxu0
  %v10398 = vadd.f32 %v10384, %v10397
  %10399 = vdwg.mxu0
  %10400 = vmatpush.bf16.msra.mxu0 %v7823
  %10401 = vmatpush.bf16.msra.mxu0 %v7822
  %10402 = vmatpush.bf16.msra.mxu0 %v7821
  %10403 = vmatpush.bf16.msra.mxu0 %v7820
  %10404 = vmatpush.bf16.msra.mxu0 %v7819
  %10405 = vmatpush.bf16.msra.mxu0 %v7818
  %10406 = vmatpush.bf16.msra.mxu0 %v7817
  %10407 = vmatpush.bf16.msra.mxu0 %v7816
  %10408 = vmatmul.bf16.gmra.mxu0 %v2762
  %v10409 = vpop.f32.mrf.mxu0
  %v10410 = vadd.f32 %v10396, %v10409
  %v10411 = vpop.f32.mrf.mxu0
  %v10412 = vadd.f32 %v10398, %v10411
  %10413 = vdwg.mxu0
  %10414 = vmatpush.bf16.msra.mxu0 %v7831
  %10415 = vmatpush.bf16.msra.mxu0 %v7830
  %10416 = vmatpush.bf16.msra.mxu0 %v7829
  %10417 = vmatpush.bf16.msra.mxu0 %v7828
  %10418 = vmatpush.bf16.msra.mxu0 %v7827
  %10419 = vmatpush.bf16.msra.mxu0 %v7826
  %10420 = vmatpush.bf16.msra.mxu0 %v7825
  %10421 = vmatpush.bf16.msra.mxu0 %v7824
  %10422 = vmatmul.bf16.gmra.mxu0 %v2763
  %v10423 = vpop.f32.mrf.mxu0
  %v10424 = vadd.f32 %v10410, %v10423
  %v10425 = vpop.f32.mrf.mxu0
  %v10426 = vadd.f32 %v10412, %v10425
  %10427 = vdwg.mxu0
  %10428 = vmatpush.bf16.msra.mxu0 %v7839
  %10429 = vmatpush.bf16.msra.mxu0 %v7838
  %10430 = vmatpush.bf16.msra.mxu0 %v7837
  %10431 = vmatpush.bf16.msra.mxu0 %v7836
  %10432 = vmatpush.bf16.msra.mxu0 %v7835
  %10433 = vmatpush.bf16.msra.mxu0 %v7834
  %10434 = vmatpush.bf16.msra.mxu0 %v7833
  %10435 = vmatpush.bf16.msra.mxu0 %v7832
  %10436 = vmatmul.bf16.gmra.mxu0 %v2764
  %v10437 = vpop.f32.mrf.mxu0
  %v10438 = vadd.f32 %v10424, %v10437
  %v10439 = vpop.f32.mrf.mxu0
  %v10440 = vadd.f32 %v10426, %v10439
  %10441 = vdwg.mxu0
  %10442 = vmatpush.bf16.msra.mxu0 %v7847
  %10443 = vmatpush.bf16.msra.mxu0 %v7846
  %10444 = vmatpush.bf16.msra.mxu0 %v7845
  %10445 = vmatpush.bf16.msra.mxu0 %v7844
  %10446 = vmatpush.bf16.msra.mxu0 %v7843
  %10447 = vmatpush.bf16.msra.mxu0 %v7842
  %10448 = vmatpush.bf16.msra.mxu0 %v7841
  %10449 = vmatpush.bf16.msra.mxu0 %v7840
  %10450 = vmatmul.bf16.gmra.mxu0 %v2765
  %v10451 = vpop.f32.mrf.mxu0
  %v10452 = vadd.f32 %v10438, %v10451
  %v10453 = vpop.f32.mrf.mxu0
  %v10454 = vadd.f32 %v10440, %v10453
  %10455 = vdwg.mxu0
  %10456 = vmatpush.bf16.msra.mxu0 %v7855
  %10457 = vmatpush.bf16.msra.mxu0 %v7854
  %10458 = vmatpush.bf16.msra.mxu0 %v7853
  %10459 = vmatpush.bf16.msra.mxu0 %v7852
  %10460 = vmatpush.bf16.msra.mxu0 %v7851
  %10461 = vmatpush.bf16.msra.mxu0 %v7850
  %10462 = vmatpush.bf16.msra.mxu0 %v7849
  %10463 = vmatpush.bf16.msra.mxu0 %v7848
  %10464 = vmatmul.bf16.gmra.mxu0 %v2766
  %v10465 = vpop.f32.mrf.mxu0
  %v10466 = vadd.f32 %v10452, %v10465
  %v10467 = vpop.f32.mrf.mxu0
  %v10468 = vadd.f32 %v10454, %v10467
  %10469 = vdwg.mxu0
  %10470 = vmatpush.bf16.msra.mxu0 %v7863
  %10471 = vmatpush.bf16.msra.mxu0 %v7862
  %10472 = vmatpush.bf16.msra.mxu0 %v7861
  %10473 = vmatpush.bf16.msra.mxu0 %v7860
  %10474 = vmatpush.bf16.msra.mxu0 %v7859
  %10475 = vmatpush.bf16.msra.mxu0 %v7858
  %10476 = vmatpush.bf16.msra.mxu0 %v7857
  %10477 = vmatpush.bf16.msra.mxu0 %v7856
  %10478 = vmatmul.bf16.gmra.mxu0 %v2767
  %v10479 = vpop.f32.mrf.mxu0
  %v10480 = vadd.f32 %v10466, %v10479
  %v10481 = vpop.f32.mrf.mxu0
  %v10482 = vadd.f32 %v10468, %v10481
  %10483 = vdwg.mxu0
  %10484 = vmatpush.bf16.msra.mxu0 %v7871
  %10485 = vmatpush.bf16.msra.mxu0 %v7870
  %10486 = vmatpush.bf16.msra.mxu0 %v7869
  %10487 = vmatpush.bf16.msra.mxu0 %v7868
  %10488 = vmatpush.bf16.msra.mxu0 %v7867
  %10489 = vmatpush.bf16.msra.mxu0 %v7866
  %10490 = vmatpush.bf16.msra.mxu0 %v7865
  %10491 = vmatpush.bf16.msra.mxu0 %v7864
  %10492 = vmatmul.bf16.gmra.mxu0 %v2768
  %v10493 = vpop.f32.mrf.mxu0
  %v10494 = vadd.f32 %v10480, %v10493
  %v10495 = vpop.f32.mrf.mxu0
  %v10496 = vadd.f32 %v10482, %v10495
  %10497 = vdwg.mxu0
  %10498 = vmatpush.bf16.msra.mxu0 %v7879
  %10499 = vmatpush.bf16.msra.mxu0 %v7878
  %10500 = vmatpush.bf16.msra.mxu0 %v7877
  %10501 = vmatpush.bf16.msra.mxu0 %v7876
  %10502 = vmatpush.bf16.msra.mxu0 %v7875
  %10503 = vmatpush.bf16.msra.mxu0 %v7874
  %10504 = vmatpush.bf16.msra.mxu0 %v7873
  %10505 = vmatpush.bf16.msra.mxu0 %v7872
  %10506 = vmatmul.bf16.gmra.mxu0 %v2769
  %v10507 = vpop.f32.mrf.mxu0
  %v10508 = vadd.f32 %v10494, %v10507
  %v10509 = vpop.f32.mrf.mxu0
  %v10510 = vadd.f32 %v10496, %v10509
  %10511 = vdwg.mxu0
  %10512 = vmatpush.bf16.msra.mxu0 %v7887
  %10513 = vmatpush.bf16.msra.mxu0 %v7886
  %10514 = vmatpush.bf16.msra.mxu0 %v7885
  %10515 = vmatpush.bf16.msra.mxu0 %v7884
  %10516 = vmatpush.bf16.msra.mxu0 %v7883
  %10517 = vmatpush.bf16.msra.mxu0 %v7882
  %10518 = vmatpush.bf16.msra.mxu0 %v7881
  %10519 = vmatpush.bf16.msra.mxu0 %v7880
  %10520 = vmatmul.bf16.gmra.mxu0 %v2770
  %v10521 = vpop.f32.mrf.mxu0
  %v10522 = vadd.f32 %v10508, %v10521
  %v10523 = vpop.f32.mrf.mxu0
  %v10524 = vadd.f32 %v10510, %v10523
  %10525 = vdwg.mxu0
  %10526 = vmatpush.bf16.msra.mxu0 %v7895
  %10527 = vmatpush.bf16.msra.mxu0 %v7894
  %10528 = vmatpush.bf16.msra.mxu0 %v7893
  %10529 = vmatpush.bf16.msra.mxu0 %v7892
  %10530 = vmatpush.bf16.msra.mxu0 %v7891
  %10531 = vmatpush.bf16.msra.mxu0 %v7890
  %10532 = vmatpush.bf16.msra.mxu0 %v7889
  %10533 = vmatpush.bf16.msra.mxu0 %v7888
  %10534 = vmatmul.bf16.gmra.mxu0 %v2771
  %v10535 = vpop.f32.mrf.mxu0
  %v10536 = vadd.f32 %v10522, %v10535
  %v10537 = vpop.f32.mrf.mxu0
  %v10538 = vadd.f32 %v10524, %v10537
  %10539 = vdwg.mxu0
  %10540 = vmatpush.bf16.msra.mxu0 %v7903
  %10541 = vmatpush.bf16.msra.mxu0 %v7902
  %10542 = vmatpush.bf16.msra.mxu0 %v7901
  %10543 = vmatpush.bf16.msra.mxu0 %v7900
  %10544 = vmatpush.bf16.msra.mxu0 %v7899
  %10545 = vmatpush.bf16.msra.mxu0 %v7898
  %10546 = vmatpush.bf16.msra.mxu0 %v7897
  %10547 = vmatpush.bf16.msra.mxu0 %v7896
  %10548 = vmatmul.bf16.gmra.mxu0 %v2772
  %v10549 = vpop.f32.mrf.mxu0
  %v10550 = vadd.f32 %v10536, %v10549
  %v10551 = vpop.f32.mrf.mxu0
  %v10552 = vadd.f32 %v10538, %v10551
  %10553 = vdwg.mxu0
  %10554 = vmatpush.bf16.msra.mxu0 %v7911
  %10555 = vmatpush.bf16.msra.mxu0 %v7910
  %10556 = vmatpush.bf16.msra.mxu0 %v7909
  %10557 = vmatpush.bf16.msra.mxu0 %v7908
  %10558 = vmatpush.bf16.msra.mxu0 %v7907
  %10559 = vmatpush.bf16.msra.mxu0 %v7906
  %10560 = vmatpush.bf16.msra.mxu0 %v7905
  %10561 = vmatpush.bf16.msra.mxu0 %v7904
  %10562 = vmatmul.bf16.gmra.mxu0 %v2773
  %v10563 = vpop.f32.mrf.mxu0
  %v10564 = vadd.f32 %v10550, %v10563
  %v10565 = vpop.f32.mrf.mxu0
  %v10566 = vadd.f32 %v10552, %v10565
  %10567 = vdwg.mxu0
  %10568 = vmatpush.bf16.msra.mxu0 %v7919
  %10569 = vmatpush.bf16.msra.mxu0 %v7918
  %10570 = vmatpush.bf16.msra.mxu0 %v7917
  %10571 = vmatpush.bf16.msra.mxu0 %v7916
  %10572 = vmatpush.bf16.msra.mxu0 %v7915
  %10573 = vmatpush.bf16.msra.mxu0 %v7914
  %10574 = vmatpush.bf16.msra.mxu0 %v7913
  %10575 = vmatpush.bf16.msra.mxu0 %v7912
  %10576 = vmatmul.bf16.gmra.mxu0 %v2774
  %v10577 = vpop.f32.mrf.mxu0
  %v10578 = vadd.f32 %v10564, %v10577
  %v10579 = vpop.f32.mrf.mxu0
  %v10580 = vadd.f32 %v10566, %v10579
  %10581 = vdwg.mxu0
  %10582 = vmatpush.bf16.msra.mxu0 %v7927
  %10583 = vmatpush.bf16.msra.mxu0 %v7926
  %10584 = vmatpush.bf16.msra.mxu0 %v7925
  %10585 = vmatpush.bf16.msra.mxu0 %v7924
  %10586 = vmatpush.bf16.msra.mxu0 %v7923
  %10587 = vmatpush.bf16.msra.mxu0 %v7922
  %10588 = vmatpush.bf16.msra.mxu0 %v7921
  %10589 = vmatpush.bf16.msra.mxu0 %v7920
  %10590 = vmatmul.bf16.gmra.mxu0 %v2775
  %v10591 = vpop.f32.mrf.mxu0
  %v10592 = vadd.f32 %v10578, %v10591
  %v10593 = vpop.f32.mrf.mxu0
  %v10594 = vadd.f32 %v10580, %v10593
  %10595 = vdwg.mxu0
  %10596 = vmatpush.bf16.msra.mxu0 %v7935
  %10597 = vmatpush.bf16.msra.mxu0 %v7934
  %10598 = vmatpush.bf16.msra.mxu0 %v7933
  %10599 = vmatpush.bf16.msra.mxu0 %v7932
  %10600 = vmatpush.bf16.msra.mxu0 %v7931
  %10601 = vmatpush.bf16.msra.mxu0 %v7930
  %10602 = vmatpush.bf16.msra.mxu0 %v7929
  %10603 = vmatpush.bf16.msra.mxu0 %v7928
  %10604 = vmatmul.bf16.gmra.mxu0 %v2776
  %v10605 = vpop.f32.mrf.mxu0
  %v10606 = vadd.f32 %v10592, %v10605
  %v10607 = vpop.f32.mrf.mxu0
  %v10608 = vadd.f32 %v10594, %v10607
  %10609 = vdwg.mxu0
  %10610 = vmatpush.bf16.msra.mxu0 %v7943
  %10611 = vmatpush.bf16.msra.mxu0 %v7942
  %10612 = vmatpush.bf16.msra.mxu0 %v7941
  %10613 = vmatpush.bf16.msra.mxu0 %v7940
  %10614 = vmatpush.bf16.msra.mxu0 %v7939
  %10615 = vmatpush.bf16.msra.mxu0 %v7938
  %10616 = vmatpush.bf16.msra.mxu0 %v7937
  %10617 = vmatpush.bf16.msra.mxu0 %v7936
  %10618 = vmatmul.bf16.gmra.mxu0 %v2777
  %v10619 = vpop.f32.mrf.mxu0
  %v10620 = vadd.f32 %v10606, %v10619
  %v10621 = vpop.f32.mrf.mxu0
  %v10622 = vadd.f32 %v10608, %v10621
  %10623 = vdwg.mxu0
  %10624 = vmatpush.bf16.msra.mxu0 %v7951
  %10625 = vmatpush.bf16.msra.mxu0 %v7950
  %10626 = vmatpush.bf16.msra.mxu0 %v7949
  %10627 = vmatpush.bf16.msra.mxu0 %v7948
  %10628 = vmatpush.bf16.msra.mxu0 %v7947
  %10629 = vmatpush.bf16.msra.mxu0 %v7946
  %10630 = vmatpush.bf16.msra.mxu0 %v7945
  %10631 = vmatpush.bf16.msra.mxu0 %v7944
  %10632 = vmatmul.bf16.gmra.mxu0 %v2778
  %v10633 = vpop.f32.mrf.mxu0
  %v10634 = vadd.f32 %v10620, %v10633
  %v10635 = vpop.f32.mrf.mxu0
  %v10636 = vadd.f32 %v10622, %v10635
  %10637 = vdwg.mxu0
  %10638 = vmatpush.bf16.msra.mxu0 %v7959
  %10639 = vmatpush.bf16.msra.mxu0 %v7958
  %10640 = vmatpush.bf16.msra.mxu0 %v7957
  %10641 = vmatpush.bf16.msra.mxu0 %v7956
  %10642 = vmatpush.bf16.msra.mxu0 %v7955
  %10643 = vmatpush.bf16.msra.mxu0 %v7954
  %10644 = vmatpush.bf16.msra.mxu0 %v7953
  %10645 = vmatpush.bf16.msra.mxu0 %v7952
  %10646 = vmatmul.bf16.gmra.mxu0 %v2779
  %v10647 = vpop.f32.mrf.mxu0
  %v10648 = vadd.f32 %v10634, %v10647
  %v10649 = vpop.f32.mrf.mxu0
  %v10650 = vadd.f32 %v10636, %v10649
  %10651 = vdwg.mxu0
  %10652 = vmatpush.bf16.msra.mxu0 %v7967
  %10653 = vmatpush.bf16.msra.mxu0 %v7966
  %10654 = vmatpush.bf16.msra.mxu0 %v7965
  %10655 = vmatpush.bf16.msra.mxu0 %v7964
  %10656 = vmatpush.bf16.msra.mxu0 %v7963
  %10657 = vmatpush.bf16.msra.mxu0 %v7962
  %10658 = vmatpush.bf16.msra.mxu0 %v7961
  %10659 = vmatpush.bf16.msra.mxu0 %v7960
  %10660 = vmatmul.bf16.gmra.mxu0 %v2780
  %v10661 = vpop.f32.mrf.mxu0
  %v10662 = vadd.f32 %v10648, %v10661
  %v10663 = vpop.f32.mrf.mxu0
  %v10664 = vadd.f32 %v10650, %v10663
  %10665 = vdwg.mxu0
  %10666 = vmatpush.bf16.msra.mxu0 %v7975
  %10667 = vmatpush.bf16.msra.mxu0 %v7974
  %10668 = vmatpush.bf16.msra.mxu0 %v7973
  %10669 = vmatpush.bf16.msra.mxu0 %v7972
  %10670 = vmatpush.bf16.msra.mxu0 %v7971
  %10671 = vmatpush.bf16.msra.mxu0 %v7970
  %10672 = vmatpush.bf16.msra.mxu0 %v7969
  %10673 = vmatpush.bf16.msra.mxu0 %v7968
  %10674 = vmatmul.bf16.gmra.mxu0 %v2781
  %v10675 = vpop.f32.mrf.mxu0
  %v10676 = vadd.f32 %v10662, %v10675
  %v10677 = vpop.f32.mrf.mxu0
  %v10678 = vadd.f32 %v10664, %v10677
  %10679 = vdwg.mxu0
  %10680 = vmatpush.bf16.msra.mxu0 %v7983
  %10681 = vmatpush.bf16.msra.mxu0 %v7982
  %10682 = vmatpush.bf16.msra.mxu0 %v7981
  %10683 = vmatpush.bf16.msra.mxu0 %v7980
  %10684 = vmatpush.bf16.msra.mxu0 %v7979
  %10685 = vmatpush.bf16.msra.mxu0 %v7978
  %10686 = vmatpush.bf16.msra.mxu0 %v7977
  %10687 = vmatpush.bf16.msra.mxu0 %v7976
  %10688 = vmatmul.bf16.gmra.mxu0 %v2782
  %v10689 = vpop.f32.mrf.mxu0
  %v10690 = vadd.f32 %v10676, %v10689
  %v10691 = vpop.f32.mrf.mxu0
  %v10692 = vadd.f32 %v10678, %v10691
  %10693 = vdwg.mxu0
  %10694 = vmatpush.bf16.msra.mxu0 %v7991
  %10695 = vmatpush.bf16.msra.mxu0 %v7990
  %10696 = vmatpush.bf16.msra.mxu0 %v7989
  %10697 = vmatpush.bf16.msra.mxu0 %v7988
  %10698 = vmatpush.bf16.msra.mxu0 %v7987
  %10699 = vmatpush.bf16.msra.mxu0 %v7986
  %10700 = vmatpush.bf16.msra.mxu0 %v7985
  %10701 = vmatpush.bf16.msra.mxu0 %v7984
  %10702 = vmatmul.bf16.gmra.mxu0 %v2783
  %v10703 = vpop.f32.mrf.mxu0
  %v10704 = vadd.f32 %v10690, %v10703
  %v10705 = vpop.f32.mrf.mxu0
  %v10706 = vadd.f32 %v10692, %v10705
  %10707 = vdwg.mxu0
  %10708 = vmatpush.bf16.msra.mxu0 %v7999
  %10709 = vmatpush.bf16.msra.mxu0 %v7998
  %10710 = vmatpush.bf16.msra.mxu0 %v7997
  %10711 = vmatpush.bf16.msra.mxu0 %v7996
  %10712 = vmatpush.bf16.msra.mxu0 %v7995
  %10713 = vmatpush.bf16.msra.mxu0 %v7994
  %10714 = vmatpush.bf16.msra.mxu0 %v7993
  %10715 = vmatpush.bf16.msra.mxu0 %v7992
  %10716 = vmatmul.bf16.gmra.mxu0 %v2784
  %v10717 = vpop.f32.mrf.mxu0
  %v10718 = vadd.f32 %v10704, %v10717
  %v10719 = vpop.f32.mrf.mxu0
  %v10720 = vadd.f32 %v10706, %v10719
  %10721 = vdwg.mxu0
  %10722 = vmatpush.bf16.msra.mxu0 %v8007
  %10723 = vmatpush.bf16.msra.mxu0 %v8006
  %10724 = vmatpush.bf16.msra.mxu0 %v8005
  %10725 = vmatpush.bf16.msra.mxu0 %v8004
  %10726 = vmatpush.bf16.msra.mxu0 %v8003
  %10727 = vmatpush.bf16.msra.mxu0 %v8002
  %10728 = vmatpush.bf16.msra.mxu0 %v8001
  %10729 = vmatpush.bf16.msra.mxu0 %v8000
  %10730 = vmatmul.bf16.gmra.mxu0 %v2785
  %v10731 = vpop.f32.mrf.mxu0
  %v10732 = vadd.f32 %v10718, %v10731
  %v10733 = vpop.f32.mrf.mxu0
  %v10734 = vadd.f32 %v10720, %v10733
  %10735 = vdwg.mxu0
  %10736 = vmatpush.bf16.msra.mxu0 %v8015
  %10737 = vmatpush.bf16.msra.mxu0 %v8014
  %10738 = vmatpush.bf16.msra.mxu0 %v8013
  %10739 = vmatpush.bf16.msra.mxu0 %v8012
  %10740 = vmatpush.bf16.msra.mxu0 %v8011
  %10741 = vmatpush.bf16.msra.mxu0 %v8010
  %10742 = vmatpush.bf16.msra.mxu0 %v8009
  %10743 = vmatpush.bf16.msra.mxu0 %v8008
  %10744 = vmatmul.bf16.gmra.mxu0 %v2786
  %v10745 = vpop.f32.mrf.mxu0
  %v10746 = vadd.f32 %v10732, %v10745
  %v10747 = vpop.f32.mrf.mxu0
  %v10748 = vadd.f32 %v10734, %v10747
  %10749 = vdwg.mxu0
  %10750 = vmatpush.bf16.msra.mxu0 %v8023
  %10751 = vmatpush.bf16.msra.mxu0 %v8022
  %10752 = vmatpush.bf16.msra.mxu0 %v8021
  %10753 = vmatpush.bf16.msra.mxu0 %v8020
  %10754 = vmatpush.bf16.msra.mxu0 %v8019
  %10755 = vmatpush.bf16.msra.mxu0 %v8018
  %10756 = vmatpush.bf16.msra.mxu0 %v8017
  %10757 = vmatpush.bf16.msra.mxu0 %v8016
  %10758 = vmatmul.bf16.gmra.mxu0 %v2787
  %v10759 = vpop.f32.mrf.mxu0
  %v10760 = vadd.f32 %v10746, %v10759
  %v10761 = vpop.f32.mrf.mxu0
  %v10762 = vadd.f32 %v10748, %v10761
  %10763 = vdwg.mxu0
  %10764 = vmatpush.bf16.msra.mxu0 %v8031
  %10765 = vmatpush.bf16.msra.mxu0 %v8030
  %10766 = vmatpush.bf16.msra.mxu0 %v8029
  %10767 = vmatpush.bf16.msra.mxu0 %v8028
  %10768 = vmatpush.bf16.msra.mxu0 %v8027
  %10769 = vmatpush.bf16.msra.mxu0 %v8026
  %10770 = vmatpush.bf16.msra.mxu0 %v8025
  %10771 = vmatpush.bf16.msra.mxu0 %v8024
  %10772 = vmatmul.bf16.gmra.mxu0 %v2788
  %v10773 = vpop.f32.mrf.mxu0
  %v10774 = vadd.f32 %v10760, %v10773
  %v10775 = vpop.f32.mrf.mxu0
  %v10776 = vadd.f32 %v10762, %v10775
  %10777 = vdwg.mxu0
  %10778 = vmatpush.bf16.msra.mxu0 %v8039
  %10779 = vmatpush.bf16.msra.mxu0 %v8038
  %10780 = vmatpush.bf16.msra.mxu0 %v8037
  %10781 = vmatpush.bf16.msra.mxu0 %v8036
  %10782 = vmatpush.bf16.msra.mxu0 %v8035
  %10783 = vmatpush.bf16.msra.mxu0 %v8034
  %10784 = vmatpush.bf16.msra.mxu0 %v8033
  %10785 = vmatpush.bf16.msra.mxu0 %v8032
  %10786 = vmatmul.bf16.gmra.mxu0 %v2789
  %v10787 = vpop.f32.mrf.mxu0
  %v10788 = vadd.f32 %v10774, %v10787
  %v10789 = vpop.f32.mrf.mxu0
  %v10790 = vadd.f32 %v10776, %v10789
  %10791 = vdwg.mxu0
  %10792 = vmatpush.bf16.msra.mxu0 %v8047
  %10793 = vmatpush.bf16.msra.mxu0 %v8046
  %10794 = vmatpush.bf16.msra.mxu0 %v8045
  %10795 = vmatpush.bf16.msra.mxu0 %v8044
  %10796 = vmatpush.bf16.msra.mxu0 %v8043
  %10797 = vmatpush.bf16.msra.mxu0 %v8042
  %10798 = vmatpush.bf16.msra.mxu0 %v8041
  %10799 = vmatpush.bf16.msra.mxu0 %v8040
  %10800 = vmatmul.bf16.gmra.mxu0 %v2790
  %v10801 = vpop.f32.mrf.mxu0
  %v10802 = vadd.f32 %v10788, %v10801
  %v10803 = vpop.f32.mrf.mxu0
  %v10804 = vadd.f32 %v10790, %v10803
  %10805 = vdwg.mxu0
  %10806 = vmatpush.bf16.msra.mxu0 %v8055
  %10807 = vmatpush.bf16.msra.mxu0 %v8054
  %10808 = vmatpush.bf16.msra.mxu0 %v8053
  %10809 = vmatpush.bf16.msra.mxu0 %v8052
  %10810 = vmatpush.bf16.msra.mxu0 %v8051
  %10811 = vmatpush.bf16.msra.mxu0 %v8050
  %10812 = vmatpush.bf16.msra.mxu0 %v8049
  %10813 = vmatpush.bf16.msra.mxu0 %v8048
  %10814 = vmatmul.bf16.gmra.mxu0 %v2791
  %v10815 = vpop.f32.mrf.mxu0
  %v10816 = vadd.f32 %v10802, %v10815
  %v10817 = vpop.f32.mrf.mxu0
  %v10818 = vadd.f32 %v10804, %v10817
  %10819 = vdwg.mxu0
  %10820 = vmatpush.bf16.msra.mxu0 %v8063
  %10821 = vmatpush.bf16.msra.mxu0 %v8062
  %10822 = vmatpush.bf16.msra.mxu0 %v8061
  %10823 = vmatpush.bf16.msra.mxu0 %v8060
  %10824 = vmatpush.bf16.msra.mxu0 %v8059
  %10825 = vmatpush.bf16.msra.mxu0 %v8058
  %10826 = vmatpush.bf16.msra.mxu0 %v8057
  %10827 = vmatpush.bf16.msra.mxu0 %v8056
  %10828 = vmatmul.bf16.gmra.mxu0 %v2792
  %v10829 = vpop.f32.mrf.mxu0
  %v10830 = vadd.f32 %v10816, %v10829
  %v10831 = vpop.f32.mrf.mxu0
  %v10832 = vadd.f32 %v10818, %v10831
  %10833 = vdwg.mxu0
  %10834 = vmatpush.bf16.msra.mxu0 %v8071
  %10835 = vmatpush.bf16.msra.mxu0 %v8070
  %10836 = vmatpush.bf16.msra.mxu0 %v8069
  %10837 = vmatpush.bf16.msra.mxu0 %v8068
  %10838 = vmatpush.bf16.msra.mxu0 %v8067
  %10839 = vmatpush.bf16.msra.mxu0 %v8066
  %10840 = vmatpush.bf16.msra.mxu0 %v8065
  %10841 = vmatpush.bf16.msra.mxu0 %v8064
  %10842 = vmatmul.bf16.gmra.mxu0 %v2793
  %v10843 = vpop.f32.mrf.mxu0
  %v10844 = vadd.f32 %v10830, %v10843
  %v10845 = vpop.f32.mrf.mxu0
  %v10846 = vadd.f32 %v10832, %v10845
  %10847 = vdwg.mxu0
  %10848 = vmatpush.bf16.msra.mxu0 %v8079
  %10849 = vmatpush.bf16.msra.mxu0 %v8078
  %10850 = vmatpush.bf16.msra.mxu0 %v8077
  %10851 = vmatpush.bf16.msra.mxu0 %v8076
  %10852 = vmatpush.bf16.msra.mxu0 %v8075
  %10853 = vmatpush.bf16.msra.mxu0 %v8074
  %10854 = vmatpush.bf16.msra.mxu0 %v8073
  %10855 = vmatpush.bf16.msra.mxu0 %v8072
  %10856 = vmatmul.bf16.gmra.mxu0 %v2794
  %v10857 = vpop.f32.mrf.mxu0
  %v10858 = vadd.f32 %v10844, %v10857
  %v10859 = vpop.f32.mrf.mxu0
  %v10860 = vadd.f32 %v10846, %v10859
  %10861 = vdwg.mxu0
  %10862 = vmatpush.bf16.msra.mxu0 %v8087
  %10863 = vmatpush.bf16.msra.mxu0 %v8086
  %10864 = vmatpush.bf16.msra.mxu0 %v8085
  %10865 = vmatpush.bf16.msra.mxu0 %v8084
  %10866 = vmatpush.bf16.msra.mxu0 %v8083
  %10867 = vmatpush.bf16.msra.mxu0 %v8082
  %10868 = vmatpush.bf16.msra.mxu0 %v8081
  %10869 = vmatpush.bf16.msra.mxu0 %v8080
  %10870 = vmatmul.bf16.gmra.mxu0 %v2795
  %v10871 = vpop.f32.mrf.mxu0
  %v10872 = vadd.f32 %v10858, %v10871
  %v10873 = vpop.f32.mrf.mxu0
  %v10874 = vadd.f32 %v10860, %v10873
  %10875 = vdwg.mxu0
  %10876 = vmatpush.bf16.msra.mxu0 %v8095
  %10877 = vmatpush.bf16.msra.mxu0 %v8094
  %10878 = vmatpush.bf16.msra.mxu0 %v8093
  %10879 = vmatpush.bf16.msra.mxu0 %v8092
  %10880 = vmatpush.bf16.msra.mxu0 %v8091
  %10881 = vmatpush.bf16.msra.mxu0 %v8090
  %10882 = vmatpush.bf16.msra.mxu0 %v8089
  %10883 = vmatpush.bf16.msra.mxu0 %v8088
  %10884 = vmatmul.bf16.gmra.mxu0 %v2796
  %v10885 = vpop.f32.mrf.mxu0
  %v10886 = vadd.f32 %v10872, %v10885
  %v10887 = vpop.f32.mrf.mxu0
  %v10888 = vadd.f32 %v10874, %v10887
  %10889 = vdwg.mxu0
  %10890 = vmatpush.bf16.msra.mxu0 %v8103
  %10891 = vmatpush.bf16.msra.mxu0 %v8102
  %10892 = vmatpush.bf16.msra.mxu0 %v8101
  %10893 = vmatpush.bf16.msra.mxu0 %v8100
  %10894 = vmatpush.bf16.msra.mxu0 %v8099
  %10895 = vmatpush.bf16.msra.mxu0 %v8098
  %10896 = vmatpush.bf16.msra.mxu0 %v8097
  %10897 = vmatpush.bf16.msra.mxu0 %v8096
  %10898 = vmatmul.bf16.gmra.mxu0 %v2797
  %v10899 = vpop.f32.mrf.mxu0
  %v10900 = vadd.f32 %v10886, %v10899
  %v10901 = vpop.f32.mrf.mxu0
  %v10902 = vadd.f32 %v10888, %v10901
  %10903 = vdwg.mxu0
  %10904 = vmatpush.bf16.msra.mxu0 %v8111
  %10905 = vmatpush.bf16.msra.mxu0 %v8110
  %10906 = vmatpush.bf16.msra.mxu0 %v8109
  %10907 = vmatpush.bf16.msra.mxu0 %v8108
  %10908 = vmatpush.bf16.msra.mxu0 %v8107
  %10909 = vmatpush.bf16.msra.mxu0 %v8106
  %10910 = vmatpush.bf16.msra.mxu0 %v8105
  %10911 = vmatpush.bf16.msra.mxu0 %v8104
  %10912 = vmatmul.bf16.gmra.mxu0 %v2798
  %v10913 = vpop.f32.mrf.mxu0
  %v10914 = vadd.f32 %v10900, %v10913
  %v10915 = vpop.f32.mrf.mxu0
  %v10916 = vadd.f32 %v10902, %v10915
  %10917 = vdwg.mxu0
  %10918 = vmatpush.bf16.msra.mxu0 %v8119
  %10919 = vmatpush.bf16.msra.mxu0 %v8118
  %10920 = vmatpush.bf16.msra.mxu0 %v8117
  %10921 = vmatpush.bf16.msra.mxu0 %v8116
  %10922 = vmatpush.bf16.msra.mxu0 %v8115
  %10923 = vmatpush.bf16.msra.mxu0 %v8114
  %10924 = vmatpush.bf16.msra.mxu0 %v8113
  %10925 = vmatpush.bf16.msra.mxu0 %v8112
  %10926 = vmatmul.bf16.gmra.mxu0 %v2799
  %v10927 = vpop.f32.mrf.mxu0
  %v10928 = vadd.f32 %v10914, %v10927
  %v10929 = vpop.f32.mrf.mxu0
  %v10930 = vadd.f32 %v10916, %v10929
  %10931 = vdwg.mxu0
  %10932 = vmatpush.bf16.msra.mxu0 %v8127
  %10933 = vmatpush.bf16.msra.mxu0 %v8126
  %10934 = vmatpush.bf16.msra.mxu0 %v8125
  %10935 = vmatpush.bf16.msra.mxu0 %v8124
  %10936 = vmatpush.bf16.msra.mxu0 %v8123
  %10937 = vmatpush.bf16.msra.mxu0 %v8122
  %10938 = vmatpush.bf16.msra.mxu0 %v8121
  %10939 = vmatpush.bf16.msra.mxu0 %v8120
  %10940 = vmatmul.bf16.gmra.mxu0 %v2800
  %v10941 = vpop.f32.mrf.mxu0
  %v10942 = vadd.f32 %v10928, %v10941
  %v10943 = vpop.f32.mrf.mxu0
  %v10944 = vadd.f32 %v10930, %v10943
  %10945 = vdwg.mxu0
  %10946 = vmatpush.bf16.msra.mxu0 %v8135
  %10947 = vmatpush.bf16.msra.mxu0 %v8134
  %10948 = vmatpush.bf16.msra.mxu0 %v8133
  %10949 = vmatpush.bf16.msra.mxu0 %v8132
  %10950 = vmatpush.bf16.msra.mxu0 %v8131
  %10951 = vmatpush.bf16.msra.mxu0 %v8130
  %10952 = vmatpush.bf16.msra.mxu0 %v8129
  %10953 = vmatpush.bf16.msra.mxu0 %v8128
  %10954 = vmatmul.bf16.gmra.mxu0 %v2801
  %v10955 = vpop.f32.mrf.mxu0
  %v10956 = vadd.f32 %v10942, %v10955
  %v10957 = vpop.f32.mrf.mxu0
  %v10958 = vadd.f32 %v10944, %v10957
  %10959 = vdwg.mxu0
  %10960 = vmatpush.bf16.msra.mxu0 %v8143
  %10961 = vmatpush.bf16.msra.mxu0 %v8142
  %10962 = vmatpush.bf16.msra.mxu0 %v8141
  %10963 = vmatpush.bf16.msra.mxu0 %v8140
  %10964 = vmatpush.bf16.msra.mxu0 %v8139
  %10965 = vmatpush.bf16.msra.mxu0 %v8138
  %10966 = vmatpush.bf16.msra.mxu0 %v8137
  %10967 = vmatpush.bf16.msra.mxu0 %v8136
  %10968 = vmatmul.bf16.gmra.mxu0 %v2802
  %v10969 = vpop.f32.mrf.mxu0
  %v10970 = vadd.f32 %v10956, %v10969
  %v10971 = vpop.f32.mrf.mxu0
  %v10972 = vadd.f32 %v10958, %v10971
  %10973 = vdwg.mxu0
  %10974 = vmatpush.bf16.msra.mxu0 %v8151
  %10975 = vmatpush.bf16.msra.mxu0 %v8150
  %10976 = vmatpush.bf16.msra.mxu0 %v8149
  %10977 = vmatpush.bf16.msra.mxu0 %v8148
  %10978 = vmatpush.bf16.msra.mxu0 %v8147
  %10979 = vmatpush.bf16.msra.mxu0 %v8146
  %10980 = vmatpush.bf16.msra.mxu0 %v8145
  %10981 = vmatpush.bf16.msra.mxu0 %v8144
  %10982 = vmatmul.bf16.gmra.mxu0 %v2803
  %v10983 = vpop.f32.mrf.mxu0
  %v10984 = vadd.f32 %v10970, %v10983
  %v10985 = vpop.f32.mrf.mxu0
  %v10986 = vadd.f32 %v10972, %v10985
  %10987 = vdwg.mxu0
  %10988 = vmatpush.bf16.msra.mxu0 %v8159
  %10989 = vmatpush.bf16.msra.mxu0 %v8158
  %10990 = vmatpush.bf16.msra.mxu0 %v8157
  %10991 = vmatpush.bf16.msra.mxu0 %v8156
  %10992 = vmatpush.bf16.msra.mxu0 %v8155
  %10993 = vmatpush.bf16.msra.mxu0 %v8154
  %10994 = vmatpush.bf16.msra.mxu0 %v8153
  %10995 = vmatpush.bf16.msra.mxu0 %v8152
  %10996 = vmatmul.bf16.gmra.mxu0 %v2804
  %v10997 = vpop.f32.mrf.mxu0
  %v10998 = vadd.f32 %v10984, %v10997
  %v10999 = vpop.f32.mrf.mxu0
  %v11000 = vadd.f32 %v10986, %v10999
  %11001 = vdwg.mxu0
  %11002 = vmatpush.bf16.msra.mxu0 %v8167
  %11003 = vmatpush.bf16.msra.mxu0 %v8166
  %11004 = vmatpush.bf16.msra.mxu0 %v8165
  %11005 = vmatpush.bf16.msra.mxu0 %v8164
  %11006 = vmatpush.bf16.msra.mxu0 %v8163
  %11007 = vmatpush.bf16.msra.mxu0 %v8162
  %11008 = vmatpush.bf16.msra.mxu0 %v8161
  %11009 = vmatpush.bf16.msra.mxu0 %v8160
  %11010 = vmatmul.bf16.gmra.mxu0 %v2805
  %v11011 = vpop.f32.mrf.mxu0
  %v11012 = vadd.f32 %v10998, %v11011
  %v11013 = vpop.f32.mrf.mxu0
  %v11014 = vadd.f32 %v11000, %v11013
  %11015 = vdwg.mxu0
  %11016 = vmatpush.bf16.msra.mxu0 %v8175
  %11017 = vmatpush.bf16.msra.mxu0 %v8174
  %11018 = vmatpush.bf16.msra.mxu0 %v8173
  %11019 = vmatpush.bf16.msra.mxu0 %v8172
  %11020 = vmatpush.bf16.msra.mxu0 %v8171
  %11021 = vmatpush.bf16.msra.mxu0 %v8170
  %11022 = vmatpush.bf16.msra.mxu0 %v8169
  %11023 = vmatpush.bf16.msra.mxu0 %v8168
  %11024 = vmatmul.bf16.gmra.mxu0 %v2806
  %v11025 = vpop.f32.mrf.mxu0
  %v11026 = vadd.f32 %v11012, %v11025
  %v11027 = vpop.f32.mrf.mxu0
  %v11028 = vadd.f32 %v11014, %v11027
  %11029 = vdwg.mxu0
  %11030 = vmatpush.bf16.msra.mxu0 %v8183
  %11031 = vmatpush.bf16.msra.mxu0 %v8182
  %11032 = vmatpush.bf16.msra.mxu0 %v8181
  %11033 = vmatpush.bf16.msra.mxu0 %v8180
  %11034 = vmatpush.bf16.msra.mxu0 %v8179
  %11035 = vmatpush.bf16.msra.mxu0 %v8178
  %11036 = vmatpush.bf16.msra.mxu0 %v8177
  %11037 = vmatpush.bf16.msra.mxu0 %v8176
  %11038 = vmatmul.bf16.gmra.mxu0 %v2807
  %v11039 = vpop.f32.mrf.mxu0
  %v11040 = vadd.f32 %v11026, %v11039
  %v11041 = vpop.f32.mrf.mxu0
  %v11042 = vadd.f32 %v11028, %v11041
  %11043 = vdwg.mxu0
  %11044 = vmatpush.bf16.msra.mxu0 %v8191
  %11045 = vmatpush.bf16.msra.mxu0 %v8190
  %11046 = vmatpush.bf16.msra.mxu0 %v8189
  %11047 = vmatpush.bf16.msra.mxu0 %v8188
  %11048 = vmatpush.bf16.msra.mxu0 %v8187
  %11049 = vmatpush.bf16.msra.mxu0 %v8186
  %11050 = vmatpush.bf16.msra.mxu0 %v8185
  %11051 = vmatpush.bf16.msra.mxu0 %v8184
  %11052 = vmatmul.bf16.gmra.mxu0 %v2808
  %v11053 = vpop.f32.mrf.mxu0
  %v11054 = vadd.f32 %v11040, %v11053
  %v11055 = vpop.f32.mrf.mxu0
  %v11056 = vadd.f32 %v11042, %v11055
  %11057 = vdwg.mxu0
  %11058 = vmatpush.bf16.msra.mxu0 %v8199
  %11059 = vmatpush.bf16.msra.mxu0 %v8198
  %11060 = vmatpush.bf16.msra.mxu0 %v8197
  %11061 = vmatpush.bf16.msra.mxu0 %v8196
  %11062 = vmatpush.bf16.msra.mxu0 %v8195
  %11063 = vmatpush.bf16.msra.mxu0 %v8194
  %11064 = vmatpush.bf16.msra.mxu0 %v8193
  %11065 = vmatpush.bf16.msra.mxu0 %v8192
  %11066 = vmatmul.bf16.gmra.mxu0 %v2809
  %v11067 = vpop.f32.mrf.mxu0
  %v11068 = vadd.f32 %v11054, %v11067
  %v11069 = vpop.f32.mrf.mxu0
  %v11070 = vadd.f32 %v11056, %v11069
  %11071 = vdwg.mxu0
  %11072 = vmatpush.bf16.msra.mxu0 %v8207
  %11073 = vmatpush.bf16.msra.mxu0 %v8206
  %11074 = vmatpush.bf16.msra.mxu0 %v8205
  %11075 = vmatpush.bf16.msra.mxu0 %v8204
  %11076 = vmatpush.bf16.msra.mxu0 %v8203
  %11077 = vmatpush.bf16.msra.mxu0 %v8202
  %11078 = vmatpush.bf16.msra.mxu0 %v8201
  %11079 = vmatpush.bf16.msra.mxu0 %v8200
  %11080 = vmatmul.bf16.gmra.mxu0 %v2810
  %v11081 = vpop.f32.mrf.mxu0
  %v11082 = vadd.f32 %v11068, %v11081
  %v11083 = vpop.f32.mrf.mxu0
  %v11084 = vadd.f32 %v11070, %v11083
  %11085 = vdwg.mxu0
  %11086 = vmatpush.bf16.msra.mxu0 %v8215
  %11087 = vmatpush.bf16.msra.mxu0 %v8214
  %11088 = vmatpush.bf16.msra.mxu0 %v8213
  %11089 = vmatpush.bf16.msra.mxu0 %v8212
  %11090 = vmatpush.bf16.msra.mxu0 %v8211
  %11091 = vmatpush.bf16.msra.mxu0 %v8210
  %11092 = vmatpush.bf16.msra.mxu0 %v8209
  %11093 = vmatpush.bf16.msra.mxu0 %v8208
  %11094 = vmatmul.bf16.gmra.mxu0 %v2811
  %v11095 = vpop.f32.mrf.mxu0
  %v11096 = vadd.f32 %v11082, %v11095
  %v11097 = vpop.f32.mrf.mxu0
  %v11098 = vadd.f32 %v11084, %v11097
  %11099 = vdwg.mxu0
  %11100 = vmatpush.bf16.msra.mxu0 %v8223
  %11101 = vmatpush.bf16.msra.mxu0 %v8222
  %11102 = vmatpush.bf16.msra.mxu0 %v8221
  %11103 = vmatpush.bf16.msra.mxu0 %v8220
  %11104 = vmatpush.bf16.msra.mxu0 %v8219
  %11105 = vmatpush.bf16.msra.mxu0 %v8218
  %11106 = vmatpush.bf16.msra.mxu0 %v8217
  %11107 = vmatpush.bf16.msra.mxu0 %v8216
  %11108 = vmatmul.bf16.gmra.mxu0 %v2812
  %v11109 = vpop.f32.mrf.mxu0
  %v11110 = vadd.f32 %v11096, %v11109
  %v11111 = vpop.f32.mrf.mxu0
  %v11112 = vadd.f32 %v11098, %v11111
  %11113 = vdwg.mxu0
  %11114 = vmatpush.bf16.msra.mxu0 %v8231
  %11115 = vmatpush.bf16.msra.mxu0 %v8230
  %11116 = vmatpush.bf16.msra.mxu0 %v8229
  %11117 = vmatpush.bf16.msra.mxu0 %v8228
  %11118 = vmatpush.bf16.msra.mxu0 %v8227
  %11119 = vmatpush.bf16.msra.mxu0 %v8226
  %11120 = vmatpush.bf16.msra.mxu0 %v8225
  %11121 = vmatpush.bf16.msra.mxu0 %v8224
  %11122 = vmatmul.bf16.gmra.mxu0 %v2813
  %v11123 = vpop.f32.mrf.mxu0
  %v11124 = vadd.f32 %v11110, %v11123
  %v11125 = vpop.f32.mrf.mxu0
  %v11126 = vadd.f32 %v11112, %v11125
  %11127 = vdwg.mxu0
  %11128 = vmatpush.bf16.msra.mxu0 %v8239
  %11129 = vmatpush.bf16.msra.mxu0 %v8238
  %11130 = vmatpush.bf16.msra.mxu0 %v8237
  %11131 = vmatpush.bf16.msra.mxu0 %v8236
  %11132 = vmatpush.bf16.msra.mxu0 %v8235
  %11133 = vmatpush.bf16.msra.mxu0 %v8234
  %11134 = vmatpush.bf16.msra.mxu0 %v8233
  %11135 = vmatpush.bf16.msra.mxu0 %v8232
  %11136 = vmatmul.bf16.gmra.mxu0 %v2814
  %v11137 = vpop.f32.mrf.mxu0
  %v11138 = vadd.f32 %v11124, %v11137
  %v11139 = vpop.f32.mrf.mxu0
  %v11140 = vadd.f32 %v11126, %v11139
  %11141 = vdwg.mxu0
  %11142 = vmatpush.bf16.msra.mxu0 %v8247
  %11143 = vmatpush.bf16.msra.mxu0 %v8246
  %11144 = vmatpush.bf16.msra.mxu0 %v8245
  %11145 = vmatpush.bf16.msra.mxu0 %v8244
  %11146 = vmatpush.bf16.msra.mxu0 %v8243
  %11147 = vmatpush.bf16.msra.mxu0 %v8242
  %11148 = vmatpush.bf16.msra.mxu0 %v8241
  %11149 = vmatpush.bf16.msra.mxu0 %v8240
  %11150 = vmatmul.bf16.gmra.mxu0 %v2815
  %v11151 = vpop.f32.mrf.mxu0
  %v11152 = vadd.f32 %v11138, %v11151
  %v11153 = vpop.f32.mrf.mxu0
  %v11154 = vadd.f32 %v11140, %v11153
  %11155 = vdwg.mxu0
  %11156 = vmatpush.bf16.msra.mxu0 %v8255
  %11157 = vmatpush.bf16.msra.mxu0 %v8254
  %11158 = vmatpush.bf16.msra.mxu0 %v8253
  %11159 = vmatpush.bf16.msra.mxu0 %v8252
  %11160 = vmatpush.bf16.msra.mxu0 %v8251
  %11161 = vmatpush.bf16.msra.mxu0 %v8250
  %11162 = vmatpush.bf16.msra.mxu0 %v8249
  %11163 = vmatpush.bf16.msra.mxu0 %v8248
  %11164 = vmatmul.bf16.gmra.mxu0 %v2816
  %v11165 = vpop.f32.mrf.mxu0
  %v11166 = vadd.f32 %v11152, %v11165
  %v11167 = vpop.f32.mrf.mxu0
  %v11168 = vadd.f32 %v11154, %v11167
  %11169 = vdwg.mxu0
  %11170 = vmatpush.bf16.msra.mxu0 %v8263
  %11171 = vmatpush.bf16.msra.mxu0 %v8262
  %11172 = vmatpush.bf16.msra.mxu0 %v8261
  %11173 = vmatpush.bf16.msra.mxu0 %v8260
  %11174 = vmatpush.bf16.msra.mxu0 %v8259
  %11175 = vmatpush.bf16.msra.mxu0 %v8258
  %11176 = vmatpush.bf16.msra.mxu0 %v8257
  %11177 = vmatpush.bf16.msra.mxu0 %v8256
  %11178 = vmatmul.bf16.gmra.mxu0 %v2817
  %v11179 = vpop.f32.mrf.mxu0
  %v11180 = vadd.f32 %v11166, %v11179
  %v11181 = vpop.f32.mrf.mxu0
  %v11182 = vadd.f32 %v11168, %v11181
  %11183 = vdwg.mxu0
  %11184 = vmatpush.bf16.msra.mxu0 %v8271
  %11185 = vmatpush.bf16.msra.mxu0 %v8270
  %11186 = vmatpush.bf16.msra.mxu0 %v8269
  %11187 = vmatpush.bf16.msra.mxu0 %v8268
  %11188 = vmatpush.bf16.msra.mxu0 %v8267
  %11189 = vmatpush.bf16.msra.mxu0 %v8266
  %11190 = vmatpush.bf16.msra.mxu0 %v8265
  %11191 = vmatpush.bf16.msra.mxu0 %v8264
  %11192 = vmatmul.bf16.gmra.mxu0 %v2818
  %v11193 = vpop.f32.mrf.mxu0
  %v11194 = vadd.f32 %v11180, %v11193
  %v11195 = vpop.f32.mrf.mxu0
  %v11196 = vadd.f32 %v11182, %v11195
  %11197 = vdwg.mxu0
  %v11198 = vmax.f32 %v11194, 0.0
  %v11199 = vmax.f32 %v11196, 0.0
  %v11200 = vpack.c.bf16 %v11199, %v11198
  %v11201 = vld [vmem:[%s3] sm:$0xf]
  %v11202 = vld [vmem:[%s3 + $0x4] sm:$0xf]
  %v11203 = vld [vmem:[%s3 + $0x8] sm:$0xf]
  %v11204 = vld [vmem:[%s3 + $0xc] sm:$0xf]
  %v11205 = vld [vmem:[%s3 + $0x10] sm:$0xf]
  %v11206 = vld [vmem:[%s3 + $0x14] sm:$0xf]
  %v11207 = vld [vmem:[%s3 + $0x18] sm:$0xf]
  %v11208 = vld [vmem:[%s3 + $0x1c] sm:$0xf]
  %v11209 = vld [vmem:[%s3 + $0x20] sm:$0xf]
  %v11210 = vld [vmem:[%s3 + $0x24] sm:$0xf]
  %v11211 = vld [vmem:[%s3 + $0x28] sm:$0xf]
  %v11212 = vld [vmem:[%s3 + $0x2c] sm:$0xf]
  %v11213 = vld [vmem:[%s3 + $0x30] sm:$0xf]
  %v11214 = vld [vmem:[%s3 + $0x34] sm:$0xf]
  %v11215 = vld [vmem:[%s3 + $0x38] sm:$0xf]
  %v11216 = vld [vmem:[%s3 + $0x3c] sm:$0xf]
  %v11217 = vld [vmem:[%s4] sm:$0x1]
  %v11219 = vperm.slane %v11217, 0
  %v11237 = vunpack.c.l.b16 %v11201
  %v11238 = vunpack.c.l.b16 %v11202
  %v11239 = vunpack.c.l.b16 %v11203
  %v11240 = vunpack.c.l.b16 %v11204
  %v11241 = vunpack.c.l.b16 %v11205
  %v11242 = vunpack.c.l.b16 %v11206
  %v11243 = vunpack.c.l.b16 %v11207
  %v11244 = vunpack.c.l.b16 %v11208
  %v11245 = vunpack.c.l.b16 %v11209
  %v11246 = vunpack.c.l.b16 %v11210
  %v11247 = vunpack.c.l.b16 %v11211
  %v11248 = vunpack.c.l.b16 %v11212
  %v11249 = vunpack.c.l.b16 %v11213
  %v11250 = vunpack.c.l.b16 %v11214
  %v11251 = vunpack.c.l.b16 %v11215
  %v11252 = vunpack.c.l.b16 %v11216
  %v11253 = vpack.c.b16 %v11238, %v11237
  %v11254 = vpack.c.b16 %v11240, %v11239
  %v11255 = vpack.c.b16 %v11242, %v11241
  %v11256 = vpack.c.b16 %v11244, %v11243
  %v11257 = vpack.c.b16 %v11246, %v11245
  %v11258 = vpack.c.b16 %v11248, %v11247
  %v11259 = vpack.c.b16 %v11250, %v11249
  %v11260 = vpack.c.b16 %v11252, %v11251
  %11269 = vmatpush.bf16.msra.mxu0 %v11260
  %11270 = vmatpush.bf16.msra.mxu0 %v11259
  %11271 = vmatpush.bf16.msra.mxu0 %v11258
  %11272 = vmatpush.bf16.msra.mxu0 %v11257
  %11273 = vmatpush.bf16.msra.mxu0 %v11256
  %11274 = vmatpush.bf16.msra.mxu0 %v11255
  %11275 = vmatpush.bf16.msra.mxu0 %v11254
  %11276 = vmatpush.bf16.msra.mxu0 %v11253
  %11277 = vmatmul.bf16.gmra.mxu0 %v11200
  %v11278 = vpop.f32.mrf.mxu0
  %v11279 = vadd.f32 %v11219, %v11278
  %v11280 = vpop.f32.mrf.mxu0
  %v11281 = vadd.f32 %v11219, %v11280
  %11282 = vdwg.mxu0
  %vm11283 = vcmask 31744
  %11284 = vst.msk [vmem:[%s5] sm:$0xff] %vm11283, %v11279
  %11285 = vst.msk [vmem:[%s5 + $0x8] sm:$0xff] %vm11283, %v11281
  // Predicated region
  $region22: #{simple_cnn_forward.7} parent=0 // pred_check
    _
  $region23: #{simple_cnn_forward.7} parent=0 // pred_check_branch
    %11287 = sbr.rel (0) target = $region25
  $region24: #{simple_cnn_forward.7} parent=0 // pred_region
    _
  $region25: #{simple_cnn_forward.7} parent=0 // pred_fallthru
    _
  // Predicated region
  $region26: #{simple_cnn_forward.7} parent=0 // pred_check
    _
  $region27: #{simple_cnn_forward.7} parent=0 // pred_check_branch
    %11289 = sbr.rel (0) target = $region29
  $region28: #{simple_cnn_forward.7} parent=0 // pred_region
    _
  $region29: #{simple_cnn_forward.7} parent=0 // pred_fallthru
    _

</llo_original>
